<compile_context>
chip_gen: v5e
topology: v5e:2x2
jax: 0.10.0
libtpu: 0.0.40
codegen_flags: <defaults>
</compile_context>

<pallas_src>
import functools

import jax
import jax.numpy as jnp
from jax import lax
from jax.experimental import pallas as pl
from jax.experimental.pallas import tpu as pltpu


LANE = 128                    # lane-dense output width (multiple of 128 lanes)
VMEM_LIMIT = 32 * 1024 * 1024  # explicit, safe on v5e/v6e/v7x


def _round_up(x, m):
    return ((x + m - 1) // m) * m


# ----------------------------------------------------------------------------
# Pallas kernel 1: fused (X @ W) + shift, optional ReLU   (bf16 MXU, f32 acc)
# ----------------------------------------------------------------------------
def mm_shift_kernel(x_ref, w_ref, shift_ref, o_ref, *, relu):
    y = jnp.dot(x_ref[...], w_ref[...], preferred_element_type=jnp.float32)
    y = y + shift_ref[...]
    if relu:
        y = jnp.maximum(y, 0.0)
    o_ref[...] = y.astype(o_ref.dtype)


def _choose_tm(M, cap=512, target_steps=8):
    """Row tile: ~target_steps grid steps (pipeline overlap and >=2 blocks for
    v7x's two TensorCores), packing-friendly (multiple of 16), capped at 512
    rows so double-buffered tiles fit v5e's 16 MiB scoped-VMEM default."""
    if M <= 16:
        return M
    tm = -(-M // target_steps)
    tm = ((tm + 15) // 16) * 16
    return max(16, min(cap, min(tm, M)))


def matmul_shift(x, w, shift, *, relu=False, out_dtype=jnp.bfloat16):
    """x: (M, K); w: (K, Co) bf16 with Co % 128 == 0; shift: (Co,) f32.

    Returns (M, Co) = relu?(x @ w + shift) in `out_dtype` (f32 accumulation).
    """
    M, K = x.shape
    Kw, Co = w.shape
    assert K == Kw and Co % LANE == 0
    tm = _choose_tm(M)
    grid = (pl.cdiv(M, tm),)
    shift2 = shift.reshape(1, Co).astype(jnp.float32)
    out_isz = int(jnp.dtype(out_dtype).itemsize)

    cost = pl.CostEstimate(
        flops=2 * M * K * Co,
        transcendentals=0,
        bytes_accessed=M * K * 2 + K * Co * 2 + Co * 4 + M * Co * out_isz,
    )
    return pl.pallas_call(
        functools.partial(mm_shift_kernel, relu=relu),
        out_shape=jax.ShapeDtypeStruct((M, Co), out_dtype),
        grid=grid,
        in_specs=[
            pl.BlockSpec((tm, K), lambda i: (i, 0)),     # streamed rows
            pl.BlockSpec((K, Co), lambda i: (0, 0)),     # resident weight
            pl.BlockSpec((1, Co), lambda i: (0, 0)),     # resident shift
        ],
        out_specs=pl.BlockSpec((tm, Co), lambda i: (i, 0)),
        compiler_params=pltpu.CompilerParams(
            dimension_semantics=("parallel",),
            vmem_limit_bytes=VMEM_LIMIT),
        cost_estimate=cost,
    )(x.astype(jnp.bfloat16), w, shift2)


# ----------------------------------------------------------------------------
# Pallas kernel 2: dual-input 3x3 conv (pad=1, stride=1), R output rows / step
# ----------------------------------------------------------------------------
def offset_conv_kernel(lo_m, lo_t, lo_b, hi_m, hi_t, hi_b,
                       wl_ref, wh_ref, shift_ref, o_ref, *, R, W, H):
    RW = R * W
    Cp = lo_m.shape[-1]
    Co = o_ref.shape[-1]
    h0 = pl.program_id(1) * R

    # Halo validity: zero the halo rows at the image top / bottom.
    top_ok = (h0 > 0).astype(jnp.bfloat16)
    bot_ok = (h0 + R < H).astype(jnp.bfloat16)

    # Column masks for the kx = -1 / +1 taps (zero outside the image width).
    col = lax.broadcasted_iota(jnp.int32, (RW, 1), 0) % W
    mask_l = (col >= 1).astype(jnp.bfloat16)
    mask_r = (col <= W - 2).astype(jnp.bfloat16)

    zrow = jnp.zeros((W, Cp), jnp.bfloat16)
    acc = jnp.zeros((RW, Co), jnp.float32)

    for m_ref, t_ref, b_ref, w_ref in ((lo_m, lo_t, lo_b, wl_ref),
                                       (hi_m, hi_t, hi_b, wh_ref)):
        # [zeros(W); top(W); main(R*W); bottom(W); zeros(W)]  -- flat row stack
        stack = jnp.concatenate(
            [zrow, t_ref[0] * top_ok, m_ref[0], b_ref[0] * bot_ok, zrow],
            axis=0)
        for kyi in range(3):
            for kxi in range(3):
                kx = kxi - 1
                start = (kyi + 1) * W + kx
                win = stack[start:start + RW]
                if kx == -1:
                    win = win * mask_l
                elif kx == 1:
                    win = win * mask_r
                acc = acc + jnp.dot(win, w_ref[kyi * 3 + kxi],
                                    preferred_element_type=jnp.float32)

    o_ref[0] = (acc + shift_ref[...]).astype(o_ref.dtype)


def _choose_rows(H):
    for r in (8, 4, 2, 1):
        if H % r == 0:
            return r
    return 1


def conv3x3_dual(low3, high3, w_lo, w_hi, shift, H, W, *, out_dtype=jnp.float32):
    """low3, high3: (N, H*W, Cp) bf16; w_lo/w_hi: (9, Cp, Co) bf16; shift: (Co,).

    Returns (N, H*W, Co) = conv3x3(concat(low, high)) + shift without
    materializing the concat or any padded/im2col tensor in HBM.
    """
    N, HW, Cp = low3.shape
    assert HW == H * W
    assert W % 8 == 0, "offset-conv kernel requires W % 8 == 0"
    assert low3.dtype == jnp.bfloat16 and high3.dtype == jnp.bfloat16
    nine, Cpw, Co = w_lo.shape
    assert nine == 9 and Cpw == Cp and Co % LANE == 0

    R = _choose_rows(H)
    shift2 = shift.reshape(1, Co).astype(jnp.float32)

    def main_map(n, i):
        return (n, i, 0)

    def top_map(n, i):
        return (n, jnp.maximum(i * R - 1, 0), 0)

    def bot_map(n, i):
        return (n, jnp.minimum(i * R + R, H - 1), 0)

    main_spec = pl.BlockSpec((1, R * W, Cp), main_map)
    halo_top = pl.BlockSpec((1, W, Cp), top_map)
    halo_bot = pl.BlockSpec((1, W, Cp), bot_map)
    w_spec = pl.BlockSpec((9, Cp, Co), lambda n, i: (0, 0, 0))

    out_isz = int(jnp.dtype(out_dtype).itemsize)
    in_bytes = 2 * (N * (H + 2 * (H // R)) * W * Cp * 2)
    cost = pl.CostEstimate(
        flops=2 * 9 * 2 * N * H * W * Cp * Co,
        transcendentals=0,
        bytes_accessed=in_bytes + 2 * 9 * Cp * Co * 2 + N * H * W * Co * out_isz,
    )
    return pl.pallas_call(
        functools.partial(offset_conv_kernel, R=R, W=W, H=H),
        out_shape=jax.ShapeDtypeStruct((N, H * W, Co), out_dtype),
        grid=(N, H // R),
        in_specs=[main_spec, halo_top, halo_bot,      # low branch
                  main_spec, halo_top, halo_bot,      # high (upsampled) branch
                  w_spec, w_spec,
                  pl.BlockSpec((1, Co), lambda n, i: (0, 0))],
        out_specs=pl.BlockSpec((1, R * W, Co), main_map),
        compiler_params=pltpu.CompilerParams(
            dimension_semantics=("parallel", "parallel"),
            vmem_limit_bytes=VMEM_LIMIT),
        cost_estimate=cost,
    )(low3, low3, low3, high3, high3, high3, w_lo, w_hi, shift2)


# ----------------------------------------------------------------------------
# Plain-JAX glue: modulated bilinear sampling with flat (1-D) bf16 gathers
# ----------------------------------------------------------------------------
def bilinear_sample_modulated(img_flat, ys, xs, mod, H, W):
    """img_flat: (N*H*W, C) bf16; ys, xs, mod: (N, H, W, K) f32.

    Returns (N, H, W, K, C) bf16 = mod * bilinear(img at (ys, xs)), zero
    outside the image; the modulation mask is folded into the 4 corner weights
    and each corner is a single flat jnp.take on linearized indices.
    """
    N = ys.shape[0]
    C = img_flat.shape[-1]
    y0 = jnp.floor(ys)
    x0 = jnp.floor(xs)
    base_n = (jnp.arange(N, dtype=jnp.int32) * (H * W))[:, None, None, None]

    out = jnp.zeros(ys.shape + (C,), jnp.float32)
    for dyc in (0.0, 1.0):
        for dxc in (0.0, 1.0):
            yi = y0 + dyc
            xi = x0 + dxc
            wy = 1.0 - jnp.abs(ys - yi)
            wx = 1.0 - jnp.abs(xs - xi)
            valid = (yi >= 0) & (yi <= H - 1) & (xi >= 0) & (xi <= W - 1)
            yc = jnp.clip(yi, 0, H - 1).astype(jnp.int32)
            xc = jnp.clip(xi, 0, W - 1).astype(jnp.int32)
            lin = (base_n + yc * W + xc).reshape(-1)
            vals = jnp.take(img_flat, lin, axis=0, mode="clip")
            vals = vals.reshape(ys.shape + (C,)).astype(jnp.float32)
            w_eff = (wy * wx * mod * valid.astype(jnp.float32))[..., None]
            out = out + vals * w_eff
    return out.astype(jnp.bfloat16)


# ----------------------------------------------------------------------------
# DAF forward
# ----------------------------------------------------------------------------
def daf_forward(low_feat, high_feat, fp):
    """low_feat: (N, Cl, Hl, Wl); high_feat: (N, Ch, Hh, Wh).  Returns NCHW."""
    N, Cl, Hl, Wl = low_feat.shape
    _, Ch, Hh, Wh = high_feat.shape
    Clp = fp["w0f"].shape[1]                               # padded channel width

    low = jnp.transpose(low_feat, (0, 2, 3, 1)).astype(jnp.bfloat16)    # NHWC
    high = jnp.transpose(high_feat, (0, 2, 3, 1)).astype(jnp.bfloat16)  # NHWC

    # --- conv1: 1x1 ConvBN on high_feat (BN folded), bf16, padded channels ---
    high_c = matmul_shift(high.reshape(-1, Ch), fp["w1f"], fp["b1f"])
    high_c = high_c.reshape(N, Hh, Wh, Clp)

    # --- F.interpolate(..., mode='nearest') to the low spatial size ----------
    yi = (jnp.arange(Hl) * Hh) // Hl
    xi = (jnp.arange(Wl) * Wh) // Wl
    high_up = high_c[:, yi][:, :, xi].reshape(N, Hl * Wl, Clp)

    # --- conv0: 1x1 ConvBN on low_feat ---------------------------------------
    low_c = matmul_shift(low.reshape(-1, Cl), fp["w0f"], fp["b0f"])
    low_c3 = low_c.reshape(N, Hl * Wl, Clp)

    # --- conv2: DeformableAlign (DCNv2-style) --------------------------------
    # 3x3 offset/mask conv over the implicit concat(low, high): fused dual-
    # input Pallas kernel, f32 output (needed for sampling coordinates).
    off = conv3x3_dual(low_c3, high_up, fp["w_off_lo"], fp["w_off_hi"],
                       fp["b_off"], Hl, Wl, out_dtype=jnp.float32)
    off = off.reshape(N, Hl, Wl, -1)
    off18 = off[..., :18]
    dy = off18[..., 0::2]                       # mmcv per-tap interleaved (dy, dx)
    dx = off18[..., 1::2]
    mask = jax.nn.sigmoid(off[..., 18:27])

    ky = jnp.repeat(jnp.arange(3, dtype=jnp.float32) - 1.0, 3)          # (9,)
    kx = jnp.tile(jnp.arange(3, dtype=jnp.float32) - 1.0, 3)            # (9,)
    ys = jnp.arange(Hl, dtype=jnp.float32)[None, :, None, None] + ky + dy
    xs = jnp.arange(Wl, dtype=jnp.float32)[None, None, :, None] + kx + dx

    # modulated bilinear sampling (mask folded into corner weights), bf16
    cols = bilinear_sample_modulated(low_c, ys, xs, mask, Hl, Wl)
    cols = cols.reshape(N * Hl * Wl, 9 * Clp)

    # deformable 3x3 conv matmul with DCN bias + final BN + ReLU fused
    out = matmul_shift(cols, fp["w_dcnf"], fp["b_dcnf"], relu=True,
                       out_dtype=jnp.float32)
    out = out.reshape(N, Hl, Wl, Clp)[..., :Cl]
    return jnp.transpose(out, (0, 3, 1, 2))                             # NCHW


# ----------------------------------------------------------------------------
# Deterministic parameter construction + folding for the kernels
# ----------------------------------------------------------------------------
def make_params(key, low_channel, high_channel):
    Cl, Ch = low_channel, high_channel
    ks = jax.random.split(key, 10)

    def bn_params(k, c):
        k1, k2, k3, k4 = jax.random.split(k, 4)
        gamma = jax.random.uniform(k1, (c,), jnp.float32, 0.5, 1.5)
        beta = 0.1 * jax.random.normal(k2, (c,), jnp.float32)
        mean = 0.1 * jax.random.normal(k3, (c,), jnp.float32)
        var = jax.random.uniform(k4, (c,), jnp.float32, 0.5, 1.5)
        return (gamma, beta, mean, var)

    w0 = 0.2 * jax.random.normal(ks[0], (Cl, Cl), jnp.float32)      # (Cin, Cout)
    w1 = 0.2 * jax.random.normal(ks[1], (Ch, Cl), jnp.float32)
    # torch layout (Cout, Cin, kh, kw) -> (kh*kw, Cin, Cout)
    w_off_t = 0.05 * jax.random.normal(ks[2], (27, 2 * Cl, 3, 3), jnp.float32)
    w_off = jnp.transpose(w_off_t, (2, 3, 1, 0)).reshape(9, 2 * Cl, 27)
    b_off = 0.01 * jax.random.normal(ks[3], (27,), jnp.float32)
    w_dcn_t = 0.2 * jax.random.normal(ks[4], (Cl, Cl, 3, 3), jnp.float32)
    w_dcn = jnp.transpose(w_dcn_t, (2, 3, 1, 0)).reshape(9, Cl, Cl)
    b_dcn = 0.01 * jax.random.normal(ks[5], (Cl,), jnp.float32)

    return {"w0": w0, "bn0": bn_params(ks[6], Cl),
            "w1": w1, "bn1": bn_params(ks[7], Cl),
            "w_off": w_off, "b_off": b_off,
            "w_dcn": w_dcn, "b_dcn": b_dcn,
            "bn2": bn_params(ks[8], Cl)}


def fold_params(p, low_channel, high_channel):
    """Fold BN scale into weights, pad channels to a multiple of 128 (lane-
    dense, carried through the whole pipeline) and pre-cast weights to bf16."""
    Cl, Ch = low_channel, high_channel
    Clp = _round_up(Cl, LANE)
    Cop = _round_up(27, LANE)

    def bn_fold(gamma, beta, mean, var, eps=1e-5):
        scale = gamma / jnp.sqrt(var + eps)
        return scale, beta - mean * scale

    s0, b0 = bn_fold(*p["bn0"])
    w0f = jnp.zeros((Cl, Clp), jnp.float32).at[:, :Cl].set(p["w0"] * s0[None, :])
    b0f = jnp.zeros((Clp,), jnp.float32).at[:Cl].set(b0)

    s1, b1 = bn_fold(*p["bn1"])
    w1f = jnp.zeros((Ch, Clp), jnp.float32).at[:, :Cl].set(p["w1"] * s1[None, :])
    b1f = jnp.zeros((Clp,), jnp.float32).at[:Cl].set(b1)

    w_off = p["w_off"]                                      # (9, 2Cl, 27)
    w_off_lo = jnp.zeros((9, Clp, Cop), jnp.float32).at[:, :Cl, :27].set(
        w_off[:, :Cl, :])
    w_off_hi = jnp.zeros((9, Clp, Cop), jnp.float32).at[:, :Cl, :27].set(
        w_off[:, Cl:, :])
    b_off = jnp.zeros((Cop,), jnp.float32).at[:27].set(p["b_off"])

    s2, b2 = bn_fold(*p["bn2"])
    w_dcnf = jnp.zeros((9, Clp, Clp), jnp.float32).at[:, :Cl, :Cl].set(
        p["w_dcn"] * s2[None, None, :]).reshape(9 * Clp, Clp)
    b_dcnf = jnp.zeros((Clp,), jnp.float32).at[:Cl].set(s2 * p["b_dcn"] + b2)

    cast = lambda a: a.astype(jnp.bfloat16)
    return {"w0f": cast(w0f), "b0f": b0f,
            "w1f": cast(w1f), "b1f": b1f,
            "w_off_lo": cast(w_off_lo), "w_off_hi": cast(w_off_hi),
            "b_off": b_off,
            "w_dcnf": cast(w_dcnf), "b_dcnf": b_dcnf}


if __name__ == "__main__":
    key = jax.random.PRNGKey(0)
    k_low, k_high, k_par = jax.random.split(key, 3)

    N = 2
    low_channel, high_channel = 8, 16
    Hl = Wl = 16   # low-level feature: higher resolution
    Hh = Wh = 8    # high-level feature: lower resolution, upsampled by DAF

    low_feat = jax.random.normal(k_low, (N, low_channel, Hl, Wl), jnp.float32)
    high_feat = jax.random.normal(k_high, (N, high_channel, Hh, Wh), jnp.float32)

    params = make_params(k_par, low_channel, high_channel)
    fparams = fold_params(params, low_channel, high_channel)

    daf = jax.jit(daf_forward)
    out = jax.block_until_ready(daf(low_feat, high_feat, fparams))

    assert out.shape == (N, low_channel, Hl, Wl)
    assert bool(jnp.all(jnp.isfinite(out)))
    assert bool(jnp.all(out >= 0.0))   # ReLU at the end
    print("KERNEL_OK")
</pallas_src>

<mosaic_0001>
module attributes {stable_mosaic.version = 11 : i64} {
  func.func @mm_shift_kernel(%arg0: i32, %arg1: memref<16x16xbf16, #tpu.memory_space<vmem>>, %arg2: memref<16x128xbf16, #tpu.memory_space<vmem>>, %arg3: memref<1x128xf32, #tpu.memory_space<vmem>>, %arg4: memref<16x128xbf16, #tpu.memory_space<vmem>>) attributes {dimension_semantics = [#tpu.dimension_semantics<parallel>], iteration_bounds = array<i64: 8>, scalar_prefetch = 0 : i64, scratch_operands = 0 : i64, tpu.core_type = #tpu.core_type<tc>, window_params = [{transform_indices = @transform_0, window_bounds = array<i64: 16, 16>}, {pipeline_mode = #tpu.pipeline_mode<synchronous>, transform_indices = @transform_1, window_bounds = array<i64: 16, 128>}, {pipeline_mode = #tpu.pipeline_mode<synchronous>, transform_indices = @transform_2, window_bounds = array<i64: 1, 128>}, {transform_indices = @transform_3, window_bounds = array<i64: 16, 128>}]} {
    %c0 = arith.constant 0 : index
    %c0_0 = arith.constant 0 : index
    %0 = vector.load %arg1[%c0, %c0_0] : memref<16x16xbf16, #tpu.memory_space<vmem>>, vector<16x16xbf16>
    %c0_1 = arith.constant 0 : index
    %c0_2 = arith.constant 0 : index
    %1 = vector.load %arg2[%c0_1, %c0_2] : memref<16x128xbf16, #tpu.memory_space<vmem>>, vector<16x128xbf16>
    %cst = arith.constant dense<0.000000e+00> : vector<16x128xf32>
    %2 = tpu.matmul %0, %1, %cst {dimension_numbers = #tpu.dot_dimension_numbers<[1], [0], [0], [1], [0, 0, 1, 1], [], []>} : vector<16x16xbf16>, vector<16x128xbf16>, vector<16x128xf32> -> vector<16x128xf32>
    %c0_3 = arith.constant 0 : index
    %c0_4 = arith.constant 0 : index
    %3 = vector.load %arg3[%c0_3, %c0_4] : memref<1x128xf32, #tpu.memory_space<vmem>>, vector<1x128xf32>
    %4 = vector.broadcast %3 : vector<1x128xf32> to vector<16x128xf32>
    %5 = arith.addf %2, %4 : vector<16x128xf32>
    %6 = arith.truncf %5 : vector<16x128xf32> to vector<16x128xbf16>
    %c0_5 = arith.constant 0 : index
    %c0_6 = arith.constant 0 : index
    %7 = vector.load %arg4[%c0_5, %c0_6] : memref<16x128xbf16, #tpu.memory_space<vmem>>, vector<16x128xbf16>
    tpu.vector_store %arg4[%c0_5, %c0_6], %6 {strides = array<i32>} : memref<16x128xbf16, #tpu.memory_space<vmem>>, vector<16x128xbf16>,
    return
  }
  func.func @transform_0(%arg0: i32) -> (i32, i32) {
    %c0_i32 = arith.constant 0 : i32
    %c0_i32_0 = arith.constant 0 : i32
    return %arg0, %c0_i32 : i32, i32
  }
  func.func @transform_1(%arg0: i32) -> (i32, i32) {
    %c0_i32 = arith.constant 0 : i32
    %c0_i32_0 = arith.constant 0 : i32
    %c0_i32_1 = arith.constant 0 : i32
    return %c0_i32, %c0_i32_0 : i32, i32
  }
  func.func @transform_2(%arg0: i32) -> (i32, i32) {
    %c0_i32 = arith.constant 0 : i32
    %c0_i32_0 = arith.constant 0 : i32
    %c0_i32_1 = arith.constant 0 : i32
    return %c0_i32, %c0_i32_0 : i32, i32
  }
  func.func @transform_3(%arg0: i32) -> (i32, i32) {
    %c0_i32 = arith.constant 0 : i32
    %c0_i32_0 = arith.constant 0 : i32
    return %arg0, %c0_i32 : i32, i32
  }
}

module attributes {stable_mosaic.version = 11 : i64} {
  func.func @mm_shift_kernel(%arg0: i32, %arg1: memref<64x8xbf16, #tpu.memory_space<vmem>>, %arg2: memref<8x128xbf16, #tpu.memory_space<vmem>>, %arg3: memref<1x128xf32, #tpu.memory_space<vmem>>, %arg4: memref<64x128xbf16, #tpu.memory_space<vmem>>) attributes {dimension_semantics = [#tpu.dimension_semantics<parallel>], iteration_bounds = array<i64: 8>, scalar_prefetch = 0 : i64, scratch_operands = 0 : i64, tpu.core_type = #tpu.core_type<tc>, window_params = [{transform_indices = @transform_0, window_bounds = array<i64: 64, 8>}, {pipeline_mode = #tpu.pipeline_mode<synchronous>, transform_indices = @transform_1, window_bounds = array<i64: 8, 128>}, {pipeline_mode = #tpu.pipeline_mode<synchronous>, transform_indices = @transform_2, window_bounds = array<i64: 1, 128>}, {transform_indices = @transform_3, window_bounds = array<i64: 64, 128>}]} {
    %c0 = arith.constant 0 : index
    %c0_0 = arith.constant 0 : index
    %0 = vector.load %arg1[%c0, %c0_0] : memref<64x8xbf16, #tpu.memory_space<vmem>>, vector<64x8xbf16>
    %c0_1 = arith.constant 0 : index
    %c0_2 = arith.constant 0 : index
    %1 = vector.load %arg2[%c0_1, %c0_2] : memref<8x128xbf16, #tpu.memory_space<vmem>>, vector<8x128xbf16>
    %cst = arith.constant dense<0.000000e+00> : vector<64x128xf32>
    %2 = tpu.matmul %0, %1, %cst {dimension_numbers = #tpu.dot_dimension_numbers<[1], [0], [0], [1], [0, 0, 1, 1], [], []>} : vector<64x8xbf16>, vector<8x128xbf16>, vector<64x128xf32> -> vector<64x128xf32>
    %c0_3 = arith.constant 0 : index
    %c0_4 = arith.constant 0 : index
    %3 = vector.load %arg3[%c0_3, %c0_4] : memref<1x128xf32, #tpu.memory_space<vmem>>, vector<1x128xf32>
    %4 = vector.broadcast %3 : vector<1x128xf32> to vector<64x128xf32>
    %5 = arith.addf %2, %4 : vector<64x128xf32>
    %6 = arith.truncf %5 : vector<64x128xf32> to vector<64x128xbf16>
    %c0_5 = arith.constant 0 : index
    %c0_6 = arith.constant 0 : index
    %7 = vector.load %arg4[%c0_5, %c0_6] : memref<64x128xbf16, #tpu.memory_space<vmem>>, vector<64x128xbf16>
    tpu.vector_store %arg4[%c0_5, %c0_6], %6 {strides = array<i32>} : memref<64x128xbf16, #tpu.memory_space<vmem>>, vector<64x128xbf16>,
    return
  }
  func.func @transform_0(%arg0: i32) -> (i32, i32) {
    %c0_i32 = arith.constant 0 : i32
    %c0_i32_0 = arith.constant 0 : i32
    return %arg0, %c0_i32 : i32, i32
  }
  func.func @transform_1(%arg0: i32) -> (i32, i32) {
    %c0_i32 = arith.constant 0 : i32
    %c0_i32_0 = arith.constant 0 : i32
    %c0_i32_1 = arith.constant 0 : i32
    return %c0_i32, %c0_i32_0 : i32, i32
  }
  func.func @transform_2(%arg0: i32) -> (i32, i32) {
    %c0_i32 = arith.constant 0 : i32
    %c0_i32_0 = arith.constant 0 : i32
    %c0_i32_1 = arith.constant 0 : i32
    return %c0_i32, %c0_i32_0 : i32, i32
  }
  func.func @transform_3(%arg0: i32) -> (i32, i32) {
    %c0_i32 = arith.constant 0 : i32
    %c0_i32_0 = arith.constant 0 : i32
    return %arg0, %c0_i32 : i32, i32
  }
}

module attributes {stable_mosaic.version = 11 : i64} {
  func.func @offset_conv_kernel(%arg0: i32, %arg1: i32, %arg2: memref<1x128x128xbf16, #tpu.memory_space<vmem>>, %arg3: memref<1x16x128xbf16, #tpu.memory_space<vmem>>, %arg4: memref<1x16x128xbf16, #tpu.memory_space<vmem>>, %arg5: memref<1x128x128xbf16, #tpu.memory_space<vmem>>, %arg6: memref<1x16x128xbf16, #tpu.memory_space<vmem>>, %arg7: memref<1x16x128xbf16, #tpu.memory_space<vmem>>, %arg8: memref<9x128x128xbf16, #tpu.memory_space<vmem>>, %arg9: memref<9x128x128xbf16, #tpu.memory_space<vmem>>, %arg10: memref<1x128xf32, #tpu.memory_space<vmem>>, %arg11: memref<1x128x128xf32, #tpu.memory_space<vmem>>) attributes {dimension_semantics = [#tpu.dimension_semantics<parallel>, #tpu.dimension_semantics<parallel>], iteration_bounds = array<i64: 2, 2>, scalar_prefetch = 0 : i64, scratch_operands = 0 : i64, tpu.core_type = #tpu.core_type<tc>, window_params = [{transform_indices = @transform_0, window_bounds = array<i64: 1, 128, 128>}, {transform_indices = @transform_1, window_bounds = array<i64: 1, 16, 128>}, {transform_indices = @transform_2, window_bounds = array<i64: 1, 16, 128>}, {transform_indices = @transform_3, window_bounds = array<i64: 1, 128, 128>}, {transform_indices = @transform_4, window_bounds = array<i64: 1, 16, 128>}, {transform_indices = @transform_5, window_bounds = array<i64: 1, 16, 128>}, {pipeline_mode = #tpu.pipeline_mode<synchronous>, transform_indices = @transform_6, window_bounds = array<i64: 9, 128, 128>}, {pipeline_mode = #tpu.pipeline_mode<synchronous>, transform_indices = @transform_7, window_bounds = array<i64: 9, 128, 128>}, {pipeline_mode = #tpu.pipeline_mode<synchronous>, transform_indices = @transform_8, window_bounds = array<i64: 1, 128>}, {transform_indices = @transform_9, window_bounds = array<i64: 1, 128, 128>}]} {
    %c8_i32 = arith.constant 8 : i32
    %0 = arith.muli %arg1, %c8_i32 : i32
    %c0_i32 = arith.constant 0 : i32
    %1 = arith.cmpi sgt, %0, %c0_i32 : i32
    %2 = arith.extui %1 : i1 to i32
    %3 = arith.sitofp %2 : i32 to f32
    %4 = arith.truncf %3 : f32 to bf16
    %c8_i32_0 = arith.constant 8 : i32
    %5 = arith.addi %0, %c8_i32_0 : i32
    %c16_i32 = arith.constant 16 : i32
    %6 = arith.cmpi slt, %5, %c16_i32 : i32
    %7 = arith.extui %6 : i1 to i32
    %8 = arith.sitofp %7 : i32 to f32
    %9 = arith.truncf %8 : f32 to bf16
    %10 = tpu.iota {dimensions = array<i32: 0>} : vector<128x1xi32>
    %c16_i32_1 = arith.constant 16 : i32
    %c0_i32_2 = arith.constant 0 : i32
    %11 = arith.cmpi eq, %c16_i32_1, %c0_i32_2 : i32
    %c1_i32 = arith.constant 1 : i32
    %12 = arith.select %11, %c1_i32, %c16_i32_1 : i32
    %13 = vector.broadcast %12 : i32 to vector<128x1xi32>
    %14 = arith.remsi %10, %13 : vector<128x1xi32>
    %c0_i32_3 = arith.constant 0 : i32
    %15 = vector.broadcast %c0_i32_3 : i32 to vector<128x1xi32>
    %16 = arith.cmpi ne, %14, %15 : vector<128x1xi32>
    %c0_i32_4 = arith.constant 0 : i32
    %17 = vector.broadcast %c0_i32_4 : i32 to vector<128x1xi32>
    %18 = arith.cmpi slt, %14, %17 : vector<128x1xi32>
    %c0_i32_5 = arith.constant 0 : i32
    %19 = arith.cmpi slt, %12, %c0_i32_5 : i32
    %20 = vector.broadcast %19 : i1 to vector<128x1xi1>
    %21 = vector.broadcast %20 : vector<128x1xi1> to vector<128x1xi1>
    %22 = arith.xori %18, %21 : vector<128x1xi1>
    %23 = arith.andi %22, %16 : vector<128x1xi1>
    %24 = vector.broadcast %12 : i32 to vector<128x1xi32>
    %25 = arith.addi %14, %24 : vector<128x1xi32>
    %26 = arith.select %23, %25, %14 : vector<128x1xi1>, vector<128x1xi32>
    %c1_i32_6 = arith.constant 1 : i32
    %27 = vector.broadcast %c1_i32_6 : i32 to vector<128x1xi32>
    %28 = arith.cmpi sge, %26, %27 : vector<128x1xi32>
    %29 = arith.extui %28 : vector<128x1xi1> to vector<128x1xi32>
    %30 = arith.sitofp %29 : vector<128x1xi32> to vector<128x1xf32>
    %31 = arith.truncf %30 : vector<128x1xf32> to vector<128x1xbf16>
    %c14_i32 = arith.constant 14 : i32
    %32 = vector.broadcast %c14_i32 : i32 to vector<128x1xi32>
    %33 = arith.cmpi sle, %26, %32 : vector<128x1xi32>
    %34 = arith.extui %33 : vector<128x1xi1> to vector<128x1xi32>
    %35 = arith.sitofp %34 : vector<128x1xi32> to vector<128x1xf32>
    %36 = arith.truncf %35 : vector<128x1xf32> to vector<128x1xbf16>
    %cst = arith.constant 0.000000e+00 : bf16
    %37 = vector.broadcast %cst : bf16 to vector<16x128xbf16>
    %cst_7 = arith.constant 0.000000e+00 : f32
    %38 = vector.broadcast %cst_7 : f32 to vector<128x128xf32>
    %c0 = arith.constant 0 : index
    %c0_8 = arith.constant 0 : index
    %c0_9 = arith.constant 0 : index
    %39 = vector.load %arg3[%c0, %c0_8, %c0_9] : memref<1x16x128xbf16, #tpu.memory_space<vmem>>, vector<1x16x128xbf16>
    %40 = vector.shape_cast %39 : vector<1x16x128xbf16> to vector<16x128xbf16>
    %41 = vector.broadcast %4 : bf16 to vector<16x128xbf16>
    %42 = arith.mulf %40, %41 : vector<16x128xbf16>
    %c0_10 = arith.constant 0 : index
    %c0_11 = arith.constant 0 : index
    %c0_12 = arith.constant 0 : index
    %43 = vector.load %arg2[%c0_10, %c0_11, %c0_12] : memref<1x128x128xbf16, #tpu.memory_space<vmem>>, vector<1x128x128xbf16>
    %44 = vector.shape_cast %43 : vector<1x128x128xbf16> to vector<128x128xbf16>
    %c0_13 = arith.constant 0 : index
    %c0_14 = arith.constant 0 : index
    %c0_15 = arith.constant 0 : index
    %45 = vector.load %arg4[%c0_13, %c0_14, %c0_15] : memref<1x16x128xbf16, #tpu.memory_space<vmem>>, vector<1x16x128xbf16>
    %46 = vector.shape_cast %45 : vector<1x16x128xbf16> to vector<16x128xbf16>
    %47 = vector.broadcast %9 : bf16 to vector<16x128xbf16>
    %48 = arith.mulf %46, %47 : vector<16x128xbf16>
    %49 = tpu.concatenate %37, %42, %44, %48, %37 in 0 : vector<16x128xbf16>, vector<16x128xbf16>, vector<128x128xbf16>, vector<16x128xbf16>, vector<16x128xbf16> -> vector<192x128xbf16>
    %50 = vector.extract_strided_slice %49 {offsets = [15, 0], sizes = [128, 128], strides = [1, 1]} : vector<192x128xbf16> to vector<128x128xbf16>
    %51 = vector.broadcast %31 : vector<128x1xbf16> to vector<128x128xbf16>
    %52 = arith.mulf %50, %51 : vector<128x128xbf16>
    %c0_16 = arith.constant 0 : index
    %c0_17 = arith.constant 0 : index
    %c0_18 = arith.constant 0 : index
    %53 = vector.load %arg8[%c0_16, %c0_17, %c0_18] : memref<9x128x128xbf16, #tpu.memory_space<vmem>>, vector<1x128x128xbf16>
    %54 = vector.shape_cast %53 : vector<1x128x128xbf16> to vector<128x128xbf16>
    %cst_19 = arith.constant dense<0.000000e+00> : vector<128x128xf32>
    %55 = tpu.matmul %52, %54, %cst_19 {dimension_numbers = #tpu.dot_dimension_numbers<[1], [0], [0], [1], [0, 0, 1, 1], [], []>} : vector<128x128xbf16>, vector<128x128xbf16>, vector<128x128xf32> -> vector<128x128xf32>
    %56 = arith.addf %38, %55 : vector<128x128xf32>
    %57 = vector.extract_strided_slice %49 {offsets = [16, 0], sizes = [128, 128], strides = [1, 1]} : vector<192x128xbf16> to vector<128x128xbf16>
    %c1 = arith.constant 1 : index
    %c0_20 = arith.constant 0 : index
    %c0_21 = arith.constant 0 : index
    %58 = vector.load %arg8[%c1, %c0_20, %c0_21] : memref<9x128x128xbf16, #tpu.memory_space<vmem>>, vector<1x128x128xbf16>
    %59 = vector.shape_cast %58 : vector<1x128x128xbf16> to vector<128x128xbf16>
    %cst_22 = arith.constant dense<0.000000e+00> : vector<128x128xf32>
    %60 = tpu.matmul %57, %59, %cst_22 {dimension_numbers = #tpu.dot_dimension_numbers<[1], [0], [0], [1], [0, 0, 1, 1], [], []>} : vector<128x128xbf16>, vector<128x128xbf16>, vector<128x128xf32> -> vector<128x128xf32>
    %61 = arith.addf %56, %60 : vector<128x128xf32>
    %62 = vector.extract_strided_slice %49 {offsets = [17, 0], sizes = [128, 128], strides = [1, 1]} : vector<192x128xbf16> to vector<128x128xbf16>
    %63 = vector.broadcast %36 : vector<128x1xbf16> to vector<128x128xbf16>
    %64 = arith.mulf %62, %63 : vector<128x128xbf16>
    %c2 = arith.constant 2 : index
    %c0_23 = arith.constant 0 : index
    %c0_24 = arith.constant 0 : index
    %65 = vector.load %arg8[%c2, %c0_23, %c0_24] : memref<9x128x128xbf16, #tpu.memory_space<vmem>>, vector<1x128x128xbf16>
    %66 = vector.shape_cast %65 : vector<1x128x128xbf16> to vector<128x128xbf16>
    %cst_25 = arith.constant dense<0.000000e+00> : vector<128x128xf32>
    %67 = tpu.matmul %64, %66, %cst_25 {dimension_numbers = #tpu.dot_dimension_numbers<[1], [0], [0], [1], [0, 0, 1, 1], [], []>} : vector<128x128xbf16>, vector<128x128xbf16>, vector<128x128xf32> -> vector<128x128xf32>
    %68 = arith.addf %61, %67 : vector<128x128xf32>
    %69 = vector.extract_strided_slice %49 {offsets = [31, 0], sizes = [128, 128], strides = [1, 1]} : vector<192x128xbf16> to vector<128x128xbf16>
    %70 = vector.broadcast %31 : vector<128x1xbf16> to vector<128x128xbf16>
    %71 = arith.mulf %69, %70 : vector<128x128xbf16>
    %c3 = arith.constant 3 : index
    %c0_26 = arith.constant 0 : index
    %c0_27 = arith.constant 0 : index
    %72 = vector.load %arg8[%c3, %c0_26, %c0_27] : memref<9x128x128xbf16, #tpu.memory_space<vmem>>, vector<1x128x128xbf16>
    %73 = vector.shape_cast %72 : vector<1x128x128xbf16> to vector<128x128xbf16>
    %cst_28 = arith.constant dense<0.000000e+00> : vector<128x128xf32>
    %74 = tpu.matmul %71, %73, %cst_28 {dimension_numbers = #tpu.dot_dimension_numbers<[1], [0], [0], [1], [0, 0, 1, 1], [], []>} : vector<128x128xbf16>, vector<128x128xbf16>, vector<128x128xf32> -> vector<128x128xf32>
    %75 = arith.addf %68, %74 : vector<128x128xf32>
    %76 = vector.extract_strided_slice %49 {offsets = [32, 0], sizes = [128, 128], strides = [1, 1]} : vector<192x128xbf16> to vector<128x128xbf16>
    %c4 = arith.constant 4 : index
    %c0_29 = arith.constant 0 : index
    %c0_30 = arith.constant 0 : index
    %77 = vector.load %arg8[%c4, %c0_29, %c0_30] : memref<9x128x128xbf16, #tpu.memory_space<vmem>>, vector<1x128x128xbf16>
    %78 = vector.shape_cast %77 : vector<1x128x128xbf16> to vector<128x128xbf16>
    %cst_31 = arith.constant dense<0.000000e+00> : vector<128x128xf32>
    %79 = tpu.matmul %76, %78, %cst_31 {dimension_numbers = #tpu.dot_dimension_numbers<[1], [0], [0], [1], [0, 0, 1, 1], [], []>} : vector<128x128xbf16>, vector<128x128xbf16>, vector<128x128xf32> -> vector<128x128xf32>
    %80 = arith.addf %75, %79 : vector<128x128xf32>
    %81 = vector.extract_strided_slice %49 {offsets = [33, 0], sizes = [128, 128], strides = [1, 1]} : vector<192x128xbf16> to vector<128x128xbf16>
    %82 = vector.broadcast %36 : vector<128x1xbf16> to vector<128x128xbf16>
    %83 = arith.mulf %81, %82 : vector<128x128xbf16>
    %c5 = arith.constant 5 : index
    %c0_32 = arith.constant 0 : index
    %c0_33 = arith.constant 0 : index
    %84 = vector.load %arg8[%c5, %c0_32, %c0_33] : memref<9x128x128xbf16, #tpu.memory_space<vmem>>, vector<1x128x128xbf16>
    %85 = vector.shape_cast %84 : vector<1x128x128xbf16> to vector<128x128xbf16>
    %cst_34 = arith.constant dense<0.000000e+00> : vector<128x128xf32>
    %86 = tpu.matmul %83, %85, %cst_34 {dimension_numbers = #tpu.dot_dimension_numbers<[1], [0], [0], [1], [0, 0, 1, 1], [], []>} : vector<128x128xbf16>, vector<128x128xbf16>, vector<128x128xf32> -> vector<128x128xf32>
    %87 = arith.addf %80, %86 : vector<128x128xf32>
    %88 = vector.extract_strided_slice %49 {offsets = [47, 0], sizes = [128, 128], strides = [1, 1]} : vector<192x128xbf16> to vector<128x128xbf16>
    %89 = vector.broadcast %31 : vector<128x1xbf16> to vector<128x128xbf16>
    %90 = arith.mulf %88, %89 : vector<128x128xbf16>
    %c6 = arith.constant 6 : index
    %c0_35 = arith.constant 0 : index
    %c0_36 = arith.constant 0 : index
    %91 = vector.load %arg8[%c6, %c0_35, %c0_36] : memref<9x128x128xbf16, #tpu.memory_space<vmem>>, vector<1x128x128xbf16>
    %92 = vector.shape_cast %91 : vector<1x128x128xbf16> to vector<128x128xbf16>
    %cst_37 = arith.constant dense<0.000000e+00> : vector<128x128xf32>
    %93 = tpu.matmul %90, %92, %cst_37 {dimension_numbers = #tpu.dot_dimension_numbers<[1], [0], [0], [1], [0, 0, 1, 1], [], []>} : vector<128x128xbf16>, vector<128x128xbf16>, vector<128x128xf32> -> vector<128x128xf32>
    %94 = arith.addf %87, %93 : vector<128x128xf32>
    %95 = vector.extract_strided_slice %49 {offsets = [48, 0], sizes = [128, 128], strides = [1, 1]} : vector<192x128xbf16> to vector<128x128xbf16>
    %c7 = arith.constant 7 : index
    %c0_38 = arith.constant 0 : index
    %c0_39 = arith.constant 0 : index
    %96 = vector.load %arg8[%c7, %c0_38, %c0_39] : memref<9x128x128xbf16, #tpu.memory_space<vmem>>, vector<1x128x128xbf16>
    %97 = vector.shape_cast %96 : vector<1x128x128xbf16> to vector<128x128xbf16>
    %cst_40 = arith.constant dense<0.000000e+00> : vector<128x128xf32>
    %98 = tpu.matmul %95, %97, %cst_40 {dimension_numbers = #tpu.dot_dimension_numbers<[1], [0], [0], [1], [0, 0, 1, 1], [], []>} : vector<128x128xbf16>, vector<128x128xbf16>, vector<128x128xf32> -> vector<128x128xf32>
    %99 = arith.addf %94, %98 : vector<128x128xf32>
    %100 = vector.extract_strided_slice %49 {offsets = [49, 0], sizes = [128, 128], strides = [1, 1]} : vector<192x128xbf16> to vector<128x128xbf16>
    %101 = vector.broadcast %36 : vector<128x1xbf16> to vector<128x128xbf16>
    %102 = arith.mulf %100, %101 : vector<128x128xbf16>
    %c8 = arith.constant 8 : index
    %c0_41 = arith.constant 0 : index
    %c0_42 = arith.constant 0 : index
    %103 = vector.load %arg8[%c8, %c0_41, %c0_42] : memref<9x128x128xbf16, #tpu.memory_space<vmem>>, vector<1x128x128xbf16>
    %104 = vector.shape_cast %103 : vector<1x128x128xbf16> to vector<128x128xbf16>
    %cst_43 = arith.constant dense<0.000000e+00> : vector<128x128xf32>
    %105 = tpu.matmul %102, %104, %cst_43 {dimension_numbers = #tpu.dot_dimension_numbers<[1], [0], [0], [1], [0, 0, 1, 1], [], []>} : vector<128x128xbf16>, vector<128x128xbf16>, vector<128x128xf32> -> vector<128x128xf32>
    %106 = arith.addf %99, %105 : vector<128x128xf32>
    %c0_44 = arith.constant 0 : index
    %c0_45 = arith.constant 0 : index
    %c0_46 = arith.constant 0 : index
    %107 = vector.load %arg6[%c0_44, %c0_45, %c0_46] : memref<1x16x128xbf16, #tpu.memory_space<vmem>>, vector<1x16x128xbf16>
    %108 = vector.shape_cast %107 : vector<1x16x128xbf16> to vector<16x128xbf16>
    %109 = vector.broadcast %4 : bf16 to vector<16x128xbf16>
    %110 = arith.mulf %108, %109 : vector<16x128xbf16>
    %c0_47 = arith.constant 0 : index
    %c0_48 = arith.constant 0 : index
    %c0_49 = arith.constant 0 : index
    %111 = vector.load %arg5[%c0_47, %c0_48, %c0_49] : memref<1x128x128xbf16, #tpu.memory_space<vmem>>, vector<1x128x128xbf16>
    %112 = vector.shape_cast %111 : vector<1x128x128xbf16> to vector<128x128xbf16>
    %c0_50 = arith.constant 0 : index
    %c0_51 = arith.constant 0 : index
    %c0_52 = arith.constant 0 : index
    %113 = vector.load %arg7[%c0_50, %c0_51, %c0_52] : memref<1x16x128xbf16, #tpu.memory_space<vmem>>, vector<1x16x128xbf16>
    %114 = vector.shape_cast %113 : vector<1x16x128xbf16> to vector<16x128xbf16>
    %115 = vector.broadcast %9 : bf16 to vector<16x128xbf16>
    %116 = arith.mulf %114, %115 : vector<16x128xbf16>
    %117 = tpu.concatenate %37, %110, %112, %116, %37 in 0 : vector<16x128xbf16>, vector<16x128xbf16>, vector<128x128xbf16>, vector<16x128xbf16>, vector<16x128xbf16> -> vector<192x128xbf16>
    %118 = vector.extract_strided_slice %117 {offsets = [15, 0], sizes = [128, 128], strides = [1, 1]} : vector<192x128xbf16> to vector<128x128xbf16>
    %119 = vector.broadcast %31 : vector<128x1xbf16> to vector<128x128xbf16>
    %120 = arith.mulf %118, %119 : vector<128x128xbf16>
    %c0_53 = arith.constant 0 : index
    %c0_54 = arith.constant 0 : index
    %c0_55 = arith.constant 0 : index
    %121 = vector.load %arg9[%c0_53, %c0_54, %c0_55] : memref<9x128x128xbf16, #tpu.memory_space<vmem>>, vector<1x128x128xbf16>
    %122 = vector.shape_cast %121 : vector<1x128x128xbf16> to vector<128x128xbf16>
    %cst_56 = arith.constant dense<0.000000e+00> : vector<128x128xf32>
    %123 = tpu.matmul %120, %122, %cst_56 {dimension_numbers = #tpu.dot_dimension_numbers<[1], [0], [0], [1], [0, 0, 1, 1], [], []>} : vector<128x128xbf16>, vector<128x128xbf16>, vector<128x128xf32> -> vector<128x128xf32>
    %124 = arith.addf %106, %123 : vector<128x128xf32>
    %125 = vector.extract_strided_slice %117 {offsets = [16, 0], sizes = [128, 128], strides = [1, 1]} : vector<192x128xbf16> to vector<128x128xbf16>
    %c1_57 = arith.constant 1 : index
    %c0_58 = arith.constant 0 : index
    %c0_59 = arith.constant 0 : index
    %126 = vector.load %arg9[%c1_57, %c0_58, %c0_59] : memref<9x128x128xbf16, #tpu.memory_space<vmem>>, vector<1x128x128xbf16>
    %127 = vector.shape_cast %126 : vector<1x128x128xbf16> to vector<128x128xbf16>
    %cst_60 = arith.constant dense<0.000000e+00> : vector<128x128xf32>
    %128 = tpu.matmul %125, %127, %cst_60 {dimension_numbers = #tpu.dot_dimension_numbers<[1], [0], [0], [1], [0, 0, 1, 1], [], []>} : vector<128x128xbf16>, vector<128x128xbf16>, vector<128x128xf32> -> vector<128x128xf32>
    %129 = arith.addf %124, %128 : vector<128x128xf32>
    %130 = vector.extract_strided_slice %117 {offsets = [17, 0], sizes = [128, 128], strides = [1, 1]} : vector<192x128xbf16> to vector<128x128xbf16>
    %131 = vector.broadcast %36 : vector<128x1xbf16> to vector<128x128xbf16>
    %132 = arith.mulf %130, %131 : vector<128x128xbf16>
    %c2_61 = arith.constant 2 : index
    %c0_62 = arith.constant 0 : index
    %c0_63 = arith.constant 0 : index
    %133 = vector.load %arg9[%c2_61, %c0_62, %c0_63] : memref<9x128x128xbf16, #tpu.memory_space<vmem>>, vector<1x128x128xbf16>
    %134 = vector.shape_cast %133 : vector<1x128x128xbf16> to vector<128x128xbf16>
    %cst_64 = arith.constant dense<0.000000e+00> : vector<128x128xf32>
    %135 = tpu.matmul %132, %134, %cst_64 {dimension_numbers = #tpu.dot_dimension_numbers<[1], [0], [0], [1], [0, 0, 1, 1], [], []>} : vector<128x128xbf16>, vector<128x128xbf16>, vector<128x128xf32> -> vector<128x128xf32>
    %136 = arith.addf %129, %135 : vector<128x128xf32>
    %137 = vector.extract_strided_slice %117 {offsets = [31, 0], sizes = [128, 128], strides = [1, 1]} : vector<192x128xbf16> to vector<128x128xbf16>
    %138 = vector.broadcast %31 : vector<128x1xbf16> to vector<128x128xbf16>
    %139 = arith.mulf %137, %138 : vector<128x128xbf16>
    %c3_65 = arith.constant 3 : index
    %c0_66 = arith.constant 0 : index
    %c0_67 = arith.constant 0 : index
    %140 = vector.load %arg9[%c3_65, %c0_66, %c0_67] : memref<9x128x128xbf16, #tpu.memory_space<vmem>>, vector<1x128x128xbf16>
    %141 = vector.shape_cast %140 : vector<1x128x128xbf16> to vector<128x128xbf16>
    %cst_68 = arith.constant dense<0.000000e+00> : vector<128x128xf32>
    %142 = tpu.matmul %139, %141, %cst_68 {dimension_numbers = #tpu.dot_dimension_numbers<[1], [0], [0], [1], [0, 0, 1, 1], [], []>} : vector<128x128xbf16>, vector<128x128xbf16>, vector<128x128xf32> -> vector<128x128xf32>
    %143 = arith.addf %136, %142 : vector<128x128xf32>
    %144 = vector.extract_strided_slice %117 {offsets = [32, 0], sizes = [128, 128], strides = [1, 1]} : vector<192x128xbf16> to vector<128x128xbf16>
    %c4_69 = arith.constant 4 : index
    %c0_70 = arith.constant 0 : index
    %c0_71 = arith.constant 0 : index
    %145 = vector.load %arg9[%c4_69, %c0_70, %c0_71] : memref<9x128x128xbf16, #tpu.memory_space<vmem>>, vector<1x128x128xbf16>
    %146 = vector.shape_cast %145 : vector<1x128x128xbf16> to vector<128x128xbf16>
    %cst_72 = arith.constant dense<0.000000e+00> : vector<128x128xf32>
    %147 = tpu.matmul %144, %146, %cst_72 {dimension_numbers = #tpu.dot_dimension_numbers<[1], [0], [0], [1], [0, 0, 1, 1], [], []>} : vector<128x128xbf16>, vector<128x128xbf16>, vector<128x128xf32> -> vector<128x128xf32>
    %148 = arith.addf %143, %147 : vector<128x128xf32>
    %149 = vector.extract_strided_slice %117 {offsets = [33, 0], sizes = [128, 128], strides = [1, 1]} : vector<192x128xbf16> to vector<128x128xbf16>
    %150 = vector.broadcast %36 : vector<128x1xbf16> to vector<128x128xbf16>
    %151 = arith.mulf %149, %150 : vector<128x128xbf16>
    %c5_73 = arith.constant 5 : index
    %c0_74 = arith.constant 0 : index
    %c0_75 = arith.constant 0 : index
    %152 = vector.load %arg9[%c5_73, %c0_74, %c0_75] : memref<9x128x128xbf16, #tpu.memory_space<vmem>>, vector<1x128x128xbf16>
    %153 = vector.shape_cast %152 : vector<1x128x128xbf16> to vector<128x128xbf16>
    %cst_76 = arith.constant dense<0.000000e+00> : vector<128x128xf32>
    %154 = tpu.matmul %151, %153, %cst_76 {dimension_numbers = #tpu.dot_dimension_numbers<[1], [0], [0], [1], [0, 0, 1, 1], [], []>} : vector<128x128xbf16>, vector<128x128xbf16>, vector<128x128xf32> -> vector<128x128xf32>
    %155 = arith.addf %148, %154 : vector<128x128xf32>
    %156 = vector.extract_strided_slice %117 {offsets = [47, 0], sizes = [128, 128], strides = [1, 1]} : vector<192x128xbf16> to vector<128x128xbf16>
    %157 = vector.broadcast %31 : vector<128x1xbf16> to vector<128x128xbf16>
    %158 = arith.mulf %156, %157 : vector<128x128xbf16>
    %c6_77 = arith.constant 6 : index
    %c0_78 = arith.constant 0 : index
    %c0_79 = arith.constant 0 : index
    %159 = vector.load %arg9[%c6_77, %c0_78, %c0_79] : memref<9x128x128xbf16, #tpu.memory_space<vmem>>, vector<1x128x128xbf16>
    %160 = vector.shape_cast %159 : vector<1x128x128xbf16> to vector<128x128xbf16>
    %cst_80 = arith.constant dense<0.000000e+00> : vector<128x128xf32>
    %161 = tpu.matmul %158, %160, %cst_80 {dimension_numbers = #tpu.dot_dimension_numbers<[1], [0], [0], [1], [0, 0, 1, 1], [], []>} : vector<128x128xbf16>, vector<128x128xbf16>, vector<128x128xf32> -> vector<128x128xf32>
    %162 = arith.addf %155, %161 : vector<128x128xf32>
    %163 = vector.extract_strided_slice %117 {offsets = [48, 0], sizes = [128, 128], strides = [1, 1]} : vector<192x128xbf16> to vector<128x128xbf16>
    %c7_81 = arith.constant 7 : index
    %c0_82 = arith.constant 0 : index
    %c0_83 = arith.constant 0 : index
    %164 = vector.load %arg9[%c7_81, %c0_82, %c0_83] : memref<9x128x128xbf16, #tpu.memory_space<vmem>>, vector<1x128x128xbf16>
    %165 = vector.shape_cast %164 : vector<1x128x128xbf16> to vector<128x128xbf16>
    %cst_84 = arith.constant dense<0.000000e+00> : vector<128x128xf32>
    %166 = tpu.matmul %163, %165, %cst_84 {dimension_numbers = #tpu.dot_dimension_numbers<[1], [0], [0], [1], [0, 0, 1, 1], [], []>} : vector<128x128xbf16>, vector<128x128xbf16>, vector<128x128xf32> -> vector<128x128xf32>
    %167 = arith.addf %162, %166 : vector<128x128xf32>
    %168 = vector.extract_strided_slice %117 {offsets = [49, 0], sizes = [128, 128], strides = [1, 1]} : vector<192x128xbf16> to vector<128x128xbf16>
    %169 = vector.broadcast %36 : vector<128x1xbf16> to vector<128x128xbf16>
    %170 = arith.mulf %168, %169 : vector<128x128xbf16>
    %c8_85 = arith.constant 8 : index
    %c0_86 = arith.constant 0 : index
    %c0_87 = arith.constant 0 : index
    %171 = vector.load %arg9[%c8_85, %c0_86, %c0_87] : memref<9x128x128xbf16, #tpu.memory_space<vmem>>, vector<1x128x128xbf16>
    %172 = vector.shape_cast %171 : vector<1x128x128xbf16> to vector<128x128xbf16>
    %cst_88 = arith.constant dense<0.000000e+00> : vector<128x128xf32>
    %173 = tpu.matmul %170, %172, %cst_88 {dimension_numbers = #tpu.dot_dimension_numbers<[1], [0], [0], [1], [0, 0, 1, 1], [], []>} : vector<128x128xbf16>, vector<128x128xbf16>, vector<128x128xf32> -> vector<128x128xf32>
    %174 = arith.addf %167, %173 : vector<128x128xf32>
    %c0_89 = arith.constant 0 : index
    %c0_90 = arith.constant 0 : index
    %175 = vector.load %arg10[%c0_89, %c0_90] : memref<1x128xf32, #tpu.memory_space<vmem>>, vector<1x128xf32>
    %176 = vector.broadcast %175 : vector<1x128xf32> to vector<128x128xf32>
    %177 = arith.addf %174, %176 : vector<128x128xf32>
    %c0_91 = arith.constant 0 : index
    %c0_92 = arith.constant 0 : index
    %c0_93 = arith.constant 0 : index
    %178 = vector.load %arg11[%c0_91, %c0_92, %c0_93] : memref<1x128x128xf32, #tpu.memory_space<vmem>>, vector<1x128x128xf32>
    %179 = vector.shape_cast %178 : vector<1x128x128xf32> to vector<128x128xf32>
    %180 = vector.shape_cast %177 : vector<128x128xf32> to vector<1x128x128xf32>
    tpu.vector_store %arg11[%c0_91, %c0_92, %c0_93], %180 {strides = array<i32>} : memref<1x128x128xf32, #tpu.memory_space<vmem>>, vector<1x128x128xf32>,
    return
  }
  func.func @transform_0(%arg0: i32, %arg1: i32) -> (i32, i32, i32) {
    %c0_i32 = arith.constant 0 : i32
    %c0_i32_0 = arith.constant 0 : i32
    return %arg0, %arg1, %c0_i32 : i32, i32, i32
  }
  func.func @transform_1(%arg0: i32, %arg1: i32) -> (i32, i32, i32) {
    %c8_i32 = arith.constant 8 : i32
    %0 = arith.muli %arg1, %c8_i32 : i32
    %c1_i32 = arith.constant 1 : i32
    %1 = arith.subi %0, %c1_i32 : i32
    %c0_i32 = arith.constant 0 : i32
    %2 = arith.maxsi %1, %c0_i32 : i32
    %c0_i32_0 = arith.constant 0 : i32
    %c0_i32_1 = arith.constant 0 : i32
    return %arg0, %2, %c0_i32_0 : i32, i32, i32
  }
  func.func @transform_2(%arg0: i32, %arg1: i32) -> (i32, i32, i32) {
    %c8_i32 = arith.constant 8 : i32
    %0 = arith.muli %arg1, %c8_i32 : i32
    %c8_i32_0 = arith.constant 8 : i32
    %1 = arith.addi %0, %c8_i32_0 : i32
    %c15_i32 = arith.constant 15 : i32
    %2 = arith.minsi %1, %c15_i32 : i32
    %c0_i32 = arith.constant 0 : i32
    %c0_i32_1 = arith.constant 0 : i32
    return %arg0, %2, %c0_i32 : i32, i32, i32
  }
  func.func @transform_3(%arg0: i32, %arg1: i32) -> (i32, i32, i32) {
    %c0_i32 = arith.constant 0 : i32
    %c0_i32_0 = arith.constant 0 : i32
    return %arg0, %arg1, %c0_i32 : i32, i32, i32
  }
  func.func @transform_4(%arg0: i32, %arg1: i32) -> (i32, i32, i32) {
    %c8_i32 = arith.constant 8 : i32
    %0 = arith.muli %arg1, %c8_i32 : i32
    %c1_i32 = arith.constant 1 : i32
    %1 = arith.subi %0, %c1_i32 : i32
    %c0_i32 = arith.constant 0 : i32
    %2 = arith.maxsi %1, %c0_i32 : i32
    %c0_i32_0 = arith.constant 0 : i32
    %c0_i32_1 = arith.constant 0 : i32
    return %arg0, %2, %c0_i32_0 : i32, i32, i32
  }
  func.func @transform_5(%arg0: i32, %arg1: i32) -> (i32, i32, i32) {
    %c8_i32 = arith.constant 8 : i32
    %0 = arith.muli %arg1, %c8_i32 : i32
    %c8_i32_0 = arith.constant 8 : i32
    %1 = arith.addi %0, %c8_i32_0 : i32
    %c15_i32 = arith.constant 15 : i32
    %2 = arith.minsi %1, %c15_i32 : i32
    %c0_i32 = arith.constant 0 : i32
    %c0_i32_1 = arith.constant 0 : i32
    return %arg0, %2, %c0_i32 : i32, i32, i32
  }
  func.func @transform_6(%arg0: i32, %arg1: i32) -> (i32, i32, i32) {
    %c0_i32 = arith.constant 0 : i32
    %c0_i32_0 = arith.constant 0 : i32
    %c0_i32_1 = arith.constant 0 : i32
    %c0_i32_2 = arith.constant 0 : i32
    return %c0_i32, %c0_i32_0, %c0_i32_1 : i32, i32, i32
  }
  func.func @transform_7(%arg0: i32, %arg1: i32) -> (i32, i32, i32) {
    %c0_i32 = arith.constant 0 : i32
    %c0_i32_0 = arith.constant 0 : i32
    %c0_i32_1 = arith.constant 0 : i32
    %c0_i32_2 = arith.constant 0 : i32
    return %c0_i32, %c0_i32_0, %c0_i32_1 : i32, i32, i32
  }
  func.func @transform_8(%arg0: i32, %arg1: i32) -> (i32, i32) {
    %c0_i32 = arith.constant 0 : i32
    %c0_i32_0 = arith.constant 0 : i32
    %c0_i32_1 = arith.constant 0 : i32
    return %c0_i32, %c0_i32_0 : i32, i32
  }
  func.func @transform_9(%arg0: i32, %arg1: i32) -> (i32, i32, i32) {
    %c0_i32 = arith.constant 0 : i32
    %c0_i32_0 = arith.constant 0 : i32
    return %arg0, %arg1, %c0_i32 : i32, i32, i32
  }
}

module attributes {stable_mosaic.version = 11 : i64} {
  func.func @mm_shift_kernel(%arg0: i32, %arg1: memref<64x1152xbf16, #tpu.memory_space<vmem>>, %arg2: memref<1152x128xbf16, #tpu.memory_space<vmem>>, %arg3: memref<1x128xf32, #tpu.memory_space<vmem>>, %arg4: memref<64x128xf32, #tpu.memory_space<vmem>>) attributes {dimension_semantics = [#tpu.dimension_semantics<parallel>], iteration_bounds = array<i64: 8>, scalar_prefetch = 0 : i64, scratch_operands = 0 : i64, tpu.core_type = #tpu.core_type<tc>, window_params = [{transform_indices = @transform_0, window_bounds = array<i64: 64, 1152>}, {pipeline_mode = #tpu.pipeline_mode<synchronous>, transform_indices = @transform_1, window_bounds = array<i64: 1152, 128>}, {pipeline_mode = #tpu.pipeline_mode<synchronous>, transform_indices = @transform_2, window_bounds = array<i64: 1, 128>}, {transform_indices = @transform_3, window_bounds = array<i64: 64, 128>}]} {
    %c0 = arith.constant 0 : index
    %c0_0 = arith.constant 0 : index
    %0 = vector.load %arg1[%c0, %c0_0] : memref<64x1152xbf16, #tpu.memory_space<vmem>>, vector<64x1152xbf16>
    %c0_1 = arith.constant 0 : index
    %c0_2 = arith.constant 0 : index
    %1 = vector.load %arg2[%c0_1, %c0_2] : memref<1152x128xbf16, #tpu.memory_space<vmem>>, vector<1152x128xbf16>
    %cst = arith.constant dense<0.000000e+00> : vector<64x128xf32>
    %2 = tpu.matmul %0, %1, %cst {dimension_numbers = #tpu.dot_dimension_numbers<[1], [0], [0], [1], [0, 0, 1, 1], [], []>} : vector<64x1152xbf16>, vector<1152x128xbf16>, vector<64x128xf32> -> vector<64x128xf32>
    %c0_3 = arith.constant 0 : index
    %c0_4 = arith.constant 0 : index
    %3 = vector.load %arg3[%c0_3, %c0_4] : memref<1x128xf32, #tpu.memory_space<vmem>>, vector<1x128xf32>
    %4 = vector.broadcast %3 : vector<1x128xf32> to vector<64x128xf32>
    %5 = arith.addf %2, %4 : vector<64x128xf32>
    %cst_5 = arith.constant 0.000000e+00 : f32
    %6 = vector.broadcast %cst_5 : f32 to vector<64x128xf32>
    %7 = arith.maximumf %5, %6 : vector<64x128xf32>
    %c0_6 = arith.constant 0 : index
    %c0_7 = arith.constant 0 : index
    %8 = vector.load %arg4[%c0_6, %c0_7] : memref<64x128xf32, #tpu.memory_space<vmem>>, vector<64x128xf32>
    tpu.vector_store %arg4[%c0_6, %c0_7], %7 {strides = array<i32>} : memref<64x128xf32, #tpu.memory_space<vmem>>, vector<64x128xf32>,
    return
  }
  func.func @transform_0(%arg0: i32) -> (i32, i32) {
    %c0_i32 = arith.constant 0 : i32
    %c0_i32_0 = arith.constant 0 : i32
    return %arg0, %c0_i32 : i32, i32
  }
  func.func @transform_1(%arg0: i32) -> (i32, i32) {
    %c0_i32 = arith.constant 0 : i32
    %c0_i32_0 = arith.constant 0 : i32
    %c0_i32_1 = arith.constant 0 : i32
    return %c0_i32, %c0_i32_0 : i32, i32
  }
  func.func @transform_2(%arg0: i32) -> (i32, i32) {
    %c0_i32 = arith.constant 0 : i32
    %c0_i32_0 = arith.constant 0 : i32
    %c0_i32_1 = arith.constant 0 : i32
    return %c0_i32, %c0_i32_0 : i32, i32
  }
  func.func @transform_3(%arg0: i32) -> (i32, i32) {
    %c0_i32 = arith.constant 0 : i32
    %c0_i32_0 = arith.constant 0 : i32
    return %arg0, %c0_i32 : i32, i32
  }
}

</mosaic_0001>

<llo_original>
// kernel: tile.8
$region0: #{tile.8}
  #allocation0 [shape = 's32[1]{0}', space=sflag, size = 0x4, scoped, tag = 'scoped memory for tile.8']
  %s0 = inlined_call_operand.vmem [shape: f32[3], index: 0, kind: input, shape index: {}]
  %s1 = inlined_call_operand.vmem [shape: f32[3,3], index: 1, kind: output, shape index: {}]
  // Predicated region
  $region2: #{tile.8} parent=0 // pred_check
    _
  $region3: #{tile.8} parent=0 // pred_check_branch
    %3 = sbr.rel (0) target = $region5
  $region4: #{tile.8} parent=0 // pred_region
    _
  $region5: #{tile.8} parent=0 // pred_fallthru
    _
  %v4 = vld [vmem:[%s0] ss:$0 sm:$0xff]
  %5 = vst [vmem:[%s1] sm:$0xf] %v4

// kernel: daf_forward.4
$region0: #{daf_forward.4}
  #allocation0 [shape = 'u32[]', space=smem, size = 0x4, offset = 0x4, fixed_abs, tag = 'smem constant byte address 0x4 - core index']
  #allocation1 [shape = 'u32[72,128]{1,0:T(1,128)}', space=vmem, size = 0x9000, scoped, tag = 'internal scratch']
  %s0 = inlined_call_operand.vmem [shape: bf16[128,16], index: 0, kind: input, shape index: {}]
  %s1 = inlined_call_operand.hbm [shape: bf16[16,128], index: 1, kind: input, shape index: {}]
  %s2 = inlined_call_operand.hbm [shape: f32[1,128], index: 2, kind: input, shape index: {}]
  %s3 = inlined_call_operand.vmem [shape: bf16[128,128], index: 3, kind: output, shape index: {}]
  %s4 = sld [smem:[#allocation0]]
  $region53: #{daf_forward.4} parent=0
    _
  %s6 = ssub.s32 1, %s4
  %s7 = scalar_select 0, %s6, %s4
  $region1: #{daf_forward.4} parent=0
    #allocation2 [shape = 'u8[4096]{0}', space=vmem, size = 0x1000, scoped, tag = 'input window, operand 1, single buffered']
    #allocation3 [shape = 's32[2]{0}', space=sflag, size = 0x8, scoped, tag = 'scoped memory for daf_forward.4']
    #allocation4 [shape = 'u8[512]{0}', space=vmem, size = 0x400, scoped, tag = 'input window, operand 2, single buffered']
    #allocation5 [shape = 's32[1]{0}', space=sflag, size = 0x4, scoped, tag = 'scoped memory for daf_forward.4']
    %8 = vsyncpa [#allocation3], 0
    %9 = vsyncpa [#allocation5], 0
    loop: start=0, step=1, limit=10
    $region2: #{daf_forward.4} parent=1 // loop_pre_header
      _
    $region3: #{daf_forward.4} parent=1 // loop_header
      %s11 = sphi 0, %s15
      %p12 = scmp.ge.s32.totalorder %s11, 10
      %s21 = sphi 0, %s23
      %s24 = sphi 0, %s21
      %s25 = sphi 0, %s24
      %s41 = sphi 0, %s25
      %s45 = sphi 0, %s45
      %s47 = sphi 0, %s45
      %s48 = sphi 0, %s47
      %s62 = sphi 0, %s48
      %s66 = sphi 0, %s66
      %s68 = sphi 0, %s66
      %s69 = sphi 0, %s68
      %s83 = sphi 0, %s69
      %s89 = sphi 0, %s91
      %s92 = sphi 0, %s89
      %s93 = sphi 0, %s92
      %s109 = sphi 0, %s93
    $region4: #{daf_forward.4} parent=1 // loop_header_branch
      %14 = sbr.rel (%p12) target = $region8
    $region5: #{daf_forward.4} parent=1 // loop_body
      %s16 = ssub.s32 %s11, 1
      %s17 = ssub.s32 %s11, 2
      %s18 = sadd.s32 %s11, 1
      %s19 = ssub.s32 %s11, %s18
      %p20 = scmp.eq.s32.totalorder %s19, 0
      %s22 = sadd.s32 %s21, 1
      %s23 = scalar_select %p20, %s21, %s22
      %p26 = pneg %p20
      %p27 = scmp.eq.s32.totalorder %s11, 7
      %p28 = por %p26, %p27
      %p29 = scmp.ne.s32.totalorder %s21, %s24
      %p30 = scmp.eq.s32.totalorder %s11, 0
      %p31 = por %p29, %p30
      %p32 = scmp.ne.s32.totalorder %s21, %s24
      %p33 = scmp.eq.s32.totalorder %s16, 7
      %p34 = por %p32, %p33
      %p35 = scmp.ne.s32.totalorder %s24, %s25
      %p36 = scmp.eq.s32.totalorder %s16, 0
      %p37 = por %p35, %p36
      %p38 = scmp.ne.s32.totalorder %s24, %s25
      %p39 = scmp.eq.s32.totalorder %s17, 7
      %p40 = por %p38, %p39
      %p42 = scmp.ne.s32.totalorder %s25, %s41
      %p43 = scmp.eq.s32.totalorder %s17, 0
      %p44 = por %p42, %p43
      %s46 = sadd.s32 %s45, 1
      %p49 = scmp.eq.s32.totalorder %s11, 7
      %p50 = scmp.ne.s32.totalorder %s45, %s47
      %p51 = scmp.eq.s32.totalorder %s11, 0
      %p52 = por %p50, %p51
      %p53 = scmp.ne.s32.totalorder %s45, %s47
      %p54 = scmp.eq.s32.totalorder %s16, 7
      %p55 = por %p53, %p54
      %p56 = scmp.ne.s32.totalorder %s47, %s48
      %p57 = scmp.eq.s32.totalorder %s16, 0
      %p58 = por %p56, %p57
      %p59 = scmp.ne.s32.totalorder %s47, %s48
      %p60 = scmp.eq.s32.totalorder %s17, 7
      %p61 = por %p59, %p60
      %p63 = scmp.ne.s32.totalorder %s48, %s62
      %p64 = scmp.eq.s32.totalorder %s17, 0
      %p65 = por %p63, %p64
      %s67 = sadd.s32 %s66, 1
      %p70 = scmp.eq.s32.totalorder %s11, 7
      %p71 = scmp.ne.s32.totalorder %s66, %s68
      %p72 = scmp.eq.s32.totalorder %s11, 0
      %p73 = por %p71, %p72
      %p74 = scmp.ne.s32.totalorder %s66, %s68
      %p75 = scmp.eq.s32.totalorder %s16, 7
      %p76 = por %p74, %p75
      %p77 = scmp.ne.s32.totalorder %s68, %s69
      %p78 = scmp.eq.s32.totalorder %s16, 0
      %p79 = por %p77, %p78
      %p80 = scmp.ne.s32.totalorder %s68, %s69
      %p81 = scmp.eq.s32.totalorder %s17, 7
      %p82 = por %p80, %p81
      %p84 = scmp.ne.s32.totalorder %s69, %s83
      %p85 = scmp.eq.s32.totalorder %s17, 0
      %p86 = por %p84, %p85
      %s87 = ssub.s32 %s11, %s18
      %p88 = scmp.eq.s32.totalorder %s87, 0
      %s90 = sadd.s32 %s89, 1
      %s91 = scalar_select %p88, %s89, %s90
      %p94 = pneg %p88
      %p95 = scmp.eq.s32.totalorder %s11, 7
      %p96 = por %p94, %p95
      %p97 = scmp.ne.s32.totalorder %s89, %s92
      %p98 = scmp.eq.s32.totalorder %s11, 0
      %p99 = por %p97, %p98
      %p100 = scmp.ne.s32.totalorder %s89, %s92
      %p101 = scmp.eq.s32.totalorder %s16, 7
      %p102 = por %p100, %p101
      %p103 = scmp.ne.s32.totalorder %s92, %s93
      %p104 = scmp.eq.s32.totalorder %s16, 0
      %p105 = por %p103, %p104
      %p106 = scmp.ne.s32.totalorder %s92, %s93
      %p107 = scmp.eq.s32.totalorder %s17, 7
      %p108 = por %p106, %p107
      %p110 = scmp.ne.s32.totalorder %s93, %s109
      %p111 = scmp.eq.s32.totalorder %s17, 0
      %p112 = por %p110, %p111
      %p113 = scmp.le.s32.totalorder 1, %s11
      %p114 = scmp.lt.s32.totalorder %s11, 9
      %p115 = pnand %p113, %p114
      %p116 = pneg %p115
      // Predicated region
      $region9: #{daf_forward.4} parent=5 // pred_check
        _
      $region10: #{daf_forward.4} parent=5 // pred_check_branch
        %118 = sbr.rel (%p115) target = $region12
      $region11: #{daf_forward.4} parent=5 // pred_region
        %s119 = ssub.s32 %s11, 1
        // Predicated region
        $region13: #{daf_forward.4} parent=11 // pred_check
          %p120 = pneg %p58
        $region14: #{daf_forward.4} parent=11 // pred_check_branch
          %122 = sbr.rel (%p120) target = $region16
        $region15: #{daf_forward.4} parent=11 // pred_region
          %124 = vsyncadd [#allocation3], 0
          %s125 = sshll.u32 %s1, 4
          %s126 = int_to_ptr.hbm [resolvable:$true] %s125
          %s127 = sshll.u32 [#allocation2], 4
          %s128 = int_to_ptr.vmem [resolvable:$true] %s127
          %133 = dma.hbm_to_vmem [thread:$0]  %s126, 128, %s128, [#allocation3], 64, 64, 4
        $region16: #{daf_forward.4} parent=11 // pred_fallthru
          _
        // Predicated region
        $region17: #{daf_forward.4} parent=11 // pred_check
          %p134 = pneg %p79
        $region18: #{daf_forward.4} parent=11 // pred_check_branch
          %136 = sbr.rel (%p134) target = $region20
        $region19: #{daf_forward.4} parent=11 // pred_region
          %138 = vsyncadd [#allocation5], 0
          %s140 = sshll.u32 %s2, 4
          %s141 = int_to_ptr.hbm [resolvable:$true] %s140
          %s142 = sshll.u32 [#allocation4], 4
          %s143 = int_to_ptr.vmem [resolvable:$true] %s142
          %145 = dma.hbm_to_vmem [thread:$0]  %s141, 16, %s143, [#allocation5]
        $region20: #{daf_forward.4} parent=11 // pred_fallthru
          _
      $region12: #{daf_forward.4} parent=5 // pred_fallthru
        _
      %p146 = scmp.lt.s32.totalorder %s11, 8
      // Predicated region
      $region21: #{daf_forward.4} parent=5 // pred_check
        %p147 = pneg %p146
      $region22: #{daf_forward.4} parent=5 // pred_check_branch
        %149 = sbr.rel (%p147) target = $region24
      $region23: #{daf_forward.4} parent=5 // pred_region
        // Predicated region
        $region25: #{daf_forward.4} parent=23 // pred_check
          %p150 = pneg %p31
        $region26: #{daf_forward.4} parent=23 // pred_check_branch
          %152 = sbr.rel (%p150) target = $region28
        $region27: #{daf_forward.4} parent=23 // pred_region
          %s153 = smul.u32 2, %s11
          %p154 = scmp.lt.s32.totalorder %s153, 15
          %s155 = scalar_select %p154, %s153, 15
          %s156 = smul.addr %s155, 4
          %s157 = scalar_lea.vmem %s0, %s156
          %s158 = smul.u32 2, %s11
        $region28: #{daf_forward.4} parent=23 // pred_fallthru
          _
      $region24: #{daf_forward.4} parent=5 // pred_fallthru
        _
      %p159 = scmp.le.s32.totalorder 1, %s11
      %p160 = scmp.lt.s32.totalorder %s11, 9
      %p161 = pnand %p159, %p160
      %p162 = pneg %p161
      // Predicated region
      $region29: #{daf_forward.4} parent=5 // pred_check
        _
      $region30: #{daf_forward.4} parent=5 // pred_check_branch
        %164 = sbr.rel (%p161) target = $region32
      $region31: #{daf_forward.4} parent=5 // pred_region
        %s165 = ssub.s32 %s11, 1
        // Predicated region
        $region33: #{daf_forward.4} parent=31 // pred_check
          %p166 = pneg %p58
        $region34: #{daf_forward.4} parent=31 // pred_check_branch
          %168 = sbr.rel (%p166) target = $region36
        $region35: #{daf_forward.4} parent=31 // pred_region
          %170 = dma.done [#allocation3], 128
        $region36: #{daf_forward.4} parent=31 // pred_fallthru
          _
        // Predicated region
        $region37: #{daf_forward.4} parent=31 // pred_check
          %p171 = pneg %p79
        $region38: #{daf_forward.4} parent=31 // pred_check_branch
          %173 = sbr.rel (%p171) target = $region40
        $region39: #{daf_forward.4} parent=31 // pred_region
          %175 = dma.done [#allocation5], 16
        $region40: #{daf_forward.4} parent=31 // pred_fallthru
          _
        %s176 = smul.u32 2, %s16
        %p177 = scmp.lt.s32.totalorder %s176, 15
        %s178 = scalar_select %p177, %s176, 15
        %s179 = smul.addr %s178, 4
        %s180 = scalar_lea.vmem %s0, %s179
        %p181 = pneg %p37
        %p182 = pneg %p34
        %p183 = pneg %p58
        %p184 = pneg %p55
        %p185 = pneg %p79
        %p186 = pneg %p76
        %p187 = pneg %p105
        %p188 = pneg %p102
        %s189 = smul.u32 2, %s16
        %p190 = scmp.lt.s32.totalorder %s189, 15
        %s191 = scalar_select %p190, %s189, 15
        %s192 = smul.addr %s191, 4
        %s193 = scalar_lea.vmem %s3, %s192
        %s194 = smul.u32 2, %s16
        %p195 = scmp.lt.s32.totalorder %s194, 15
        %s196 = scalar_select %p195, %s194, 15
        %s197 = smul.addr %s196, 4
        %s198 = scalar_lea.vmem %s0, %s197
        %s199 = smul.u32 2, %s16
        %s200 = smul.u32 2, %s16
        %p201 = scmp.lt.s32.totalorder %s200, 15
        %s202 = scalar_select %p201, %s200, 15
        %s203 = smul.addr %s202, 4
        %s204 = scalar_lea.vmem %s3, %s203
        %s205 = smul.u32 2, %s16
        %v207 = vld [vmem:[%s198] sm:$0xf]
        %v208 = vld [vmem:[%s198 + $0x4] sm:$0xf]
        %v209 = vld [vmem:[#allocation2] sm:$0xf]
        %v210 = vld [vmem:[#allocation2 + $0x4] sm:$0xf]
        %v211 = vld [vmem:[#allocation4] sm:$0x1]
        %v213 = vperm.slane %v211, 0
        %v217 = vunpack.c.l.b16 %v207
        %v218 = vunpack.c.l.b16 %v208
        %v219 = vpack.c.b16 %v218, %v217
        %v222 = vunpack.c.l.b16 %v209
        %v223 = vunpack.c.l.b16 %v210
        %v224 = vpack.c.b16 %v223, %v222
        %vm226 = vcmask 130048
        %v228 = vsel %vm226, %v219, 0
        %230 = vmatpush.bf16.msra.mxu0 0
        %231 = vmatpush.bf16.msra.mxu0 0
        %232 = vmatpush.bf16.msra.mxu0 0
        %233 = vmatpush.bf16.msra.mxu0 0
        %234 = vmatpush.bf16.msra.mxu0 0
        %235 = vmatpush.bf16.msra.mxu0 0
        %236 = vmatpush.bf16.msra.mxu0 0
        %237 = vmatpush.bf16.msra.mxu0 %v224
        %238 = vmatmul.bf16.gmra.mxu0 %v228
        %v239 = vpop.f32.mrf.mxu0
        %v240 = vadd.f32 %v213, %v239
        %v241 = vpop.f32.mrf.mxu0
        %v242 = vadd.f32 %v213, %v241
        %243 = vdwg.mxu0
        %v244 = vpack.c.bf16 %v240, %v240
        %v245 = vpack.c.bf16 %v242, %v242
        %246 = vst [vmem:[%s204] sm:$0xf] %v244
        %247 = vst [vmem:[%s204 + $0x4] sm:$0xf] %v245
        %s248 = smul.u32 2, %s16
        %p249 = scmp.lt.s32.totalorder %s248, 15
        %s250 = scalar_select %p249, %s248, 15
        %s251 = smul.addr %s250, 4
        %s252 = scalar_lea.vmem %s3, %s251
        // Predicated region
        $region41: #{daf_forward.4} parent=31 // pred_check
          %p253 = pneg %p102
        $region42: #{daf_forward.4} parent=31 // pred_check_branch
          %255 = sbr.rel (%p253) target = $region44
        $region43: #{daf_forward.4} parent=31 // pred_region
          %s256 = smul.u32 2, %s16
        $region44: #{daf_forward.4} parent=31 // pred_fallthru
          _
      $region32: #{daf_forward.4} parent=5 // pred_fallthru
        _
      %p257 = scmp.le.s32.totalorder 2, %s11
      // Predicated region
      $region45: #{daf_forward.4} parent=5 // pred_check
        %p258 = pneg %p257
      $region46: #{daf_forward.4} parent=5 // pred_check_branch
        %260 = sbr.rel (%p258) target = $region48
      $region47: #{daf_forward.4} parent=5 // pred_region
        %s261 = ssub.s32 %s11, 2
        // Predicated region
        $region49: #{daf_forward.4} parent=47 // pred_check
          %p262 = pneg %p108
        $region50: #{daf_forward.4} parent=47 // pred_check_branch
          %264 = sbr.rel (%p262) target = $region52
        $region51: #{daf_forward.4} parent=47 // pred_region
          %s265 = smul.u32 2, %s17
          %p266 = scmp.lt.s32.totalorder %s265, 15
          %s267 = scalar_select %p266, %s265, 15
          %s268 = smul.addr %s267, 4
          %s269 = scalar_lea.vmem %s3, %s268
        $region52: #{daf_forward.4} parent=47 // pred_fallthru
          _
      $region48: #{daf_forward.4} parent=5 // pred_fallthru
        _
    $region6: #{daf_forward.4} parent=1 // loop_footer
      %s15 = sadd.s32 1, %s11
    $region7: #{daf_forward.4} parent=1 // loop_footer_branch
      %10 = sbr.rel target = $region3
    $region8: #{daf_forward.4} parent=1 // loop_exit
      _
    %270 = vsyncpa [#allocation3], 1
    %s271 = scalar_lea.sflag [#allocation3], 1
    %272 = vsyncpa %s271, 1
    %273 = vsyncpa [#allocation5], 1

// kernel: daf_forward.5
$region0: #{daf_forward.5}
  #allocation0 [shape = 'u32[]', space=smem, size = 0x4, offset = 0x4, fixed_abs, tag = 'smem constant byte address 0x4 - core index']
  #allocation1 [shape = 'u32[72,128]{1,0:T(1,128)}', space=vmem, size = 0x9000, scoped, tag = 'internal scratch']
  %s0 = inlined_call_operand.vmem [shape: bf16[512,8], index: 0, kind: input, shape index: {}]
  %s1 = inlined_call_operand.hbm [shape: bf16[8,128], index: 1, kind: input, shape index: {}]
  %s2 = inlined_call_operand.hbm [shape: f32[1,128], index: 2, kind: input, shape index: {}]
  %s3 = inlined_call_operand.vmem [shape: bf16[512,128], index: 3, kind: output, shape index: {}]
  %s4 = sld [smem:[#allocation0]]
  $region53: #{daf_forward.5} parent=0
    _
  %s6 = ssub.s32 1, %s4
  %s7 = scalar_select 0, %s6, %s4
  $region1: #{daf_forward.5} parent=0
    #allocation2 [shape = 'u8[2048]{0}', space=vmem, size = 0x800, scoped, tag = 'input window, operand 1, single buffered']
    #allocation3 [shape = 's32[2]{0}', space=sflag, size = 0x8, scoped, tag = 'scoped memory for daf_forward.5']
    #allocation4 [shape = 'u8[512]{0}', space=vmem, size = 0x400, scoped, tag = 'input window, operand 2, single buffered']
    #allocation5 [shape = 's32[1]{0}', space=sflag, size = 0x4, scoped, tag = 'scoped memory for daf_forward.5']
    %8 = vsyncpa [#allocation3], 0
    %9 = vsyncpa [#allocation5], 0
    loop: start=0, step=1, limit=10
    $region2: #{daf_forward.5} parent=1 // loop_pre_header
      _
    $region3: #{daf_forward.5} parent=1 // loop_header
      %s11 = sphi 0, %s15
      %p12 = scmp.ge.s32.totalorder %s11, 10
      %s21 = sphi 0, %s23
      %s24 = sphi 0, %s21
      %s25 = sphi 0, %s24
      %s41 = sphi 0, %s25
      %s45 = sphi 0, %s45
      %s47 = sphi 0, %s45
      %s48 = sphi 0, %s47
      %s62 = sphi 0, %s48
      %s66 = sphi 0, %s66
      %s68 = sphi 0, %s66
      %s69 = sphi 0, %s68
      %s83 = sphi 0, %s69
      %s89 = sphi 0, %s91
      %s92 = sphi 0, %s89
      %s93 = sphi 0, %s92
      %s109 = sphi 0, %s93
    $region4: #{daf_forward.5} parent=1 // loop_header_branch
      %14 = sbr.rel (%p12) target = $region8
    $region5: #{daf_forward.5} parent=1 // loop_body
      %s16 = ssub.s32 %s11, 1
      %s17 = ssub.s32 %s11, 2
      %s18 = sadd.s32 %s11, 1
      %s19 = ssub.s32 %s11, %s18
      %p20 = scmp.eq.s32.totalorder %s19, 0
      %s22 = sadd.s32 %s21, 1
      %s23 = scalar_select %p20, %s21, %s22
      %p26 = pneg %p20
      %p27 = scmp.eq.s32.totalorder %s11, 7
      %p28 = por %p26, %p27
      %p29 = scmp.ne.s32.totalorder %s21, %s24
      %p30 = scmp.eq.s32.totalorder %s11, 0
      %p31 = por %p29, %p30
      %p32 = scmp.ne.s32.totalorder %s21, %s24
      %p33 = scmp.eq.s32.totalorder %s16, 7
      %p34 = por %p32, %p33
      %p35 = scmp.ne.s32.totalorder %s24, %s25
      %p36 = scmp.eq.s32.totalorder %s16, 0
      %p37 = por %p35, %p36
      %p38 = scmp.ne.s32.totalorder %s24, %s25
      %p39 = scmp.eq.s32.totalorder %s17, 7
      %p40 = por %p38, %p39
      %p42 = scmp.ne.s32.totalorder %s25, %s41
      %p43 = scmp.eq.s32.totalorder %s17, 0
      %p44 = por %p42, %p43
      %s46 = sadd.s32 %s45, 1
      %p49 = scmp.eq.s32.totalorder %s11, 7
      %p50 = scmp.ne.s32.totalorder %s45, %s47
      %p51 = scmp.eq.s32.totalorder %s11, 0
      %p52 = por %p50, %p51
      %p53 = scmp.ne.s32.totalorder %s45, %s47
      %p54 = scmp.eq.s32.totalorder %s16, 7
      %p55 = por %p53, %p54
      %p56 = scmp.ne.s32.totalorder %s47, %s48
      %p57 = scmp.eq.s32.totalorder %s16, 0
      %p58 = por %p56, %p57
      %p59 = scmp.ne.s32.totalorder %s47, %s48
      %p60 = scmp.eq.s32.totalorder %s17, 7
      %p61 = por %p59, %p60
      %p63 = scmp.ne.s32.totalorder %s48, %s62
      %p64 = scmp.eq.s32.totalorder %s17, 0
      %p65 = por %p63, %p64
      %s67 = sadd.s32 %s66, 1
      %p70 = scmp.eq.s32.totalorder %s11, 7
      %p71 = scmp.ne.s32.totalorder %s66, %s68
      %p72 = scmp.eq.s32.totalorder %s11, 0
      %p73 = por %p71, %p72
      %p74 = scmp.ne.s32.totalorder %s66, %s68
      %p75 = scmp.eq.s32.totalorder %s16, 7
      %p76 = por %p74, %p75
      %p77 = scmp.ne.s32.totalorder %s68, %s69
      %p78 = scmp.eq.s32.totalorder %s16, 0
      %p79 = por %p77, %p78
      %p80 = scmp.ne.s32.totalorder %s68, %s69
      %p81 = scmp.eq.s32.totalorder %s17, 7
      %p82 = por %p80, %p81
      %p84 = scmp.ne.s32.totalorder %s69, %s83
      %p85 = scmp.eq.s32.totalorder %s17, 0
      %p86 = por %p84, %p85
      %s87 = ssub.s32 %s11, %s18
      %p88 = scmp.eq.s32.totalorder %s87, 0
      %s90 = sadd.s32 %s89, 1
      %s91 = scalar_select %p88, %s89, %s90
      %p94 = pneg %p88
      %p95 = scmp.eq.s32.totalorder %s11, 7
      %p96 = por %p94, %p95
      %p97 = scmp.ne.s32.totalorder %s89, %s92
      %p98 = scmp.eq.s32.totalorder %s11, 0
      %p99 = por %p97, %p98
      %p100 = scmp.ne.s32.totalorder %s89, %s92
      %p101 = scmp.eq.s32.totalorder %s16, 7
      %p102 = por %p100, %p101
      %p103 = scmp.ne.s32.totalorder %s92, %s93
      %p104 = scmp.eq.s32.totalorder %s16, 0
      %p105 = por %p103, %p104
      %p106 = scmp.ne.s32.totalorder %s92, %s93
      %p107 = scmp.eq.s32.totalorder %s17, 7
      %p108 = por %p106, %p107
      %p110 = scmp.ne.s32.totalorder %s93, %s109
      %p111 = scmp.eq.s32.totalorder %s17, 0
      %p112 = por %p110, %p111
      %p113 = scmp.le.s32.totalorder 1, %s11
      %p114 = scmp.lt.s32.totalorder %s11, 9
      %p115 = pnand %p113, %p114
      %p116 = pneg %p115
      // Predicated region
      $region9: #{daf_forward.5} parent=5 // pred_check
        _
      $region10: #{daf_forward.5} parent=5 // pred_check_branch
        %118 = sbr.rel (%p115) target = $region12
      $region11: #{daf_forward.5} parent=5 // pred_region
        %s119 = ssub.s32 %s11, 1
        // Predicated region
        $region13: #{daf_forward.5} parent=11 // pred_check
          %p120 = pneg %p58
        $region14: #{daf_forward.5} parent=11 // pred_check_branch
          %122 = sbr.rel (%p120) target = $region16
        $region15: #{daf_forward.5} parent=11 // pred_region
          %124 = vsyncadd [#allocation3], 0
          %s126 = sshll.u32 %s1, 4
          %s127 = int_to_ptr.hbm [resolvable:$true] %s126
          %s128 = sshll.u32 [#allocation2], 4
          %s129 = int_to_ptr.vmem [resolvable:$true] %s128
          %131 = dma.hbm_to_vmem [thread:$0]  %s127, 64, %s129, [#allocation3]
        $region16: #{daf_forward.5} parent=11 // pred_fallthru
          _
        // Predicated region
        $region17: #{daf_forward.5} parent=11 // pred_check
          %p132 = pneg %p79
        $region18: #{daf_forward.5} parent=11 // pred_check_branch
          %134 = sbr.rel (%p132) target = $region20
        $region19: #{daf_forward.5} parent=11 // pred_region
          %136 = vsyncadd [#allocation5], 0
          %s138 = sshll.u32 %s2, 4
          %s139 = int_to_ptr.hbm [resolvable:$true] %s138
          %s140 = sshll.u32 [#allocation4], 4
          %s141 = int_to_ptr.vmem [resolvable:$true] %s140
          %143 = dma.hbm_to_vmem [thread:$0]  %s139, 16, %s141, [#allocation5]
        $region20: #{daf_forward.5} parent=11 // pred_fallthru
          _
      $region12: #{daf_forward.5} parent=5 // pred_fallthru
        _
      %p144 = scmp.lt.s32.totalorder %s11, 8
      // Predicated region
      $region21: #{daf_forward.5} parent=5 // pred_check
        %p145 = pneg %p144
      $region22: #{daf_forward.5} parent=5 // pred_check_branch
        %147 = sbr.rel (%p145) target = $region24
      $region23: #{daf_forward.5} parent=5 // pred_region
        // Predicated region
        $region25: #{daf_forward.5} parent=23 // pred_check
          %p148 = pneg %p31
        $region26: #{daf_forward.5} parent=23 // pred_check_branch
          %150 = sbr.rel (%p148) target = $region28
        $region27: #{daf_forward.5} parent=23 // pred_region
          %s151 = smul.u32 8, %s11
          %p152 = scmp.lt.s32.totalorder %s151, 63
          %s153 = scalar_select %p152, %s151, 63
          %s154 = smul.addr %s153, 4
          %s155 = scalar_lea.vmem %s0, %s154
          %s156 = smul.u32 8, %s11
        $region28: #{daf_forward.5} parent=23 // pred_fallthru
          _
      $region24: #{daf_forward.5} parent=5 // pred_fallthru
        _
      %p157 = scmp.le.s32.totalorder 1, %s11
      %p158 = scmp.lt.s32.totalorder %s11, 9
      %p159 = pnand %p157, %p158
      %p160 = pneg %p159
      // Predicated region
      $region29: #{daf_forward.5} parent=5 // pred_check
        _
      $region30: #{daf_forward.5} parent=5 // pred_check_branch
        %162 = sbr.rel (%p159) target = $region32
      $region31: #{daf_forward.5} parent=5 // pred_region
        %s163 = ssub.s32 %s11, 1
        // Predicated region
        $region33: #{daf_forward.5} parent=31 // pred_check
          %p164 = pneg %p58
        $region34: #{daf_forward.5} parent=31 // pred_check_branch
          %166 = sbr.rel (%p164) target = $region36
        $region35: #{daf_forward.5} parent=31 // pred_region
          %168 = dma.done [#allocation3], 64
        $region36: #{daf_forward.5} parent=31 // pred_fallthru
          _
        // Predicated region
        $region37: #{daf_forward.5} parent=31 // pred_check
          %p169 = pneg %p79
        $region38: #{daf_forward.5} parent=31 // pred_check_branch
          %171 = sbr.rel (%p169) target = $region40
        $region39: #{daf_forward.5} parent=31 // pred_region
          %173 = dma.done [#allocation5], 16
        $region40: #{daf_forward.5} parent=31 // pred_fallthru
          _
        %s174 = smul.u32 8, %s16
        %p175 = scmp.lt.s32.totalorder %s174, 63
        %s176 = scalar_select %p175, %s174, 63
        %s177 = smul.addr %s176, 4
        %s178 = scalar_lea.vmem %s0, %s177
        %p179 = pneg %p37
        %p180 = pneg %p34
        %p181 = pneg %p58
        %p182 = pneg %p55
        %p183 = pneg %p79
        %p184 = pneg %p76
        %p185 = pneg %p105
        %p186 = pneg %p102
        %s187 = smul.u32 8, %s16
        %p188 = scmp.lt.s32.totalorder %s187, 63
        %s189 = scalar_select %p188, %s187, 63
        %s190 = smul.addr %s189, 4
        %s191 = scalar_lea.vmem %s3, %s190
        %s192 = smul.u32 8, %s16
        %p193 = scmp.lt.s32.totalorder %s192, 63
        %s194 = scalar_select %p193, %s192, 63
        %s195 = smul.addr %s194, 4
        %s196 = scalar_lea.vmem %s0, %s195
        %s197 = smul.u32 8, %s16
        %s198 = smul.u32 8, %s16
        %p199 = scmp.lt.s32.totalorder %s198, 63
        %s200 = scalar_select %p199, %s198, 63
        %s201 = smul.addr %s200, 4
        %s202 = scalar_lea.vmem %s3, %s201
        %s203 = smul.u32 8, %s16
        %v205 = vld [vmem:[%s196] sm:$0xf]
        %v206 = vld [vmem:[%s196 + $0x4] sm:$0xf]
        %v207 = vld [vmem:[%s196 + $0x8] sm:$0xf]
        %v208 = vld [vmem:[%s196 + $0xc] sm:$0xf]
        %v209 = vld [vmem:[%s196 + $0x10] sm:$0xf]
        %v210 = vld [vmem:[%s196 + $0x14] sm:$0xf]
        %v211 = vld [vmem:[%s196 + $0x18] sm:$0xf]
        %v212 = vld [vmem:[%s196 + $0x1c] sm:$0xf]
        %v213 = vld [vmem:[#allocation2] sm:$0xf]
        %v214 = vld [vmem:[#allocation4] sm:$0x1]
        %v216 = vperm.slane %v214, 0
        %v226 = vunpack.c.l.b16 %v205
        %v227 = vunpack.c.l.b16 %v206
        %v228 = vunpack.c.l.b16 %v207
        %v229 = vunpack.c.l.b16 %v208
        %v230 = vunpack.c.l.b16 %v209
        %v231 = vunpack.c.l.b16 %v210
        %v232 = vunpack.c.l.b16 %v211
        %v233 = vunpack.c.l.b16 %v212
        %v234 = vpack.c.b16 %v227, %v226
        %v235 = vpack.c.b16 %v229, %v228
        %v236 = vpack.c.b16 %v231, %v230
        %v237 = vpack.c.b16 %v233, %v232
        %vm238 = vcmask 64512
        %v240 = vsel %vm238, %v234, 0
        %v243 = vsel %vm238, %v235, 0
        %v246 = vsel %vm238, %v236, 0
        %v249 = vsel %vm238, %v237, 0
        %vm251 = vcmask 1043456
        %v253 = vsel %vm251, %v213, 0
        %255 = vmatpush.bf16.msra.mxu0 0
        %256 = vmatpush.bf16.msra.mxu0 0
        %257 = vmatpush.bf16.msra.mxu0 0
        %258 = vmatpush.bf16.msra.mxu0 0
        %259 = vmatpush.bf16.msra.mxu0 0
        %260 = vmatpush.bf16.msra.mxu0 0
        %261 = vmatpush.bf16.msra.mxu0 0
        %262 = vmatpush.bf16.msra.mxu0 %v253
        %263 = vmatmul.bf16.gmra.mxu0 %v240
        %v264 = vpop.f32.mrf.mxu0
        %v265 = vadd.f32 %v216, %v264
        %v266 = vpop.f32.mrf.mxu0
        %v267 = vadd.f32 %v216, %v266
        %268 = vmatmul.bf16.gmra.mxu0 %v243
        %v269 = vpop.f32.mrf.mxu0
        %v270 = vadd.f32 %v216, %v269
        %v271 = vpop.f32.mrf.mxu0
        %v272 = vadd.f32 %v216, %v271
        %273 = vmatmul.bf16.gmra.mxu0 %v246
        %v274 = vpop.f32.mrf.mxu0
        %v275 = vadd.f32 %v216, %v274
        %v276 = vpop.f32.mrf.mxu0
        %v277 = vadd.f32 %v216, %v276
        %278 = vmatmul.bf16.gmra.mxu0 %v249
        %v279 = vpop.f32.mrf.mxu0
        %v280 = vadd.f32 %v216, %v279
        %v281 = vpop.f32.mrf.mxu0
        %v282 = vadd.f32 %v216, %v281
        %283 = vdwg.mxu0
        %v284 = vpack.c.bf16 %v265, %v265
        %v285 = vpack.c.bf16 %v267, %v267
        %v286 = vpack.c.bf16 %v270, %v270
        %v287 = vpack.c.bf16 %v272, %v272
        %v288 = vpack.c.bf16 %v275, %v275
        %v289 = vpack.c.bf16 %v277, %v277
        %v290 = vpack.c.bf16 %v280, %v280
        %v291 = vpack.c.bf16 %v282, %v282
        %292 = vst [vmem:[%s202] sm:$0xf] %v284
        %293 = vst [vmem:[%s202 + $0x4] sm:$0xf] %v285
        %294 = vst [vmem:[%s202 + $0x8] sm:$0xf] %v286
        %295 = vst [vmem:[%s202 + $0xc] sm:$0xf] %v287
        %296 = vst [vmem:[%s202 + $0x10] sm:$0xf] %v288
        %297 = vst [vmem:[%s202 + $0x14] sm:$0xf] %v289
        %298 = vst [vmem:[%s202 + $0x18] sm:$0xf] %v290
        %299 = vst [vmem:[%s202 + $0x1c] sm:$0xf] %v291
        %s300 = smul.u32 8, %s16
        %p301 = scmp.lt.s32.totalorder %s300, 63
        %s302 = scalar_select %p301, %s300, 63
        %s303 = smul.addr %s302, 4
        %s304 = scalar_lea.vmem %s3, %s303
        // Predicated region
        $region41: #{daf_forward.5} parent=31 // pred_check
          %p305 = pneg %p102
        $region42: #{daf_forward.5} parent=31 // pred_check_branch
          %307 = sbr.rel (%p305) target = $region44
        $region43: #{daf_forward.5} parent=31 // pred_region
          %s308 = smul.u32 8, %s16
        $region44: #{daf_forward.5} parent=31 // pred_fallthru
          _
      $region32: #{daf_forward.5} parent=5 // pred_fallthru
        _
      %p309 = scmp.le.s32.totalorder 2, %s11
      // Predicated region
      $region45: #{daf_forward.5} parent=5 // pred_check
        %p310 = pneg %p309
      $region46: #{daf_forward.5} parent=5 // pred_check_branch
        %312 = sbr.rel (%p310) target = $region48
      $region47: #{daf_forward.5} parent=5 // pred_region
        %s313 = ssub.s32 %s11, 2
        // Predicated region
        $region49: #{daf_forward.5} parent=47 // pred_check
          %p314 = pneg %p108
        $region50: #{daf_forward.5} parent=47 // pred_check_branch
          %316 = sbr.rel (%p314) target = $region52
        $region51: #{daf_forward.5} parent=47 // pred_region
          %s317 = smul.u32 8, %s17
          %p318 = scmp.lt.s32.totalorder %s317, 63
          %s319 = scalar_select %p318, %s317, 63
          %s320 = smul.addr %s319, 4
          %s321 = scalar_lea.vmem %s3, %s320
        $region52: #{daf_forward.5} parent=47 // pred_fallthru
          _
      $region48: #{daf_forward.5} parent=5 // pred_fallthru
        _
    $region6: #{daf_forward.5} parent=1 // loop_footer
      %s15 = sadd.s32 1, %s11
    $region7: #{daf_forward.5} parent=1 // loop_footer_branch
      %10 = sbr.rel target = $region3
    $region8: #{daf_forward.5} parent=1 // loop_exit
      _
    %322 = vsyncpa [#allocation3], 1
    %s323 = scalar_lea.sflag [#allocation3], 1
    %324 = vsyncpa %s323, 1
    %325 = vsyncpa [#allocation5], 1

// kernel: daf_forward.6
$region0: #{daf_forward.6}
  #allocation0 [shape = 'u32[]', space=smem, size = 0x4, offset = 0x4, fixed_abs, tag = 'smem constant byte address 0x4 - core index']
  #allocation1 [shape = 'u32[72,128]{1,0:T(1,128)}', space=vmem, size = 0x9000, scoped, tag = 'internal scratch']
  %s0 = inlined_call_operand.vmem [shape: bf16[2,256,128], index: 0, kind: input, shape index: {}, may-alias: {0,1,2}]
  %s1 = inlined_call_operand.vmem [shape: bf16[2,256,128], index: 1, kind: input, shape index: {}, may-alias: {0,1,2}]
  %s2 = inlined_call_operand.vmem [shape: bf16[2,256,128], index: 2, kind: input, shape index: {}, may-alias: {0,1,2}]
  %s3 = inlined_call_operand.vmem [shape: bf16[2,256,128], index: 3, kind: input, shape index: {}, may-alias: {3,4,5}]
  %s4 = inlined_call_operand.vmem [shape: bf16[2,256,128], index: 4, kind: input, shape index: {}, may-alias: {3,4,5}]
  %s5 = inlined_call_operand.vmem [shape: bf16[2,256,128], index: 5, kind: input, shape index: {}, may-alias: {3,4,5}]
  %s6 = inlined_call_operand.hbm [shape: bf16[9,128,128], index: 6, kind: input, shape index: {}]
  %s7 = inlined_call_operand.hbm [shape: bf16[9,128,128], index: 7, kind: input, shape index: {}]
  %s8 = inlined_call_operand.hbm [shape: f32[1,128], index: 8, kind: input, shape index: {}]
  %s9 = inlined_call_operand.vmem [shape: f32[2,256,128], index: 9, kind: output, shape index: {}]
  %s10 = sld [smem:[#allocation0]]
  $region81: #{daf_forward.6} parent=0
    _
  %s12 = ssub.s32 1, %s10
  %s13 = scalar_select 0, %s12, %s10
  $region1: #{daf_forward.6} parent=0
    #allocation2 [shape = 'u8[294912]{0}', space=vmem, size = 0x48000, scoped, tag = 'input window, operand 6, single buffered']
    #allocation3 [shape = 's32[2]{0}', space=sflag, size = 0x8, scoped, tag = 'scoped memory for daf_forward.6']
    #allocation4 [shape = 'u8[294912]{0}', space=vmem, size = 0x48000, scoped, tag = 'input window, operand 7, single buffered']
    #allocation5 [shape = 's32[1]{0}', space=sflag, size = 0x4, scoped, tag = 'scoped memory for daf_forward.6']
    #allocation6 [shape = 'u8[512]{0}', space=vmem, size = 0x400, scoped, tag = 'input window, operand 8, single buffered']
    %14 = vsyncpa [#allocation3], 0
    %15 = vsyncpa [#allocation5], 0
    loop: start=0, step=1, limit=6
    $region2: #{daf_forward.6} parent=1 // loop_pre_header
      _
    $region3: #{daf_forward.6} parent=1 // loop_header
      %s17 = sphi 0, %s21
      %p18 = scmp.ge.s32.totalorder %s17, 6
      %s24 = sphi 0, %s36
      %s25 = sphi 0, %s32
      %s26 = sphi 0, %s24
      %s27 = sphi 0, %s25
      %s28 = sphi 0, %s26
      %s29 = sphi 0, %s27
      %s41 = sphi 0, %s43
      %s44 = sphi 0, %s41
      %s45 = sphi 0, %s44
      %s61 = sphi 0, %s45
      %s77 = sphi 0, %s79
      %s80 = sphi 0, %s77
      %s81 = sphi 0, %s80
      %s97 = sphi 0, %s81
      %s113 = sphi 0, %s115
      %s116 = sphi 0, %s113
      %s117 = sphi 0, %s116
      %s133 = sphi 0, %s117
      %s141 = sphi 0, %s143
      %s144 = sphi 0, %s141
      %s145 = sphi 0, %s144
      %s161 = sphi 0, %s145
      %s177 = sphi 0, %s179
      %s180 = sphi 0, %s177
      %s181 = sphi 0, %s180
      %s197 = sphi 0, %s181
      %s213 = sphi 0, %s215
      %s216 = sphi 0, %s213
      %s217 = sphi 0, %s216
      %s233 = sphi 0, %s217
      %s237 = sphi 0, %s237
      %s239 = sphi 0, %s237
      %s240 = sphi 0, %s239
      %s254 = sphi 0, %s240
      %s258 = sphi 0, %s258
      %s260 = sphi 0, %s258
      %s261 = sphi 0, %s260
      %s275 = sphi 0, %s261
      %s279 = sphi 0, %s279
      %s281 = sphi 0, %s279
      %s282 = sphi 0, %s281
      %s296 = sphi 0, %s282
      %s304 = sphi 0, %s306
      %s307 = sphi 0, %s304
      %s308 = sphi 0, %s307
      %s324 = sphi 0, %s308
    $region4: #{daf_forward.6} parent=1 // loop_header_branch
      %20 = sbr.rel (%p18) target = $region8
    $region5: #{daf_forward.6} parent=1 // loop_body
      %s22 = ssub.s32 %s17, 1
      %s23 = ssub.s32 %s17, 2
      %s30 = sadd.s32 1, %s25
      %p31 = scmp.ge.s32.totalorder %s30, 2
      %s32 = scalar_select %p31, 0, %s30
      %s33 = sadd.s32 1, %s24
      %s34 = scalar_select %p31, %s33, %s24
      %p35 = scmp.ge.s32.totalorder %s34, 2
      %s36 = scalar_select %p35, 0, %s34
      %s37 = ssub.s32 %s24, %s36
      %s38 = ssub.s32 %s25, %s32
      %s39 = sor.u32 %s37, %s38
      %p40 = scmp.eq.s32.totalorder %s39, 0
      %s42 = sadd.s32 %s41, 1
      %s43 = scalar_select %p40, %s41, %s42
      %p46 = pneg %p40
      %p47 = scmp.eq.s32.totalorder %s17, 3
      %p48 = por %p46, %p47
      %p49 = scmp.ne.s32.totalorder %s41, %s44
      %p50 = scmp.eq.s32.totalorder %s17, 0
      %p51 = por %p49, %p50
      %p52 = scmp.ne.s32.totalorder %s41, %s44
      %p53 = scmp.eq.s32.totalorder %s22, 3
      %p54 = por %p52, %p53
      %p55 = scmp.ne.s32.totalorder %s44, %s45
      %p56 = scmp.eq.s32.totalorder %s22, 0
      %p57 = por %p55, %p56
      %p58 = scmp.ne.s32.totalorder %s44, %s45
      %p59 = scmp.eq.s32.totalorder %s23, 3
      %p60 = por %p58, %p59
      %p62 = scmp.ne.s32.totalorder %s45, %s61
      %p63 = scmp.eq.s32.totalorder %s23, 0
      %p64 = por %p62, %p63
      %s65 = smul.u32 %s25, 8
      %s66 = ssub.s32 %s65, 1
      %p67 = scmp.gt.s32.totalorder %s66, 0
      %s68 = scalar_select %p67, %s66, 0
      %s69 = smul.u32 %s32, 8
      %s70 = ssub.s32 %s69, 1
      %p71 = scmp.gt.s32.totalorder %s70, 0
      %s72 = scalar_select %p71, %s70, 0
      %s73 = ssub.s32 %s24, %s36
      %s74 = ssub.s32 %s68, %s72
      %s75 = sor.u32 %s73, %s74
      %p76 = scmp.eq.s32.totalorder %s75, 0
      %s78 = sadd.s32 %s77, 1
      %s79 = scalar_select %p76, %s77, %s78
      %p82 = pneg %p76
      %p83 = scmp.eq.s32.totalorder %s17, 3
      %p84 = por %p82, %p83
      %p85 = scmp.ne.s32.totalorder %s77, %s80
      %p86 = scmp.eq.s32.totalorder %s17, 0
      %p87 = por %p85, %p86
      %p88 = scmp.ne.s32.totalorder %s77, %s80
      %p89 = scmp.eq.s32.totalorder %s22, 3
      %p90 = por %p88, %p89
      %p91 = scmp.ne.s32.totalorder %s80, %s81
      %p92 = scmp.eq.s32.totalorder %s22, 0
      %p93 = por %p91, %p92
      %p94 = scmp.ne.s32.totalorder %s80, %s81
      %p95 = scmp.eq.s32.totalorder %s23, 3
      %p96 = por %p94, %p95
      %p98 = scmp.ne.s32.totalorder %s81, %s97
      %p99 = scmp.eq.s32.totalorder %s23, 0
      %p100 = por %p98, %p99
      %s101 = smul.u32 %s25, 8
      %s102 = sadd.s32 %s101, 8
      %p103 = scmp.lt.s32.totalorder %s102, 15
      %s104 = scalar_select %p103, %s102, 15
      %s105 = smul.u32 %s32, 8
      %s106 = sadd.s32 %s105, 8
      %p107 = scmp.lt.s32.totalorder %s106, 15
      %s108 = scalar_select %p107, %s106, 15
      %s109 = ssub.s32 %s24, %s36
      %s110 = ssub.s32 %s104, %s108
      %s111 = sor.u32 %s109, %s110
      %p112 = scmp.eq.s32.totalorder %s111, 0
      %s114 = sadd.s32 %s113, 1
      %s115 = scalar_select %p112, %s113, %s114
      %p118 = pneg %p112
      %p119 = scmp.eq.s32.totalorder %s17, 3
      %p120 = por %p118, %p119
      %p121 = scmp.ne.s32.totalorder %s113, %s116
      %p122 = scmp.eq.s32.totalorder %s17, 0
      %p123 = por %p121, %p122
      %p124 = scmp.ne.s32.totalorder %s113, %s116
      %p125 = scmp.eq.s32.totalorder %s22, 3
      %p126 = por %p124, %p125
      %p127 = scmp.ne.s32.totalorder %s116, %s117
      %p128 = scmp.eq.s32.totalorder %s22, 0
      %p129 = por %p127, %p128
      %p130 = scmp.ne.s32.totalorder %s116, %s117
      %p131 = scmp.eq.s32.totalorder %s23, 3
      %p132 = por %p130, %p131
      %p134 = scmp.ne.s32.totalorder %s117, %s133
      %p135 = scmp.eq.s32.totalorder %s23, 0
      %p136 = por %p134, %p135
      %s137 = ssub.s32 %s24, %s36
      %s138 = ssub.s32 %s25, %s32
      %s139 = sor.u32 %s137, %s138
      %p140 = scmp.eq.s32.totalorder %s139, 0
      %s142 = sadd.s32 %s141, 1
      %s143 = scalar_select %p140, %s141, %s142
      %p146 = pneg %p140
      %p147 = scmp.eq.s32.totalorder %s17, 3
      %p148 = por %p146, %p147
      %p149 = scmp.ne.s32.totalorder %s141, %s144
      %p150 = scmp.eq.s32.totalorder %s17, 0
      %p151 = por %p149, %p150
      %p152 = scmp.ne.s32.totalorder %s141, %s144
      %p153 = scmp.eq.s32.totalorder %s22, 3
      %p154 = por %p152, %p153
      %p155 = scmp.ne.s32.totalorder %s144, %s145
      %p156 = scmp.eq.s32.totalorder %s22, 0
      %p157 = por %p155, %p156
      %p158 = scmp.ne.s32.totalorder %s144, %s145
      %p159 = scmp.eq.s32.totalorder %s23, 3
      %p160 = por %p158, %p159
      %p162 = scmp.ne.s32.totalorder %s145, %s161
      %p163 = scmp.eq.s32.totalorder %s23, 0
      %p164 = por %p162, %p163
      %s165 = smul.u32 %s25, 8
      %s166 = ssub.s32 %s165, 1
      %p167 = scmp.gt.s32.totalorder %s166, 0
      %s168 = scalar_select %p167, %s166, 0
      %s169 = smul.u32 %s32, 8
      %s170 = ssub.s32 %s169, 1
      %p171 = scmp.gt.s32.totalorder %s170, 0
      %s172 = scalar_select %p171, %s170, 0
      %s173 = ssub.s32 %s24, %s36
      %s174 = ssub.s32 %s168, %s172
      %s175 = sor.u32 %s173, %s174
      %p176 = scmp.eq.s32.totalorder %s175, 0
      %s178 = sadd.s32 %s177, 1
      %s179 = scalar_select %p176, %s177, %s178
      %p182 = pneg %p176
      %p183 = scmp.eq.s32.totalorder %s17, 3
      %p184 = por %p182, %p183
      %p185 = scmp.ne.s32.totalorder %s177, %s180
      %p186 = scmp.eq.s32.totalorder %s17, 0
      %p187 = por %p185, %p186
      %p188 = scmp.ne.s32.totalorder %s177, %s180
      %p189 = scmp.eq.s32.totalorder %s22, 3
      %p190 = por %p188, %p189
      %p191 = scmp.ne.s32.totalorder %s180, %s181
      %p192 = scmp.eq.s32.totalorder %s22, 0
      %p193 = por %p191, %p192
      %p194 = scmp.ne.s32.totalorder %s180, %s181
      %p195 = scmp.eq.s32.totalorder %s23, 3
      %p196 = por %p194, %p195
      %p198 = scmp.ne.s32.totalorder %s181, %s197
      %p199 = scmp.eq.s32.totalorder %s23, 0
      %p200 = por %p198, %p199
      %s201 = smul.u32 %s25, 8
      %s202 = sadd.s32 %s201, 8
      %p203 = scmp.lt.s32.totalorder %s202, 15
      %s204 = scalar_select %p203, %s202, 15
      %s205 = smul.u32 %s32, 8
      %s206 = sadd.s32 %s205, 8
      %p207 = scmp.lt.s32.totalorder %s206, 15
      %s208 = scalar_select %p207, %s206, 15
      %s209 = ssub.s32 %s24, %s36
      %s210 = ssub.s32 %s204, %s208
      %s211 = sor.u32 %s209, %s210
      %p212 = scmp.eq.s32.totalorder %s211, 0
      %s214 = sadd.s32 %s213, 1
      %s215 = scalar_select %p212, %s213, %s214
      %p218 = pneg %p212
      %p219 = scmp.eq.s32.totalorder %s17, 3
      %p220 = por %p218, %p219
      %p221 = scmp.ne.s32.totalorder %s213, %s216
      %p222 = scmp.eq.s32.totalorder %s17, 0
      %p223 = por %p221, %p222
      %p224 = scmp.ne.s32.totalorder %s213, %s216
      %p225 = scmp.eq.s32.totalorder %s22, 3
      %p226 = por %p224, %p225
      %p227 = scmp.ne.s32.totalorder %s216, %s217
      %p228 = scmp.eq.s32.totalorder %s22, 0
      %p229 = por %p227, %p228
      %p230 = scmp.ne.s32.totalorder %s216, %s217
      %p231 = scmp.eq.s32.totalorder %s23, 3
      %p232 = por %p230, %p231
      %p234 = scmp.ne.s32.totalorder %s217, %s233
      %p235 = scmp.eq.s32.totalorder %s23, 0
      %p236 = por %p234, %p235
      %s238 = sadd.s32 %s237, 1
      %p241 = scmp.eq.s32.totalorder %s17, 3
      %p242 = scmp.ne.s32.totalorder %s237, %s239
      %p243 = scmp.eq.s32.totalorder %s17, 0
      %p244 = por %p242, %p243
      %p245 = scmp.ne.s32.totalorder %s237, %s239
      %p246 = scmp.eq.s32.totalorder %s22, 3
      %p247 = por %p245, %p246
      %p248 = scmp.ne.s32.totalorder %s239, %s240
      %p249 = scmp.eq.s32.totalorder %s22, 0
      %p250 = por %p248, %p249
      %p251 = scmp.ne.s32.totalorder %s239, %s240
      %p252 = scmp.eq.s32.totalorder %s23, 3
      %p253 = por %p251, %p252
      %p255 = scmp.ne.s32.totalorder %s240, %s254
      %p256 = scmp.eq.s32.totalorder %s23, 0
      %p257 = por %p255, %p256
      %s259 = sadd.s32 %s258, 1
      %p262 = scmp.eq.s32.totalorder %s17, 3
      %p263 = scmp.ne.s32.totalorder %s258, %s260
      %p264 = scmp.eq.s32.totalorder %s17, 0
      %p265 = por %p263, %p264
      %p266 = scmp.ne.s32.totalorder %s258, %s260
      %p267 = scmp.eq.s32.totalorder %s22, 3
      %p268 = por %p266, %p267
      %p269 = scmp.ne.s32.totalorder %s260, %s261
      %p270 = scmp.eq.s32.totalorder %s22, 0
      %p271 = por %p269, %p270
      %p272 = scmp.ne.s32.totalorder %s260, %s261
      %p273 = scmp.eq.s32.totalorder %s23, 3
      %p274 = por %p272, %p273
      %p276 = scmp.ne.s32.totalorder %s261, %s275
      %p277 = scmp.eq.s32.totalorder %s23, 0
      %p278 = por %p276, %p277
      %s280 = sadd.s32 %s279, 1
      %p283 = scmp.eq.s32.totalorder %s17, 3
      %p284 = scmp.ne.s32.totalorder %s279, %s281
      %p285 = scmp.eq.s32.totalorder %s17, 0
      %p286 = por %p284, %p285
      %p287 = scmp.ne.s32.totalorder %s279, %s281
      %p288 = scmp.eq.s32.totalorder %s22, 3
      %p289 = por %p287, %p288
      %p290 = scmp.ne.s32.totalorder %s281, %s282
      %p291 = scmp.eq.s32.totalorder %s22, 0
      %p292 = por %p290, %p291
      %p293 = scmp.ne.s32.totalorder %s281, %s282
      %p294 = scmp.eq.s32.totalorder %s23, 3
      %p295 = por %p293, %p294
      %p297 = scmp.ne.s32.totalorder %s282, %s296
      %p298 = scmp.eq.s32.totalorder %s23, 0
      %p299 = por %p297, %p298
      %s300 = ssub.s32 %s24, %s36
      %s301 = ssub.s32 %s25, %s32
      %s302 = sor.u32 %s300, %s301
      %p303 = scmp.eq.s32.totalorder %s302, 0
      %s305 = sadd.s32 %s304, 1
      %s306 = scalar_select %p303, %s304, %s305
      %p309 = pneg %p303
      %p310 = scmp.eq.s32.totalorder %s17, 3
      %p311 = por %p309, %p310
      %p312 = scmp.ne.s32.totalorder %s304, %s307
      %p313 = scmp.eq.s32.totalorder %s17, 0
      %p314 = por %p312, %p313
      %p315 = scmp.ne.s32.totalorder %s304, %s307
      %p316 = scmp.eq.s32.totalorder %s22, 3
      %p317 = por %p315, %p316
      %p318 = scmp.ne.s32.totalorder %s307, %s308
      %p319 = scmp.eq.s32.totalorder %s22, 0
      %p320 = por %p318, %p319
      %p321 = scmp.ne.s32.totalorder %s307, %s308
      %p322 = scmp.eq.s32.totalorder %s23, 3
      %p323 = por %p321, %p322
      %p325 = scmp.ne.s32.totalorder %s308, %s324
      %p326 = scmp.eq.s32.totalorder %s23, 0
      %p327 = por %p325, %p326
      %p328 = scmp.le.s32.totalorder 1, %s17
      %p329 = scmp.lt.s32.totalorder %s17, 5
      %p330 = pnand %p328, %p329
      %p331 = pneg %p330
      // Predicated region
      $region9: #{daf_forward.6} parent=5 // pred_check
        _
      $region10: #{daf_forward.6} parent=5 // pred_check_branch
        %333 = sbr.rel (%p330) target = $region12
      $region11: #{daf_forward.6} parent=5 // pred_region
        %s334 = ssub.s32 %s17, 1
        // Predicated region
        $region13: #{daf_forward.6} parent=11 // pred_check
          %p335 = pneg %p250
        $region14: #{daf_forward.6} parent=11 // pred_check_branch
          %337 = sbr.rel (%p335) target = $region16
        $region15: #{daf_forward.6} parent=11 // pred_region
          %339 = vsyncadd [#allocation3], 0
          %s340 = sshll.u32 %s6, 4
          %s341 = int_to_ptr.hbm [resolvable:$true] %s340
          %s342 = sshll.u32 [#allocation2], 4
          %s343 = int_to_ptr.vmem [resolvable:$true] %s342
          %348 = dma.hbm_to_vmem [thread:$0]  %s341, 9216, %s343, [#allocation3], 64, 64, 4
        $region16: #{daf_forward.6} parent=11 // pred_fallthru
          _
        // Predicated region
        $region17: #{daf_forward.6} parent=11 // pred_check
          %p349 = pneg %p271
        $region18: #{daf_forward.6} parent=11 // pred_check_branch
          %351 = sbr.rel (%p349) target = $region20
        $region19: #{daf_forward.6} parent=11 // pred_region
          %353 = vsyncadd [#allocation5], 0
          %s354 = sshll.u32 %s7, 4
          %s355 = int_to_ptr.hbm [resolvable:$true] %s354
          %s356 = sshll.u32 [#allocation4], 4
          %s357 = int_to_ptr.vmem [resolvable:$true] %s356
          %362 = dma.hbm_to_vmem [thread:$0]  %s355, 9216, %s357, [#allocation5], 64, 64, 4
        $region20: #{daf_forward.6} parent=11 // pred_fallthru
          _
        // Predicated region
        $region21: #{daf_forward.6} parent=11 // pred_check
          %p363 = pneg %p292
        $region22: #{daf_forward.6} parent=11 // pred_check_branch
          %365 = sbr.rel (%p363) target = $region24
        $region23: #{daf_forward.6} parent=11 // pred_region
          %367 = vsyncadd [#allocation5], 0
          %s369 = sshll.u32 %s8, 4
          %s370 = int_to_ptr.hbm [resolvable:$true] %s369
          %s371 = sshll.u32 [#allocation6], 4
          %s372 = int_to_ptr.vmem [resolvable:$true] %s371
          %374 = dma.hbm_to_vmem [thread:$0]  %s370, 16, %s372, [#allocation5]
        $region24: #{daf_forward.6} parent=11 // pred_fallthru
          _
      $region12: #{daf_forward.6} parent=5 // pred_fallthru
        _
      %p375 = scmp.lt.s32.totalorder %s17, 4
      // Predicated region
      $region25: #{daf_forward.6} parent=5 // pred_check
        %p376 = pneg %p375
      $region26: #{daf_forward.6} parent=5 // pred_check_branch
        %378 = sbr.rel (%p376) target = $region28
      $region27: #{daf_forward.6} parent=5 // pred_region
        // Predicated region
        $region29: #{daf_forward.6} parent=27 // pred_check
          %p379 = pneg %p51
        $region30: #{daf_forward.6} parent=27 // pred_check_branch
          %381 = sbr.rel (%p379) target = $region32
        $region31: #{daf_forward.6} parent=27 // pred_region
          %s382 = smul.u32 16, %s25
          %p383 = scmp.lt.s32.totalorder %s24, 1
          %s384 = scalar_select %p383, %s24, 1
          %p385 = scmp.lt.s32.totalorder %s382, 31
          %s386 = scalar_select %p385, %s382, 31
          %s387 = smul.addr %s384, 32
          %s388 = sadd.s32 %s386, %s387
          %s389 = smul.addr %s388, 4
          %s390 = scalar_lea.vmem %s0, %s389
          %s391 = smul.u32 16, %s25
        $region32: #{daf_forward.6} parent=27 // pred_fallthru
          _
        // Predicated region
        $region33: #{daf_forward.6} parent=27 // pred_check
          %p392 = pneg %p87
        $region34: #{daf_forward.6} parent=27 // pred_check_branch
          %394 = sbr.rel (%p392) target = $region36
        $region35: #{daf_forward.6} parent=27 // pred_region
          %s395 = smul.u32 %s25, 8
          %s396 = ssub.s32 %s395, 1
          %p397 = scmp.gt.s32.totalorder %s396, 0
          %s398 = scalar_select %p397, %s396, 0
          %s399 = smul.u32 2, %s398
          %p400 = scmp.lt.s32.totalorder %s24, 1
          %s401 = scalar_select %p400, %s24, 1
          %p402 = scmp.lt.s32.totalorder %s399, 31
          %s403 = scalar_select %p402, %s399, 31
          %s404 = smul.addr %s401, 32
          %s405 = sadd.s32 %s403, %s404
          %s406 = smul.addr %s405, 4
          %s407 = scalar_lea.vmem %s1, %s406
          %s408 = smul.u32 %s25, 8
          %s409 = ssub.s32 %s408, 1
          %p410 = scmp.gt.s32.totalorder %s409, 0
          %s411 = scalar_select %p410, %s409, 0
          %s412 = smul.u32 2, %s411
        $region36: #{daf_forward.6} parent=27 // pred_fallthru
          _
        // Predicated region
        $region37: #{daf_forward.6} parent=27 // pred_check
          %p413 = pneg %p123
        $region38: #{daf_forward.6} parent=27 // pred_check_branch
          %415 = sbr.rel (%p413) target = $region40
        $region39: #{daf_forward.6} parent=27 // pred_region
          %s416 = smul.u32 %s25, 8
          %s417 = sadd.s32 %s416, 8
          %p418 = scmp.lt.s32.totalorder %s417, 15
          %s419 = scalar_select %p418, %s417, 15
          %s420 = smul.u32 2, %s419
          %p421 = scmp.lt.s32.totalorder %s24, 1
          %s422 = scalar_select %p421, %s24, 1
          %p423 = scmp.lt.s32.totalorder %s420, 31
          %s424 = scalar_select %p423, %s420, 31
          %s425 = smul.addr %s422, 32
          %s426 = sadd.s32 %s424, %s425
          %s427 = smul.addr %s426, 4
          %s428 = scalar_lea.vmem %s2, %s427
          %s429 = smul.u32 %s25, 8
          %s430 = sadd.s32 %s429, 8
          %p431 = scmp.lt.s32.totalorder %s430, 15
          %s432 = scalar_select %p431, %s430, 15
          %s433 = smul.u32 2, %s432
        $region40: #{daf_forward.6} parent=27 // pred_fallthru
          _
        // Predicated region
        $region41: #{daf_forward.6} parent=27 // pred_check
          %p434 = pneg %p151
        $region42: #{daf_forward.6} parent=27 // pred_check_branch
          %436 = sbr.rel (%p434) target = $region44
        $region43: #{daf_forward.6} parent=27 // pred_region
          %s437 = smul.u32 16, %s25
          %p438 = scmp.lt.s32.totalorder %s24, 1
          %s439 = scalar_select %p438, %s24, 1
          %p440 = scmp.lt.s32.totalorder %s437, 31
          %s441 = scalar_select %p440, %s437, 31
          %s442 = smul.addr %s439, 32
          %s443 = sadd.s32 %s441, %s442
          %s444 = smul.addr %s443, 4
          %s445 = scalar_lea.vmem %s3, %s444
          %s446 = smul.u32 16, %s25
        $region44: #{daf_forward.6} parent=27 // pred_fallthru
          _
        // Predicated region
        $region45: #{daf_forward.6} parent=27 // pred_check
          %p447 = pneg %p187
        $region46: #{daf_forward.6} parent=27 // pred_check_branch
          %449 = sbr.rel (%p447) target = $region48
        $region47: #{daf_forward.6} parent=27 // pred_region
          %s450 = smul.u32 %s25, 8
          %s451 = ssub.s32 %s450, 1
          %p452 = scmp.gt.s32.totalorder %s451, 0
          %s453 = scalar_select %p452, %s451, 0
          %s454 = smul.u32 2, %s453
          %p455 = scmp.lt.s32.totalorder %s24, 1
          %s456 = scalar_select %p455, %s24, 1
          %p457 = scmp.lt.s32.totalorder %s454, 31
          %s458 = scalar_select %p457, %s454, 31
          %s459 = smul.addr %s456, 32
          %s460 = sadd.s32 %s458, %s459
          %s461 = smul.addr %s460, 4
          %s462 = scalar_lea.vmem %s4, %s461
          %s463 = smul.u32 %s25, 8
          %s464 = ssub.s32 %s463, 1
          %p465 = scmp.gt.s32.totalorder %s464, 0
          %s466 = scalar_select %p465, %s464, 0
          %s467 = smul.u32 2, %s466
        $region48: #{daf_forward.6} parent=27 // pred_fallthru
          _
        // Predicated region
        $region49: #{daf_forward.6} parent=27 // pred_check
          %p468 = pneg %p223
        $region50: #{daf_forward.6} parent=27 // pred_check_branch
          %470 = sbr.rel (%p468) target = $region52
        $region51: #{daf_forward.6} parent=27 // pred_region
          %s471 = smul.u32 %s25, 8
          %s472 = sadd.s32 %s471, 8
          %p473 = scmp.lt.s32.totalorder %s472, 15
          %s474 = scalar_select %p473, %s472, 15
          %s475 = smul.u32 2, %s474
          %p476 = scmp.lt.s32.totalorder %s24, 1
          %s477 = scalar_select %p476, %s24, 1
          %p478 = scmp.lt.s32.totalorder %s475, 31
          %s479 = scalar_select %p478, %s475, 31
          %s480 = smul.addr %s477, 32
          %s481 = sadd.s32 %s479, %s480
          %s482 = smul.addr %s481, 4
          %s483 = scalar_lea.vmem %s5, %s482
          %s484 = smul.u32 %s25, 8
          %s485 = sadd.s32 %s484, 8
          %p486 = scmp.lt.s32.totalorder %s485, 15
          %s487 = scalar_select %p486, %s485, 15
          %s488 = smul.u32 2, %s487
        $region52: #{daf_forward.6} parent=27 // pred_fallthru
          _
      $region28: #{daf_forward.6} parent=5 // pred_fallthru
        _
      %p489 = scmp.le.s32.totalorder 1, %s17
      %p490 = scmp.lt.s32.totalorder %s17, 5
      %p491 = pnand %p489, %p490
      %p492 = pneg %p491
      // Predicated region
      $region53: #{daf_forward.6} parent=5 // pred_check
        _
      $region54: #{daf_forward.6} parent=5 // pred_check_branch
        %494 = sbr.rel (%p491) target = $region56
      $region55: #{daf_forward.6} parent=5 // pred_region
        %s495 = ssub.s32 %s17, 1
        // Predicated region
        $region57: #{daf_forward.6} parent=55 // pred_check
          %p496 = pneg %p250
        $region58: #{daf_forward.6} parent=55 // pred_check_branch
          %498 = sbr.rel (%p496) target = $region60
        $region59: #{daf_forward.6} parent=55 // pred_region
          %500 = dma.done [#allocation3], 9216
        $region60: #{daf_forward.6} parent=55 // pred_fallthru
          _
        // Predicated region
        $region61: #{daf_forward.6} parent=55 // pred_check
          %p501 = pneg %p271
        $region62: #{daf_forward.6} parent=55 // pred_check_branch
          %503 = sbr.rel (%p501) target = $region64
        $region63: #{daf_forward.6} parent=55 // pred_region
          %505 = dma.done [#allocation5], 9216
        $region64: #{daf_forward.6} parent=55 // pred_fallthru
          _
        // Predicated region
        $region65: #{daf_forward.6} parent=55 // pred_check
          %p506 = pneg %p292
        $region66: #{daf_forward.6} parent=55 // pred_check_branch
          %508 = sbr.rel (%p506) target = $region68
        $region67: #{daf_forward.6} parent=55 // pred_region
          %510 = dma.done [#allocation5], 16
        $region68: #{daf_forward.6} parent=55 // pred_fallthru
          _
        %s511 = smul.u32 16, %s27
        %p512 = scmp.lt.s32.totalorder %s26, 1
        %s513 = scalar_select %p512, %s26, 1
        %p514 = scmp.lt.s32.totalorder %s511, 31
        %s515 = scalar_select %p514, %s511, 31
        %s516 = smul.addr %s513, 32
        %s517 = sadd.s32 %s515, %s516
        %s518 = smul.addr %s517, 4
        %s519 = scalar_lea.vmem %s0, %s518
        %p520 = pneg %p57
        %p521 = pneg %p54
        %s522 = smul.u32 %s27, 8
        %s523 = ssub.s32 %s522, 1
        %p524 = scmp.gt.s32.totalorder %s523, 0
        %s525 = scalar_select %p524, %s523, 0
        %s526 = smul.u32 2, %s525
        %p527 = scmp.lt.s32.totalorder %s26, 1
        %s528 = scalar_select %p527, %s26, 1
        %p529 = scmp.lt.s32.totalorder %s526, 31
        %s530 = scalar_select %p529, %s526, 31
        %s531 = smul.addr %s528, 32
        %s532 = sadd.s32 %s530, %s531
        %s533 = smul.addr %s532, 4
        %s534 = scalar_lea.vmem %s1, %s533
        %p535 = pneg %p93
        %p536 = pneg %p90
        %s537 = smul.u32 %s27, 8
        %s538 = sadd.s32 %s537, 8
        %p539 = scmp.lt.s32.totalorder %s538, 15
        %s540 = scalar_select %p539, %s538, 15
        %s541 = smul.u32 2, %s540
        %p542 = scmp.lt.s32.totalorder %s26, 1
        %s543 = scalar_select %p542, %s26, 1
        %p544 = scmp.lt.s32.totalorder %s541, 31
        %s545 = scalar_select %p544, %s541, 31
        %s546 = smul.addr %s543, 32
        %s547 = sadd.s32 %s545, %s546
        %s548 = smul.addr %s547, 4
        %s549 = scalar_lea.vmem %s2, %s548
        %p550 = pneg %p129
        %p551 = pneg %p126
        %s552 = smul.u32 16, %s27
        %p553 = scmp.lt.s32.totalorder %s26, 1
        %s554 = scalar_select %p553, %s26, 1
        %p555 = scmp.lt.s32.totalorder %s552, 31
        %s556 = scalar_select %p555, %s552, 31
        %s557 = smul.addr %s554, 32
        %s558 = sadd.s32 %s556, %s557
        %s559 = smul.addr %s558, 4
        %s560 = scalar_lea.vmem %s3, %s559
        %p561 = pneg %p157
        %p562 = pneg %p154
        %s563 = smul.u32 %s27, 8
        %s564 = ssub.s32 %s563, 1
        %p565 = scmp.gt.s32.totalorder %s564, 0
        %s566 = scalar_select %p565, %s564, 0
        %s567 = smul.u32 2, %s566
        %p568 = scmp.lt.s32.totalorder %s26, 1
        %s569 = scalar_select %p568, %s26, 1
        %p570 = scmp.lt.s32.totalorder %s567, 31
        %s571 = scalar_select %p570, %s567, 31
        %s572 = smul.addr %s569, 32
        %s573 = sadd.s32 %s571, %s572
        %s574 = smul.addr %s573, 4
        %s575 = scalar_lea.vmem %s4, %s574
        %p576 = pneg %p193
        %p577 = pneg %p190
        %s578 = smul.u32 %s27, 8
        %s579 = sadd.s32 %s578, 8
        %p580 = scmp.lt.s32.totalorder %s579, 15
        %s581 = scalar_select %p580, %s579, 15
        %s582 = smul.u32 2, %s581
        %p583 = scmp.lt.s32.totalorder %s26, 1
        %s584 = scalar_select %p583, %s26, 1
        %p585 = scmp.lt.s32.totalorder %s582, 31
        %s586 = scalar_select %p585, %s582, 31
        %s587 = smul.addr %s584, 32
        %s588 = sadd.s32 %s586, %s587
        %s589 = smul.addr %s588, 4
        %s590 = scalar_lea.vmem %s5, %s589
        %p591 = pneg %p229
        %p592 = pneg %p226
        %p593 = pneg %p250
        %p594 = pneg %p247
        %p595 = pneg %p271
        %p596 = pneg %p268
        %p597 = pneg %p292
        %p598 = pneg %p289
        %p599 = pneg %p320
        %p600 = pneg %p317
        %s601 = smul.u32 16, %s27
        %p602 = scmp.lt.s32.totalorder %s26, 1
        %s603 = scalar_select %p602, %s26, 1
        %p604 = scmp.lt.s32.totalorder %s601, 31
        %s605 = scalar_select %p604, %s601, 31
        %s606 = smul.addr %s603, 32
        %s607 = sadd.s32 %s605, %s606
        %s608 = smul.addr %s607, 8
        %s609 = scalar_lea.vmem %s9, %s608
        %s610 = smul.u32 16, %s27
        %p611 = scmp.lt.s32.totalorder %s26, 1
        %s612 = scalar_select %p611, %s26, 1
        %p613 = scmp.lt.s32.totalorder %s610, 31
        %s614 = scalar_select %p613, %s610, 31
        %s615 = smul.addr %s612, 32
        %s616 = sadd.s32 %s614, %s615
        %s617 = smul.addr %s616, 4
        %s618 = scalar_lea.vmem %s0, %s617
        %s619 = smul.u32 16, %s27
        %s620 = smul.u32 %s27, 8
        %s621 = ssub.s32 %s620, 1
        %p622 = scmp.gt.s32.totalorder %s621, 0
        %s623 = scalar_select %p622, %s621, 0
        %s624 = smul.u32 2, %s623
        %p625 = scmp.lt.s32.totalorder %s26, 1
        %s626 = scalar_select %p625, %s26, 1
        %p627 = scmp.lt.s32.totalorder %s624, 31
        %s628 = scalar_select %p627, %s624, 31
        %s629 = smul.addr %s626, 32
        %s630 = sadd.s32 %s628, %s629
        %s631 = smul.addr %s630, 4
        %s632 = scalar_lea.vmem %s1, %s631
        %s633 = smul.u32 %s27, 8
        %s634 = ssub.s32 %s633, 1
        %p635 = scmp.gt.s32.totalorder %s634, 0
        %s636 = scalar_select %p635, %s634, 0
        %s637 = smul.u32 2, %s636
        %s638 = smul.u32 %s27, 8
        %s639 = sadd.s32 %s638, 8
        %p640 = scmp.lt.s32.totalorder %s639, 15
        %s641 = scalar_select %p640, %s639, 15
        %s642 = smul.u32 2, %s641
        %p643 = scmp.lt.s32.totalorder %s26, 1
        %s644 = scalar_select %p643, %s26, 1
        %p645 = scmp.lt.s32.totalorder %s642, 31
        %s646 = scalar_select %p645, %s642, 31
        %s647 = smul.addr %s644, 32
        %s648 = sadd.s32 %s646, %s647
        %s649 = smul.addr %s648, 4
        %s650 = scalar_lea.vmem %s2, %s649
        %s651 = smul.u32 %s27, 8
        %s652 = sadd.s32 %s651, 8
        %p653 = scmp.lt.s32.totalorder %s652, 15
        %s654 = scalar_select %p653, %s652, 15
        %s655 = smul.u32 2, %s654
        %s656 = smul.u32 16, %s27
        %p657 = scmp.lt.s32.totalorder %s26, 1
        %s658 = scalar_select %p657, %s26, 1
        %p659 = scmp.lt.s32.totalorder %s656, 31
        %s660 = scalar_select %p659, %s656, 31
        %s661 = smul.addr %s658, 32
        %s662 = sadd.s32 %s660, %s661
        %s663 = smul.addr %s662, 4
        %s664 = scalar_lea.vmem %s3, %s663
        %s665 = smul.u32 16, %s27
        %s666 = smul.u32 %s27, 8
        %s667 = ssub.s32 %s666, 1
        %p668 = scmp.gt.s32.totalorder %s667, 0
        %s669 = scalar_select %p668, %s667, 0
        %s670 = smul.u32 2, %s669
        %p671 = scmp.lt.s32.totalorder %s26, 1
        %s672 = scalar_select %p671, %s26, 1
        %p673 = scmp.lt.s32.totalorder %s670, 31
        %s674 = scalar_select %p673, %s670, 31
        %s675 = smul.addr %s672, 32
        %s676 = sadd.s32 %s674, %s675
        %s677 = smul.addr %s676, 4
        %s678 = scalar_lea.vmem %s4, %s677
        %s679 = smul.u32 %s27, 8
        %s680 = ssub.s32 %s679, 1
        %p681 = scmp.gt.s32.totalorder %s680, 0
        %s682 = scalar_select %p681, %s680, 0
        %s683 = smul.u32 2, %s682
        %s684 = smul.u32 %s27, 8
        %s685 = sadd.s32 %s684, 8
        %p686 = scmp.lt.s32.totalorder %s685, 15
        %s687 = scalar_select %p686, %s685, 15
        %s688 = smul.u32 2, %s687
        %p689 = scmp.lt.s32.totalorder %s26, 1
        %s690 = scalar_select %p689, %s26, 1
        %p691 = scmp.lt.s32.totalorder %s688, 31
        %s692 = scalar_select %p691, %s688, 31
        %s693 = smul.addr %s690, 32
        %s694 = sadd.s32 %s692, %s693
        %s695 = smul.addr %s694, 4
        %s696 = scalar_lea.vmem %s5, %s695
        %s697 = smul.u32 %s27, 8
        %s698 = sadd.s32 %s697, 8
        %p699 = scmp.lt.s32.totalorder %s698, 15
        %s700 = scalar_select %p699, %s698, 15
        %s701 = smul.u32 2, %s700
        %s702 = smul.u32 16, %s27
        %p703 = scmp.lt.s32.totalorder %s26, 1
        %s704 = scalar_select %p703, %s26, 1
        %p705 = scmp.lt.s32.totalorder %s702, 31
        %s706 = scalar_select %p705, %s702, 31
        %s707 = smul.addr %s704, 32
        %s708 = sadd.s32 %s706, %s707
        %s709 = smul.addr %s708, 8
        %s710 = scalar_lea.vmem %s9, %s709
        %s711 = smul.u32 16, %s27
        %s713 = smul.u32 %s27, 8
        %p714 = scmp.gt.s32.totalorder %s713, 0
        %s715 = scalar_select %p714, 1, 0
        %s716 = scvt.s32.f32 %s715
        %p718 = scmp.ne.f32.partialorder %s716, %s716
        %s719 = sshrl.u32 %s716, 16
        %s720 = sand.u32 %s719, 1
        %s721 = sadd.s32 32767, %s720
        %s722 = sadd.s32 %s716, %s721
        %s723 = sand.u32 %s722, 4294901760
        %s724 = scalar_select %p718, 2143289344, %s723
        %s726 = sshrl.u32 %s724, 16
        %s727 = sadd.s32 %s713, 8
        %p728 = scmp.lt.s32.totalorder %s727, 16
        %s729 = scalar_select %p728, 1, 0
        %s730 = scvt.s32.f32 %s729
        %p732 = scmp.ne.f32.partialorder %s730, %s730
        %s733 = sshrl.u32 %s730, 16
        %s734 = sand.u32 %s733, 1
        %s735 = sadd.s32 32767, %s734
        %s736 = sadd.s32 %s730, %s735
        %s737 = sand.u32 %s736, 4294901760
        %s738 = scalar_select %p732, 2143289344, %s737
        %s740 = sshrl.u32 %s738, 16
        %v741 = vlaneseq
        %v742 = vshrl.u32 %v741, 7
        %v743 = vadd.s32 %v742, 8
        %v744 = vadd.s32 %v742, 16
        %v745 = vadd.s32 %v742, 24
        %v746 = vadd.s32 %v742, 32
        %v747 = vadd.s32 %v742, 40
        %v748 = vadd.s32 %v742, 48
        %v749 = vadd.s32 %v742, 56
        %v750 = vadd.s32 %v742, 64
        %v751 = vadd.s32 %v742, 72
        %v752 = vadd.s32 %v742, 80
        %v753 = vadd.s32 %v742, 88
        %v754 = vadd.s32 %v742, 96
        %v755 = vadd.s32 %v742, 104
        %v756 = vadd.s32 %v742, 112
        %v757 = vadd.s32 %v742, 120
        %vm758 = vcmp.lt.s32.totalorder %v742, 0
        %v759 = vsub.s32 0, %v742
        %v760 = vsel %vm758, %v759, %v742
        %v761 = vshrl.u32 %v760, 4
        %v762 = vand.u32 %v760, 15
        %v763 = vsub.s32 0, %v762
        %v764 = vsel %vm758, %v763, %v762
        %vm765 = vcmp.lt.s32.totalorder %v743, 0
        %v766 = vsub.s32 0, %v743
        %v767 = vsel %vm765, %v766, %v743
        %v768 = vshrl.u32 %v767, 4
        %v769 = vand.u32 %v767, 15
        %v770 = vsub.s32 0, %v769
        %v771 = vsel %vm765, %v770, %v769
        %vm772 = vcmp.lt.s32.totalorder %v744, 0
        %v773 = vsub.s32 0, %v744
        %v774 = vsel %vm772, %v773, %v744
        %v775 = vshrl.u32 %v774, 4
        %v776 = vand.u32 %v774, 15
        %v777 = vsub.s32 0, %v776
        %v778 = vsel %vm772, %v777, %v776
        %vm779 = vcmp.lt.s32.totalorder %v745, 0
        %v780 = vsub.s32 0, %v745
        %v781 = vsel %vm779, %v780, %v745
        %v782 = vshrl.u32 %v781, 4
        %v783 = vand.u32 %v781, 15
        %v784 = vsub.s32 0, %v783
        %v785 = vsel %vm779, %v784, %v783
        %vm786 = vcmp.lt.s32.totalorder %v746, 0
        %v787 = vsub.s32 0, %v746
        %v788 = vsel %vm786, %v787, %v746
        %v789 = vshrl.u32 %v788, 4
        %v790 = vand.u32 %v788, 15
        %v791 = vsub.s32 0, %v790
        %v792 = vsel %vm786, %v791, %v790
        %vm793 = vcmp.lt.s32.totalorder %v747, 0
        %v794 = vsub.s32 0, %v747
        %v795 = vsel %vm793, %v794, %v747
        %v796 = vshrl.u32 %v795, 4
        %v797 = vand.u32 %v795, 15
        %v798 = vsub.s32 0, %v797
        %v799 = vsel %vm793, %v798, %v797
        %vm800 = vcmp.lt.s32.totalorder %v748, 0
        %v801 = vsub.s32 0, %v748
        %v802 = vsel %vm800, %v801, %v748
        %v803 = vshrl.u32 %v802, 4
        %v804 = vand.u32 %v802, 15
        %v805 = vsub.s32 0, %v804
        %v806 = vsel %vm800, %v805, %v804
        %vm807 = vcmp.lt.s32.totalorder %v749, 0
        %v808 = vsub.s32 0, %v749
        %v809 = vsel %vm807, %v808, %v749
        %v810 = vshrl.u32 %v809, 4
        %v811 = vand.u32 %v809, 15
        %v812 = vsub.s32 0, %v811
        %v813 = vsel %vm807, %v812, %v811
        %vm814 = vcmp.lt.s32.totalorder %v750, 0
        %v815 = vsub.s32 0, %v750
        %v816 = vsel %vm814, %v815, %v750
        %v817 = vshrl.u32 %v816, 4
        %v818 = vand.u32 %v816, 15
        %v819 = vsub.s32 0, %v818
        %v820 = vsel %vm814, %v819, %v818
        %vm821 = vcmp.lt.s32.totalorder %v751, 0
        %v822 = vsub.s32 0, %v751
        %v823 = vsel %vm821, %v822, %v751
        %v824 = vshrl.u32 %v823, 4
        %v825 = vand.u32 %v823, 15
        %v826 = vsub.s32 0, %v825
        %v827 = vsel %vm821, %v826, %v825
        %vm828 = vcmp.lt.s32.totalorder %v752, 0
        %v829 = vsub.s32 0, %v752
        %v830 = vsel %vm828, %v829, %v752
        %v831 = vshrl.u32 %v830, 4
        %v832 = vand.u32 %v830, 15
        %v833 = vsub.s32 0, %v832
        %v834 = vsel %vm828, %v833, %v832
        %vm835 = vcmp.lt.s32.totalorder %v753, 0
        %v836 = vsub.s32 0, %v753
        %v837 = vsel %vm835, %v836, %v753
        %v838 = vshrl.u32 %v837, 4
        %v839 = vand.u32 %v837, 15
        %v840 = vsub.s32 0, %v839
        %v841 = vsel %vm835, %v840, %v839
        %vm842 = vcmp.lt.s32.totalorder %v754, 0
        %v843 = vsub.s32 0, %v754
        %v844 = vsel %vm842, %v843, %v754
        %v845 = vshrl.u32 %v844, 4
        %v846 = vand.u32 %v844, 15
        %v847 = vsub.s32 0, %v846
        %v848 = vsel %vm842, %v847, %v846
        %vm849 = vcmp.lt.s32.totalorder %v755, 0
        %v850 = vsub.s32 0, %v755
        %v851 = vsel %vm849, %v850, %v755
        %v852 = vshrl.u32 %v851, 4
        %v853 = vand.u32 %v851, 15
        %v854 = vsub.s32 0, %v853
        %v855 = vsel %vm849, %v854, %v853
        %vm856 = vcmp.lt.s32.totalorder %v756, 0
        %v857 = vsub.s32 0, %v756
        %v858 = vsel %vm856, %v857, %v756
        %v859 = vshrl.u32 %v858, 4
        %v860 = vand.u32 %v858, 15
        %v861 = vsub.s32 0, %v860
        %v862 = vsel %vm856, %v861, %v860
        %vm863 = vcmp.lt.s32.totalorder %v757, 0
        %v864 = vsub.s32 0, %v757
        %v865 = vsel %vm863, %v864, %v757
        %v866 = vshrl.u32 %v865, 4
        %v867 = vand.u32 %v865, 15
        %v868 = vsub.s32 0, %v867
        %v869 = vsel %vm863, %v868, %v867
        %vm870 = vcmp.ne.s32.totalorder %v764, 0
        %vm871 = vcmp.ne.s32.totalorder %v771, 0
        %vm872 = vcmp.ne.s32.totalorder %v778, 0
        %vm873 = vcmp.ne.s32.totalorder %v785, 0
        %vm874 = vcmp.ne.s32.totalorder %v792, 0
        %vm875 = vcmp.ne.s32.totalorder %v799, 0
        %vm876 = vcmp.ne.s32.totalorder %v806, 0
        %vm877 = vcmp.ne.s32.totalorder %v813, 0
        %vm878 = vcmp.ne.s32.totalorder %v820, 0
        %vm879 = vcmp.ne.s32.totalorder %v827, 0
        %vm880 = vcmp.ne.s32.totalorder %v834, 0
        %vm881 = vcmp.ne.s32.totalorder %v841, 0
        %vm882 = vcmp.ne.s32.totalorder %v848, 0
        %vm883 = vcmp.ne.s32.totalorder %v855, 0
        %vm884 = vcmp.ne.s32.totalorder %v862, 0
        %vm885 = vcmp.ne.s32.totalorder %v869, 0
        %vm886 = vcmp.lt.s32.totalorder %v764, 0
        %vm887 = vcmp.lt.s32.totalorder %v771, 0
        %vm888 = vcmp.lt.s32.totalorder %v778, 0
        %vm889 = vcmp.lt.s32.totalorder %v785, 0
        %vm890 = vcmp.lt.s32.totalorder %v792, 0
        %vm891 = vcmp.lt.s32.totalorder %v799, 0
        %vm892 = vcmp.lt.s32.totalorder %v806, 0
        %vm893 = vcmp.lt.s32.totalorder %v813, 0
        %vm894 = vcmp.lt.s32.totalorder %v820, 0
        %vm895 = vcmp.lt.s32.totalorder %v827, 0
        %vm896 = vcmp.lt.s32.totalorder %v834, 0
        %vm897 = vcmp.lt.s32.totalorder %v841, 0
        %vm898 = vcmp.lt.s32.totalorder %v848, 0
        %vm899 = vcmp.lt.s32.totalorder %v855, 0
        %vm900 = vcmp.lt.s32.totalorder %v862, 0
        %vm901 = vcmp.lt.s32.totalorder %v869, 0
        %vm902 = vmand %vm886, %vm870
        %vm903 = vmand %vm887, %vm871
        %vm904 = vmand %vm888, %vm872
        %vm905 = vmand %vm889, %vm873
        %vm906 = vmand %vm890, %vm874
        %vm907 = vmand %vm891, %vm875
        %vm908 = vmand %vm892, %vm876
        %vm909 = vmand %vm893, %vm877
        %vm910 = vmand %vm894, %vm878
        %vm911 = vmand %vm895, %vm879
        %vm912 = vmand %vm896, %vm880
        %vm913 = vmand %vm897, %vm881
        %vm914 = vmand %vm898, %vm882
        %vm915 = vmand %vm899, %vm883
        %vm916 = vmand %vm900, %vm884
        %vm917 = vmand %vm901, %vm885
        %v918 = vadd.s32 %v764, 16
        %v919 = vadd.s32 %v771, 16
        %v920 = vadd.s32 %v778, 16
        %v921 = vadd.s32 %v785, 16
        %v922 = vadd.s32 %v792, 16
        %v923 = vadd.s32 %v799, 16
        %v924 = vadd.s32 %v806, 16
        %v925 = vadd.s32 %v813, 16
        %v926 = vadd.s32 %v820, 16
        %v927 = vadd.s32 %v827, 16
        %v928 = vadd.s32 %v834, 16
        %v929 = vadd.s32 %v841, 16
        %v930 = vadd.s32 %v848, 16
        %v931 = vadd.s32 %v855, 16
        %v932 = vadd.s32 %v862, 16
        %v933 = vadd.s32 %v869, 16
        %v934 = vsel %vm902, %v918, %v764
        %v935 = vsel %vm903, %v919, %v771
        %v936 = vsel %vm904, %v920, %v778
        %v937 = vsel %vm905, %v921, %v785
        %v938 = vsel %vm906, %v922, %v792
        %v939 = vsel %vm907, %v923, %v799
        %v940 = vsel %vm908, %v924, %v806
        %v941 = vsel %vm909, %v925, %v813
        %v942 = vsel %vm910, %v926, %v820
        %v943 = vsel %vm911, %v927, %v827
        %v944 = vsel %vm912, %v928, %v834
        %v945 = vsel %vm913, %v929, %v841
        %v946 = vsel %vm914, %v930, %v848
        %v947 = vsel %vm915, %v931, %v855
        %v948 = vsel %vm916, %v932, %v862
        %v949 = vsel %vm917, %v933, %v869
        %vm950 = vcmp.ge.s32.totalorder %v934, 1
        %vm951 = vcmp.ge.s32.totalorder %v935, 1
        %vm952 = vcmp.ge.s32.totalorder %v936, 1
        %vm953 = vcmp.ge.s32.totalorder %v937, 1
        %vm954 = vcmp.ge.s32.totalorder %v938, 1
        %vm955 = vcmp.ge.s32.totalorder %v939, 1
        %vm956 = vcmp.ge.s32.totalorder %v940, 1
        %vm957 = vcmp.ge.s32.totalorder %v941, 1
        %vm958 = vcmp.ge.s32.totalorder %v942, 1
        %vm959 = vcmp.ge.s32.totalorder %v943, 1
        %vm960 = vcmp.ge.s32.totalorder %v944, 1
        %vm961 = vcmp.ge.s32.totalorder %v945, 1
        %vm962 = vcmp.ge.s32.totalorder %v946, 1
        %vm963 = vcmp.ge.s32.totalorder %v947, 1
        %vm964 = vcmp.ge.s32.totalorder %v948, 1
        %vm965 = vcmp.ge.s32.totalorder %v949, 1
        %v966 = vsel %vm950, 1, 0
        %v967 = vsel %vm951, 1, 0
        %v968 = vsel %vm952, 1, 0
        %v969 = vsel %vm953, 1, 0
        %v970 = vsel %vm954, 1, 0
        %v971 = vsel %vm955, 1, 0
        %v972 = vsel %vm956, 1, 0
        %v973 = vsel %vm957, 1, 0
        %v974 = vsel %vm958, 1, 0
        %v975 = vsel %vm959, 1, 0
        %v976 = vsel %vm960, 1, 0
        %v977 = vsel %vm961, 1, 0
        %v978 = vsel %vm962, 1, 0
        %v979 = vsel %vm963, 1, 0
        %v980 = vsel %vm964, 1, 0
        %v981 = vsel %vm965, 1, 0
        %v982 = vcvt.s32.f32 %v966
        %v983 = vcvt.s32.f32 %v967
        %v984 = vcvt.s32.f32 %v968
        %v985 = vcvt.s32.f32 %v969
        %v986 = vcvt.s32.f32 %v970
        %v987 = vcvt.s32.f32 %v971
        %v988 = vcvt.s32.f32 %v972
        %v989 = vcvt.s32.f32 %v973
        %v990 = vcvt.s32.f32 %v974
        %v991 = vcvt.s32.f32 %v975
        %v992 = vcvt.s32.f32 %v976
        %v993 = vcvt.s32.f32 %v977
        %v994 = vcvt.s32.f32 %v978
        %v995 = vcvt.s32.f32 %v979
        %v996 = vcvt.s32.f32 %v980
        %v997 = vcvt.s32.f32 %v981
        %v998 = vpack.c.bf16 %v982, %v982
        %v999 = vpack.c.bf16 %v983, %v983
        %v1000 = vpack.c.bf16 %v984, %v984
        %v1001 = vpack.c.bf16 %v985, %v985
        %v1002 = vpack.c.bf16 %v986, %v986
        %v1003 = vpack.c.bf16 %v987, %v987
        %v1004 = vpack.c.bf16 %v988, %v988
        %v1005 = vpack.c.bf16 %v989, %v989
        %v1006 = vpack.c.bf16 %v990, %v990
        %v1007 = vpack.c.bf16 %v991, %v991
        %v1008 = vpack.c.bf16 %v992, %v992
        %v1009 = vpack.c.bf16 %v993, %v993
        %v1010 = vpack.c.bf16 %v994, %v994
        %v1011 = vpack.c.bf16 %v995, %v995
        %v1012 = vpack.c.bf16 %v996, %v996
        %v1013 = vpack.c.bf16 %v997, %v997
        %vm1014 = vcmp.le.s32.totalorder %v934, 14
        %vm1015 = vcmp.le.s32.totalorder %v935, 14
        %vm1016 = vcmp.le.s32.totalorder %v936, 14
        %vm1017 = vcmp.le.s32.totalorder %v937, 14
        %vm1018 = vcmp.le.s32.totalorder %v938, 14
        %vm1019 = vcmp.le.s32.totalorder %v939, 14
        %vm1020 = vcmp.le.s32.totalorder %v940, 14
        %vm1021 = vcmp.le.s32.totalorder %v941, 14
        %vm1022 = vcmp.le.s32.totalorder %v942, 14
        %vm1023 = vcmp.le.s32.totalorder %v943, 14
        %vm1024 = vcmp.le.s32.totalorder %v944, 14
        %vm1025 = vcmp.le.s32.totalorder %v945, 14
        %vm1026 = vcmp.le.s32.totalorder %v946, 14
        %vm1027 = vcmp.le.s32.totalorder %v947, 14
        %vm1028 = vcmp.le.s32.totalorder %v948, 14
        %vm1029 = vcmp.le.s32.totalorder %v949, 14
        %v1030 = vsel %vm1014, 1, 0
        %v1031 = vsel %vm1015, 1, 0
        %v1032 = vsel %vm1016, 1, 0
        %v1033 = vsel %vm1017, 1, 0
        %v1034 = vsel %vm1018, 1, 0
        %v1035 = vsel %vm1019, 1, 0
        %v1036 = vsel %vm1020, 1, 0
        %v1037 = vsel %vm1021, 1, 0
        %v1038 = vsel %vm1022, 1, 0
        %v1039 = vsel %vm1023, 1, 0
        %v1040 = vsel %vm1024, 1, 0
        %v1041 = vsel %vm1025, 1, 0
        %v1042 = vsel %vm1026, 1, 0
        %v1043 = vsel %vm1027, 1, 0
        %v1044 = vsel %vm1028, 1, 0
        %v1045 = vsel %vm1029, 1, 0
        %v1046 = vcvt.s32.f32 %v1030
        %v1047 = vcvt.s32.f32 %v1031
        %v1048 = vcvt.s32.f32 %v1032
        %v1049 = vcvt.s32.f32 %v1033
        %v1050 = vcvt.s32.f32 %v1034
        %v1051 = vcvt.s32.f32 %v1035
        %v1052 = vcvt.s32.f32 %v1036
        %v1053 = vcvt.s32.f32 %v1037
        %v1054 = vcvt.s32.f32 %v1038
        %v1055 = vcvt.s32.f32 %v1039
        %v1056 = vcvt.s32.f32 %v1040
        %v1057 = vcvt.s32.f32 %v1041
        %v1058 = vcvt.s32.f32 %v1042
        %v1059 = vcvt.s32.f32 %v1043
        %v1060 = vcvt.s32.f32 %v1044
        %v1061 = vcvt.s32.f32 %v1045
        %v1062 = vpack.c.bf16 %v1046, %v1046
        %v1063 = vpack.c.bf16 %v1047, %v1047
        %v1064 = vpack.c.bf16 %v1048, %v1048
        %v1065 = vpack.c.bf16 %v1049, %v1049
        %v1066 = vpack.c.bf16 %v1050, %v1050
        %v1067 = vpack.c.bf16 %v1051, %v1051
        %v1068 = vpack.c.bf16 %v1052, %v1052
        %v1069 = vpack.c.bf16 %v1053, %v1053
        %v1070 = vpack.c.bf16 %v1054, %v1054
        %v1071 = vpack.c.bf16 %v1055, %v1055
        %v1072 = vpack.c.bf16 %v1056, %v1056
        %v1073 = vpack.c.bf16 %v1057, %v1057
        %v1074 = vpack.c.bf16 %v1058, %v1058
        %v1075 = vpack.c.bf16 %v1059, %v1059
        %v1076 = vpack.c.bf16 %v1060, %v1060
        %v1077 = vpack.c.bf16 %v1061, %v1061
        %v1078 = vld [vmem:[%s632] sm:$0xf]
        %v1079 = vld [vmem:[%s632 + $0x4] sm:$0xf]
        %s1080 = sshll.u32 %s726, 16
        %s1081 = sor.u32 %s726, %s1080
        %v1082 = vstv %s1081
        %v1084 = vunpack.c.l.bf16 %v1078
        %v1085 = vunpack.c.l.bf16 %v1079
        %v1086 = vunpack.c.l.bf16 %v1082
        %v1087 = vmul.f32 %v1084, %v1086
        %v1088 = vmul.f32 %v1085, %v1086
        %v1089 = vpack.c.bf16 %v1087, %v1087
        %v1090 = vpack.c.bf16 %v1088, %v1088
        %v1091 = vld [vmem:[%s618] sm:$0xf]
        %v1092 = vld [vmem:[%s618 + $0x4] sm:$0xf]
        %v1093 = vld [vmem:[%s618 + $0x8] sm:$0xf]
        %v1094 = vld [vmem:[%s618 + $0xc] sm:$0xf]
        %v1095 = vld [vmem:[%s618 + $0x10] sm:$0xf]
        %v1096 = vld [vmem:[%s618 + $0x14] sm:$0xf]
        %v1097 = vld [vmem:[%s618 + $0x18] sm:$0xf]
        %v1098 = vld [vmem:[%s618 + $0x1c] sm:$0xf]
        %v1099 = vld [vmem:[%s618 + $0x20] sm:$0xf]
        %v1100 = vld [vmem:[%s618 + $0x24] sm:$0xf]
        %v1101 = vld [vmem:[%s618 + $0x28] sm:$0xf]
        %v1102 = vld [vmem:[%s618 + $0x2c] sm:$0xf]
        %v1103 = vld [vmem:[%s618 + $0x30] sm:$0xf]
        %v1104 = vld [vmem:[%s618 + $0x34] sm:$0xf]
        %v1105 = vld [vmem:[%s618 + $0x38] sm:$0xf]
        %v1106 = vld [vmem:[%s618 + $0x3c] sm:$0xf]
        %v1107 = vld [vmem:[%s650] sm:$0xf]
        %v1108 = vld [vmem:[%s650 + $0x4] sm:$0xf]
        %s1109 = sshll.u32 %s740, 16
        %s1110 = sor.u32 %s740, %s1109
        %v1111 = vstv %s1110
        %v1113 = vunpack.c.l.bf16 %v1107
        %v1114 = vunpack.c.l.bf16 %v1108
        %v1115 = vunpack.c.l.bf16 %v1111
        %v1116 = vmul.f32 %v1113, %v1115
        %v1117 = vmul.f32 %v1114, %v1115
        %v1118 = vpack.c.bf16 %v1116, %v1116
        %v1119 = vpack.c.bf16 %v1117, %v1117
        %v1122 = vunpack.c.l.b16 %v1089
        %v1123 = vunpack.c.l.b16 %v1090
        %v1124 = vpack.c.b16 %v1123, %v1122
        %v1142 = vunpack.c.l.b16 %v1091
        %v1143 = vunpack.c.l.b16 %v1092
        %v1144 = vunpack.c.l.b16 %v1093
        %v1145 = vunpack.c.l.b16 %v1094
        %v1146 = vunpack.c.l.b16 %v1095
        %v1147 = vunpack.c.l.b16 %v1096
        %v1148 = vunpack.c.l.b16 %v1097
        %v1149 = vunpack.c.l.b16 %v1098
        %v1150 = vunpack.c.l.b16 %v1099
        %v1151 = vunpack.c.l.b16 %v1100
        %v1152 = vunpack.c.l.b16 %v1101
        %v1153 = vunpack.c.l.b16 %v1102
        %v1154 = vunpack.c.l.b16 %v1103
        %v1155 = vunpack.c.l.b16 %v1104
        %v1156 = vunpack.c.l.b16 %v1105
        %v1157 = vunpack.c.l.b16 %v1106
        %v1158 = vpack.c.b16 %v1143, %v1142
        %v1159 = vpack.c.b16 %v1145, %v1144
        %v1160 = vpack.c.b16 %v1147, %v1146
        %v1161 = vpack.c.b16 %v1149, %v1148
        %v1162 = vpack.c.b16 %v1151, %v1150
        %v1163 = vpack.c.b16 %v1153, %v1152
        %v1164 = vpack.c.b16 %v1155, %v1154
        %v1165 = vpack.c.b16 %v1157, %v1156
        %v1176 = vunpack.c.l.b16 %v1118
        %v1177 = vunpack.c.l.b16 %v1119
        %v1178 = vpack.c.b16 %v1177, %v1176
        %vm1181 = vcmask 1043456
        %v1182 = vrot.slane 0, 4
        %v1183 = vrot.slane %v1124, 4
        %v1184 = vsel %vm1181, %v1182, %v1183
        %v1185 = vrot.slane %v1158, 4
        %v1186 = vsel %vm1181, %v1183, %v1185
        %v1187 = vrot.slane %v1159, 4
        %v1188 = vsel %vm1181, %v1185, %v1187
        %v1189 = vrot.slane %v1160, 4
        %v1190 = vsel %vm1181, %v1187, %v1189
        %v1191 = vrot.slane %v1161, 4
        %v1192 = vsel %vm1181, %v1189, %v1191
        %v1193 = vrot.slane %v1162, 4
        %v1194 = vsel %vm1181, %v1191, %v1193
        %v1195 = vrot.slane %v1163, 4
        %v1196 = vsel %vm1181, %v1193, %v1195
        %v1197 = vrot.slane %v1164, 4
        %v1198 = vsel %vm1181, %v1195, %v1197
        %v1208 = vunpack.c.l.bf16 %v1184
        %v1209 = vunpack.c.h.bf16 %v1184
        %v1210 = vunpack.c.l.bf16 %v1186
        %v1211 = vunpack.c.h.bf16 %v1186
        %v1212 = vunpack.c.l.bf16 %v1188
        %v1213 = vunpack.c.h.bf16 %v1188
        %v1214 = vunpack.c.l.bf16 %v1190
        %v1215 = vunpack.c.h.bf16 %v1190
        %v1216 = vunpack.c.l.bf16 %v1192
        %v1217 = vunpack.c.h.bf16 %v1192
        %v1218 = vunpack.c.l.bf16 %v1194
        %v1219 = vunpack.c.h.bf16 %v1194
        %v1220 = vunpack.c.l.bf16 %v1196
        %v1221 = vunpack.c.h.bf16 %v1196
        %v1222 = vunpack.c.l.bf16 %v1198
        %v1223 = vunpack.c.h.bf16 %v1198
        %v1224 = vunpack.c.l.bf16 %v1197
        %v1225 = vunpack.c.l.bf16 %v998
        %v1226 = vunpack.c.l.bf16 %v999
        %v1227 = vunpack.c.l.bf16 %v1000
        %v1228 = vunpack.c.l.bf16 %v1001
        %v1229 = vunpack.c.l.bf16 %v1002
        %v1230 = vunpack.c.l.bf16 %v1003
        %v1231 = vunpack.c.l.bf16 %v1004
        %v1232 = vunpack.c.l.bf16 %v1005
        %v1233 = vunpack.c.l.bf16 %v1006
        %v1234 = vunpack.c.l.bf16 %v1007
        %v1235 = vunpack.c.l.bf16 %v1008
        %v1236 = vunpack.c.l.bf16 %v1009
        %v1237 = vunpack.c.l.bf16 %v1010
        %v1238 = vunpack.c.l.bf16 %v1011
        %v1239 = vunpack.c.l.bf16 %v1012
        %v1240 = vunpack.c.l.bf16 %v1013
        %vm1257 = vcmask 1046528
        %v1258 = vrot.slane %v1225, 1
        %v1259 = vrot.slane %v1226, 1
        %v1260 = vsel %vm1257, %v1258, %v1259
        %v1261 = vrot.slane %v1227, 1
        %v1262 = vsel %vm1257, %v1259, %v1261
        %v1263 = vrot.slane %v1228, 1
        %v1264 = vsel %vm1257, %v1261, %v1263
        %v1265 = vrot.slane %v1229, 1
        %v1266 = vsel %vm1257, %v1263, %v1265
        %v1267 = vrot.slane %v1230, 1
        %v1268 = vsel %vm1257, %v1265, %v1267
        %v1269 = vrot.slane %v1231, 1
        %v1270 = vsel %vm1257, %v1267, %v1269
        %v1271 = vrot.slane %v1232, 1
        %v1272 = vsel %vm1257, %v1269, %v1271
        %v1273 = vrot.slane %v1233, 1
        %v1274 = vsel %vm1257, %v1271, %v1273
        %v1275 = vrot.slane %v1234, 1
        %v1276 = vsel %vm1257, %v1273, %v1275
        %v1277 = vrot.slane %v1235, 1
        %v1278 = vsel %vm1257, %v1275, %v1277
        %v1279 = vrot.slane %v1236, 1
        %v1280 = vsel %vm1257, %v1277, %v1279
        %v1281 = vrot.slane %v1237, 1
        %v1282 = vsel %vm1257, %v1279, %v1281
        %v1283 = vrot.slane %v1238, 1
        %v1284 = vsel %vm1257, %v1281, %v1283
        %v1285 = vrot.slane %v1239, 1
        %v1286 = vsel %vm1257, %v1283, %v1285
        %v1287 = vrot.slane %v1240, 1
        %v1288 = vsel %vm1257, %v1285, %v1287
        %v1306 = vmul.f32 %v1208, %v1258
        %v1307 = vmul.f32 %v1209, %v1260
        %v1308 = vmul.f32 %v1210, %v1262
        %v1309 = vmul.f32 %v1211, %v1264
        %v1310 = vmul.f32 %v1212, %v1266
        %v1311 = vmul.f32 %v1213, %v1268
        %v1312 = vmul.f32 %v1214, %v1270
        %v1313 = vmul.f32 %v1215, %v1272
        %v1314 = vmul.f32 %v1216, %v1274
        %v1315 = vmul.f32 %v1217, %v1276
        %v1316 = vmul.f32 %v1218, %v1278
        %v1317 = vmul.f32 %v1219, %v1280
        %v1318 = vmul.f32 %v1220, %v1282
        %v1319 = vmul.f32 %v1221, %v1284
        %v1320 = vmul.f32 %v1222, %v1286
        %v1321 = vmul.f32 %v1223, %v1288
        %v1322 = vmul.f32 %v1224, %v1287
        %v1323 = vpack.c.bf16 %v1307, %v1306
        %v1324 = vpack.c.bf16 %v1309, %v1308
        %v1325 = vpack.c.bf16 %v1311, %v1310
        %v1326 = vpack.c.bf16 %v1313, %v1312
        %v1327 = vpack.c.bf16 %v1315, %v1314
        %v1328 = vpack.c.bf16 %v1317, %v1316
        %v1329 = vpack.c.bf16 %v1319, %v1318
        %v1330 = vpack.c.bf16 %v1321, %v1320
        %v1331 = vpack.c.bf16 %v1322, %v1322
        %v1332 = vld [vmem:[#allocation2] sm:$0xf]
        %v1333 = vld [vmem:[#allocation2 + $0x4] sm:$0xf]
        %v1334 = vld [vmem:[#allocation2 + $0x8] sm:$0xf]
        %v1335 = vld [vmem:[#allocation2 + $0xc] sm:$0xf]
        %v1336 = vld [vmem:[#allocation2 + $0x10] sm:$0xf]
        %v1337 = vld [vmem:[#allocation2 + $0x14] sm:$0xf]
        %v1338 = vld [vmem:[#allocation2 + $0x18] sm:$0xf]
        %v1339 = vld [vmem:[#allocation2 + $0x1c] sm:$0xf]
        %v1340 = vld [vmem:[#allocation2 + $0x20] sm:$0xf]
        %v1341 = vld [vmem:[#allocation2 + $0x24] sm:$0xf]
        %v1342 = vld [vmem:[#allocation2 + $0x28] sm:$0xf]
        %v1343 = vld [vmem:[#allocation2 + $0x2c] sm:$0xf]
        %v1344 = vld [vmem:[#allocation2 + $0x30] sm:$0xf]
        %v1345 = vld [vmem:[#allocation2 + $0x34] sm:$0xf]
        %v1346 = vld [vmem:[#allocation2 + $0x38] sm:$0xf]
        %v1347 = vld [vmem:[#allocation2 + $0x3c] sm:$0xf]
        %s1348 = scalar_lea.vmem [#allocation2], 64
        %v1349 = vld [vmem:[%s1348] sm:$0xf]
        %v1350 = vld [vmem:[%s1348 + $0x4] sm:$0xf]
        %v1351 = vld [vmem:[%s1348 + $0x8] sm:$0xf]
        %v1352 = vld [vmem:[%s1348 + $0xc] sm:$0xf]
        %v1353 = vld [vmem:[%s1348 + $0x10] sm:$0xf]
        %v1354 = vld [vmem:[%s1348 + $0x14] sm:$0xf]
        %v1355 = vld [vmem:[%s1348 + $0x18] sm:$0xf]
        %v1356 = vld [vmem:[%s1348 + $0x1c] sm:$0xf]
        %v1357 = vld [vmem:[%s1348 + $0x20] sm:$0xf]
        %v1358 = vld [vmem:[%s1348 + $0x24] sm:$0xf]
        %v1359 = vld [vmem:[%s1348 + $0x28] sm:$0xf]
        %v1360 = vld [vmem:[%s1348 + $0x2c] sm:$0xf]
        %v1361 = vld [vmem:[%s1348 + $0x30] sm:$0xf]
        %v1362 = vld [vmem:[%s1348 + $0x34] sm:$0xf]
        %v1363 = vld [vmem:[%s1348 + $0x38] sm:$0xf]
        %v1364 = vld [vmem:[%s1348 + $0x3c] sm:$0xf]
        %v1381 = vunpack.c.l.b16 %v1349
        %v1382 = vunpack.c.l.b16 %v1350
        %v1383 = vunpack.c.l.b16 %v1351
        %v1384 = vunpack.c.l.b16 %v1352
        %v1385 = vunpack.c.l.b16 %v1353
        %v1386 = vunpack.c.l.b16 %v1354
        %v1387 = vunpack.c.l.b16 %v1355
        %v1388 = vunpack.c.l.b16 %v1356
        %v1389 = vunpack.c.l.b16 %v1357
        %v1390 = vunpack.c.l.b16 %v1358
        %v1391 = vunpack.c.l.b16 %v1359
        %v1392 = vunpack.c.l.b16 %v1360
        %v1393 = vunpack.c.l.b16 %v1361
        %v1394 = vunpack.c.l.b16 %v1362
        %v1395 = vunpack.c.l.b16 %v1363
        %v1396 = vunpack.c.l.b16 %v1364
        %v1397 = vpack.c.b16 %v1382, %v1381
        %v1398 = vpack.c.b16 %v1384, %v1383
        %v1399 = vpack.c.b16 %v1386, %v1385
        %v1400 = vpack.c.b16 %v1388, %v1387
        %v1401 = vpack.c.b16 %v1390, %v1389
        %v1402 = vpack.c.b16 %v1392, %v1391
        %v1403 = vpack.c.b16 %v1394, %v1393
        %v1404 = vpack.c.b16 %v1396, %v1395
        %1413 = vmatpush.bf16.msra.mxu0 %v1404
        %1414 = vmatpush.bf16.msra.mxu0 %v1403
        %1415 = vmatpush.bf16.msra.mxu0 %v1402
        %1416 = vmatpush.bf16.msra.mxu0 %v1401
        %1417 = vmatpush.bf16.msra.mxu0 %v1400
        %1418 = vmatpush.bf16.msra.mxu0 %v1399
        %1419 = vmatpush.bf16.msra.mxu0 %v1398
        %1420 = vmatpush.bf16.msra.mxu0 %v1397
        %1421 = vmatmul.bf16.gmra.mxu0 %v1124
        %v1422 = vpop.f32.mrf.mxu0
        %v1423 = vadd.f32 0.0, %v1422
        %v1424 = vpop.f32.mrf.mxu0
        %v1425 = vadd.f32 0.0, %v1424
        %1426 = vmatmul.bf16.gmra.mxu0 %v1158
        %v1427 = vpop.f32.mrf.mxu0
        %v1428 = vadd.f32 0.0, %v1427
        %v1429 = vpop.f32.mrf.mxu0
        %v1430 = vadd.f32 0.0, %v1429
        %1431 = vmatmul.bf16.gmra.mxu0 %v1159
        %v1432 = vpop.f32.mrf.mxu0
        %v1433 = vadd.f32 0.0, %v1432
        %v1434 = vpop.f32.mrf.mxu0
        %v1435 = vadd.f32 0.0, %v1434
        %1436 = vmatmul.bf16.gmra.mxu0 %v1160
        %v1437 = vpop.f32.mrf.mxu0
        %v1438 = vadd.f32 0.0, %v1437
        %v1439 = vpop.f32.mrf.mxu0
        %v1440 = vadd.f32 0.0, %v1439
        %1441 = vmatmul.bf16.gmra.mxu0 %v1161
        %v1442 = vpop.f32.mrf.mxu0
        %v1443 = vadd.f32 0.0, %v1442
        %v1444 = vpop.f32.mrf.mxu0
        %v1445 = vadd.f32 0.0, %v1444
        %1446 = vmatmul.bf16.gmra.mxu0 %v1162
        %v1447 = vpop.f32.mrf.mxu0
        %v1448 = vadd.f32 0.0, %v1447
        %v1449 = vpop.f32.mrf.mxu0
        %v1450 = vadd.f32 0.0, %v1449
        %1451 = vmatmul.bf16.gmra.mxu0 %v1163
        %v1452 = vpop.f32.mrf.mxu0
        %v1453 = vadd.f32 0.0, %v1452
        %v1454 = vpop.f32.mrf.mxu0
        %v1455 = vadd.f32 0.0, %v1454
        %1456 = vmatmul.bf16.gmra.mxu0 %v1164
        %v1457 = vpop.f32.mrf.mxu0
        %v1458 = vadd.f32 0.0, %v1457
        %v1459 = vpop.f32.mrf.mxu0
        %v1460 = vadd.f32 0.0, %v1459
        %1461 = vdwg.mxu0
        %vm1462 = vsmask.f32 4352
        %v1464 = vshrl.u32 %v1323, 16
        %v1466 = vrot.slane %v1464, 3
        %v1467 = vshll.u32 %v1323, 16
        %v1469 = vrot.slane %v1467, 4
        %v1470 = vor.u32 %v1466, %v1469
        %v1472 = vshrl.u32 %v1324, 16
        %v1474 = vrot.slane %v1472, 3
        %v1475 = vshll.u32 %v1324, 16
        %v1477 = vrot.slane %v1475, 4
        %v1478 = vor.u32 %v1474, %v1477
        %v1479 = vsel %vm1462, %v1470, %v1478
        %v1481 = vshrl.u32 %v1325, 16
        %v1483 = vrot.slane %v1481, 3
        %v1484 = vshll.u32 %v1325, 16
        %v1486 = vrot.slane %v1484, 4
        %v1487 = vor.u32 %v1483, %v1486
        %v1488 = vsel %vm1462, %v1478, %v1487
        %v1490 = vshrl.u32 %v1326, 16
        %v1492 = vrot.slane %v1490, 3
        %v1493 = vshll.u32 %v1326, 16
        %v1495 = vrot.slane %v1493, 4
        %v1496 = vor.u32 %v1492, %v1495
        %v1497 = vsel %vm1462, %v1487, %v1496
        %v1499 = vshrl.u32 %v1327, 16
        %v1501 = vrot.slane %v1499, 3
        %v1502 = vshll.u32 %v1327, 16
        %v1504 = vrot.slane %v1502, 4
        %v1505 = vor.u32 %v1501, %v1504
        %v1506 = vsel %vm1462, %v1496, %v1505
        %v1508 = vshrl.u32 %v1328, 16
        %v1510 = vrot.slane %v1508, 3
        %v1511 = vshll.u32 %v1328, 16
        %v1513 = vrot.slane %v1511, 4
        %v1514 = vor.u32 %v1510, %v1513
        %v1515 = vsel %vm1462, %v1505, %v1514
        %v1517 = vshrl.u32 %v1329, 16
        %v1519 = vrot.slane %v1517, 3
        %v1520 = vshll.u32 %v1329, 16
        %v1522 = vrot.slane %v1520, 4
        %v1523 = vor.u32 %v1519, %v1522
        %v1524 = vsel %vm1462, %v1514, %v1523
        %v1526 = vshrl.u32 %v1330, 16
        %v1528 = vrot.slane %v1526, 3
        %v1529 = vshll.u32 %v1330, 16
        %v1531 = vrot.slane %v1529, 4
        %v1532 = vor.u32 %v1528, %v1531
        %v1533 = vsel %vm1462, %v1523, %v1532
        %v1535 = vshrl.u32 %v1331, 16
        %v1537 = vrot.slane %v1535, 3
        %v1538 = vshll.u32 %v1331, 16
        %v1540 = vrot.slane %v1538, 4
        %v1541 = vor.u32 %v1537, %v1540
        %v1542 = vsel %vm1462, %v1532, %v1541
        %v1567 = vunpack.c.l.b16 %v1332
        %v1568 = vunpack.c.l.b16 %v1333
        %v1569 = vunpack.c.l.b16 %v1334
        %v1570 = vunpack.c.l.b16 %v1335
        %v1571 = vunpack.c.l.b16 %v1336
        %v1572 = vunpack.c.l.b16 %v1337
        %v1573 = vunpack.c.l.b16 %v1338
        %v1574 = vunpack.c.l.b16 %v1339
        %v1575 = vunpack.c.l.b16 %v1340
        %v1576 = vunpack.c.l.b16 %v1341
        %v1577 = vunpack.c.l.b16 %v1342
        %v1578 = vunpack.c.l.b16 %v1343
        %v1579 = vunpack.c.l.b16 %v1344
        %v1580 = vunpack.c.l.b16 %v1345
        %v1581 = vunpack.c.l.b16 %v1346
        %v1582 = vunpack.c.l.b16 %v1347
        %v1583 = vpack.c.b16 %v1568, %v1567
        %v1584 = vpack.c.b16 %v1570, %v1569
        %v1585 = vpack.c.b16 %v1572, %v1571
        %v1586 = vpack.c.b16 %v1574, %v1573
        %v1587 = vpack.c.b16 %v1576, %v1575
        %v1588 = vpack.c.b16 %v1578, %v1577
        %v1589 = vpack.c.b16 %v1580, %v1579
        %v1590 = vpack.c.b16 %v1582, %v1581
        %1599 = vmatpush.bf16.msra.mxu0 %v1590
        %1600 = vmatpush.bf16.msra.mxu0 %v1589
        %1601 = vmatpush.bf16.msra.mxu0 %v1588
        %1602 = vmatpush.bf16.msra.mxu0 %v1587
        %1603 = vmatpush.bf16.msra.mxu0 %v1586
        %1604 = vmatpush.bf16.msra.mxu0 %v1585
        %1605 = vmatpush.bf16.msra.mxu0 %v1584
        %1606 = vmatpush.bf16.msra.mxu0 %v1583
        %1607 = vmatmul.bf16.gmra.mxu0 %v1479
        %v1608 = vpop.f32.mrf.mxu0
        %v1609 = vadd.f32 %v1423, %v1608
        %v1610 = vpop.f32.mrf.mxu0
        %v1611 = vadd.f32 %v1425, %v1610
        %1612 = vmatmul.bf16.gmra.mxu0 %v1488
        %v1613 = vpop.f32.mrf.mxu0
        %v1614 = vadd.f32 %v1428, %v1613
        %v1615 = vpop.f32.mrf.mxu0
        %v1616 = vadd.f32 %v1430, %v1615
        %1617 = vmatmul.bf16.gmra.mxu0 %v1497
        %v1618 = vpop.f32.mrf.mxu0
        %v1619 = vadd.f32 %v1433, %v1618
        %v1620 = vpop.f32.mrf.mxu0
        %v1621 = vadd.f32 %v1435, %v1620
        %1622 = vmatmul.bf16.gmra.mxu0 %v1506
        %v1623 = vpop.f32.mrf.mxu0
        %v1624 = vadd.f32 %v1438, %v1623
        %v1625 = vpop.f32.mrf.mxu0
        %v1626 = vadd.f32 %v1440, %v1625
        %1627 = vmatmul.bf16.gmra.mxu0 %v1515
        %v1628 = vpop.f32.mrf.mxu0
        %v1629 = vadd.f32 %v1443, %v1628
        %v1630 = vpop.f32.mrf.mxu0
        %v1631 = vadd.f32 %v1445, %v1630
        %1632 = vmatmul.bf16.gmra.mxu0 %v1524
        %v1633 = vpop.f32.mrf.mxu0
        %v1634 = vadd.f32 %v1448, %v1633
        %v1635 = vpop.f32.mrf.mxu0
        %v1636 = vadd.f32 %v1450, %v1635
        %1637 = vmatmul.bf16.gmra.mxu0 %v1533
        %v1638 = vpop.f32.mrf.mxu0
        %v1639 = vadd.f32 %v1453, %v1638
        %v1640 = vpop.f32.mrf.mxu0
        %v1641 = vadd.f32 %v1455, %v1640
        %1642 = vmatmul.bf16.gmra.mxu0 %v1542
        %v1643 = vpop.f32.mrf.mxu0
        %v1644 = vadd.f32 %v1458, %v1643
        %v1645 = vpop.f32.mrf.mxu0
        %v1646 = vadd.f32 %v1460, %v1645
        %1647 = vdwg.mxu0
        %v1648 = vunpack.c.l.bf16 %v1124
        %v1649 = vunpack.c.h.bf16 %v1124
        %v1650 = vunpack.c.l.bf16 %v1158
        %v1651 = vunpack.c.h.bf16 %v1158
        %v1652 = vunpack.c.l.bf16 %v1159
        %v1653 = vunpack.c.h.bf16 %v1159
        %v1654 = vunpack.c.l.bf16 %v1160
        %v1655 = vunpack.c.h.bf16 %v1160
        %v1656 = vunpack.c.l.bf16 %v1161
        %v1657 = vunpack.c.h.bf16 %v1161
        %v1658 = vunpack.c.l.bf16 %v1162
        %v1659 = vunpack.c.h.bf16 %v1162
        %v1660 = vunpack.c.l.bf16 %v1163
        %v1661 = vunpack.c.h.bf16 %v1163
        %v1662 = vunpack.c.l.bf16 %v1164
        %v1663 = vunpack.c.h.bf16 %v1164
        %v1664 = vunpack.c.l.bf16 %v1165
        %v1665 = vunpack.c.l.bf16 %v1062
        %v1666 = vunpack.c.l.bf16 %v1063
        %v1667 = vunpack.c.l.bf16 %v1064
        %v1668 = vunpack.c.l.bf16 %v1065
        %v1669 = vunpack.c.l.bf16 %v1066
        %v1670 = vunpack.c.l.bf16 %v1067
        %v1671 = vunpack.c.l.bf16 %v1068
        %v1672 = vunpack.c.l.bf16 %v1069
        %v1673 = vunpack.c.l.bf16 %v1070
        %v1674 = vunpack.c.l.bf16 %v1071
        %v1675 = vunpack.c.l.bf16 %v1072
        %v1676 = vunpack.c.l.bf16 %v1073
        %v1677 = vunpack.c.l.bf16 %v1074
        %v1678 = vunpack.c.l.bf16 %v1075
        %v1679 = vunpack.c.l.bf16 %v1076
        %v1680 = vunpack.c.l.bf16 %v1077
        %vm1697 = vcmask 1040384
        %v1698 = vrot.slane %v1665, 7
        %v1699 = vrot.slane %v1666, 7
        %v1700 = vsel %vm1697, %v1698, %v1699
        %v1701 = vrot.slane %v1667, 7
        %v1702 = vsel %vm1697, %v1699, %v1701
        %v1703 = vrot.slane %v1668, 7
        %v1704 = vsel %vm1697, %v1701, %v1703
        %v1705 = vrot.slane %v1669, 7
        %v1706 = vsel %vm1697, %v1703, %v1705
        %v1707 = vrot.slane %v1670, 7
        %v1708 = vsel %vm1697, %v1705, %v1707
        %v1709 = vrot.slane %v1671, 7
        %v1710 = vsel %vm1697, %v1707, %v1709
        %v1711 = vrot.slane %v1672, 7
        %v1712 = vsel %vm1697, %v1709, %v1711
        %v1713 = vrot.slane %v1673, 7
        %v1714 = vsel %vm1697, %v1711, %v1713
        %v1715 = vrot.slane %v1674, 7
        %v1716 = vsel %vm1697, %v1713, %v1715
        %v1717 = vrot.slane %v1675, 7
        %v1718 = vsel %vm1697, %v1715, %v1717
        %v1719 = vrot.slane %v1676, 7
        %v1720 = vsel %vm1697, %v1717, %v1719
        %v1721 = vrot.slane %v1677, 7
        %v1722 = vsel %vm1697, %v1719, %v1721
        %v1723 = vrot.slane %v1678, 7
        %v1724 = vsel %vm1697, %v1721, %v1723
        %v1725 = vrot.slane %v1679, 7
        %v1726 = vsel %vm1697, %v1723, %v1725
        %v1727 = vrot.slane %v1680, 7
        %v1728 = vsel %vm1697, %v1725, %v1727
        %v1746 = vmul.f32 %v1648, %v1698
        %v1747 = vmul.f32 %v1649, %v1700
        %v1748 = vmul.f32 %v1650, %v1702
        %v1749 = vmul.f32 %v1651, %v1704
        %v1750 = vmul.f32 %v1652, %v1706
        %v1751 = vmul.f32 %v1653, %v1708
        %v1752 = vmul.f32 %v1654, %v1710
        %v1753 = vmul.f32 %v1655, %v1712
        %v1754 = vmul.f32 %v1656, %v1714
        %v1755 = vmul.f32 %v1657, %v1716
        %v1756 = vmul.f32 %v1658, %v1718
        %v1757 = vmul.f32 %v1659, %v1720
        %v1758 = vmul.f32 %v1660, %v1722
        %v1759 = vmul.f32 %v1661, %v1724
        %v1760 = vmul.f32 %v1662, %v1726
        %v1761 = vmul.f32 %v1663, %v1728
        %v1762 = vmul.f32 %v1664, %v1727
        %v1763 = vpack.c.bf16 %v1747, %v1746
        %v1764 = vpack.c.bf16 %v1749, %v1748
        %v1765 = vpack.c.bf16 %v1751, %v1750
        %v1766 = vpack.c.bf16 %v1753, %v1752
        %v1767 = vpack.c.bf16 %v1755, %v1754
        %v1768 = vpack.c.bf16 %v1757, %v1756
        %v1769 = vpack.c.bf16 %v1759, %v1758
        %v1770 = vpack.c.bf16 %v1761, %v1760
        %v1771 = vpack.c.bf16 %v1762, %v1762
        %s1772 = scalar_lea.vmem [#allocation2], 128
        %v1773 = vld [vmem:[%s1772] sm:$0xf]
        %v1774 = vld [vmem:[%s1772 + $0x4] sm:$0xf]
        %v1775 = vld [vmem:[%s1772 + $0x8] sm:$0xf]
        %v1776 = vld [vmem:[%s1772 + $0xc] sm:$0xf]
        %v1777 = vld [vmem:[%s1772 + $0x10] sm:$0xf]
        %v1778 = vld [vmem:[%s1772 + $0x14] sm:$0xf]
        %v1779 = vld [vmem:[%s1772 + $0x18] sm:$0xf]
        %v1780 = vld [vmem:[%s1772 + $0x1c] sm:$0xf]
        %v1781 = vld [vmem:[%s1772 + $0x20] sm:$0xf]
        %v1782 = vld [vmem:[%s1772 + $0x24] sm:$0xf]
        %v1783 = vld [vmem:[%s1772 + $0x28] sm:$0xf]
        %v1784 = vld [vmem:[%s1772 + $0x2c] sm:$0xf]
        %v1785 = vld [vmem:[%s1772 + $0x30] sm:$0xf]
        %v1786 = vld [vmem:[%s1772 + $0x34] sm:$0xf]
        %v1787 = vld [vmem:[%s1772 + $0x38] sm:$0xf]
        %v1788 = vld [vmem:[%s1772 + $0x3c] sm:$0xf]
        %vm1789 = vsmask.f32 7424
        %v1791 = vshrl.u32 %v1763, 16
        %v1793 = vshll.u32 %v1763, 16
        %v1795 = vrot.slane %v1793, 1
        %v1796 = vor.u32 %v1791, %v1795
        %v1798 = vshll.u32 %v1764, 16
        %v1800 = vrot.slane %v1798, 1
        %v1801 = vsel %vm1789, %v1796, %v1800
        %v1802 = vshrl.u32 %v1764, 16
        %v1804 = vor.u32 %v1802, %v1800
        %v1806 = vshll.u32 %v1765, 16
        %v1808 = vrot.slane %v1806, 1
        %v1809 = vsel %vm1789, %v1804, %v1808
        %v1810 = vshrl.u32 %v1765, 16
        %v1812 = vor.u32 %v1810, %v1808
        %v1814 = vshll.u32 %v1766, 16
        %v1816 = vrot.slane %v1814, 1
        %v1817 = vsel %vm1789, %v1812, %v1816
        %v1818 = vshrl.u32 %v1766, 16
        %v1820 = vor.u32 %v1818, %v1816
        %v1822 = vshll.u32 %v1767, 16
        %v1824 = vrot.slane %v1822, 1
        %v1825 = vsel %vm1789, %v1820, %v1824
        %v1826 = vshrl.u32 %v1767, 16
        %v1828 = vor.u32 %v1826, %v1824
        %v1830 = vshll.u32 %v1768, 16
        %v1832 = vrot.slane %v1830, 1
        %v1833 = vsel %vm1789, %v1828, %v1832
        %v1834 = vshrl.u32 %v1768, 16
        %v1836 = vor.u32 %v1834, %v1832
        %v1838 = vshll.u32 %v1769, 16
        %v1840 = vrot.slane %v1838, 1
        %v1841 = vsel %vm1789, %v1836, %v1840
        %v1842 = vshrl.u32 %v1769, 16
        %v1844 = vor.u32 %v1842, %v1840
        %v1846 = vshll.u32 %v1770, 16
        %v1848 = vrot.slane %v1846, 1
        %v1849 = vsel %vm1789, %v1844, %v1848
        %v1850 = vshrl.u32 %v1770, 16
        %v1852 = vor.u32 %v1850, %v1848
        %v1854 = vshll.u32 %v1771, 16
        %v1856 = vrot.slane %v1854, 1
        %v1857 = vsel %vm1789, %v1852, %v1856
        %v1882 = vunpack.c.l.b16 %v1773
        %v1883 = vunpack.c.l.b16 %v1774
        %v1884 = vunpack.c.l.b16 %v1775
        %v1885 = vunpack.c.l.b16 %v1776
        %v1886 = vunpack.c.l.b16 %v1777
        %v1887 = vunpack.c.l.b16 %v1778
        %v1888 = vunpack.c.l.b16 %v1779
        %v1889 = vunpack.c.l.b16 %v1780
        %v1890 = vunpack.c.l.b16 %v1781
        %v1891 = vunpack.c.l.b16 %v1782
        %v1892 = vunpack.c.l.b16 %v1783
        %v1893 = vunpack.c.l.b16 %v1784
        %v1894 = vunpack.c.l.b16 %v1785
        %v1895 = vunpack.c.l.b16 %v1786
        %v1896 = vunpack.c.l.b16 %v1787
        %v1897 = vunpack.c.l.b16 %v1788
        %v1898 = vpack.c.b16 %v1883, %v1882
        %v1899 = vpack.c.b16 %v1885, %v1884
        %v1900 = vpack.c.b16 %v1887, %v1886
        %v1901 = vpack.c.b16 %v1889, %v1888
        %v1902 = vpack.c.b16 %v1891, %v1890
        %v1903 = vpack.c.b16 %v1893, %v1892
        %v1904 = vpack.c.b16 %v1895, %v1894
        %v1905 = vpack.c.b16 %v1897, %v1896
        %1914 = vmatpush.bf16.msra.mxu0 %v1905
        %1915 = vmatpush.bf16.msra.mxu0 %v1904
        %1916 = vmatpush.bf16.msra.mxu0 %v1903
        %1917 = vmatpush.bf16.msra.mxu0 %v1902
        %1918 = vmatpush.bf16.msra.mxu0 %v1901
        %1919 = vmatpush.bf16.msra.mxu0 %v1900
        %1920 = vmatpush.bf16.msra.mxu0 %v1899
        %1921 = vmatpush.bf16.msra.mxu0 %v1898
        %1922 = vmatmul.bf16.gmra.mxu0 %v1801
        %v1923 = vpop.f32.mrf.mxu0
        %v1924 = vadd.f32 0.0, %v1923
        %v1925 = vpop.f32.mrf.mxu0
        %v1926 = vadd.f32 0.0, %v1925
        %1927 = vmatmul.bf16.gmra.mxu0 %v1809
        %v1928 = vpop.f32.mrf.mxu0
        %v1929 = vadd.f32 0.0, %v1928
        %v1930 = vpop.f32.mrf.mxu0
        %v1931 = vadd.f32 0.0, %v1930
        %1932 = vmatmul.bf16.gmra.mxu0 %v1817
        %v1933 = vpop.f32.mrf.mxu0
        %v1934 = vadd.f32 0.0, %v1933
        %v1935 = vpop.f32.mrf.mxu0
        %v1936 = vadd.f32 0.0, %v1935
        %1937 = vmatmul.bf16.gmra.mxu0 %v1825
        %v1938 = vpop.f32.mrf.mxu0
        %v1939 = vadd.f32 0.0, %v1938
        %v1940 = vpop.f32.mrf.mxu0
        %v1941 = vadd.f32 0.0, %v1940
        %1942 = vmatmul.bf16.gmra.mxu0 %v1833
        %v1943 = vpop.f32.mrf.mxu0
        %v1944 = vadd.f32 0.0, %v1943
        %v1945 = vpop.f32.mrf.mxu0
        %v1946 = vadd.f32 0.0, %v1945
        %1947 = vmatmul.bf16.gmra.mxu0 %v1841
        %v1948 = vpop.f32.mrf.mxu0
        %v1949 = vadd.f32 0.0, %v1948
        %v1950 = vpop.f32.mrf.mxu0
        %v1951 = vadd.f32 0.0, %v1950
        %1952 = vmatmul.bf16.gmra.mxu0 %v1849
        %v1953 = vpop.f32.mrf.mxu0
        %v1954 = vadd.f32 0.0, %v1953
        %v1955 = vpop.f32.mrf.mxu0
        %v1956 = vadd.f32 0.0, %v1955
        %1957 = vmatmul.bf16.gmra.mxu0 %v1857
        %v1958 = vpop.f32.mrf.mxu0
        %v1959 = vadd.f32 0.0, %v1958
        %v1960 = vpop.f32.mrf.mxu0
        %v1961 = vadd.f32 0.0, %v1960
        %1962 = vdwg.mxu0
        %v1963 = vadd.f32 %v1609, %v1924
        %v1964 = vadd.f32 %v1611, %v1926
        %v1965 = vadd.f32 %v1614, %v1929
        %v1966 = vadd.f32 %v1616, %v1931
        %v1967 = vadd.f32 %v1619, %v1934
        %v1968 = vadd.f32 %v1621, %v1936
        %v1969 = vadd.f32 %v1624, %v1939
        %v1970 = vadd.f32 %v1626, %v1941
        %v1971 = vadd.f32 %v1629, %v1944
        %v1972 = vadd.f32 %v1631, %v1946
        %v1973 = vadd.f32 %v1634, %v1949
        %v1974 = vadd.f32 %v1636, %v1951
        %v1975 = vadd.f32 %v1639, %v1954
        %v1976 = vadd.f32 %v1641, %v1956
        %v1977 = vadd.f32 %v1644, %v1959
        %v1978 = vadd.f32 %v1646, %v1961
        %v1979 = vrot.slane %v1165, 4
        %v1980 = vsel %vm1181, %v1197, %v1979
        %v1983 = vunpack.c.l.bf16 %v1980
        %v1984 = vunpack.c.h.bf16 %v1980
        %v1985 = vunpack.c.l.bf16 %v1979
        %v1986 = vmul.f32 %v1210, %v1258
        %v1987 = vmul.f32 %v1211, %v1260
        %v1988 = vmul.f32 %v1212, %v1262
        %v1989 = vmul.f32 %v1213, %v1264
        %v1990 = vmul.f32 %v1214, %v1266
        %v1991 = vmul.f32 %v1215, %v1268
        %v1992 = vmul.f32 %v1216, %v1270
        %v1993 = vmul.f32 %v1217, %v1272
        %v1994 = vmul.f32 %v1218, %v1274
        %v1995 = vmul.f32 %v1219, %v1276
        %v1996 = vmul.f32 %v1220, %v1278
        %v1997 = vmul.f32 %v1221, %v1280
        %v1998 = vmul.f32 %v1222, %v1282
        %v1999 = vmul.f32 %v1223, %v1284
        %v2000 = vmul.f32 %v1983, %v1286
        %v2001 = vmul.f32 %v1984, %v1288
        %v2002 = vmul.f32 %v1985, %v1287
        %v2003 = vpack.c.bf16 %v1987, %v1986
        %v2004 = vpack.c.bf16 %v1989, %v1988
        %v2005 = vpack.c.bf16 %v1991, %v1990
        %v2006 = vpack.c.bf16 %v1993, %v1992
        %v2007 = vpack.c.bf16 %v1995, %v1994
        %v2008 = vpack.c.bf16 %v1997, %v1996
        %v2009 = vpack.c.bf16 %v1999, %v1998
        %v2010 = vpack.c.bf16 %v2001, %v2000
        %v2011 = vpack.c.bf16 %v2002, %v2002
        %s2012 = scalar_lea.vmem [#allocation2], 192
        %v2013 = vld [vmem:[%s2012] sm:$0xf]
        %v2014 = vld [vmem:[%s2012 + $0x4] sm:$0xf]
        %v2015 = vld [vmem:[%s2012 + $0x8] sm:$0xf]
        %v2016 = vld [vmem:[%s2012 + $0xc] sm:$0xf]
        %v2017 = vld [vmem:[%s2012 + $0x10] sm:$0xf]
        %v2018 = vld [vmem:[%s2012 + $0x14] sm:$0xf]
        %v2019 = vld [vmem:[%s2012 + $0x18] sm:$0xf]
        %v2020 = vld [vmem:[%s2012 + $0x1c] sm:$0xf]
        %v2021 = vld [vmem:[%s2012 + $0x20] sm:$0xf]
        %v2022 = vld [vmem:[%s2012 + $0x24] sm:$0xf]
        %v2023 = vld [vmem:[%s2012 + $0x28] sm:$0xf]
        %v2024 = vld [vmem:[%s2012 + $0x2c] sm:$0xf]
        %v2025 = vld [vmem:[%s2012 + $0x30] sm:$0xf]
        %v2026 = vld [vmem:[%s2012 + $0x34] sm:$0xf]
        %v2027 = vld [vmem:[%s2012 + $0x38] sm:$0xf]
        %v2028 = vld [vmem:[%s2012 + $0x3c] sm:$0xf]
        %v2030 = vshrl.u32 %v2003, 16
        %v2032 = vrot.slane %v2030, 3
        %v2033 = vshll.u32 %v2003, 16
        %v2035 = vrot.slane %v2033, 4
        %v2036 = vor.u32 %v2032, %v2035
        %v2038 = vshrl.u32 %v2004, 16
        %v2040 = vrot.slane %v2038, 3
        %v2041 = vshll.u32 %v2004, 16
        %v2043 = vrot.slane %v2041, 4
        %v2044 = vor.u32 %v2040, %v2043
        %v2045 = vsel %vm1462, %v2036, %v2044
        %v2047 = vshrl.u32 %v2005, 16
        %v2049 = vrot.slane %v2047, 3
        %v2050 = vshll.u32 %v2005, 16
        %v2052 = vrot.slane %v2050, 4
        %v2053 = vor.u32 %v2049, %v2052
        %v2054 = vsel %vm1462, %v2044, %v2053
        %v2056 = vshrl.u32 %v2006, 16
        %v2058 = vrot.slane %v2056, 3
        %v2059 = vshll.u32 %v2006, 16
        %v2061 = vrot.slane %v2059, 4
        %v2062 = vor.u32 %v2058, %v2061
        %v2063 = vsel %vm1462, %v2053, %v2062
        %v2065 = vshrl.u32 %v2007, 16
        %v2067 = vrot.slane %v2065, 3
        %v2068 = vshll.u32 %v2007, 16
        %v2070 = vrot.slane %v2068, 4
        %v2071 = vor.u32 %v2067, %v2070
        %v2072 = vsel %vm1462, %v2062, %v2071
        %v2074 = vshrl.u32 %v2008, 16
        %v2076 = vrot.slane %v2074, 3
        %v2077 = vshll.u32 %v2008, 16
        %v2079 = vrot.slane %v2077, 4
        %v2080 = vor.u32 %v2076, %v2079
        %v2081 = vsel %vm1462, %v2071, %v2080
        %v2083 = vshrl.u32 %v2009, 16
        %v2085 = vrot.slane %v2083, 3
        %v2086 = vshll.u32 %v2009, 16
        %v2088 = vrot.slane %v2086, 4
        %v2089 = vor.u32 %v2085, %v2088
        %v2090 = vsel %vm1462, %v2080, %v2089
        %v2092 = vshrl.u32 %v2010, 16
        %v2094 = vrot.slane %v2092, 3
        %v2095 = vshll.u32 %v2010, 16
        %v2097 = vrot.slane %v2095, 4
        %v2098 = vor.u32 %v2094, %v2097
        %v2099 = vsel %vm1462, %v2089, %v2098
        %v2101 = vshrl.u32 %v2011, 16
        %v2103 = vrot.slane %v2101, 3
        %v2104 = vshll.u32 %v2011, 16
        %v2106 = vrot.slane %v2104, 4
        %v2107 = vor.u32 %v2103, %v2106
        %v2108 = vsel %vm1462, %v2098, %v2107
        %v2133 = vunpack.c.l.b16 %v2013
        %v2134 = vunpack.c.l.b16 %v2014
        %v2135 = vunpack.c.l.b16 %v2015
        %v2136 = vunpack.c.l.b16 %v2016
        %v2137 = vunpack.c.l.b16 %v2017
        %v2138 = vunpack.c.l.b16 %v2018
        %v2139 = vunpack.c.l.b16 %v2019
        %v2140 = vunpack.c.l.b16 %v2020
        %v2141 = vunpack.c.l.b16 %v2021
        %v2142 = vunpack.c.l.b16 %v2022
        %v2143 = vunpack.c.l.b16 %v2023
        %v2144 = vunpack.c.l.b16 %v2024
        %v2145 = vunpack.c.l.b16 %v2025
        %v2146 = vunpack.c.l.b16 %v2026
        %v2147 = vunpack.c.l.b16 %v2027
        %v2148 = vunpack.c.l.b16 %v2028
        %v2149 = vpack.c.b16 %v2134, %v2133
        %v2150 = vpack.c.b16 %v2136, %v2135
        %v2151 = vpack.c.b16 %v2138, %v2137
        %v2152 = vpack.c.b16 %v2140, %v2139
        %v2153 = vpack.c.b16 %v2142, %v2141
        %v2154 = vpack.c.b16 %v2144, %v2143
        %v2155 = vpack.c.b16 %v2146, %v2145
        %v2156 = vpack.c.b16 %v2148, %v2147
        %2165 = vmatpush.bf16.msra.mxu0 %v2156
        %2166 = vmatpush.bf16.msra.mxu0 %v2155
        %2167 = vmatpush.bf16.msra.mxu0 %v2154
        %2168 = vmatpush.bf16.msra.mxu0 %v2153
        %2169 = vmatpush.bf16.msra.mxu0 %v2152
        %2170 = vmatpush.bf16.msra.mxu0 %v2151
        %2171 = vmatpush.bf16.msra.mxu0 %v2150
        %2172 = vmatpush.bf16.msra.mxu0 %v2149
        %2173 = vmatmul.bf16.gmra.mxu0 %v2045
        %v2174 = vpop.f32.mrf.mxu0
        %v2175 = vadd.f32 0.0, %v2174
        %v2176 = vpop.f32.mrf.mxu0
        %v2177 = vadd.f32 0.0, %v2176
        %2178 = vmatmul.bf16.gmra.mxu0 %v2054
        %v2179 = vpop.f32.mrf.mxu0
        %v2180 = vadd.f32 0.0, %v2179
        %v2181 = vpop.f32.mrf.mxu0
        %v2182 = vadd.f32 0.0, %v2181
        %2183 = vmatmul.bf16.gmra.mxu0 %v2063
        %v2184 = vpop.f32.mrf.mxu0
        %v2185 = vadd.f32 0.0, %v2184
        %v2186 = vpop.f32.mrf.mxu0
        %v2187 = vadd.f32 0.0, %v2186
        %2188 = vmatmul.bf16.gmra.mxu0 %v2072
        %v2189 = vpop.f32.mrf.mxu0
        %v2190 = vadd.f32 0.0, %v2189
        %v2191 = vpop.f32.mrf.mxu0
        %v2192 = vadd.f32 0.0, %v2191
        %2193 = vmatmul.bf16.gmra.mxu0 %v2081
        %v2194 = vpop.f32.mrf.mxu0
        %v2195 = vadd.f32 0.0, %v2194
        %v2196 = vpop.f32.mrf.mxu0
        %v2197 = vadd.f32 0.0, %v2196
        %2198 = vmatmul.bf16.gmra.mxu0 %v2090
        %v2199 = vpop.f32.mrf.mxu0
        %v2200 = vadd.f32 0.0, %v2199
        %v2201 = vpop.f32.mrf.mxu0
        %v2202 = vadd.f32 0.0, %v2201
        %2203 = vmatmul.bf16.gmra.mxu0 %v2099
        %v2204 = vpop.f32.mrf.mxu0
        %v2205 = vadd.f32 0.0, %v2204
        %v2206 = vpop.f32.mrf.mxu0
        %v2207 = vadd.f32 0.0, %v2206
        %2208 = vmatmul.bf16.gmra.mxu0 %v2108
        %v2209 = vpop.f32.mrf.mxu0
        %v2210 = vadd.f32 0.0, %v2209
        %v2211 = vpop.f32.mrf.mxu0
        %v2212 = vadd.f32 0.0, %v2211
        %2213 = vdwg.mxu0
        %v2214 = vadd.f32 %v1963, %v2175
        %v2215 = vadd.f32 %v1964, %v2177
        %v2216 = vadd.f32 %v1965, %v2180
        %v2217 = vadd.f32 %v1966, %v2182
        %v2218 = vadd.f32 %v1967, %v2185
        %v2219 = vadd.f32 %v1968, %v2187
        %v2220 = vadd.f32 %v1969, %v2190
        %v2221 = vadd.f32 %v1970, %v2192
        %v2222 = vadd.f32 %v1971, %v2195
        %v2223 = vadd.f32 %v1972, %v2197
        %v2224 = vadd.f32 %v1973, %v2200
        %v2225 = vadd.f32 %v1974, %v2202
        %v2226 = vadd.f32 %v1975, %v2205
        %v2227 = vadd.f32 %v1976, %v2207
        %v2228 = vadd.f32 %v1977, %v2210
        %v2229 = vadd.f32 %v1978, %v2212
        %s2230 = scalar_lea.vmem [#allocation2], 256
        %v2231 = vld [vmem:[%s2230] sm:$0xf]
        %v2232 = vld [vmem:[%s2230 + $0x4] sm:$0xf]
        %v2233 = vld [vmem:[%s2230 + $0x8] sm:$0xf]
        %v2234 = vld [vmem:[%s2230 + $0xc] sm:$0xf]
        %v2235 = vld [vmem:[%s2230 + $0x10] sm:$0xf]
        %v2236 = vld [vmem:[%s2230 + $0x14] sm:$0xf]
        %v2237 = vld [vmem:[%s2230 + $0x18] sm:$0xf]
        %v2238 = vld [vmem:[%s2230 + $0x1c] sm:$0xf]
        %v2239 = vld [vmem:[%s2230 + $0x20] sm:$0xf]
        %v2240 = vld [vmem:[%s2230 + $0x24] sm:$0xf]
        %v2241 = vld [vmem:[%s2230 + $0x28] sm:$0xf]
        %v2242 = vld [vmem:[%s2230 + $0x2c] sm:$0xf]
        %v2243 = vld [vmem:[%s2230 + $0x30] sm:$0xf]
        %v2244 = vld [vmem:[%s2230 + $0x34] sm:$0xf]
        %v2245 = vld [vmem:[%s2230 + $0x38] sm:$0xf]
        %v2246 = vld [vmem:[%s2230 + $0x3c] sm:$0xf]
        %v2263 = vunpack.c.l.b16 %v2231
        %v2264 = vunpack.c.l.b16 %v2232
        %v2265 = vunpack.c.l.b16 %v2233
        %v2266 = vunpack.c.l.b16 %v2234
        %v2267 = vunpack.c.l.b16 %v2235
        %v2268 = vunpack.c.l.b16 %v2236
        %v2269 = vunpack.c.l.b16 %v2237
        %v2270 = vunpack.c.l.b16 %v2238
        %v2271 = vunpack.c.l.b16 %v2239
        %v2272 = vunpack.c.l.b16 %v2240
        %v2273 = vunpack.c.l.b16 %v2241
        %v2274 = vunpack.c.l.b16 %v2242
        %v2275 = vunpack.c.l.b16 %v2243
        %v2276 = vunpack.c.l.b16 %v2244
        %v2277 = vunpack.c.l.b16 %v2245
        %v2278 = vunpack.c.l.b16 %v2246
        %v2279 = vpack.c.b16 %v2264, %v2263
        %v2280 = vpack.c.b16 %v2266, %v2265
        %v2281 = vpack.c.b16 %v2268, %v2267
        %v2282 = vpack.c.b16 %v2270, %v2269
        %v2283 = vpack.c.b16 %v2272, %v2271
        %v2284 = vpack.c.b16 %v2274, %v2273
        %v2285 = vpack.c.b16 %v2276, %v2275
        %v2286 = vpack.c.b16 %v2278, %v2277
        %2295 = vmatpush.bf16.msra.mxu0 %v2286
        %2296 = vmatpush.bf16.msra.mxu0 %v2285
        %2297 = vmatpush.bf16.msra.mxu0 %v2284
        %2298 = vmatpush.bf16.msra.mxu0 %v2283
        %2299 = vmatpush.bf16.msra.mxu0 %v2282
        %2300 = vmatpush.bf16.msra.mxu0 %v2281
        %2301 = vmatpush.bf16.msra.mxu0 %v2280
        %2302 = vmatpush.bf16.msra.mxu0 %v2279
        %2303 = vmatmul.bf16.gmra.mxu0 %v1158
        %v2304 = vpop.f32.mrf.mxu0
        %v2305 = vadd.f32 0.0, %v2304
        %v2306 = vpop.f32.mrf.mxu0
        %v2307 = vadd.f32 0.0, %v2306
        %2308 = vmatmul.bf16.gmra.mxu0 %v1159
        %v2309 = vpop.f32.mrf.mxu0
        %v2310 = vadd.f32 0.0, %v2309
        %v2311 = vpop.f32.mrf.mxu0
        %v2312 = vadd.f32 0.0, %v2311
        %2313 = vmatmul.bf16.gmra.mxu0 %v1160
        %v2314 = vpop.f32.mrf.mxu0
        %v2315 = vadd.f32 0.0, %v2314
        %v2316 = vpop.f32.mrf.mxu0
        %v2317 = vadd.f32 0.0, %v2316
        %2318 = vmatmul.bf16.gmra.mxu0 %v1161
        %v2319 = vpop.f32.mrf.mxu0
        %v2320 = vadd.f32 0.0, %v2319
        %v2321 = vpop.f32.mrf.mxu0
        %v2322 = vadd.f32 0.0, %v2321
        %2323 = vmatmul.bf16.gmra.mxu0 %v1162
        %v2324 = vpop.f32.mrf.mxu0
        %v2325 = vadd.f32 0.0, %v2324
        %v2326 = vpop.f32.mrf.mxu0
        %v2327 = vadd.f32 0.0, %v2326
        %2328 = vmatmul.bf16.gmra.mxu0 %v1163
        %v2329 = vpop.f32.mrf.mxu0
        %v2330 = vadd.f32 0.0, %v2329
        %v2331 = vpop.f32.mrf.mxu0
        %v2332 = vadd.f32 0.0, %v2331
        %2333 = vmatmul.bf16.gmra.mxu0 %v1164
        %v2334 = vpop.f32.mrf.mxu0
        %v2335 = vadd.f32 0.0, %v2334
        %v2336 = vpop.f32.mrf.mxu0
        %v2337 = vadd.f32 0.0, %v2336
        %2338 = vmatmul.bf16.gmra.mxu0 %v1165
        %v2339 = vpop.f32.mrf.mxu0
        %v2340 = vadd.f32 0.0, %v2339
        %v2341 = vpop.f32.mrf.mxu0
        %v2342 = vadd.f32 0.0, %v2341
        %2343 = vdwg.mxu0
        %v2344 = vadd.f32 %v2214, %v2305
        %v2345 = vadd.f32 %v2215, %v2307
        %v2346 = vadd.f32 %v2216, %v2310
        %v2347 = vadd.f32 %v2217, %v2312
        %v2348 = vadd.f32 %v2218, %v2315
        %v2349 = vadd.f32 %v2219, %v2317
        %v2350 = vadd.f32 %v2220, %v2320
        %v2351 = vadd.f32 %v2221, %v2322
        %v2352 = vadd.f32 %v2222, %v2325
        %v2353 = vadd.f32 %v2223, %v2327
        %v2354 = vadd.f32 %v2224, %v2330
        %v2355 = vadd.f32 %v2225, %v2332
        %v2356 = vadd.f32 %v2226, %v2335
        %v2357 = vadd.f32 %v2227, %v2337
        %v2358 = vadd.f32 %v2228, %v2340
        %v2359 = vadd.f32 %v2229, %v2342
        %v2360 = vunpack.c.h.bf16 %v1165
        %v2361 = vunpack.c.l.bf16 %v1178
        %v2362 = vmul.f32 %v1650, %v1698
        %v2363 = vmul.f32 %v1651, %v1700
        %v2364 = vmul.f32 %v1652, %v1702
        %v2365 = vmul.f32 %v1653, %v1704
        %v2366 = vmul.f32 %v1654, %v1706
        %v2367 = vmul.f32 %v1655, %v1708
        %v2368 = vmul.f32 %v1656, %v1710
        %v2369 = vmul.f32 %v1657, %v1712
        %v2370 = vmul.f32 %v1658, %v1714
        %v2371 = vmul.f32 %v1659, %v1716
        %v2372 = vmul.f32 %v1660, %v1718
        %v2373 = vmul.f32 %v1661, %v1720
        %v2374 = vmul.f32 %v1662, %v1722
        %v2375 = vmul.f32 %v1663, %v1724
        %v2376 = vmul.f32 %v1664, %v1726
        %v2377 = vmul.f32 %v2360, %v1728
        %v2378 = vmul.f32 %v2361, %v1727
        %v2379 = vpack.c.bf16 %v2363, %v2362
        %v2380 = vpack.c.bf16 %v2365, %v2364
        %v2381 = vpack.c.bf16 %v2367, %v2366
        %v2382 = vpack.c.bf16 %v2369, %v2368
        %v2383 = vpack.c.bf16 %v2371, %v2370
        %v2384 = vpack.c.bf16 %v2373, %v2372
        %v2385 = vpack.c.bf16 %v2375, %v2374
        %v2386 = vpack.c.bf16 %v2377, %v2376
        %v2387 = vpack.c.bf16 %v2378, %v2378
        %s2388 = scalar_lea.vmem [#allocation2], 320
        %v2389 = vld [vmem:[%s2388] sm:$0xf]
        %v2390 = vld [vmem:[%s2388 + $0x4] sm:$0xf]
        %v2391 = vld [vmem:[%s2388 + $0x8] sm:$0xf]
        %v2392 = vld [vmem:[%s2388 + $0xc] sm:$0xf]
        %v2393 = vld [vmem:[%s2388 + $0x10] sm:$0xf]
        %v2394 = vld [vmem:[%s2388 + $0x14] sm:$0xf]
        %v2395 = vld [vmem:[%s2388 + $0x18] sm:$0xf]
        %v2396 = vld [vmem:[%s2388 + $0x1c] sm:$0xf]
        %v2397 = vld [vmem:[%s2388 + $0x20] sm:$0xf]
        %v2398 = vld [vmem:[%s2388 + $0x24] sm:$0xf]
        %v2399 = vld [vmem:[%s2388 + $0x28] sm:$0xf]
        %v2400 = vld [vmem:[%s2388 + $0x2c] sm:$0xf]
        %v2401 = vld [vmem:[%s2388 + $0x30] sm:$0xf]
        %v2402 = vld [vmem:[%s2388 + $0x34] sm:$0xf]
        %v2403 = vld [vmem:[%s2388 + $0x38] sm:$0xf]
        %v2404 = vld [vmem:[%s2388 + $0x3c] sm:$0xf]
        %v2406 = vshrl.u32 %v2379, 16
        %v2408 = vshll.u32 %v2379, 16
        %v2410 = vrot.slane %v2408, 1
        %v2411 = vor.u32 %v2406, %v2410
        %v2413 = vshll.u32 %v2380, 16
        %v2415 = vrot.slane %v2413, 1
        %v2416 = vsel %vm1789, %v2411, %v2415
        %v2417 = vshrl.u32 %v2380, 16
        %v2419 = vor.u32 %v2417, %v2415
        %v2421 = vshll.u32 %v2381, 16
        %v2423 = vrot.slane %v2421, 1
        %v2424 = vsel %vm1789, %v2419, %v2423
        %v2425 = vshrl.u32 %v2381, 16
        %v2427 = vor.u32 %v2425, %v2423
        %v2429 = vshll.u32 %v2382, 16
        %v2431 = vrot.slane %v2429, 1
        %v2432 = vsel %vm1789, %v2427, %v2431
        %v2433 = vshrl.u32 %v2382, 16
        %v2435 = vor.u32 %v2433, %v2431
        %v2437 = vshll.u32 %v2383, 16
        %v2439 = vrot.slane %v2437, 1
        %v2440 = vsel %vm1789, %v2435, %v2439
        %v2441 = vshrl.u32 %v2383, 16
        %v2443 = vor.u32 %v2441, %v2439
        %v2445 = vshll.u32 %v2384, 16
        %v2447 = vrot.slane %v2445, 1
        %v2448 = vsel %vm1789, %v2443, %v2447
        %v2449 = vshrl.u32 %v2384, 16
        %v2451 = vor.u32 %v2449, %v2447
        %v2453 = vshll.u32 %v2385, 16
        %v2455 = vrot.slane %v2453, 1
        %v2456 = vsel %vm1789, %v2451, %v2455
        %v2457 = vshrl.u32 %v2385, 16
        %v2459 = vor.u32 %v2457, %v2455
        %v2461 = vshll.u32 %v2386, 16
        %v2463 = vrot.slane %v2461, 1
        %v2464 = vsel %vm1789, %v2459, %v2463
        %v2465 = vshrl.u32 %v2386, 16
        %v2467 = vor.u32 %v2465, %v2463
        %v2469 = vshll.u32 %v2387, 16
        %v2471 = vrot.slane %v2469, 1
        %v2472 = vsel %vm1789, %v2467, %v2471
        %v2497 = vunpack.c.l.b16 %v2389
        %v2498 = vunpack.c.l.b16 %v2390
        %v2499 = vunpack.c.l.b16 %v2391
        %v2500 = vunpack.c.l.b16 %v2392
        %v2501 = vunpack.c.l.b16 %v2393
        %v2502 = vunpack.c.l.b16 %v2394
        %v2503 = vunpack.c.l.b16 %v2395
        %v2504 = vunpack.c.l.b16 %v2396
        %v2505 = vunpack.c.l.b16 %v2397
        %v2506 = vunpack.c.l.b16 %v2398
        %v2507 = vunpack.c.l.b16 %v2399
        %v2508 = vunpack.c.l.b16 %v2400
        %v2509 = vunpack.c.l.b16 %v2401
        %v2510 = vunpack.c.l.b16 %v2402
        %v2511 = vunpack.c.l.b16 %v2403
        %v2512 = vunpack.c.l.b16 %v2404
        %v2513 = vpack.c.b16 %v2498, %v2497
        %v2514 = vpack.c.b16 %v2500, %v2499
        %v2515 = vpack.c.b16 %v2502, %v2501
        %v2516 = vpack.c.b16 %v2504, %v2503
        %v2517 = vpack.c.b16 %v2506, %v2505
        %v2518 = vpack.c.b16 %v2508, %v2507
        %v2519 = vpack.c.b16 %v2510, %v2509
        %v2520 = vpack.c.b16 %v2512, %v2511
        %2529 = vmatpush.bf16.msra.mxu0 %v2520
        %2530 = vmatpush.bf16.msra.mxu0 %v2519
        %2531 = vmatpush.bf16.msra.mxu0 %v2518
        %2532 = vmatpush.bf16.msra.mxu0 %v2517
        %2533 = vmatpush.bf16.msra.mxu0 %v2516
        %2534 = vmatpush.bf16.msra.mxu0 %v2515
        %2535 = vmatpush.bf16.msra.mxu0 %v2514
        %2536 = vmatpush.bf16.msra.mxu0 %v2513
        %2537 = vmatmul.bf16.gmra.mxu0 %v2416
        %v2538 = vpop.f32.mrf.mxu0
        %v2539 = vadd.f32 0.0, %v2538
        %v2540 = vpop.f32.mrf.mxu0
        %v2541 = vadd.f32 0.0, %v2540
        %2542 = vmatmul.bf16.gmra.mxu0 %v2424
        %v2543 = vpop.f32.mrf.mxu0
        %v2544 = vadd.f32 0.0, %v2543
        %v2545 = vpop.f32.mrf.mxu0
        %v2546 = vadd.f32 0.0, %v2545
        %2547 = vmatmul.bf16.gmra.mxu0 %v2432
        %v2548 = vpop.f32.mrf.mxu0
        %v2549 = vadd.f32 0.0, %v2548
        %v2550 = vpop.f32.mrf.mxu0
        %v2551 = vadd.f32 0.0, %v2550
        %2552 = vmatmul.bf16.gmra.mxu0 %v2440
        %v2553 = vpop.f32.mrf.mxu0
        %v2554 = vadd.f32 0.0, %v2553
        %v2555 = vpop.f32.mrf.mxu0
        %v2556 = vadd.f32 0.0, %v2555
        %2557 = vmatmul.bf16.gmra.mxu0 %v2448
        %v2558 = vpop.f32.mrf.mxu0
        %v2559 = vadd.f32 0.0, %v2558
        %v2560 = vpop.f32.mrf.mxu0
        %v2561 = vadd.f32 0.0, %v2560
        %2562 = vmatmul.bf16.gmra.mxu0 %v2456
        %v2563 = vpop.f32.mrf.mxu0
        %v2564 = vadd.f32 0.0, %v2563
        %v2565 = vpop.f32.mrf.mxu0
        %v2566 = vadd.f32 0.0, %v2565
        %2567 = vmatmul.bf16.gmra.mxu0 %v2464
        %v2568 = vpop.f32.mrf.mxu0
        %v2569 = vadd.f32 0.0, %v2568
        %v2570 = vpop.f32.mrf.mxu0
        %v2571 = vadd.f32 0.0, %v2570
        %2572 = vmatmul.bf16.gmra.mxu0 %v2472
        %v2573 = vpop.f32.mrf.mxu0
        %v2574 = vadd.f32 0.0, %v2573
        %v2575 = vpop.f32.mrf.mxu0
        %v2576 = vadd.f32 0.0, %v2575
        %2577 = vdwg.mxu0
        %v2578 = vadd.f32 %v2344, %v2539
        %v2579 = vadd.f32 %v2345, %v2541
        %v2580 = vadd.f32 %v2346, %v2544
        %v2581 = vadd.f32 %v2347, %v2546
        %v2582 = vadd.f32 %v2348, %v2549
        %v2583 = vadd.f32 %v2349, %v2551
        %v2584 = vadd.f32 %v2350, %v2554
        %v2585 = vadd.f32 %v2351, %v2556
        %v2586 = vadd.f32 %v2352, %v2559
        %v2587 = vadd.f32 %v2353, %v2561
        %v2588 = vadd.f32 %v2354, %v2564
        %v2589 = vadd.f32 %v2355, %v2566
        %v2590 = vadd.f32 %v2356, %v2569
        %v2591 = vadd.f32 %v2357, %v2571
        %v2592 = vadd.f32 %v2358, %v2574
        %v2593 = vadd.f32 %v2359, %v2576
        %v2594 = vrot.slane %v1178, 4
        %v2595 = vsel %vm1181, %v1979, %v2594
        %v2598 = vunpack.c.l.bf16 %v2595
        %v2599 = vunpack.c.h.bf16 %v2595
        %v2600 = vunpack.c.l.bf16 %v2594
        %v2601 = vmul.f32 %v1212, %v1258
        %v2602 = vmul.f32 %v1213, %v1260
        %v2603 = vmul.f32 %v1214, %v1262
        %v2604 = vmul.f32 %v1215, %v1264
        %v2605 = vmul.f32 %v1216, %v1266
        %v2606 = vmul.f32 %v1217, %v1268
        %v2607 = vmul.f32 %v1218, %v1270
        %v2608 = vmul.f32 %v1219, %v1272
        %v2609 = vmul.f32 %v1220, %v1274
        %v2610 = vmul.f32 %v1221, %v1276
        %v2611 = vmul.f32 %v1222, %v1278
        %v2612 = vmul.f32 %v1223, %v1280
        %v2613 = vmul.f32 %v1983, %v1282
        %v2614 = vmul.f32 %v1984, %v1284
        %v2615 = vmul.f32 %v2598, %v1286
        %v2616 = vmul.f32 %v2599, %v1288
        %v2617 = vmul.f32 %v2600, %v1287
        %v2618 = vpack.c.bf16 %v2602, %v2601
        %v2619 = vpack.c.bf16 %v2604, %v2603
        %v2620 = vpack.c.bf16 %v2606, %v2605
        %v2621 = vpack.c.bf16 %v2608, %v2607
        %v2622 = vpack.c.bf16 %v2610, %v2609
        %v2623 = vpack.c.bf16 %v2612, %v2611
        %v2624 = vpack.c.bf16 %v2614, %v2613
        %v2625 = vpack.c.bf16 %v2616, %v2615
        %v2626 = vpack.c.bf16 %v2617, %v2617
        %s2627 = scalar_lea.vmem [#allocation2], 384
        %v2628 = vld [vmem:[%s2627] sm:$0xf]
        %v2629 = vld [vmem:[%s2627 + $0x4] sm:$0xf]
        %v2630 = vld [vmem:[%s2627 + $0x8] sm:$0xf]
        %v2631 = vld [vmem:[%s2627 + $0xc] sm:$0xf]
        %v2632 = vld [vmem:[%s2627 + $0x10] sm:$0xf]
        %v2633 = vld [vmem:[%s2627 + $0x14] sm:$0xf]
        %v2634 = vld [vmem:[%s2627 + $0x18] sm:$0xf]
        %v2635 = vld [vmem:[%s2627 + $0x1c] sm:$0xf]
        %v2636 = vld [vmem:[%s2627 + $0x20] sm:$0xf]
        %v2637 = vld [vmem:[%s2627 + $0x24] sm:$0xf]
        %v2638 = vld [vmem:[%s2627 + $0x28] sm:$0xf]
        %v2639 = vld [vmem:[%s2627 + $0x2c] sm:$0xf]
        %v2640 = vld [vmem:[%s2627 + $0x30] sm:$0xf]
        %v2641 = vld [vmem:[%s2627 + $0x34] sm:$0xf]
        %v2642 = vld [vmem:[%s2627 + $0x38] sm:$0xf]
        %v2643 = vld [vmem:[%s2627 + $0x3c] sm:$0xf]
        %v2645 = vshrl.u32 %v2618, 16
        %v2647 = vrot.slane %v2645, 3
        %v2648 = vshll.u32 %v2618, 16
        %v2650 = vrot.slane %v2648, 4
        %v2651 = vor.u32 %v2647, %v2650
        %v2653 = vshrl.u32 %v2619, 16
        %v2655 = vrot.slane %v2653, 3
        %v2656 = vshll.u32 %v2619, 16
        %v2658 = vrot.slane %v2656, 4
        %v2659 = vor.u32 %v2655, %v2658
        %v2660 = vsel %vm1462, %v2651, %v2659
        %v2662 = vshrl.u32 %v2620, 16
        %v2664 = vrot.slane %v2662, 3
        %v2665 = vshll.u32 %v2620, 16
        %v2667 = vrot.slane %v2665, 4
        %v2668 = vor.u32 %v2664, %v2667
        %v2669 = vsel %vm1462, %v2659, %v2668
        %v2671 = vshrl.u32 %v2621, 16
        %v2673 = vrot.slane %v2671, 3
        %v2674 = vshll.u32 %v2621, 16
        %v2676 = vrot.slane %v2674, 4
        %v2677 = vor.u32 %v2673, %v2676
        %v2678 = vsel %vm1462, %v2668, %v2677
        %v2680 = vshrl.u32 %v2622, 16
        %v2682 = vrot.slane %v2680, 3
        %v2683 = vshll.u32 %v2622, 16
        %v2685 = vrot.slane %v2683, 4
        %v2686 = vor.u32 %v2682, %v2685
        %v2687 = vsel %vm1462, %v2677, %v2686
        %v2689 = vshrl.u32 %v2623, 16
        %v2691 = vrot.slane %v2689, 3
        %v2692 = vshll.u32 %v2623, 16
        %v2694 = vrot.slane %v2692, 4
        %v2695 = vor.u32 %v2691, %v2694
        %v2696 = vsel %vm1462, %v2686, %v2695
        %v2698 = vshrl.u32 %v2624, 16
        %v2700 = vrot.slane %v2698, 3
        %v2701 = vshll.u32 %v2624, 16
        %v2703 = vrot.slane %v2701, 4
        %v2704 = vor.u32 %v2700, %v2703
        %v2705 = vsel %vm1462, %v2695, %v2704
        %v2707 = vshrl.u32 %v2625, 16
        %v2709 = vrot.slane %v2707, 3
        %v2710 = vshll.u32 %v2625, 16
        %v2712 = vrot.slane %v2710, 4
        %v2713 = vor.u32 %v2709, %v2712
        %v2714 = vsel %vm1462, %v2704, %v2713
        %v2716 = vshrl.u32 %v2626, 16
        %v2718 = vrot.slane %v2716, 3
        %v2719 = vshll.u32 %v2626, 16
        %v2721 = vrot.slane %v2719, 4
        %v2722 = vor.u32 %v2718, %v2721
        %v2723 = vsel %vm1462, %v2713, %v2722
        %v2748 = vunpack.c.l.b16 %v2628
        %v2749 = vunpack.c.l.b16 %v2629
        %v2750 = vunpack.c.l.b16 %v2630
        %v2751 = vunpack.c.l.b16 %v2631
        %v2752 = vunpack.c.l.b16 %v2632
        %v2753 = vunpack.c.l.b16 %v2633
        %v2754 = vunpack.c.l.b16 %v2634
        %v2755 = vunpack.c.l.b16 %v2635
        %v2756 = vunpack.c.l.b16 %v2636
        %v2757 = vunpack.c.l.b16 %v2637
        %v2758 = vunpack.c.l.b16 %v2638
        %v2759 = vunpack.c.l.b16 %v2639
        %v2760 = vunpack.c.l.b16 %v2640
        %v2761 = vunpack.c.l.b16 %v2641
        %v2762 = vunpack.c.l.b16 %v2642
        %v2763 = vunpack.c.l.b16 %v2643
        %v2764 = vpack.c.b16 %v2749, %v2748
        %v2765 = vpack.c.b16 %v2751, %v2750
        %v2766 = vpack.c.b16 %v2753, %v2752
        %v2767 = vpack.c.b16 %v2755, %v2754
        %v2768 = vpack.c.b16 %v2757, %v2756
        %v2769 = vpack.c.b16 %v2759, %v2758
        %v2770 = vpack.c.b16 %v2761, %v2760
        %v2771 = vpack.c.b16 %v2763, %v2762
        %2780 = vmatpush.bf16.msra.mxu0 %v2771
        %2781 = vmatpush.bf16.msra.mxu0 %v2770
        %2782 = vmatpush.bf16.msra.mxu0 %v2769
        %2783 = vmatpush.bf16.msra.mxu0 %v2768
        %2784 = vmatpush.bf16.msra.mxu0 %v2767
        %2785 = vmatpush.bf16.msra.mxu0 %v2766
        %2786 = vmatpush.bf16.msra.mxu0 %v2765
        %2787 = vmatpush.bf16.msra.mxu0 %v2764
        %2788 = vmatmul.bf16.gmra.mxu0 %v2660
        %v2789 = vpop.f32.mrf.mxu0
        %v2790 = vadd.f32 0.0, %v2789
        %v2791 = vpop.f32.mrf.mxu0
        %v2792 = vadd.f32 0.0, %v2791
        %2793 = vmatmul.bf16.gmra.mxu0 %v2669
        %v2794 = vpop.f32.mrf.mxu0
        %v2795 = vadd.f32 0.0, %v2794
        %v2796 = vpop.f32.mrf.mxu0
        %v2797 = vadd.f32 0.0, %v2796
        %2798 = vmatmul.bf16.gmra.mxu0 %v2678
        %v2799 = vpop.f32.mrf.mxu0
        %v2800 = vadd.f32 0.0, %v2799
        %v2801 = vpop.f32.mrf.mxu0
        %v2802 = vadd.f32 0.0, %v2801
        %2803 = vmatmul.bf16.gmra.mxu0 %v2687
        %v2804 = vpop.f32.mrf.mxu0
        %v2805 = vadd.f32 0.0, %v2804
        %v2806 = vpop.f32.mrf.mxu0
        %v2807 = vadd.f32 0.0, %v2806
        %2808 = vmatmul.bf16.gmra.mxu0 %v2696
        %v2809 = vpop.f32.mrf.mxu0
        %v2810 = vadd.f32 0.0, %v2809
        %v2811 = vpop.f32.mrf.mxu0
        %v2812 = vadd.f32 0.0, %v2811
        %2813 = vmatmul.bf16.gmra.mxu0 %v2705
        %v2814 = vpop.f32.mrf.mxu0
        %v2815 = vadd.f32 0.0, %v2814
        %v2816 = vpop.f32.mrf.mxu0
        %v2817 = vadd.f32 0.0, %v2816
        %2818 = vmatmul.bf16.gmra.mxu0 %v2714
        %v2819 = vpop.f32.mrf.mxu0
        %v2820 = vadd.f32 0.0, %v2819
        %v2821 = vpop.f32.mrf.mxu0
        %v2822 = vadd.f32 0.0, %v2821
        %2823 = vmatmul.bf16.gmra.mxu0 %v2723
        %v2824 = vpop.f32.mrf.mxu0
        %v2825 = vadd.f32 0.0, %v2824
        %v2826 = vpop.f32.mrf.mxu0
        %v2827 = vadd.f32 0.0, %v2826
        %2828 = vdwg.mxu0
        %v2829 = vadd.f32 %v2578, %v2790
        %v2830 = vadd.f32 %v2579, %v2792
        %v2831 = vadd.f32 %v2580, %v2795
        %v2832 = vadd.f32 %v2581, %v2797
        %v2833 = vadd.f32 %v2582, %v2800
        %v2834 = vadd.f32 %v2583, %v2802
        %v2835 = vadd.f32 %v2584, %v2805
        %v2836 = vadd.f32 %v2585, %v2807
        %v2837 = vadd.f32 %v2586, %v2810
        %v2838 = vadd.f32 %v2587, %v2812
        %v2839 = vadd.f32 %v2588, %v2815
        %v2840 = vadd.f32 %v2589, %v2817
        %v2841 = vadd.f32 %v2590, %v2820
        %v2842 = vadd.f32 %v2591, %v2822
        %v2843 = vadd.f32 %v2592, %v2825
        %v2844 = vadd.f32 %v2593, %v2827
        %s2845 = scalar_lea.vmem [#allocation2], 448
        %v2846 = vld [vmem:[%s2845] sm:$0xf]
        %v2847 = vld [vmem:[%s2845 + $0x4] sm:$0xf]
        %v2848 = vld [vmem:[%s2845 + $0x8] sm:$0xf]
        %v2849 = vld [vmem:[%s2845 + $0xc] sm:$0xf]
        %v2850 = vld [vmem:[%s2845 + $0x10] sm:$0xf]
        %v2851 = vld [vmem:[%s2845 + $0x14] sm:$0xf]
        %v2852 = vld [vmem:[%s2845 + $0x18] sm:$0xf]
        %v2853 = vld [vmem:[%s2845 + $0x1c] sm:$0xf]
        %v2854 = vld [vmem:[%s2845 + $0x20] sm:$0xf]
        %v2855 = vld [vmem:[%s2845 + $0x24] sm:$0xf]
        %v2856 = vld [vmem:[%s2845 + $0x28] sm:$0xf]
        %v2857 = vld [vmem:[%s2845 + $0x2c] sm:$0xf]
        %v2858 = vld [vmem:[%s2845 + $0x30] sm:$0xf]
        %v2859 = vld [vmem:[%s2845 + $0x34] sm:$0xf]
        %v2860 = vld [vmem:[%s2845 + $0x38] sm:$0xf]
        %v2861 = vld [vmem:[%s2845 + $0x3c] sm:$0xf]
        %v2878 = vunpack.c.l.b16 %v2846
        %v2879 = vunpack.c.l.b16 %v2847
        %v2880 = vunpack.c.l.b16 %v2848
        %v2881 = vunpack.c.l.b16 %v2849
        %v2882 = vunpack.c.l.b16 %v2850
        %v2883 = vunpack.c.l.b16 %v2851
        %v2884 = vunpack.c.l.b16 %v2852
        %v2885 = vunpack.c.l.b16 %v2853
        %v2886 = vunpack.c.l.b16 %v2854
        %v2887 = vunpack.c.l.b16 %v2855
        %v2888 = vunpack.c.l.b16 %v2856
        %v2889 = vunpack.c.l.b16 %v2857
        %v2890 = vunpack.c.l.b16 %v2858
        %v2891 = vunpack.c.l.b16 %v2859
        %v2892 = vunpack.c.l.b16 %v2860
        %v2893 = vunpack.c.l.b16 %v2861
        %v2894 = vpack.c.b16 %v2879, %v2878
        %v2895 = vpack.c.b16 %v2881, %v2880
        %v2896 = vpack.c.b16 %v2883, %v2882
        %v2897 = vpack.c.b16 %v2885, %v2884
        %v2898 = vpack.c.b16 %v2887, %v2886
        %v2899 = vpack.c.b16 %v2889, %v2888
        %v2900 = vpack.c.b16 %v2891, %v2890
        %v2901 = vpack.c.b16 %v2893, %v2892
        %2910 = vmatpush.bf16.msra.mxu0 %v2901
        %2911 = vmatpush.bf16.msra.mxu0 %v2900
        %2912 = vmatpush.bf16.msra.mxu0 %v2899
        %2913 = vmatpush.bf16.msra.mxu0 %v2898
        %2914 = vmatpush.bf16.msra.mxu0 %v2897
        %2915 = vmatpush.bf16.msra.mxu0 %v2896
        %2916 = vmatpush.bf16.msra.mxu0 %v2895
        %2917 = vmatpush.bf16.msra.mxu0 %v2894
        %2918 = vmatmul.bf16.gmra.mxu0 %v1159
        %v2919 = vpop.f32.mrf.mxu0
        %v2920 = vadd.f32 0.0, %v2919
        %v2921 = vpop.f32.mrf.mxu0
        %v2922 = vadd.f32 0.0, %v2921
        %2923 = vmatmul.bf16.gmra.mxu0 %v1160
        %v2924 = vpop.f32.mrf.mxu0
        %v2925 = vadd.f32 0.0, %v2924
        %v2926 = vpop.f32.mrf.mxu0
        %v2927 = vadd.f32 0.0, %v2926
        %2928 = vmatmul.bf16.gmra.mxu0 %v1161
        %v2929 = vpop.f32.mrf.mxu0
        %v2930 = vadd.f32 0.0, %v2929
        %v2931 = vpop.f32.mrf.mxu0
        %v2932 = vadd.f32 0.0, %v2931
        %2933 = vmatmul.bf16.gmra.mxu0 %v1162
        %v2934 = vpop.f32.mrf.mxu0
        %v2935 = vadd.f32 0.0, %v2934
        %v2936 = vpop.f32.mrf.mxu0
        %v2937 = vadd.f32 0.0, %v2936
        %2938 = vmatmul.bf16.gmra.mxu0 %v1163
        %v2939 = vpop.f32.mrf.mxu0
        %v2940 = vadd.f32 0.0, %v2939
        %v2941 = vpop.f32.mrf.mxu0
        %v2942 = vadd.f32 0.0, %v2941
        %2943 = vmatmul.bf16.gmra.mxu0 %v1164
        %v2944 = vpop.f32.mrf.mxu0
        %v2945 = vadd.f32 0.0, %v2944
        %v2946 = vpop.f32.mrf.mxu0
        %v2947 = vadd.f32 0.0, %v2946
        %2948 = vmatmul.bf16.gmra.mxu0 %v1165
        %v2949 = vpop.f32.mrf.mxu0
        %v2950 = vadd.f32 0.0, %v2949
        %v2951 = vpop.f32.mrf.mxu0
        %v2952 = vadd.f32 0.0, %v2951
        %2953 = vmatmul.bf16.gmra.mxu0 %v1178
        %v2954 = vpop.f32.mrf.mxu0
        %v2955 = vadd.f32 0.0, %v2954
        %v2956 = vpop.f32.mrf.mxu0
        %v2957 = vadd.f32 0.0, %v2956
        %2958 = vdwg.mxu0
        %v2959 = vadd.f32 %v2829, %v2920
        %v2960 = vadd.f32 %v2830, %v2922
        %v2961 = vadd.f32 %v2831, %v2925
        %v2962 = vadd.f32 %v2832, %v2927
        %v2963 = vadd.f32 %v2833, %v2930
        %v2964 = vadd.f32 %v2834, %v2932
        %v2965 = vadd.f32 %v2835, %v2935
        %v2966 = vadd.f32 %v2836, %v2937
        %v2967 = vadd.f32 %v2837, %v2940
        %v2968 = vadd.f32 %v2838, %v2942
        %v2969 = vadd.f32 %v2839, %v2945
        %v2970 = vadd.f32 %v2840, %v2947
        %v2971 = vadd.f32 %v2841, %v2950
        %v2972 = vadd.f32 %v2842, %v2952
        %v2973 = vadd.f32 %v2843, %v2955
        %v2974 = vadd.f32 %v2844, %v2957
        %v2975 = vunpack.c.h.bf16 %v1178
        %v2976 = vunpack.c.l.bf16 0
        %v2977 = vmul.f32 %v1652, %v1698
        %v2978 = vmul.f32 %v1653, %v1700
        %v2979 = vmul.f32 %v1654, %v1702
        %v2980 = vmul.f32 %v1655, %v1704
        %v2981 = vmul.f32 %v1656, %v1706
        %v2982 = vmul.f32 %v1657, %v1708
        %v2983 = vmul.f32 %v1658, %v1710
        %v2984 = vmul.f32 %v1659, %v1712
        %v2985 = vmul.f32 %v1660, %v1714
        %v2986 = vmul.f32 %v1661, %v1716
        %v2987 = vmul.f32 %v1662, %v1718
        %v2988 = vmul.f32 %v1663, %v1720
        %v2989 = vmul.f32 %v1664, %v1722
        %v2990 = vmul.f32 %v2360, %v1724
        %v2991 = vmul.f32 %v2361, %v1726
        %v2992 = vmul.f32 %v2975, %v1728
        %v2993 = vmul.f32 %v2976, %v1727
        %v2994 = vpack.c.bf16 %v2978, %v2977
        %v2995 = vpack.c.bf16 %v2980, %v2979
        %v2996 = vpack.c.bf16 %v2982, %v2981
        %v2997 = vpack.c.bf16 %v2984, %v2983
        %v2998 = vpack.c.bf16 %v2986, %v2985
        %v2999 = vpack.c.bf16 %v2988, %v2987
        %v3000 = vpack.c.bf16 %v2990, %v2989
        %v3001 = vpack.c.bf16 %v2992, %v2991
        %v3002 = vpack.c.bf16 %v2993, %v2993
        %s3003 = scalar_lea.vmem [#allocation2], 512
        %v3004 = vld [vmem:[%s3003] sm:$0xf]
        %v3005 = vld [vmem:[%s3003 + $0x4] sm:$0xf]
        %v3006 = vld [vmem:[%s3003 + $0x8] sm:$0xf]
        %v3007 = vld [vmem:[%s3003 + $0xc] sm:$0xf]
        %v3008 = vld [vmem:[%s3003 + $0x10] sm:$0xf]
        %v3009 = vld [vmem:[%s3003 + $0x14] sm:$0xf]
        %v3010 = vld [vmem:[%s3003 + $0x18] sm:$0xf]
        %v3011 = vld [vmem:[%s3003 + $0x1c] sm:$0xf]
        %v3012 = vld [vmem:[%s3003 + $0x20] sm:$0xf]
        %v3013 = vld [vmem:[%s3003 + $0x24] sm:$0xf]
        %v3014 = vld [vmem:[%s3003 + $0x28] sm:$0xf]
        %v3015 = vld [vmem:[%s3003 + $0x2c] sm:$0xf]
        %v3016 = vld [vmem:[%s3003 + $0x30] sm:$0xf]
        %v3017 = vld [vmem:[%s3003 + $0x34] sm:$0xf]
        %v3018 = vld [vmem:[%s3003 + $0x38] sm:$0xf]
        %v3019 = vld [vmem:[%s3003 + $0x3c] sm:$0xf]
        %v3021 = vshrl.u32 %v2994, 16
        %v3023 = vshll.u32 %v2994, 16
        %v3025 = vrot.slane %v3023, 1
        %v3026 = vor.u32 %v3021, %v3025
        %v3028 = vshll.u32 %v2995, 16
        %v3030 = vrot.slane %v3028, 1
        %v3031 = vsel %vm1789, %v3026, %v3030
        %v3032 = vshrl.u32 %v2995, 16
        %v3034 = vor.u32 %v3032, %v3030
        %v3036 = vshll.u32 %v2996, 16
        %v3038 = vrot.slane %v3036, 1
        %v3039 = vsel %vm1789, %v3034, %v3038
        %v3040 = vshrl.u32 %v2996, 16
        %v3042 = vor.u32 %v3040, %v3038
        %v3044 = vshll.u32 %v2997, 16
        %v3046 = vrot.slane %v3044, 1
        %v3047 = vsel %vm1789, %v3042, %v3046
        %v3048 = vshrl.u32 %v2997, 16
        %v3050 = vor.u32 %v3048, %v3046
        %v3052 = vshll.u32 %v2998, 16
        %v3054 = vrot.slane %v3052, 1
        %v3055 = vsel %vm1789, %v3050, %v3054
        %v3056 = vshrl.u32 %v2998, 16
        %v3058 = vor.u32 %v3056, %v3054
        %v3060 = vshll.u32 %v2999, 16
        %v3062 = vrot.slane %v3060, 1
        %v3063 = vsel %vm1789, %v3058, %v3062
        %v3064 = vshrl.u32 %v2999, 16
        %v3066 = vor.u32 %v3064, %v3062
        %v3068 = vshll.u32 %v3000, 16
        %v3070 = vrot.slane %v3068, 1
        %v3071 = vsel %vm1789, %v3066, %v3070
        %v3072 = vshrl.u32 %v3000, 16
        %v3074 = vor.u32 %v3072, %v3070
        %v3076 = vshll.u32 %v3001, 16
        %v3078 = vrot.slane %v3076, 1
        %v3079 = vsel %vm1789, %v3074, %v3078
        %v3080 = vshrl.u32 %v3001, 16
        %v3082 = vor.u32 %v3080, %v3078
        %v3084 = vshll.u32 %v3002, 16
        %v3086 = vrot.slane %v3084, 1
        %v3087 = vsel %vm1789, %v3082, %v3086
        %v3112 = vunpack.c.l.b16 %v3004
        %v3113 = vunpack.c.l.b16 %v3005
        %v3114 = vunpack.c.l.b16 %v3006
        %v3115 = vunpack.c.l.b16 %v3007
        %v3116 = vunpack.c.l.b16 %v3008
        %v3117 = vunpack.c.l.b16 %v3009
        %v3118 = vunpack.c.l.b16 %v3010
        %v3119 = vunpack.c.l.b16 %v3011
        %v3120 = vunpack.c.l.b16 %v3012
        %v3121 = vunpack.c.l.b16 %v3013
        %v3122 = vunpack.c.l.b16 %v3014
        %v3123 = vunpack.c.l.b16 %v3015
        %v3124 = vunpack.c.l.b16 %v3016
        %v3125 = vunpack.c.l.b16 %v3017
        %v3126 = vunpack.c.l.b16 %v3018
        %v3127 = vunpack.c.l.b16 %v3019
        %v3128 = vpack.c.b16 %v3113, %v3112
        %v3129 = vpack.c.b16 %v3115, %v3114
        %v3130 = vpack.c.b16 %v3117, %v3116
        %v3131 = vpack.c.b16 %v3119, %v3118
        %v3132 = vpack.c.b16 %v3121, %v3120
        %v3133 = vpack.c.b16 %v3123, %v3122
        %v3134 = vpack.c.b16 %v3125, %v3124
        %v3135 = vpack.c.b16 %v3127, %v3126
        %3144 = vmatpush.bf16.msra.mxu0 %v3135
        %3145 = vmatpush.bf16.msra.mxu0 %v3134
        %3146 = vmatpush.bf16.msra.mxu0 %v3133
        %3147 = vmatpush.bf16.msra.mxu0 %v3132
        %3148 = vmatpush.bf16.msra.mxu0 %v3131
        %3149 = vmatpush.bf16.msra.mxu0 %v3130
        %3150 = vmatpush.bf16.msra.mxu0 %v3129
        %3151 = vmatpush.bf16.msra.mxu0 %v3128
        %3152 = vmatmul.bf16.gmra.mxu0 %v3031
        %v3153 = vpop.f32.mrf.mxu0
        %v3154 = vadd.f32 0.0, %v3153
        %v3155 = vpop.f32.mrf.mxu0
        %v3156 = vadd.f32 0.0, %v3155
        %3157 = vmatmul.bf16.gmra.mxu0 %v3039
        %v3158 = vpop.f32.mrf.mxu0
        %v3159 = vadd.f32 0.0, %v3158
        %v3160 = vpop.f32.mrf.mxu0
        %v3161 = vadd.f32 0.0, %v3160
        %3162 = vmatmul.bf16.gmra.mxu0 %v3047
        %v3163 = vpop.f32.mrf.mxu0
        %v3164 = vadd.f32 0.0, %v3163
        %v3165 = vpop.f32.mrf.mxu0
        %v3166 = vadd.f32 0.0, %v3165
        %3167 = vmatmul.bf16.gmra.mxu0 %v3055
        %v3168 = vpop.f32.mrf.mxu0
        %v3169 = vadd.f32 0.0, %v3168
        %v3170 = vpop.f32.mrf.mxu0
        %v3171 = vadd.f32 0.0, %v3170
        %3172 = vmatmul.bf16.gmra.mxu0 %v3063
        %v3173 = vpop.f32.mrf.mxu0
        %v3174 = vadd.f32 0.0, %v3173
        %v3175 = vpop.f32.mrf.mxu0
        %v3176 = vadd.f32 0.0, %v3175
        %3177 = vmatmul.bf16.gmra.mxu0 %v3071
        %v3178 = vpop.f32.mrf.mxu0
        %v3179 = vadd.f32 0.0, %v3178
        %v3180 = vpop.f32.mrf.mxu0
        %v3181 = vadd.f32 0.0, %v3180
        %3182 = vmatmul.bf16.gmra.mxu0 %v3079
        %v3183 = vpop.f32.mrf.mxu0
        %v3184 = vadd.f32 0.0, %v3183
        %v3185 = vpop.f32.mrf.mxu0
        %v3186 = vadd.f32 0.0, %v3185
        %3187 = vmatmul.bf16.gmra.mxu0 %v3087
        %v3188 = vpop.f32.mrf.mxu0
        %v3189 = vadd.f32 0.0, %v3188
        %v3190 = vpop.f32.mrf.mxu0
        %v3191 = vadd.f32 0.0, %v3190
        %3192 = vdwg.mxu0
        %v3193 = vadd.f32 %v2959, %v3154
        %v3194 = vadd.f32 %v2960, %v3156
        %v3195 = vadd.f32 %v2961, %v3159
        %v3196 = vadd.f32 %v2962, %v3161
        %v3197 = vadd.f32 %v2963, %v3164
        %v3198 = vadd.f32 %v2964, %v3166
        %v3199 = vadd.f32 %v2965, %v3169
        %v3200 = vadd.f32 %v2966, %v3171
        %v3201 = vadd.f32 %v2967, %v3174
        %v3202 = vadd.f32 %v2968, %v3176
        %v3203 = vadd.f32 %v2969, %v3179
        %v3204 = vadd.f32 %v2970, %v3181
        %v3205 = vadd.f32 %v2971, %v3184
        %v3206 = vadd.f32 %v2972, %v3186
        %v3207 = vadd.f32 %v2973, %v3189
        %v3208 = vadd.f32 %v2974, %v3191
        %v3209 = vld [vmem:[%s678] sm:$0xf]
        %v3210 = vld [vmem:[%s678 + $0x4] sm:$0xf]
        %v3211 = vunpack.c.l.bf16 %v3209
        %v3212 = vunpack.c.l.bf16 %v3210
        %v3213 = vmul.f32 %v3211, %v1086
        %v3214 = vmul.f32 %v3212, %v1086
        %v3215 = vpack.c.bf16 %v3213, %v3213
        %v3216 = vpack.c.bf16 %v3214, %v3214
        %v3217 = vld [vmem:[%s664] sm:$0xf]
        %v3218 = vld [vmem:[%s664 + $0x4] sm:$0xf]
        %v3219 = vld [vmem:[%s664 + $0x8] sm:$0xf]
        %v3220 = vld [vmem:[%s664 + $0xc] sm:$0xf]
        %v3221 = vld [vmem:[%s664 + $0x10] sm:$0xf]
        %v3222 = vld [vmem:[%s664 + $0x14] sm:$0xf]
        %v3223 = vld [vmem:[%s664 + $0x18] sm:$0xf]
        %v3224 = vld [vmem:[%s664 + $0x1c] sm:$0xf]
        %v3225 = vld [vmem:[%s664 + $0x20] sm:$0xf]
        %v3226 = vld [vmem:[%s664 + $0x24] sm:$0xf]
        %v3227 = vld [vmem:[%s664 + $0x28] sm:$0xf]
        %v3228 = vld [vmem:[%s664 + $0x2c] sm:$0xf]
        %v3229 = vld [vmem:[%s664 + $0x30] sm:$0xf]
        %v3230 = vld [vmem:[%s664 + $0x34] sm:$0xf]
        %v3231 = vld [vmem:[%s664 + $0x38] sm:$0xf]
        %v3232 = vld [vmem:[%s664 + $0x3c] sm:$0xf]
        %v3233 = vld [vmem:[%s696] sm:$0xf]
        %v3234 = vld [vmem:[%s696 + $0x4] sm:$0xf]
        %v3235 = vunpack.c.l.bf16 %v3233
        %v3236 = vunpack.c.l.bf16 %v3234
        %v3237 = vmul.f32 %v3235, %v1115
        %v3238 = vmul.f32 %v3236, %v1115
        %v3239 = vpack.c.bf16 %v3237, %v3237
        %v3240 = vpack.c.bf16 %v3238, %v3238
        %v3243 = vunpack.c.l.b16 %v3215
        %v3244 = vunpack.c.l.b16 %v3216
        %v3245 = vpack.c.b16 %v3244, %v3243
        %v3263 = vunpack.c.l.b16 %v3217
        %v3264 = vunpack.c.l.b16 %v3218
        %v3265 = vunpack.c.l.b16 %v3219
        %v3266 = vunpack.c.l.b16 %v3220
        %v3267 = vunpack.c.l.b16 %v3221
        %v3268 = vunpack.c.l.b16 %v3222
        %v3269 = vunpack.c.l.b16 %v3223
        %v3270 = vunpack.c.l.b16 %v3224
        %v3271 = vunpack.c.l.b16 %v3225
        %v3272 = vunpack.c.l.b16 %v3226
        %v3273 = vunpack.c.l.b16 %v3227
        %v3274 = vunpack.c.l.b16 %v3228
        %v3275 = vunpack.c.l.b16 %v3229
        %v3276 = vunpack.c.l.b16 %v3230
        %v3277 = vunpack.c.l.b16 %v3231
        %v3278 = vunpack.c.l.b16 %v3232
        %v3279 = vpack.c.b16 %v3264, %v3263
        %v3280 = vpack.c.b16 %v3266, %v3265
        %v3281 = vpack.c.b16 %v3268, %v3267
        %v3282 = vpack.c.b16 %v3270, %v3269
        %v3283 = vpack.c.b16 %v3272, %v3271
        %v3284 = vpack.c.b16 %v3274, %v3273
        %v3285 = vpack.c.b16 %v3276, %v3275
        %v3286 = vpack.c.b16 %v3278, %v3277
        %v3297 = vunpack.c.l.b16 %v3239
        %v3298 = vunpack.c.l.b16 %v3240
        %v3299 = vpack.c.b16 %v3298, %v3297
        %v3301 = vrot.slane %v3245, 4
        %v3302 = vsel %vm1181, %v1182, %v3301
        %v3303 = vrot.slane %v3279, 4
        %v3304 = vsel %vm1181, %v3301, %v3303
        %v3305 = vrot.slane %v3280, 4
        %v3306 = vsel %vm1181, %v3303, %v3305
        %v3307 = vrot.slane %v3281, 4
        %v3308 = vsel %vm1181, %v3305, %v3307
        %v3309 = vrot.slane %v3282, 4
        %v3310 = vsel %vm1181, %v3307, %v3309
        %v3311 = vrot.slane %v3283, 4
        %v3312 = vsel %vm1181, %v3309, %v3311
        %v3313 = vrot.slane %v3284, 4
        %v3314 = vsel %vm1181, %v3311, %v3313
        %v3315 = vrot.slane %v3285, 4
        %v3316 = vsel %vm1181, %v3313, %v3315
        %v3326 = vunpack.c.l.bf16 %v3302
        %v3327 = vunpack.c.h.bf16 %v3302
        %v3328 = vunpack.c.l.bf16 %v3304
        %v3329 = vunpack.c.h.bf16 %v3304
        %v3330 = vunpack.c.l.bf16 %v3306
        %v3331 = vunpack.c.h.bf16 %v3306
        %v3332 = vunpack.c.l.bf16 %v3308
        %v3333 = vunpack.c.h.bf16 %v3308
        %v3334 = vunpack.c.l.bf16 %v3310
        %v3335 = vunpack.c.h.bf16 %v3310
        %v3336 = vunpack.c.l.bf16 %v3312
        %v3337 = vunpack.c.h.bf16 %v3312
        %v3338 = vunpack.c.l.bf16 %v3314
        %v3339 = vunpack.c.h.bf16 %v3314
        %v3340 = vunpack.c.l.bf16 %v3316
        %v3341 = vunpack.c.h.bf16 %v3316
        %v3342 = vunpack.c.l.bf16 %v3315
        %v3343 = vmul.f32 %v3326, %v1258
        %v3344 = vmul.f32 %v3327, %v1260
        %v3345 = vmul.f32 %v3328, %v1262
        %v3346 = vmul.f32 %v3329, %v1264
        %v3347 = vmul.f32 %v3330, %v1266
        %v3348 = vmul.f32 %v3331, %v1268
        %v3349 = vmul.f32 %v3332, %v1270
        %v3350 = vmul.f32 %v3333, %v1272
        %v3351 = vmul.f32 %v3334, %v1274
        %v3352 = vmul.f32 %v3335, %v1276
        %v3353 = vmul.f32 %v3336, %v1278
        %v3354 = vmul.f32 %v3337, %v1280
        %v3355 = vmul.f32 %v3338, %v1282
        %v3356 = vmul.f32 %v3339, %v1284
        %v3357 = vmul.f32 %v3340, %v1286
        %v3358 = vmul.f32 %v3341, %v1288
        %v3359 = vmul.f32 %v3342, %v1287
        %v3360 = vpack.c.bf16 %v3344, %v3343
        %v3361 = vpack.c.bf16 %v3346, %v3345
        %v3362 = vpack.c.bf16 %v3348, %v3347
        %v3363 = vpack.c.bf16 %v3350, %v3349
        %v3364 = vpack.c.bf16 %v3352, %v3351
        %v3365 = vpack.c.bf16 %v3354, %v3353
        %v3366 = vpack.c.bf16 %v3356, %v3355
        %v3367 = vpack.c.bf16 %v3358, %v3357
        %v3368 = vpack.c.bf16 %v3359, %v3359
        %v3369 = vld [vmem:[#allocation4] sm:$0xf]
        %v3370 = vld [vmem:[#allocation4 + $0x4] sm:$0xf]
        %v3371 = vld [vmem:[#allocation4 + $0x8] sm:$0xf]
        %v3372 = vld [vmem:[#allocation4 + $0xc] sm:$0xf]
        %v3373 = vld [vmem:[#allocation4 + $0x10] sm:$0xf]
        %v3374 = vld [vmem:[#allocation4 + $0x14] sm:$0xf]
        %v3375 = vld [vmem:[#allocation4 + $0x18] sm:$0xf]
        %v3376 = vld [vmem:[#allocation4 + $0x1c] sm:$0xf]
        %v3377 = vld [vmem:[#allocation4 + $0x20] sm:$0xf]
        %v3378 = vld [vmem:[#allocation4 + $0x24] sm:$0xf]
        %v3379 = vld [vmem:[#allocation4 + $0x28] sm:$0xf]
        %v3380 = vld [vmem:[#allocation4 + $0x2c] sm:$0xf]
        %v3381 = vld [vmem:[#allocation4 + $0x30] sm:$0xf]
        %v3382 = vld [vmem:[#allocation4 + $0x34] sm:$0xf]
        %v3383 = vld [vmem:[#allocation4 + $0x38] sm:$0xf]
        %v3384 = vld [vmem:[#allocation4 + $0x3c] sm:$0xf]
        %v3386 = vshrl.u32 %v3360, 16
        %v3388 = vrot.slane %v3386, 3
        %v3389 = vshll.u32 %v3360, 16
        %v3391 = vrot.slane %v3389, 4
        %v3392 = vor.u32 %v3388, %v3391
        %v3394 = vshrl.u32 %v3361, 16
        %v3396 = vrot.slane %v3394, 3
        %v3397 = vshll.u32 %v3361, 16
        %v3399 = vrot.slane %v3397, 4
        %v3400 = vor.u32 %v3396, %v3399
        %v3401 = vsel %vm1462, %v3392, %v3400
        %v3403 = vshrl.u32 %v3362, 16
        %v3405 = vrot.slane %v3403, 3
        %v3406 = vshll.u32 %v3362, 16
        %v3408 = vrot.slane %v3406, 4
        %v3409 = vor.u32 %v3405, %v3408
        %v3410 = vsel %vm1462, %v3400, %v3409
        %v3412 = vshrl.u32 %v3363, 16
        %v3414 = vrot.slane %v3412, 3
        %v3415 = vshll.u32 %v3363, 16
        %v3417 = vrot.slane %v3415, 4
        %v3418 = vor.u32 %v3414, %v3417
        %v3419 = vsel %vm1462, %v3409, %v3418
        %v3421 = vshrl.u32 %v3364, 16
        %v3423 = vrot.slane %v3421, 3
        %v3424 = vshll.u32 %v3364, 16
        %v3426 = vrot.slane %v3424, 4
        %v3427 = vor.u32 %v3423, %v3426
        %v3428 = vsel %vm1462, %v3418, %v3427
        %v3430 = vshrl.u32 %v3365, 16
        %v3432 = vrot.slane %v3430, 3
        %v3433 = vshll.u32 %v3365, 16
        %v3435 = vrot.slane %v3433, 4
        %v3436 = vor.u32 %v3432, %v3435
        %v3437 = vsel %vm1462, %v3427, %v3436
        %v3439 = vshrl.u32 %v3366, 16
        %v3441 = vrot.slane %v3439, 3
        %v3442 = vshll.u32 %v3366, 16
        %v3444 = vrot.slane %v3442, 4
        %v3445 = vor.u32 %v3441, %v3444
        %v3446 = vsel %vm1462, %v3436, %v3445
        %v3448 = vshrl.u32 %v3367, 16
        %v3450 = vrot.slane %v3448, 3
        %v3451 = vshll.u32 %v3367, 16
        %v3453 = vrot.slane %v3451, 4
        %v3454 = vor.u32 %v3450, %v3453
        %v3455 = vsel %vm1462, %v3445, %v3454
        %v3457 = vshrl.u32 %v3368, 16
        %v3459 = vrot.slane %v3457, 3
        %v3460 = vshll.u32 %v3368, 16
        %v3462 = vrot.slane %v3460, 4
        %v3463 = vor.u32 %v3459, %v3462
        %v3464 = vsel %vm1462, %v3454, %v3463
        %v3489 = vunpack.c.l.b16 %v3369
        %v3490 = vunpack.c.l.b16 %v3370
        %v3491 = vunpack.c.l.b16 %v3371
        %v3492 = vunpack.c.l.b16 %v3372
        %v3493 = vunpack.c.l.b16 %v3373
        %v3494 = vunpack.c.l.b16 %v3374
        %v3495 = vunpack.c.l.b16 %v3375
        %v3496 = vunpack.c.l.b16 %v3376
        %v3497 = vunpack.c.l.b16 %v3377
        %v3498 = vunpack.c.l.b16 %v3378
        %v3499 = vunpack.c.l.b16 %v3379
        %v3500 = vunpack.c.l.b16 %v3380
        %v3501 = vunpack.c.l.b16 %v3381
        %v3502 = vunpack.c.l.b16 %v3382
        %v3503 = vunpack.c.l.b16 %v3383
        %v3504 = vunpack.c.l.b16 %v3384
        %v3505 = vpack.c.b16 %v3490, %v3489
        %v3506 = vpack.c.b16 %v3492, %v3491
        %v3507 = vpack.c.b16 %v3494, %v3493
        %v3508 = vpack.c.b16 %v3496, %v3495
        %v3509 = vpack.c.b16 %v3498, %v3497
        %v3510 = vpack.c.b16 %v3500, %v3499
        %v3511 = vpack.c.b16 %v3502, %v3501
        %v3512 = vpack.c.b16 %v3504, %v3503
        %3521 = vmatpush.bf16.msra.mxu0 %v3512
        %3522 = vmatpush.bf16.msra.mxu0 %v3511
        %3523 = vmatpush.bf16.msra.mxu0 %v3510
        %3524 = vmatpush.bf16.msra.mxu0 %v3509
        %3525 = vmatpush.bf16.msra.mxu0 %v3508
        %3526 = vmatpush.bf16.msra.mxu0 %v3507
        %3527 = vmatpush.bf16.msra.mxu0 %v3506
        %3528 = vmatpush.bf16.msra.mxu0 %v3505
        %3529 = vmatmul.bf16.gmra.mxu0 %v3401
        %v3530 = vpop.f32.mrf.mxu0
        %v3531 = vadd.f32 0.0, %v3530
        %v3532 = vpop.f32.mrf.mxu0
        %v3533 = vadd.f32 0.0, %v3532
        %3534 = vmatmul.bf16.gmra.mxu0 %v3410
        %v3535 = vpop.f32.mrf.mxu0
        %v3536 = vadd.f32 0.0, %v3535
        %v3537 = vpop.f32.mrf.mxu0
        %v3538 = vadd.f32 0.0, %v3537
        %3539 = vmatmul.bf16.gmra.mxu0 %v3419
        %v3540 = vpop.f32.mrf.mxu0
        %v3541 = vadd.f32 0.0, %v3540
        %v3542 = vpop.f32.mrf.mxu0
        %v3543 = vadd.f32 0.0, %v3542
        %3544 = vmatmul.bf16.gmra.mxu0 %v3428
        %v3545 = vpop.f32.mrf.mxu0
        %v3546 = vadd.f32 0.0, %v3545
        %v3547 = vpop.f32.mrf.mxu0
        %v3548 = vadd.f32 0.0, %v3547
        %3549 = vmatmul.bf16.gmra.mxu0 %v3437
        %v3550 = vpop.f32.mrf.mxu0
        %v3551 = vadd.f32 0.0, %v3550
        %v3552 = vpop.f32.mrf.mxu0
        %v3553 = vadd.f32 0.0, %v3552
        %3554 = vmatmul.bf16.gmra.mxu0 %v3446
        %v3555 = vpop.f32.mrf.mxu0
        %v3556 = vadd.f32 0.0, %v3555
        %v3557 = vpop.f32.mrf.mxu0
        %v3558 = vadd.f32 0.0, %v3557
        %3559 = vmatmul.bf16.gmra.mxu0 %v3455
        %v3560 = vpop.f32.mrf.mxu0
        %v3561 = vadd.f32 0.0, %v3560
        %v3562 = vpop.f32.mrf.mxu0
        %v3563 = vadd.f32 0.0, %v3562
        %3564 = vmatmul.bf16.gmra.mxu0 %v3464
        %v3565 = vpop.f32.mrf.mxu0
        %v3566 = vadd.f32 0.0, %v3565
        %v3567 = vpop.f32.mrf.mxu0
        %v3568 = vadd.f32 0.0, %v3567
        %3569 = vdwg.mxu0
        %v3570 = vadd.f32 %v3193, %v3531
        %v3571 = vadd.f32 %v3194, %v3533
        %v3572 = vadd.f32 %v3195, %v3536
        %v3573 = vadd.f32 %v3196, %v3538
        %v3574 = vadd.f32 %v3197, %v3541
        %v3575 = vadd.f32 %v3198, %v3543
        %v3576 = vadd.f32 %v3199, %v3546
        %v3577 = vadd.f32 %v3200, %v3548
        %v3578 = vadd.f32 %v3201, %v3551
        %v3579 = vadd.f32 %v3202, %v3553
        %v3580 = vadd.f32 %v3203, %v3556
        %v3581 = vadd.f32 %v3204, %v3558
        %v3582 = vadd.f32 %v3205, %v3561
        %v3583 = vadd.f32 %v3206, %v3563
        %v3584 = vadd.f32 %v3207, %v3566
        %v3585 = vadd.f32 %v3208, %v3568
        %s3586 = scalar_lea.vmem [#allocation4], 64
        %v3587 = vld [vmem:[%s3586] sm:$0xf]
        %v3588 = vld [vmem:[%s3586 + $0x4] sm:$0xf]
        %v3589 = vld [vmem:[%s3586 + $0x8] sm:$0xf]
        %v3590 = vld [vmem:[%s3586 + $0xc] sm:$0xf]
        %v3591 = vld [vmem:[%s3586 + $0x10] sm:$0xf]
        %v3592 = vld [vmem:[%s3586 + $0x14] sm:$0xf]
        %v3593 = vld [vmem:[%s3586 + $0x18] sm:$0xf]
        %v3594 = vld [vmem:[%s3586 + $0x1c] sm:$0xf]
        %v3595 = vld [vmem:[%s3586 + $0x20] sm:$0xf]
        %v3596 = vld [vmem:[%s3586 + $0x24] sm:$0xf]
        %v3597 = vld [vmem:[%s3586 + $0x28] sm:$0xf]
        %v3598 = vld [vmem:[%s3586 + $0x2c] sm:$0xf]
        %v3599 = vld [vmem:[%s3586 + $0x30] sm:$0xf]
        %v3600 = vld [vmem:[%s3586 + $0x34] sm:$0xf]
        %v3601 = vld [vmem:[%s3586 + $0x38] sm:$0xf]
        %v3602 = vld [vmem:[%s3586 + $0x3c] sm:$0xf]
        %v3619 = vunpack.c.l.b16 %v3587
        %v3620 = vunpack.c.l.b16 %v3588
        %v3621 = vunpack.c.l.b16 %v3589
        %v3622 = vunpack.c.l.b16 %v3590
        %v3623 = vunpack.c.l.b16 %v3591
        %v3624 = vunpack.c.l.b16 %v3592
        %v3625 = vunpack.c.l.b16 %v3593
        %v3626 = vunpack.c.l.b16 %v3594
        %v3627 = vunpack.c.l.b16 %v3595
        %v3628 = vunpack.c.l.b16 %v3596
        %v3629 = vunpack.c.l.b16 %v3597
        %v3630 = vunpack.c.l.b16 %v3598
        %v3631 = vunpack.c.l.b16 %v3599
        %v3632 = vunpack.c.l.b16 %v3600
        %v3633 = vunpack.c.l.b16 %v3601
        %v3634 = vunpack.c.l.b16 %v3602
        %v3635 = vpack.c.b16 %v3620, %v3619
        %v3636 = vpack.c.b16 %v3622, %v3621
        %v3637 = vpack.c.b16 %v3624, %v3623
        %v3638 = vpack.c.b16 %v3626, %v3625
        %v3639 = vpack.c.b16 %v3628, %v3627
        %v3640 = vpack.c.b16 %v3630, %v3629
        %v3641 = vpack.c.b16 %v3632, %v3631
        %v3642 = vpack.c.b16 %v3634, %v3633
        %3651 = vmatpush.bf16.msra.mxu0 %v3642
        %3652 = vmatpush.bf16.msra.mxu0 %v3641
        %3653 = vmatpush.bf16.msra.mxu0 %v3640
        %3654 = vmatpush.bf16.msra.mxu0 %v3639
        %3655 = vmatpush.bf16.msra.mxu0 %v3638
        %3656 = vmatpush.bf16.msra.mxu0 %v3637
        %3657 = vmatpush.bf16.msra.mxu0 %v3636
        %3658 = vmatpush.bf16.msra.mxu0 %v3635
        %3659 = vmatmul.bf16.gmra.mxu0 %v3245
        %v3660 = vpop.f32.mrf.mxu0
        %v3661 = vadd.f32 0.0, %v3660
        %v3662 = vpop.f32.mrf.mxu0
        %v3663 = vadd.f32 0.0, %v3662
        %3664 = vmatmul.bf16.gmra.mxu0 %v3279
        %v3665 = vpop.f32.mrf.mxu0
        %v3666 = vadd.f32 0.0, %v3665
        %v3667 = vpop.f32.mrf.mxu0
        %v3668 = vadd.f32 0.0, %v3667
        %3669 = vmatmul.bf16.gmra.mxu0 %v3280
        %v3670 = vpop.f32.mrf.mxu0
        %v3671 = vadd.f32 0.0, %v3670
        %v3672 = vpop.f32.mrf.mxu0
        %v3673 = vadd.f32 0.0, %v3672
        %3674 = vmatmul.bf16.gmra.mxu0 %v3281
        %v3675 = vpop.f32.mrf.mxu0
        %v3676 = vadd.f32 0.0, %v3675
        %v3677 = vpop.f32.mrf.mxu0
        %v3678 = vadd.f32 0.0, %v3677
        %3679 = vmatmul.bf16.gmra.mxu0 %v3282
        %v3680 = vpop.f32.mrf.mxu0
        %v3681 = vadd.f32 0.0, %v3680
        %v3682 = vpop.f32.mrf.mxu0
        %v3683 = vadd.f32 0.0, %v3682
        %3684 = vmatmul.bf16.gmra.mxu0 %v3283
        %v3685 = vpop.f32.mrf.mxu0
        %v3686 = vadd.f32 0.0, %v3685
        %v3687 = vpop.f32.mrf.mxu0
        %v3688 = vadd.f32 0.0, %v3687
        %3689 = vmatmul.bf16.gmra.mxu0 %v3284
        %v3690 = vpop.f32.mrf.mxu0
        %v3691 = vadd.f32 0.0, %v3690
        %v3692 = vpop.f32.mrf.mxu0
        %v3693 = vadd.f32 0.0, %v3692
        %3694 = vmatmul.bf16.gmra.mxu0 %v3285
        %v3695 = vpop.f32.mrf.mxu0
        %v3696 = vadd.f32 0.0, %v3695
        %v3697 = vpop.f32.mrf.mxu0
        %v3698 = vadd.f32 0.0, %v3697
        %3699 = vdwg.mxu0
        %v3700 = vadd.f32 %v3570, %v3661
        %v3701 = vadd.f32 %v3571, %v3663
        %v3702 = vadd.f32 %v3572, %v3666
        %v3703 = vadd.f32 %v3573, %v3668
        %v3704 = vadd.f32 %v3574, %v3671
        %v3705 = vadd.f32 %v3575, %v3673
        %v3706 = vadd.f32 %v3576, %v3676
        %v3707 = vadd.f32 %v3577, %v3678
        %v3708 = vadd.f32 %v3578, %v3681
        %v3709 = vadd.f32 %v3579, %v3683
        %v3710 = vadd.f32 %v3580, %v3686
        %v3711 = vadd.f32 %v3581, %v3688
        %v3712 = vadd.f32 %v3582, %v3691
        %v3713 = vadd.f32 %v3583, %v3693
        %v3714 = vadd.f32 %v3584, %v3696
        %v3715 = vadd.f32 %v3585, %v3698
        %v3716 = vunpack.c.l.bf16 %v3245
        %v3717 = vunpack.c.h.bf16 %v3245
        %v3718 = vunpack.c.l.bf16 %v3279
        %v3719 = vunpack.c.h.bf16 %v3279
        %v3720 = vunpack.c.l.bf16 %v3280
        %v3721 = vunpack.c.h.bf16 %v3280
        %v3722 = vunpack.c.l.bf16 %v3281
        %v3723 = vunpack.c.h.bf16 %v3281
        %v3724 = vunpack.c.l.bf16 %v3282
        %v3725 = vunpack.c.h.bf16 %v3282
        %v3726 = vunpack.c.l.bf16 %v3283
        %v3727 = vunpack.c.h.bf16 %v3283
        %v3728 = vunpack.c.l.bf16 %v3284
        %v3729 = vunpack.c.h.bf16 %v3284
        %v3730 = vunpack.c.l.bf16 %v3285
        %v3731 = vunpack.c.h.bf16 %v3285
        %v3732 = vunpack.c.l.bf16 %v3286
        %v3733 = vmul.f32 %v3716, %v1698
        %v3734 = vmul.f32 %v3717, %v1700
        %v3735 = vmul.f32 %v3718, %v1702
        %v3736 = vmul.f32 %v3719, %v1704
        %v3737 = vmul.f32 %v3720, %v1706
        %v3738 = vmul.f32 %v3721, %v1708
        %v3739 = vmul.f32 %v3722, %v1710
        %v3740 = vmul.f32 %v3723, %v1712
        %v3741 = vmul.f32 %v3724, %v1714
        %v3742 = vmul.f32 %v3725, %v1716
        %v3743 = vmul.f32 %v3726, %v1718
        %v3744 = vmul.f32 %v3727, %v1720
        %v3745 = vmul.f32 %v3728, %v1722
        %v3746 = vmul.f32 %v3729, %v1724
        %v3747 = vmul.f32 %v3730, %v1726
        %v3748 = vmul.f32 %v3731, %v1728
        %v3749 = vmul.f32 %v3732, %v1727
        %v3750 = vpack.c.bf16 %v3734, %v3733
        %v3751 = vpack.c.bf16 %v3736, %v3735
        %v3752 = vpack.c.bf16 %v3738, %v3737
        %v3753 = vpack.c.bf16 %v3740, %v3739
        %v3754 = vpack.c.bf16 %v3742, %v3741
        %v3755 = vpack.c.bf16 %v3744, %v3743
        %v3756 = vpack.c.bf16 %v3746, %v3745
        %v3757 = vpack.c.bf16 %v3748, %v3747
        %v3758 = vpack.c.bf16 %v3749, %v3749
        %s3759 = scalar_lea.vmem [#allocation4], 128
        %v3760 = vld [vmem:[%s3759] sm:$0xf]
        %v3761 = vld [vmem:[%s3759 + $0x4] sm:$0xf]
        %v3762 = vld [vmem:[%s3759 + $0x8] sm:$0xf]
        %v3763 = vld [vmem:[%s3759 + $0xc] sm:$0xf]
        %v3764 = vld [vmem:[%s3759 + $0x10] sm:$0xf]
        %v3765 = vld [vmem:[%s3759 + $0x14] sm:$0xf]
        %v3766 = vld [vmem:[%s3759 + $0x18] sm:$0xf]
        %v3767 = vld [vmem:[%s3759 + $0x1c] sm:$0xf]
        %v3768 = vld [vmem:[%s3759 + $0x20] sm:$0xf]
        %v3769 = vld [vmem:[%s3759 + $0x24] sm:$0xf]
        %v3770 = vld [vmem:[%s3759 + $0x28] sm:$0xf]
        %v3771 = vld [vmem:[%s3759 + $0x2c] sm:$0xf]
        %v3772 = vld [vmem:[%s3759 + $0x30] sm:$0xf]
        %v3773 = vld [vmem:[%s3759 + $0x34] sm:$0xf]
        %v3774 = vld [vmem:[%s3759 + $0x38] sm:$0xf]
        %v3775 = vld [vmem:[%s3759 + $0x3c] sm:$0xf]
        %v3777 = vshrl.u32 %v3750, 16
        %v3779 = vshll.u32 %v3750, 16
        %v3781 = vrot.slane %v3779, 1
        %v3782 = vor.u32 %v3777, %v3781
        %v3784 = vshll.u32 %v3751, 16
        %v3786 = vrot.slane %v3784, 1
        %v3787 = vsel %vm1789, %v3782, %v3786
        %v3788 = vshrl.u32 %v3751, 16
        %v3790 = vor.u32 %v3788, %v3786
        %v3792 = vshll.u32 %v3752, 16
        %v3794 = vrot.slane %v3792, 1
        %v3795 = vsel %vm1789, %v3790, %v3794
        %v3796 = vshrl.u32 %v3752, 16
        %v3798 = vor.u32 %v3796, %v3794
        %v3800 = vshll.u32 %v3753, 16
        %v3802 = vrot.slane %v3800, 1
        %v3803 = vsel %vm1789, %v3798, %v3802
        %v3804 = vshrl.u32 %v3753, 16
        %v3806 = vor.u32 %v3804, %v3802
        %v3808 = vshll.u32 %v3754, 16
        %v3810 = vrot.slane %v3808, 1
        %v3811 = vsel %vm1789, %v3806, %v3810
        %v3812 = vshrl.u32 %v3754, 16
        %v3814 = vor.u32 %v3812, %v3810
        %v3816 = vshll.u32 %v3755, 16
        %v3818 = vrot.slane %v3816, 1
        %v3819 = vsel %vm1789, %v3814, %v3818
        %v3820 = vshrl.u32 %v3755, 16
        %v3822 = vor.u32 %v3820, %v3818
        %v3824 = vshll.u32 %v3756, 16
        %v3826 = vrot.slane %v3824, 1
        %v3827 = vsel %vm1789, %v3822, %v3826
        %v3828 = vshrl.u32 %v3756, 16
        %v3830 = vor.u32 %v3828, %v3826
        %v3832 = vshll.u32 %v3757, 16
        %v3834 = vrot.slane %v3832, 1
        %v3835 = vsel %vm1789, %v3830, %v3834
        %v3836 = vshrl.u32 %v3757, 16
        %v3838 = vor.u32 %v3836, %v3834
        %v3840 = vshll.u32 %v3758, 16
        %v3842 = vrot.slane %v3840, 1
        %v3843 = vsel %vm1789, %v3838, %v3842
        %v3868 = vunpack.c.l.b16 %v3760
        %v3869 = vunpack.c.l.b16 %v3761
        %v3870 = vunpack.c.l.b16 %v3762
        %v3871 = vunpack.c.l.b16 %v3763
        %v3872 = vunpack.c.l.b16 %v3764
        %v3873 = vunpack.c.l.b16 %v3765
        %v3874 = vunpack.c.l.b16 %v3766
        %v3875 = vunpack.c.l.b16 %v3767
        %v3876 = vunpack.c.l.b16 %v3768
        %v3877 = vunpack.c.l.b16 %v3769
        %v3878 = vunpack.c.l.b16 %v3770
        %v3879 = vunpack.c.l.b16 %v3771
        %v3880 = vunpack.c.l.b16 %v3772
        %v3881 = vunpack.c.l.b16 %v3773
        %v3882 = vunpack.c.l.b16 %v3774
        %v3883 = vunpack.c.l.b16 %v3775
        %v3884 = vpack.c.b16 %v3869, %v3868
        %v3885 = vpack.c.b16 %v3871, %v3870
        %v3886 = vpack.c.b16 %v3873, %v3872
        %v3887 = vpack.c.b16 %v3875, %v3874
        %v3888 = vpack.c.b16 %v3877, %v3876
        %v3889 = vpack.c.b16 %v3879, %v3878
        %v3890 = vpack.c.b16 %v3881, %v3880
        %v3891 = vpack.c.b16 %v3883, %v3882
        %3900 = vmatpush.bf16.msra.mxu0 %v3891
        %3901 = vmatpush.bf16.msra.mxu0 %v3890
        %3902 = vmatpush.bf16.msra.mxu0 %v3889
        %3903 = vmatpush.bf16.msra.mxu0 %v3888
        %3904 = vmatpush.bf16.msra.mxu0 %v3887
        %3905 = vmatpush.bf16.msra.mxu0 %v3886
        %3906 = vmatpush.bf16.msra.mxu0 %v3885
        %3907 = vmatpush.bf16.msra.mxu0 %v3884
        %3908 = vmatmul.bf16.gmra.mxu0 %v3787
        %v3909 = vpop.f32.mrf.mxu0
        %v3910 = vadd.f32 0.0, %v3909
        %v3911 = vpop.f32.mrf.mxu0
        %v3912 = vadd.f32 0.0, %v3911
        %3913 = vmatmul.bf16.gmra.mxu0 %v3795
        %v3914 = vpop.f32.mrf.mxu0
        %v3915 = vadd.f32 0.0, %v3914
        %v3916 = vpop.f32.mrf.mxu0
        %v3917 = vadd.f32 0.0, %v3916
        %3918 = vmatmul.bf16.gmra.mxu0 %v3803
        %v3919 = vpop.f32.mrf.mxu0
        %v3920 = vadd.f32 0.0, %v3919
        %v3921 = vpop.f32.mrf.mxu0
        %v3922 = vadd.f32 0.0, %v3921
        %3923 = vmatmul.bf16.gmra.mxu0 %v3811
        %v3924 = vpop.f32.mrf.mxu0
        %v3925 = vadd.f32 0.0, %v3924
        %v3926 = vpop.f32.mrf.mxu0
        %v3927 = vadd.f32 0.0, %v3926
        %3928 = vmatmul.bf16.gmra.mxu0 %v3819
        %v3929 = vpop.f32.mrf.mxu0
        %v3930 = vadd.f32 0.0, %v3929
        %v3931 = vpop.f32.mrf.mxu0
        %v3932 = vadd.f32 0.0, %v3931
        %3933 = vmatmul.bf16.gmra.mxu0 %v3827
        %v3934 = vpop.f32.mrf.mxu0
        %v3935 = vadd.f32 0.0, %v3934
        %v3936 = vpop.f32.mrf.mxu0
        %v3937 = vadd.f32 0.0, %v3936
        %3938 = vmatmul.bf16.gmra.mxu0 %v3835
        %v3939 = vpop.f32.mrf.mxu0
        %v3940 = vadd.f32 0.0, %v3939
        %v3941 = vpop.f32.mrf.mxu0
        %v3942 = vadd.f32 0.0, %v3941
        %3943 = vmatmul.bf16.gmra.mxu0 %v3843
        %v3944 = vpop.f32.mrf.mxu0
        %v3945 = vadd.f32 0.0, %v3944
        %v3946 = vpop.f32.mrf.mxu0
        %v3947 = vadd.f32 0.0, %v3946
        %3948 = vdwg.mxu0
        %v3949 = vadd.f32 %v3700, %v3910
        %v3950 = vadd.f32 %v3701, %v3912
        %v3951 = vadd.f32 %v3702, %v3915
        %v3952 = vadd.f32 %v3703, %v3917
        %v3953 = vadd.f32 %v3704, %v3920
        %v3954 = vadd.f32 %v3705, %v3922
        %v3955 = vadd.f32 %v3706, %v3925
        %v3956 = vadd.f32 %v3707, %v3927
        %v3957 = vadd.f32 %v3708, %v3930
        %v3958 = vadd.f32 %v3709, %v3932
        %v3959 = vadd.f32 %v3710, %v3935
        %v3960 = vadd.f32 %v3711, %v3937
        %v3961 = vadd.f32 %v3712, %v3940
        %v3962 = vadd.f32 %v3713, %v3942
        %v3963 = vadd.f32 %v3714, %v3945
        %v3964 = vadd.f32 %v3715, %v3947
        %v3965 = vrot.slane %v3286, 4
        %v3966 = vsel %vm1181, %v3315, %v3965
        %v3969 = vunpack.c.l.bf16 %v3966
        %v3970 = vunpack.c.h.bf16 %v3966
        %v3971 = vunpack.c.l.bf16 %v3965
        %v3972 = vmul.f32 %v3328, %v1258
        %v3973 = vmul.f32 %v3329, %v1260
        %v3974 = vmul.f32 %v3330, %v1262
        %v3975 = vmul.f32 %v3331, %v1264
        %v3976 = vmul.f32 %v3332, %v1266
        %v3977 = vmul.f32 %v3333, %v1268
        %v3978 = vmul.f32 %v3334, %v1270
        %v3979 = vmul.f32 %v3335, %v1272
        %v3980 = vmul.f32 %v3336, %v1274
        %v3981 = vmul.f32 %v3337, %v1276
        %v3982 = vmul.f32 %v3338, %v1278
        %v3983 = vmul.f32 %v3339, %v1280
        %v3984 = vmul.f32 %v3340, %v1282
        %v3985 = vmul.f32 %v3341, %v1284
        %v3986 = vmul.f32 %v3969, %v1286
        %v3987 = vmul.f32 %v3970, %v1288
        %v3988 = vmul.f32 %v3971, %v1287
        %v3989 = vpack.c.bf16 %v3973, %v3972
        %v3990 = vpack.c.bf16 %v3975, %v3974
        %v3991 = vpack.c.bf16 %v3977, %v3976
        %v3992 = vpack.c.bf16 %v3979, %v3978
        %v3993 = vpack.c.bf16 %v3981, %v3980
        %v3994 = vpack.c.bf16 %v3983, %v3982
        %v3995 = vpack.c.bf16 %v3985, %v3984
        %v3996 = vpack.c.bf16 %v3987, %v3986
        %v3997 = vpack.c.bf16 %v3988, %v3988
        %s3998 = scalar_lea.vmem [#allocation4], 192
        %v3999 = vld [vmem:[%s3998] sm:$0xf]
        %v4000 = vld [vmem:[%s3998 + $0x4] sm:$0xf]
        %v4001 = vld [vmem:[%s3998 + $0x8] sm:$0xf]
        %v4002 = vld [vmem:[%s3998 + $0xc] sm:$0xf]
        %v4003 = vld [vmem:[%s3998 + $0x10] sm:$0xf]
        %v4004 = vld [vmem:[%s3998 + $0x14] sm:$0xf]
        %v4005 = vld [vmem:[%s3998 + $0x18] sm:$0xf]
        %v4006 = vld [vmem:[%s3998 + $0x1c] sm:$0xf]
        %v4007 = vld [vmem:[%s3998 + $0x20] sm:$0xf]
        %v4008 = vld [vmem:[%s3998 + $0x24] sm:$0xf]
        %v4009 = vld [vmem:[%s3998 + $0x28] sm:$0xf]
        %v4010 = vld [vmem:[%s3998 + $0x2c] sm:$0xf]
        %v4011 = vld [vmem:[%s3998 + $0x30] sm:$0xf]
        %v4012 = vld [vmem:[%s3998 + $0x34] sm:$0xf]
        %v4013 = vld [vmem:[%s3998 + $0x38] sm:$0xf]
        %v4014 = vld [vmem:[%s3998 + $0x3c] sm:$0xf]
        %v4016 = vshrl.u32 %v3989, 16
        %v4018 = vrot.slane %v4016, 3
        %v4019 = vshll.u32 %v3989, 16
        %v4021 = vrot.slane %v4019, 4
        %v4022 = vor.u32 %v4018, %v4021
        %v4024 = vshrl.u32 %v3990, 16
        %v4026 = vrot.slane %v4024, 3
        %v4027 = vshll.u32 %v3990, 16
        %v4029 = vrot.slane %v4027, 4
        %v4030 = vor.u32 %v4026, %v4029
        %v4031 = vsel %vm1462, %v4022, %v4030
        %v4033 = vshrl.u32 %v3991, 16
        %v4035 = vrot.slane %v4033, 3
        %v4036 = vshll.u32 %v3991, 16
        %v4038 = vrot.slane %v4036, 4
        %v4039 = vor.u32 %v4035, %v4038
        %v4040 = vsel %vm1462, %v4030, %v4039
        %v4042 = vshrl.u32 %v3992, 16
        %v4044 = vrot.slane %v4042, 3
        %v4045 = vshll.u32 %v3992, 16
        %v4047 = vrot.slane %v4045, 4
        %v4048 = vor.u32 %v4044, %v4047
        %v4049 = vsel %vm1462, %v4039, %v4048
        %v4051 = vshrl.u32 %v3993, 16
        %v4053 = vrot.slane %v4051, 3
        %v4054 = vshll.u32 %v3993, 16
        %v4056 = vrot.slane %v4054, 4
        %v4057 = vor.u32 %v4053, %v4056
        %v4058 = vsel %vm1462, %v4048, %v4057
        %v4060 = vshrl.u32 %v3994, 16
        %v4062 = vrot.slane %v4060, 3
        %v4063 = vshll.u32 %v3994, 16
        %v4065 = vrot.slane %v4063, 4
        %v4066 = vor.u32 %v4062, %v4065
        %v4067 = vsel %vm1462, %v4057, %v4066
        %v4069 = vshrl.u32 %v3995, 16
        %v4071 = vrot.slane %v4069, 3
        %v4072 = vshll.u32 %v3995, 16
        %v4074 = vrot.slane %v4072, 4
        %v4075 = vor.u32 %v4071, %v4074
        %v4076 = vsel %vm1462, %v4066, %v4075
        %v4078 = vshrl.u32 %v3996, 16
        %v4080 = vrot.slane %v4078, 3
        %v4081 = vshll.u32 %v3996, 16
        %v4083 = vrot.slane %v4081, 4
        %v4084 = vor.u32 %v4080, %v4083
        %v4085 = vsel %vm1462, %v4075, %v4084
        %v4087 = vshrl.u32 %v3997, 16
        %v4089 = vrot.slane %v4087, 3
        %v4090 = vshll.u32 %v3997, 16
        %v4092 = vrot.slane %v4090, 4
        %v4093 = vor.u32 %v4089, %v4092
        %v4094 = vsel %vm1462, %v4084, %v4093
        %v4119 = vunpack.c.l.b16 %v3999
        %v4120 = vunpack.c.l.b16 %v4000
        %v4121 = vunpack.c.l.b16 %v4001
        %v4122 = vunpack.c.l.b16 %v4002
        %v4123 = vunpack.c.l.b16 %v4003
        %v4124 = vunpack.c.l.b16 %v4004
        %v4125 = vunpack.c.l.b16 %v4005
        %v4126 = vunpack.c.l.b16 %v4006
        %v4127 = vunpack.c.l.b16 %v4007
        %v4128 = vunpack.c.l.b16 %v4008
        %v4129 = vunpack.c.l.b16 %v4009
        %v4130 = vunpack.c.l.b16 %v4010
        %v4131 = vunpack.c.l.b16 %v4011
        %v4132 = vunpack.c.l.b16 %v4012
        %v4133 = vunpack.c.l.b16 %v4013
        %v4134 = vunpack.c.l.b16 %v4014
        %v4135 = vpack.c.b16 %v4120, %v4119
        %v4136 = vpack.c.b16 %v4122, %v4121
        %v4137 = vpack.c.b16 %v4124, %v4123
        %v4138 = vpack.c.b16 %v4126, %v4125
        %v4139 = vpack.c.b16 %v4128, %v4127
        %v4140 = vpack.c.b16 %v4130, %v4129
        %v4141 = vpack.c.b16 %v4132, %v4131
        %v4142 = vpack.c.b16 %v4134, %v4133
        %4151 = vmatpush.bf16.msra.mxu0 %v4142
        %4152 = vmatpush.bf16.msra.mxu0 %v4141
        %4153 = vmatpush.bf16.msra.mxu0 %v4140
        %4154 = vmatpush.bf16.msra.mxu0 %v4139
        %4155 = vmatpush.bf16.msra.mxu0 %v4138
        %4156 = vmatpush.bf16.msra.mxu0 %v4137
        %4157 = vmatpush.bf16.msra.mxu0 %v4136
        %4158 = vmatpush.bf16.msra.mxu0 %v4135
        %4159 = vmatmul.bf16.gmra.mxu0 %v4031
        %v4160 = vpop.f32.mrf.mxu0
        %v4161 = vadd.f32 0.0, %v4160
        %v4162 = vpop.f32.mrf.mxu0
        %v4163 = vadd.f32 0.0, %v4162
        %4164 = vmatmul.bf16.gmra.mxu0 %v4040
        %v4165 = vpop.f32.mrf.mxu0
        %v4166 = vadd.f32 0.0, %v4165
        %v4167 = vpop.f32.mrf.mxu0
        %v4168 = vadd.f32 0.0, %v4167
        %4169 = vmatmul.bf16.gmra.mxu0 %v4049
        %v4170 = vpop.f32.mrf.mxu0
        %v4171 = vadd.f32 0.0, %v4170
        %v4172 = vpop.f32.mrf.mxu0
        %v4173 = vadd.f32 0.0, %v4172
        %4174 = vmatmul.bf16.gmra.mxu0 %v4058
        %v4175 = vpop.f32.mrf.mxu0
        %v4176 = vadd.f32 0.0, %v4175
        %v4177 = vpop.f32.mrf.mxu0
        %v4178 = vadd.f32 0.0, %v4177
        %4179 = vmatmul.bf16.gmra.mxu0 %v4067
        %v4180 = vpop.f32.mrf.mxu0
        %v4181 = vadd.f32 0.0, %v4180
        %v4182 = vpop.f32.mrf.mxu0
        %v4183 = vadd.f32 0.0, %v4182
        %4184 = vmatmul.bf16.gmra.mxu0 %v4076
        %v4185 = vpop.f32.mrf.mxu0
        %v4186 = vadd.f32 0.0, %v4185
        %v4187 = vpop.f32.mrf.mxu0
        %v4188 = vadd.f32 0.0, %v4187
        %4189 = vmatmul.bf16.gmra.mxu0 %v4085
        %v4190 = vpop.f32.mrf.mxu0
        %v4191 = vadd.f32 0.0, %v4190
        %v4192 = vpop.f32.mrf.mxu0
        %v4193 = vadd.f32 0.0, %v4192
        %4194 = vmatmul.bf16.gmra.mxu0 %v4094
        %v4195 = vpop.f32.mrf.mxu0
        %v4196 = vadd.f32 0.0, %v4195
        %v4197 = vpop.f32.mrf.mxu0
        %v4198 = vadd.f32 0.0, %v4197
        %4199 = vdwg.mxu0
        %v4200 = vadd.f32 %v3949, %v4161
        %v4201 = vadd.f32 %v3950, %v4163
        %v4202 = vadd.f32 %v3951, %v4166
        %v4203 = vadd.f32 %v3952, %v4168
        %v4204 = vadd.f32 %v3953, %v4171
        %v4205 = vadd.f32 %v3954, %v4173
        %v4206 = vadd.f32 %v3955, %v4176
        %v4207 = vadd.f32 %v3956, %v4178
        %v4208 = vadd.f32 %v3957, %v4181
        %v4209 = vadd.f32 %v3958, %v4183
        %v4210 = vadd.f32 %v3959, %v4186
        %v4211 = vadd.f32 %v3960, %v4188
        %v4212 = vadd.f32 %v3961, %v4191
        %v4213 = vadd.f32 %v3962, %v4193
        %v4214 = vadd.f32 %v3963, %v4196
        %v4215 = vadd.f32 %v3964, %v4198
        %s4216 = scalar_lea.vmem [#allocation4], 256
        %v4217 = vld [vmem:[%s4216] sm:$0xf]
        %v4218 = vld [vmem:[%s4216 + $0x4] sm:$0xf]
        %v4219 = vld [vmem:[%s4216 + $0x8] sm:$0xf]
        %v4220 = vld [vmem:[%s4216 + $0xc] sm:$0xf]
        %v4221 = vld [vmem:[%s4216 + $0x10] sm:$0xf]
        %v4222 = vld [vmem:[%s4216 + $0x14] sm:$0xf]
        %v4223 = vld [vmem:[%s4216 + $0x18] sm:$0xf]
        %v4224 = vld [vmem:[%s4216 + $0x1c] sm:$0xf]
        %v4225 = vld [vmem:[%s4216 + $0x20] sm:$0xf]
        %v4226 = vld [vmem:[%s4216 + $0x24] sm:$0xf]
        %v4227 = vld [vmem:[%s4216 + $0x28] sm:$0xf]
        %v4228 = vld [vmem:[%s4216 + $0x2c] sm:$0xf]
        %v4229 = vld [vmem:[%s4216 + $0x30] sm:$0xf]
        %v4230 = vld [vmem:[%s4216 + $0x34] sm:$0xf]
        %v4231 = vld [vmem:[%s4216 + $0x38] sm:$0xf]
        %v4232 = vld [vmem:[%s4216 + $0x3c] sm:$0xf]
        %v4249 = vunpack.c.l.b16 %v4217
        %v4250 = vunpack.c.l.b16 %v4218
        %v4251 = vunpack.c.l.b16 %v4219
        %v4252 = vunpack.c.l.b16 %v4220
        %v4253 = vunpack.c.l.b16 %v4221
        %v4254 = vunpack.c.l.b16 %v4222
        %v4255 = vunpack.c.l.b16 %v4223
        %v4256 = vunpack.c.l.b16 %v4224
        %v4257 = vunpack.c.l.b16 %v4225
        %v4258 = vunpack.c.l.b16 %v4226
        %v4259 = vunpack.c.l.b16 %v4227
        %v4260 = vunpack.c.l.b16 %v4228
        %v4261 = vunpack.c.l.b16 %v4229
        %v4262 = vunpack.c.l.b16 %v4230
        %v4263 = vunpack.c.l.b16 %v4231
        %v4264 = vunpack.c.l.b16 %v4232
        %v4265 = vpack.c.b16 %v4250, %v4249
        %v4266 = vpack.c.b16 %v4252, %v4251
        %v4267 = vpack.c.b16 %v4254, %v4253
        %v4268 = vpack.c.b16 %v4256, %v4255
        %v4269 = vpack.c.b16 %v4258, %v4257
        %v4270 = vpack.c.b16 %v4260, %v4259
        %v4271 = vpack.c.b16 %v4262, %v4261
        %v4272 = vpack.c.b16 %v4264, %v4263
        %4281 = vmatpush.bf16.msra.mxu0 %v4272
        %4282 = vmatpush.bf16.msra.mxu0 %v4271
        %4283 = vmatpush.bf16.msra.mxu0 %v4270
        %4284 = vmatpush.bf16.msra.mxu0 %v4269
        %4285 = vmatpush.bf16.msra.mxu0 %v4268
        %4286 = vmatpush.bf16.msra.mxu0 %v4267
        %4287 = vmatpush.bf16.msra.mxu0 %v4266
        %4288 = vmatpush.bf16.msra.mxu0 %v4265
        %4289 = vmatmul.bf16.gmra.mxu0 %v3279
        %v4290 = vpop.f32.mrf.mxu0
        %v4291 = vadd.f32 0.0, %v4290
        %v4292 = vpop.f32.mrf.mxu0
        %v4293 = vadd.f32 0.0, %v4292
        %4294 = vmatmul.bf16.gmra.mxu0 %v3280
        %v4295 = vpop.f32.mrf.mxu0
        %v4296 = vadd.f32 0.0, %v4295
        %v4297 = vpop.f32.mrf.mxu0
        %v4298 = vadd.f32 0.0, %v4297
        %4299 = vmatmul.bf16.gmra.mxu0 %v3281
        %v4300 = vpop.f32.mrf.mxu0
        %v4301 = vadd.f32 0.0, %v4300
        %v4302 = vpop.f32.mrf.mxu0
        %v4303 = vadd.f32 0.0, %v4302
        %4304 = vmatmul.bf16.gmra.mxu0 %v3282
        %v4305 = vpop.f32.mrf.mxu0
        %v4306 = vadd.f32 0.0, %v4305
        %v4307 = vpop.f32.mrf.mxu0
        %v4308 = vadd.f32 0.0, %v4307
        %4309 = vmatmul.bf16.gmra.mxu0 %v3283
        %v4310 = vpop.f32.mrf.mxu0
        %v4311 = vadd.f32 0.0, %v4310
        %v4312 = vpop.f32.mrf.mxu0
        %v4313 = vadd.f32 0.0, %v4312
        %4314 = vmatmul.bf16.gmra.mxu0 %v3284
        %v4315 = vpop.f32.mrf.mxu0
        %v4316 = vadd.f32 0.0, %v4315
        %v4317 = vpop.f32.mrf.mxu0
        %v4318 = vadd.f32 0.0, %v4317
        %4319 = vmatmul.bf16.gmra.mxu0 %v3285
        %v4320 = vpop.f32.mrf.mxu0
        %v4321 = vadd.f32 0.0, %v4320
        %v4322 = vpop.f32.mrf.mxu0
        %v4323 = vadd.f32 0.0, %v4322
        %4324 = vmatmul.bf16.gmra.mxu0 %v3286
        %v4325 = vpop.f32.mrf.mxu0
        %v4326 = vadd.f32 0.0, %v4325
        %v4327 = vpop.f32.mrf.mxu0
        %v4328 = vadd.f32 0.0, %v4327
        %4329 = vdwg.mxu0
        %v4330 = vadd.f32 %v4200, %v4291
        %v4331 = vadd.f32 %v4201, %v4293
        %v4332 = vadd.f32 %v4202, %v4296
        %v4333 = vadd.f32 %v4203, %v4298
        %v4334 = vadd.f32 %v4204, %v4301
        %v4335 = vadd.f32 %v4205, %v4303
        %v4336 = vadd.f32 %v4206, %v4306
        %v4337 = vadd.f32 %v4207, %v4308
        %v4338 = vadd.f32 %v4208, %v4311
        %v4339 = vadd.f32 %v4209, %v4313
        %v4340 = vadd.f32 %v4210, %v4316
        %v4341 = vadd.f32 %v4211, %v4318
        %v4342 = vadd.f32 %v4212, %v4321
        %v4343 = vadd.f32 %v4213, %v4323
        %v4344 = vadd.f32 %v4214, %v4326
        %v4345 = vadd.f32 %v4215, %v4328
        %v4346 = vunpack.c.h.bf16 %v3286
        %v4347 = vunpack.c.l.bf16 %v3299
        %v4348 = vmul.f32 %v3718, %v1698
        %v4349 = vmul.f32 %v3719, %v1700
        %v4350 = vmul.f32 %v3720, %v1702
        %v4351 = vmul.f32 %v3721, %v1704
        %v4352 = vmul.f32 %v3722, %v1706
        %v4353 = vmul.f32 %v3723, %v1708
        %v4354 = vmul.f32 %v3724, %v1710
        %v4355 = vmul.f32 %v3725, %v1712
        %v4356 = vmul.f32 %v3726, %v1714
        %v4357 = vmul.f32 %v3727, %v1716
        %v4358 = vmul.f32 %v3728, %v1718
        %v4359 = vmul.f32 %v3729, %v1720
        %v4360 = vmul.f32 %v3730, %v1722
        %v4361 = vmul.f32 %v3731, %v1724
        %v4362 = vmul.f32 %v3732, %v1726
        %v4363 = vmul.f32 %v4346, %v1728
        %v4364 = vmul.f32 %v4347, %v1727
        %v4365 = vpack.c.bf16 %v4349, %v4348
        %v4366 = vpack.c.bf16 %v4351, %v4350
        %v4367 = vpack.c.bf16 %v4353, %v4352
        %v4368 = vpack.c.bf16 %v4355, %v4354
        %v4369 = vpack.c.bf16 %v4357, %v4356
        %v4370 = vpack.c.bf16 %v4359, %v4358
        %v4371 = vpack.c.bf16 %v4361, %v4360
        %v4372 = vpack.c.bf16 %v4363, %v4362
        %v4373 = vpack.c.bf16 %v4364, %v4364
        %s4374 = scalar_lea.vmem [#allocation4], 320
        %v4375 = vld [vmem:[%s4374] sm:$0xf]
        %v4376 = vld [vmem:[%s4374 + $0x4] sm:$0xf]
        %v4377 = vld [vmem:[%s4374 + $0x8] sm:$0xf]
        %v4378 = vld [vmem:[%s4374 + $0xc] sm:$0xf]
        %v4379 = vld [vmem:[%s4374 + $0x10] sm:$0xf]
        %v4380 = vld [vmem:[%s4374 + $0x14] sm:$0xf]
        %v4381 = vld [vmem:[%s4374 + $0x18] sm:$0xf]
        %v4382 = vld [vmem:[%s4374 + $0x1c] sm:$0xf]
        %v4383 = vld [vmem:[%s4374 + $0x20] sm:$0xf]
        %v4384 = vld [vmem:[%s4374 + $0x24] sm:$0xf]
        %v4385 = vld [vmem:[%s4374 + $0x28] sm:$0xf]
        %v4386 = vld [vmem:[%s4374 + $0x2c] sm:$0xf]
        %v4387 = vld [vmem:[%s4374 + $0x30] sm:$0xf]
        %v4388 = vld [vmem:[%s4374 + $0x34] sm:$0xf]
        %v4389 = vld [vmem:[%s4374 + $0x38] sm:$0xf]
        %v4390 = vld [vmem:[%s4374 + $0x3c] sm:$0xf]
        %v4392 = vshrl.u32 %v4365, 16
        %v4394 = vshll.u32 %v4365, 16
        %v4396 = vrot.slane %v4394, 1
        %v4397 = vor.u32 %v4392, %v4396
        %v4399 = vshll.u32 %v4366, 16
        %v4401 = vrot.slane %v4399, 1
        %v4402 = vsel %vm1789, %v4397, %v4401
        %v4403 = vshrl.u32 %v4366, 16
        %v4405 = vor.u32 %v4403, %v4401
        %v4407 = vshll.u32 %v4367, 16
        %v4409 = vrot.slane %v4407, 1
        %v4410 = vsel %vm1789, %v4405, %v4409
        %v4411 = vshrl.u32 %v4367, 16
        %v4413 = vor.u32 %v4411, %v4409
        %v4415 = vshll.u32 %v4368, 16
        %v4417 = vrot.slane %v4415, 1
        %v4418 = vsel %vm1789, %v4413, %v4417
        %v4419 = vshrl.u32 %v4368, 16
        %v4421 = vor.u32 %v4419, %v4417
        %v4423 = vshll.u32 %v4369, 16
        %v4425 = vrot.slane %v4423, 1
        %v4426 = vsel %vm1789, %v4421, %v4425
        %v4427 = vshrl.u32 %v4369, 16
        %v4429 = vor.u32 %v4427, %v4425
        %v4431 = vshll.u32 %v4370, 16
        %v4433 = vrot.slane %v4431, 1
        %v4434 = vsel %vm1789, %v4429, %v4433
        %v4435 = vshrl.u32 %v4370, 16
        %v4437 = vor.u32 %v4435, %v4433
        %v4439 = vshll.u32 %v4371, 16
        %v4441 = vrot.slane %v4439, 1
        %v4442 = vsel %vm1789, %v4437, %v4441
        %v4443 = vshrl.u32 %v4371, 16
        %v4445 = vor.u32 %v4443, %v4441
        %v4447 = vshll.u32 %v4372, 16
        %v4449 = vrot.slane %v4447, 1
        %v4450 = vsel %vm1789, %v4445, %v4449
        %v4451 = vshrl.u32 %v4372, 16
        %v4453 = vor.u32 %v4451, %v4449
        %v4455 = vshll.u32 %v4373, 16
        %v4457 = vrot.slane %v4455, 1
        %v4458 = vsel %vm1789, %v4453, %v4457
        %v4483 = vunpack.c.l.b16 %v4375
        %v4484 = vunpack.c.l.b16 %v4376
        %v4485 = vunpack.c.l.b16 %v4377
        %v4486 = vunpack.c.l.b16 %v4378
        %v4487 = vunpack.c.l.b16 %v4379
        %v4488 = vunpack.c.l.b16 %v4380
        %v4489 = vunpack.c.l.b16 %v4381
        %v4490 = vunpack.c.l.b16 %v4382
        %v4491 = vunpack.c.l.b16 %v4383
        %v4492 = vunpack.c.l.b16 %v4384
        %v4493 = vunpack.c.l.b16 %v4385
        %v4494 = vunpack.c.l.b16 %v4386
        %v4495 = vunpack.c.l.b16 %v4387
        %v4496 = vunpack.c.l.b16 %v4388
        %v4497 = vunpack.c.l.b16 %v4389
        %v4498 = vunpack.c.l.b16 %v4390
        %v4499 = vpack.c.b16 %v4484, %v4483
        %v4500 = vpack.c.b16 %v4486, %v4485
        %v4501 = vpack.c.b16 %v4488, %v4487
        %v4502 = vpack.c.b16 %v4490, %v4489
        %v4503 = vpack.c.b16 %v4492, %v4491
        %v4504 = vpack.c.b16 %v4494, %v4493
        %v4505 = vpack.c.b16 %v4496, %v4495
        %v4506 = vpack.c.b16 %v4498, %v4497
        %4515 = vmatpush.bf16.msra.mxu0 %v4506
        %4516 = vmatpush.bf16.msra.mxu0 %v4505
        %4517 = vmatpush.bf16.msra.mxu0 %v4504
        %4518 = vmatpush.bf16.msra.mxu0 %v4503
        %4519 = vmatpush.bf16.msra.mxu0 %v4502
        %4520 = vmatpush.bf16.msra.mxu0 %v4501
        %4521 = vmatpush.bf16.msra.mxu0 %v4500
        %4522 = vmatpush.bf16.msra.mxu0 %v4499
        %4523 = vmatmul.bf16.gmra.mxu0 %v4402
        %v4524 = vpop.f32.mrf.mxu0
        %v4525 = vadd.f32 0.0, %v4524
        %v4526 = vpop.f32.mrf.mxu0
        %v4527 = vadd.f32 0.0, %v4526
        %4528 = vmatmul.bf16.gmra.mxu0 %v4410
        %v4529 = vpop.f32.mrf.mxu0
        %v4530 = vadd.f32 0.0, %v4529
        %v4531 = vpop.f32.mrf.mxu0
        %v4532 = vadd.f32 0.0, %v4531
        %4533 = vmatmul.bf16.gmra.mxu0 %v4418
        %v4534 = vpop.f32.mrf.mxu0
        %v4535 = vadd.f32 0.0, %v4534
        %v4536 = vpop.f32.mrf.mxu0
        %v4537 = vadd.f32 0.0, %v4536
        %4538 = vmatmul.bf16.gmra.mxu0 %v4426
        %v4539 = vpop.f32.mrf.mxu0
        %v4540 = vadd.f32 0.0, %v4539
        %v4541 = vpop.f32.mrf.mxu0
        %v4542 = vadd.f32 0.0, %v4541
        %4543 = vmatmul.bf16.gmra.mxu0 %v4434
        %v4544 = vpop.f32.mrf.mxu0
        %v4545 = vadd.f32 0.0, %v4544
        %v4546 = vpop.f32.mrf.mxu0
        %v4547 = vadd.f32 0.0, %v4546
        %4548 = vmatmul.bf16.gmra.mxu0 %v4442
        %v4549 = vpop.f32.mrf.mxu0
        %v4550 = vadd.f32 0.0, %v4549
        %v4551 = vpop.f32.mrf.mxu0
        %v4552 = vadd.f32 0.0, %v4551
        %4553 = vmatmul.bf16.gmra.mxu0 %v4450
        %v4554 = vpop.f32.mrf.mxu0
        %v4555 = vadd.f32 0.0, %v4554
        %v4556 = vpop.f32.mrf.mxu0
        %v4557 = vadd.f32 0.0, %v4556
        %4558 = vmatmul.bf16.gmra.mxu0 %v4458
        %v4559 = vpop.f32.mrf.mxu0
        %v4560 = vadd.f32 0.0, %v4559
        %v4561 = vpop.f32.mrf.mxu0
        %v4562 = vadd.f32 0.0, %v4561
        %4563 = vdwg.mxu0
        %v4564 = vadd.f32 %v4330, %v4525
        %v4565 = vadd.f32 %v4331, %v4527
        %v4566 = vadd.f32 %v4332, %v4530
        %v4567 = vadd.f32 %v4333, %v4532
        %v4568 = vadd.f32 %v4334, %v4535
        %v4569 = vadd.f32 %v4335, %v4537
        %v4570 = vadd.f32 %v4336, %v4540
        %v4571 = vadd.f32 %v4337, %v4542
        %v4572 = vadd.f32 %v4338, %v4545
        %v4573 = vadd.f32 %v4339, %v4547
        %v4574 = vadd.f32 %v4340, %v4550
        %v4575 = vadd.f32 %v4341, %v4552
        %v4576 = vadd.f32 %v4342, %v4555
        %v4577 = vadd.f32 %v4343, %v4557
        %v4578 = vadd.f32 %v4344, %v4560
        %v4579 = vadd.f32 %v4345, %v4562
        %v4580 = vrot.slane %v3299, 4
        %v4581 = vsel %vm1181, %v3965, %v4580
        %v4584 = vunpack.c.l.bf16 %v4581
        %v4585 = vunpack.c.h.bf16 %v4581
        %v4586 = vunpack.c.l.bf16 %v4580
        %v4587 = vmul.f32 %v3330, %v1258
        %v4588 = vmul.f32 %v3331, %v1260
        %v4589 = vmul.f32 %v3332, %v1262
        %v4590 = vmul.f32 %v3333, %v1264
        %v4591 = vmul.f32 %v3334, %v1266
        %v4592 = vmul.f32 %v3335, %v1268
        %v4593 = vmul.f32 %v3336, %v1270
        %v4594 = vmul.f32 %v3337, %v1272
        %v4595 = vmul.f32 %v3338, %v1274
        %v4596 = vmul.f32 %v3339, %v1276
        %v4597 = vmul.f32 %v3340, %v1278
        %v4598 = vmul.f32 %v3341, %v1280
        %v4599 = vmul.f32 %v3969, %v1282
        %v4600 = vmul.f32 %v3970, %v1284
        %v4601 = vmul.f32 %v4584, %v1286
        %v4602 = vmul.f32 %v4585, %v1288
        %v4603 = vmul.f32 %v4586, %v1287
        %v4604 = vpack.c.bf16 %v4588, %v4587
        %v4605 = vpack.c.bf16 %v4590, %v4589
        %v4606 = vpack.c.bf16 %v4592, %v4591
        %v4607 = vpack.c.bf16 %v4594, %v4593
        %v4608 = vpack.c.bf16 %v4596, %v4595
        %v4609 = vpack.c.bf16 %v4598, %v4597
        %v4610 = vpack.c.bf16 %v4600, %v4599
        %v4611 = vpack.c.bf16 %v4602, %v4601
        %v4612 = vpack.c.bf16 %v4603, %v4603
        %s4613 = scalar_lea.vmem [#allocation4], 384
        %v4614 = vld [vmem:[%s4613] sm:$0xf]
        %v4615 = vld [vmem:[%s4613 + $0x4] sm:$0xf]
        %v4616 = vld [vmem:[%s4613 + $0x8] sm:$0xf]
        %v4617 = vld [vmem:[%s4613 + $0xc] sm:$0xf]
        %v4618 = vld [vmem:[%s4613 + $0x10] sm:$0xf]
        %v4619 = vld [vmem:[%s4613 + $0x14] sm:$0xf]
        %v4620 = vld [vmem:[%s4613 + $0x18] sm:$0xf]
        %v4621 = vld [vmem:[%s4613 + $0x1c] sm:$0xf]
        %v4622 = vld [vmem:[%s4613 + $0x20] sm:$0xf]
        %v4623 = vld [vmem:[%s4613 + $0x24] sm:$0xf]
        %v4624 = vld [vmem:[%s4613 + $0x28] sm:$0xf]
        %v4625 = vld [vmem:[%s4613 + $0x2c] sm:$0xf]
        %v4626 = vld [vmem:[%s4613 + $0x30] sm:$0xf]
        %v4627 = vld [vmem:[%s4613 + $0x34] sm:$0xf]
        %v4628 = vld [vmem:[%s4613 + $0x38] sm:$0xf]
        %v4629 = vld [vmem:[%s4613 + $0x3c] sm:$0xf]
        %v4631 = vshrl.u32 %v4604, 16
        %v4633 = vrot.slane %v4631, 3
        %v4634 = vshll.u32 %v4604, 16
        %v4636 = vrot.slane %v4634, 4
        %v4637 = vor.u32 %v4633, %v4636
        %v4639 = vshrl.u32 %v4605, 16
        %v4641 = vrot.slane %v4639, 3
        %v4642 = vshll.u32 %v4605, 16
        %v4644 = vrot.slane %v4642, 4
        %v4645 = vor.u32 %v4641, %v4644
        %v4646 = vsel %vm1462, %v4637, %v4645
        %v4648 = vshrl.u32 %v4606, 16
        %v4650 = vrot.slane %v4648, 3
        %v4651 = vshll.u32 %v4606, 16
        %v4653 = vrot.slane %v4651, 4
        %v4654 = vor.u32 %v4650, %v4653
        %v4655 = vsel %vm1462, %v4645, %v4654
        %v4657 = vshrl.u32 %v4607, 16
        %v4659 = vrot.slane %v4657, 3
        %v4660 = vshll.u32 %v4607, 16
        %v4662 = vrot.slane %v4660, 4
        %v4663 = vor.u32 %v4659, %v4662
        %v4664 = vsel %vm1462, %v4654, %v4663
        %v4666 = vshrl.u32 %v4608, 16
        %v4668 = vrot.slane %v4666, 3
        %v4669 = vshll.u32 %v4608, 16
        %v4671 = vrot.slane %v4669, 4
        %v4672 = vor.u32 %v4668, %v4671
        %v4673 = vsel %vm1462, %v4663, %v4672
        %v4675 = vshrl.u32 %v4609, 16
        %v4677 = vrot.slane %v4675, 3
        %v4678 = vshll.u32 %v4609, 16
        %v4680 = vrot.slane %v4678, 4
        %v4681 = vor.u32 %v4677, %v4680
        %v4682 = vsel %vm1462, %v4672, %v4681
        %v4684 = vshrl.u32 %v4610, 16
        %v4686 = vrot.slane %v4684, 3
        %v4687 = vshll.u32 %v4610, 16
        %v4689 = vrot.slane %v4687, 4
        %v4690 = vor.u32 %v4686, %v4689
        %v4691 = vsel %vm1462, %v4681, %v4690
        %v4693 = vshrl.u32 %v4611, 16
        %v4695 = vrot.slane %v4693, 3
        %v4696 = vshll.u32 %v4611, 16
        %v4698 = vrot.slane %v4696, 4
        %v4699 = vor.u32 %v4695, %v4698
        %v4700 = vsel %vm1462, %v4690, %v4699
        %v4702 = vshrl.u32 %v4612, 16
        %v4704 = vrot.slane %v4702, 3
        %v4705 = vshll.u32 %v4612, 16
        %v4707 = vrot.slane %v4705, 4
        %v4708 = vor.u32 %v4704, %v4707
        %v4709 = vsel %vm1462, %v4699, %v4708
        %v4734 = vunpack.c.l.b16 %v4614
        %v4735 = vunpack.c.l.b16 %v4615
        %v4736 = vunpack.c.l.b16 %v4616
        %v4737 = vunpack.c.l.b16 %v4617
        %v4738 = vunpack.c.l.b16 %v4618
        %v4739 = vunpack.c.l.b16 %v4619
        %v4740 = vunpack.c.l.b16 %v4620
        %v4741 = vunpack.c.l.b16 %v4621
        %v4742 = vunpack.c.l.b16 %v4622
        %v4743 = vunpack.c.l.b16 %v4623
        %v4744 = vunpack.c.l.b16 %v4624
        %v4745 = vunpack.c.l.b16 %v4625
        %v4746 = vunpack.c.l.b16 %v4626
        %v4747 = vunpack.c.l.b16 %v4627
        %v4748 = vunpack.c.l.b16 %v4628
        %v4749 = vunpack.c.l.b16 %v4629
        %v4750 = vpack.c.b16 %v4735, %v4734
        %v4751 = vpack.c.b16 %v4737, %v4736
        %v4752 = vpack.c.b16 %v4739, %v4738
        %v4753 = vpack.c.b16 %v4741, %v4740
        %v4754 = vpack.c.b16 %v4743, %v4742
        %v4755 = vpack.c.b16 %v4745, %v4744
        %v4756 = vpack.c.b16 %v4747, %v4746
        %v4757 = vpack.c.b16 %v4749, %v4748
        %4766 = vmatpush.bf16.msra.mxu0 %v4757
        %4767 = vmatpush.bf16.msra.mxu0 %v4756
        %4768 = vmatpush.bf16.msra.mxu0 %v4755
        %4769 = vmatpush.bf16.msra.mxu0 %v4754
        %4770 = vmatpush.bf16.msra.mxu0 %v4753
        %4771 = vmatpush.bf16.msra.mxu0 %v4752
        %4772 = vmatpush.bf16.msra.mxu0 %v4751
        %4773 = vmatpush.bf16.msra.mxu0 %v4750
        %4774 = vmatmul.bf16.gmra.mxu0 %v4646
        %v4775 = vpop.f32.mrf.mxu0
        %v4776 = vadd.f32 0.0, %v4775
        %v4777 = vpop.f32.mrf.mxu0
        %v4778 = vadd.f32 0.0, %v4777
        %4779 = vmatmul.bf16.gmra.mxu0 %v4655
        %v4780 = vpop.f32.mrf.mxu0
        %v4781 = vadd.f32 0.0, %v4780
        %v4782 = vpop.f32.mrf.mxu0
        %v4783 = vadd.f32 0.0, %v4782
        %4784 = vmatmul.bf16.gmra.mxu0 %v4664
        %v4785 = vpop.f32.mrf.mxu0
        %v4786 = vadd.f32 0.0, %v4785
        %v4787 = vpop.f32.mrf.mxu0
        %v4788 = vadd.f32 0.0, %v4787
        %4789 = vmatmul.bf16.gmra.mxu0 %v4673
        %v4790 = vpop.f32.mrf.mxu0
        %v4791 = vadd.f32 0.0, %v4790
        %v4792 = vpop.f32.mrf.mxu0
        %v4793 = vadd.f32 0.0, %v4792
        %4794 = vmatmul.bf16.gmra.mxu0 %v4682
        %v4795 = vpop.f32.mrf.mxu0
        %v4796 = vadd.f32 0.0, %v4795
        %v4797 = vpop.f32.mrf.mxu0
        %v4798 = vadd.f32 0.0, %v4797
        %4799 = vmatmul.bf16.gmra.mxu0 %v4691
        %v4800 = vpop.f32.mrf.mxu0
        %v4801 = vadd.f32 0.0, %v4800
        %v4802 = vpop.f32.mrf.mxu0
        %v4803 = vadd.f32 0.0, %v4802
        %4804 = vmatmul.bf16.gmra.mxu0 %v4700
        %v4805 = vpop.f32.mrf.mxu0
        %v4806 = vadd.f32 0.0, %v4805
        %v4807 = vpop.f32.mrf.mxu0
        %v4808 = vadd.f32 0.0, %v4807
        %4809 = vmatmul.bf16.gmra.mxu0 %v4709
        %v4810 = vpop.f32.mrf.mxu0
        %v4811 = vadd.f32 0.0, %v4810
        %v4812 = vpop.f32.mrf.mxu0
        %v4813 = vadd.f32 0.0, %v4812
        %4814 = vdwg.mxu0
        %v4815 = vadd.f32 %v4564, %v4776
        %v4816 = vadd.f32 %v4565, %v4778
        %v4817 = vadd.f32 %v4566, %v4781
        %v4818 = vadd.f32 %v4567, %v4783
        %v4819 = vadd.f32 %v4568, %v4786
        %v4820 = vadd.f32 %v4569, %v4788
        %v4821 = vadd.f32 %v4570, %v4791
        %v4822 = vadd.f32 %v4571, %v4793
        %v4823 = vadd.f32 %v4572, %v4796
        %v4824 = vadd.f32 %v4573, %v4798
        %v4825 = vadd.f32 %v4574, %v4801
        %v4826 = vadd.f32 %v4575, %v4803
        %v4827 = vadd.f32 %v4576, %v4806
        %v4828 = vadd.f32 %v4577, %v4808
        %v4829 = vadd.f32 %v4578, %v4811
        %v4830 = vadd.f32 %v4579, %v4813
        %s4831 = scalar_lea.vmem [#allocation4], 448
        %v4832 = vld [vmem:[%s4831] sm:$0xf]
        %v4833 = vld [vmem:[%s4831 + $0x4] sm:$0xf]
        %v4834 = vld [vmem:[%s4831 + $0x8] sm:$0xf]
        %v4835 = vld [vmem:[%s4831 + $0xc] sm:$0xf]
        %v4836 = vld [vmem:[%s4831 + $0x10] sm:$0xf]
        %v4837 = vld [vmem:[%s4831 + $0x14] sm:$0xf]
        %v4838 = vld [vmem:[%s4831 + $0x18] sm:$0xf]
        %v4839 = vld [vmem:[%s4831 + $0x1c] sm:$0xf]
        %v4840 = vld [vmem:[%s4831 + $0x20] sm:$0xf]
        %v4841 = vld [vmem:[%s4831 + $0x24] sm:$0xf]
        %v4842 = vld [vmem:[%s4831 + $0x28] sm:$0xf]
        %v4843 = vld [vmem:[%s4831 + $0x2c] sm:$0xf]
        %v4844 = vld [vmem:[%s4831 + $0x30] sm:$0xf]
        %v4845 = vld [vmem:[%s4831 + $0x34] sm:$0xf]
        %v4846 = vld [vmem:[%s4831 + $0x38] sm:$0xf]
        %v4847 = vld [vmem:[%s4831 + $0x3c] sm:$0xf]
        %v4864 = vunpack.c.l.b16 %v4832
        %v4865 = vunpack.c.l.b16 %v4833
        %v4866 = vunpack.c.l.b16 %v4834
        %v4867 = vunpack.c.l.b16 %v4835
        %v4868 = vunpack.c.l.b16 %v4836
        %v4869 = vunpack.c.l.b16 %v4837
        %v4870 = vunpack.c.l.b16 %v4838
        %v4871 = vunpack.c.l.b16 %v4839
        %v4872 = vunpack.c.l.b16 %v4840
        %v4873 = vunpack.c.l.b16 %v4841
        %v4874 = vunpack.c.l.b16 %v4842
        %v4875 = vunpack.c.l.b16 %v4843
        %v4876 = vunpack.c.l.b16 %v4844
        %v4877 = vunpack.c.l.b16 %v4845
        %v4878 = vunpack.c.l.b16 %v4846
        %v4879 = vunpack.c.l.b16 %v4847
        %v4880 = vpack.c.b16 %v4865, %v4864
        %v4881 = vpack.c.b16 %v4867, %v4866
        %v4882 = vpack.c.b16 %v4869, %v4868
        %v4883 = vpack.c.b16 %v4871, %v4870
        %v4884 = vpack.c.b16 %v4873, %v4872
        %v4885 = vpack.c.b16 %v4875, %v4874
        %v4886 = vpack.c.b16 %v4877, %v4876
        %v4887 = vpack.c.b16 %v4879, %v4878
        %4896 = vmatpush.bf16.msra.mxu0 %v4887
        %4897 = vmatpush.bf16.msra.mxu0 %v4886
        %4898 = vmatpush.bf16.msra.mxu0 %v4885
        %4899 = vmatpush.bf16.msra.mxu0 %v4884
        %4900 = vmatpush.bf16.msra.mxu0 %v4883
        %4901 = vmatpush.bf16.msra.mxu0 %v4882
        %4902 = vmatpush.bf16.msra.mxu0 %v4881
        %4903 = vmatpush.bf16.msra.mxu0 %v4880
        %4904 = vmatmul.bf16.gmra.mxu0 %v3280
        %v4905 = vpop.f32.mrf.mxu0
        %v4906 = vadd.f32 0.0, %v4905
        %v4907 = vpop.f32.mrf.mxu0
        %v4908 = vadd.f32 0.0, %v4907
        %4909 = vmatmul.bf16.gmra.mxu0 %v3281
        %v4910 = vpop.f32.mrf.mxu0
        %v4911 = vadd.f32 0.0, %v4910
        %v4912 = vpop.f32.mrf.mxu0
        %v4913 = vadd.f32 0.0, %v4912
        %4914 = vmatmul.bf16.gmra.mxu0 %v3282
        %v4915 = vpop.f32.mrf.mxu0
        %v4916 = vadd.f32 0.0, %v4915
        %v4917 = vpop.f32.mrf.mxu0
        %v4918 = vadd.f32 0.0, %v4917
        %4919 = vmatmul.bf16.gmra.mxu0 %v3283
        %v4920 = vpop.f32.mrf.mxu0
        %v4921 = vadd.f32 0.0, %v4920
        %v4922 = vpop.f32.mrf.mxu0
        %v4923 = vadd.f32 0.0, %v4922
        %4924 = vmatmul.bf16.gmra.mxu0 %v3284
        %v4925 = vpop.f32.mrf.mxu0
        %v4926 = vadd.f32 0.0, %v4925
        %v4927 = vpop.f32.mrf.mxu0
        %v4928 = vadd.f32 0.0, %v4927
        %4929 = vmatmul.bf16.gmra.mxu0 %v3285
        %v4930 = vpop.f32.mrf.mxu0
        %v4931 = vadd.f32 0.0, %v4930
        %v4932 = vpop.f32.mrf.mxu0
        %v4933 = vadd.f32 0.0, %v4932
        %4934 = vmatmul.bf16.gmra.mxu0 %v3286
        %v4935 = vpop.f32.mrf.mxu0
        %v4936 = vadd.f32 0.0, %v4935
        %v4937 = vpop.f32.mrf.mxu0
        %v4938 = vadd.f32 0.0, %v4937
        %4939 = vmatmul.bf16.gmra.mxu0 %v3299
        %v4940 = vpop.f32.mrf.mxu0
        %v4941 = vadd.f32 0.0, %v4940
        %v4942 = vpop.f32.mrf.mxu0
        %v4943 = vadd.f32 0.0, %v4942
        %4944 = vdwg.mxu0
        %v4945 = vadd.f32 %v4815, %v4906
        %v4946 = vadd.f32 %v4816, %v4908
        %v4947 = vadd.f32 %v4817, %v4911
        %v4948 = vadd.f32 %v4818, %v4913
        %v4949 = vadd.f32 %v4819, %v4916
        %v4950 = vadd.f32 %v4820, %v4918
        %v4951 = vadd.f32 %v4821, %v4921
        %v4952 = vadd.f32 %v4822, %v4923
        %v4953 = vadd.f32 %v4823, %v4926
        %v4954 = vadd.f32 %v4824, %v4928
        %v4955 = vadd.f32 %v4825, %v4931
        %v4956 = vadd.f32 %v4826, %v4933
        %v4957 = vadd.f32 %v4827, %v4936
        %v4958 = vadd.f32 %v4828, %v4938
        %v4959 = vadd.f32 %v4829, %v4941
        %v4960 = vadd.f32 %v4830, %v4943
        %v4961 = vunpack.c.h.bf16 %v3299
        %v4962 = vmul.f32 %v3720, %v1698
        %v4963 = vmul.f32 %v3721, %v1700
        %v4964 = vmul.f32 %v3722, %v1702
        %v4965 = vmul.f32 %v3723, %v1704
        %v4966 = vmul.f32 %v3724, %v1706
        %v4967 = vmul.f32 %v3725, %v1708
        %v4968 = vmul.f32 %v3726, %v1710
        %v4969 = vmul.f32 %v3727, %v1712
        %v4970 = vmul.f32 %v3728, %v1714
        %v4971 = vmul.f32 %v3729, %v1716
        %v4972 = vmul.f32 %v3730, %v1718
        %v4973 = vmul.f32 %v3731, %v1720
        %v4974 = vmul.f32 %v3732, %v1722
        %v4975 = vmul.f32 %v4346, %v1724
        %v4976 = vmul.f32 %v4347, %v1726
        %v4977 = vmul.f32 %v4961, %v1728
        %v4978 = vpack.c.bf16 %v4963, %v4962
        %v4979 = vpack.c.bf16 %v4965, %v4964
        %v4980 = vpack.c.bf16 %v4967, %v4966
        %v4981 = vpack.c.bf16 %v4969, %v4968
        %v4982 = vpack.c.bf16 %v4971, %v4970
        %v4983 = vpack.c.bf16 %v4973, %v4972
        %v4984 = vpack.c.bf16 %v4975, %v4974
        %v4985 = vpack.c.bf16 %v4977, %v4976
        %s4986 = scalar_lea.vmem [#allocation4], 512
        %v4987 = vld [vmem:[%s4986] sm:$0xf]
        %v4988 = vld [vmem:[%s4986 + $0x4] sm:$0xf]
        %v4989 = vld [vmem:[%s4986 + $0x8] sm:$0xf]
        %v4990 = vld [vmem:[%s4986 + $0xc] sm:$0xf]
        %v4991 = vld [vmem:[%s4986 + $0x10] sm:$0xf]
        %v4992 = vld [vmem:[%s4986 + $0x14] sm:$0xf]
        %v4993 = vld [vmem:[%s4986 + $0x18] sm:$0xf]
        %v4994 = vld [vmem:[%s4986 + $0x1c] sm:$0xf]
        %v4995 = vld [vmem:[%s4986 + $0x20] sm:$0xf]
        %v4996 = vld [vmem:[%s4986 + $0x24] sm:$0xf]
        %v4997 = vld [vmem:[%s4986 + $0x28] sm:$0xf]
        %v4998 = vld [vmem:[%s4986 + $0x2c] sm:$0xf]
        %v4999 = vld [vmem:[%s4986 + $0x30] sm:$0xf]
        %v5000 = vld [vmem:[%s4986 + $0x34] sm:$0xf]
        %v5001 = vld [vmem:[%s4986 + $0x38] sm:$0xf]
        %v5002 = vld [vmem:[%s4986 + $0x3c] sm:$0xf]
        %v5004 = vshrl.u32 %v4978, 16
        %v5006 = vshll.u32 %v4978, 16
        %v5008 = vrot.slane %v5006, 1
        %v5009 = vor.u32 %v5004, %v5008
        %v5011 = vshll.u32 %v4979, 16
        %v5013 = vrot.slane %v5011, 1
        %v5014 = vsel %vm1789, %v5009, %v5013
        %v5015 = vshrl.u32 %v4979, 16
        %v5017 = vor.u32 %v5015, %v5013
        %v5019 = vshll.u32 %v4980, 16
        %v5021 = vrot.slane %v5019, 1
        %v5022 = vsel %vm1789, %v5017, %v5021
        %v5023 = vshrl.u32 %v4980, 16
        %v5025 = vor.u32 %v5023, %v5021
        %v5027 = vshll.u32 %v4981, 16
        %v5029 = vrot.slane %v5027, 1
        %v5030 = vsel %vm1789, %v5025, %v5029
        %v5031 = vshrl.u32 %v4981, 16
        %v5033 = vor.u32 %v5031, %v5029
        %v5035 = vshll.u32 %v4982, 16
        %v5037 = vrot.slane %v5035, 1
        %v5038 = vsel %vm1789, %v5033, %v5037
        %v5039 = vshrl.u32 %v4982, 16
        %v5041 = vor.u32 %v5039, %v5037
        %v5043 = vshll.u32 %v4983, 16
        %v5045 = vrot.slane %v5043, 1
        %v5046 = vsel %vm1789, %v5041, %v5045
        %v5047 = vshrl.u32 %v4983, 16
        %v5049 = vor.u32 %v5047, %v5045
        %v5051 = vshll.u32 %v4984, 16
        %v5053 = vrot.slane %v5051, 1
        %v5054 = vsel %vm1789, %v5049, %v5053
        %v5055 = vshrl.u32 %v4984, 16
        %v5057 = vor.u32 %v5055, %v5053
        %v5059 = vshll.u32 %v4985, 16
        %v5061 = vrot.slane %v5059, 1
        %v5062 = vsel %vm1789, %v5057, %v5061
        %v5063 = vshrl.u32 %v4985, 16
        %v5065 = vor.u32 %v5063, %v5061
        %v5066 = vsel %vm1789, %v5065, %v3086
        %v5091 = vunpack.c.l.b16 %v4987
        %v5092 = vunpack.c.l.b16 %v4988
        %v5093 = vunpack.c.l.b16 %v4989
        %v5094 = vunpack.c.l.b16 %v4990
        %v5095 = vunpack.c.l.b16 %v4991
        %v5096 = vunpack.c.l.b16 %v4992
        %v5097 = vunpack.c.l.b16 %v4993
        %v5098 = vunpack.c.l.b16 %v4994
        %v5099 = vunpack.c.l.b16 %v4995
        %v5100 = vunpack.c.l.b16 %v4996
        %v5101 = vunpack.c.l.b16 %v4997
        %v5102 = vunpack.c.l.b16 %v4998
        %v5103 = vunpack.c.l.b16 %v4999
        %v5104 = vunpack.c.l.b16 %v5000
        %v5105 = vunpack.c.l.b16 %v5001
        %v5106 = vunpack.c.l.b16 %v5002
        %v5107 = vpack.c.b16 %v5092, %v5091
        %v5108 = vpack.c.b16 %v5094, %v5093
        %v5109 = vpack.c.b16 %v5096, %v5095
        %v5110 = vpack.c.b16 %v5098, %v5097
        %v5111 = vpack.c.b16 %v5100, %v5099
        %v5112 = vpack.c.b16 %v5102, %v5101
        %v5113 = vpack.c.b16 %v5104, %v5103
        %v5114 = vpack.c.b16 %v5106, %v5105
        %5123 = vmatpush.bf16.msra.mxu0 %v5114
        %5124 = vmatpush.bf16.msra.mxu0 %v5113
        %5125 = vmatpush.bf16.msra.mxu0 %v5112
        %5126 = vmatpush.bf16.msra.mxu0 %v5111
        %5127 = vmatpush.bf16.msra.mxu0 %v5110
        %5128 = vmatpush.bf16.msra.mxu0 %v5109
        %5129 = vmatpush.bf16.msra.mxu0 %v5108
        %5130 = vmatpush.bf16.msra.mxu0 %v5107
        %5131 = vmatmul.bf16.gmra.mxu0 %v5014
        %v5132 = vpop.f32.mrf.mxu0
        %v5133 = vadd.f32 0.0, %v5132
        %v5134 = vpop.f32.mrf.mxu0
        %v5135 = vadd.f32 0.0, %v5134
        %5136 = vmatmul.bf16.gmra.mxu0 %v5022
        %v5137 = vpop.f32.mrf.mxu0
        %v5138 = vadd.f32 0.0, %v5137
        %v5139 = vpop.f32.mrf.mxu0
        %v5140 = vadd.f32 0.0, %v5139
        %5141 = vmatmul.bf16.gmra.mxu0 %v5030
        %v5142 = vpop.f32.mrf.mxu0
        %v5143 = vadd.f32 0.0, %v5142
        %v5144 = vpop.f32.mrf.mxu0
        %v5145 = vadd.f32 0.0, %v5144
        %5146 = vmatmul.bf16.gmra.mxu0 %v5038
        %v5147 = vpop.f32.mrf.mxu0
        %v5148 = vadd.f32 0.0, %v5147
        %v5149 = vpop.f32.mrf.mxu0
        %v5150 = vadd.f32 0.0, %v5149
        %5151 = vmatmul.bf16.gmra.mxu0 %v5046
        %v5152 = vpop.f32.mrf.mxu0
        %v5153 = vadd.f32 0.0, %v5152
        %v5154 = vpop.f32.mrf.mxu0
        %v5155 = vadd.f32 0.0, %v5154
        %5156 = vmatmul.bf16.gmra.mxu0 %v5054
        %v5157 = vpop.f32.mrf.mxu0
        %v5158 = vadd.f32 0.0, %v5157
        %v5159 = vpop.f32.mrf.mxu0
        %v5160 = vadd.f32 0.0, %v5159
        %5161 = vmatmul.bf16.gmra.mxu0 %v5062
        %v5162 = vpop.f32.mrf.mxu0
        %v5163 = vadd.f32 0.0, %v5162
        %v5164 = vpop.f32.mrf.mxu0
        %v5165 = vadd.f32 0.0, %v5164
        %5166 = vmatmul.bf16.gmra.mxu0 %v5066
        %v5167 = vpop.f32.mrf.mxu0
        %v5168 = vadd.f32 0.0, %v5167
        %v5169 = vpop.f32.mrf.mxu0
        %v5170 = vadd.f32 0.0, %v5169
        %5171 = vdwg.mxu0
        %v5172 = vadd.f32 %v4945, %v5133
        %v5173 = vadd.f32 %v4946, %v5135
        %v5174 = vadd.f32 %v4947, %v5138
        %v5175 = vadd.f32 %v4948, %v5140
        %v5176 = vadd.f32 %v4949, %v5143
        %v5177 = vadd.f32 %v4950, %v5145
        %v5178 = vadd.f32 %v4951, %v5148
        %v5179 = vadd.f32 %v4952, %v5150
        %v5180 = vadd.f32 %v4953, %v5153
        %v5181 = vadd.f32 %v4954, %v5155
        %v5182 = vadd.f32 %v4955, %v5158
        %v5183 = vadd.f32 %v4956, %v5160
        %v5184 = vadd.f32 %v4957, %v5163
        %v5185 = vadd.f32 %v4958, %v5165
        %v5186 = vadd.f32 %v4959, %v5168
        %v5187 = vadd.f32 %v4960, %v5170
        %v5188 = vld [vmem:[#allocation6] sm:$0x1]
        %v5190 = vperm.slane %v5188, 0
        %v5192 = vadd.f32 %v5172, %v5190
        %v5193 = vadd.f32 %v5173, %v5190
        %v5194 = vadd.f32 %v5174, %v5190
        %v5195 = vadd.f32 %v5175, %v5190
        %v5196 = vadd.f32 %v5176, %v5190
        %v5197 = vadd.f32 %v5177, %v5190
        %v5198 = vadd.f32 %v5178, %v5190
        %v5199 = vadd.f32 %v5179, %v5190
        %v5200 = vadd.f32 %v5180, %v5190
        %v5201 = vadd.f32 %v5181, %v5190
        %v5202 = vadd.f32 %v5182, %v5190
        %v5203 = vadd.f32 %v5183, %v5190
        %v5204 = vadd.f32 %v5184, %v5190
        %v5205 = vadd.f32 %v5185, %v5190
        %v5206 = vadd.f32 %v5186, %v5190
        %v5207 = vadd.f32 %v5187, %v5190
        %5208 = vst [vmem:[%s710] sm:$0xff] %v5192
        %5209 = vst [vmem:[%s710 + $0x8] sm:$0xff] %v5193
        %5210 = vst [vmem:[%s710 + $0x10] sm:$0xff] %v5194
        %5211 = vst [vmem:[%s710 + $0x18] sm:$0xff] %v5195
        %5212 = vst [vmem:[%s710 + $0x20] sm:$0xff] %v5196
        %5213 = vst [vmem:[%s710 + $0x28] sm:$0xff] %v5197
        %5214 = vst [vmem:[%s710 + $0x30] sm:$0xff] %v5198
        %5215 = vst [vmem:[%s710 + $0x38] sm:$0xff] %v5199
        %5216 = vst [vmem:[%s710 + $0x40] sm:$0xff] %v5200
        %5217 = vst [vmem:[%s710 + $0x48] sm:$0xff] %v5201
        %5218 = vst [vmem:[%s710 + $0x50] sm:$0xff] %v5202
        %5219 = vst [vmem:[%s710 + $0x58] sm:$0xff] %v5203
        %5220 = vst [vmem:[%s710 + $0x60] sm:$0xff] %v5204
        %5221 = vst [vmem:[%s710 + $0x68] sm:$0xff] %v5205
        %5222 = vst [vmem:[%s710 + $0x70] sm:$0xff] %v5206
        %5223 = vst [vmem:[%s710 + $0x78] sm:$0xff] %v5207
        %s5224 = smul.u32 16, %s27
        %p5225 = scmp.lt.s32.totalorder %s26, 1
        %s5226 = scalar_select %p5225, %s26, 1
        %p5227 = scmp.lt.s32.totalorder %s5224, 31
        %s5228 = scalar_select %p5227, %s5224, 31
        %s5229 = smul.addr %s5226, 32
        %s5230 = sadd.s32 %s5228, %s5229
        %s5231 = smul.addr %s5230, 8
        %s5232 = scalar_lea.vmem %s9, %s5231
        // Predicated region
        $region69: #{daf_forward.6} parent=55 // pred_check
          %p5233 = pneg %p317
        $region70: #{daf_forward.6} parent=55 // pred_check_branch
          %5235 = sbr.rel (%p5233) target = $region72
        $region71: #{daf_forward.6} parent=55 // pred_region
          %s5236 = smul.u32 16, %s27
        $region72: #{daf_forward.6} parent=55 // pred_fallthru
          _
      $region56: #{daf_forward.6} parent=5 // pred_fallthru
        _
      %p5237 = scmp.le.s32.totalorder 2, %s17
      // Predicated region
      $region73: #{daf_forward.6} parent=5 // pred_check
        %p5238 = pneg %p5237
      $region74: #{daf_forward.6} parent=5 // pred_check_branch
        %5240 = sbr.rel (%p5238) target = $region76
      $region75: #{daf_forward.6} parent=5 // pred_region
        %s5241 = ssub.s32 %s17, 2
        // Predicated region
        $region77: #{daf_forward.6} parent=75 // pred_check
          %p5242 = pneg %p323
        $region78: #{daf_forward.6} parent=75 // pred_check_branch
          %5244 = sbr.rel (%p5242) target = $region80
        $region79: #{daf_forward.6} parent=75 // pred_region
          %s5245 = smul.u32 16, %s29
          %p5246 = scmp.lt.s32.totalorder %s28, 1
          %s5247 = scalar_select %p5246, %s28, 1
          %p5248 = scmp.lt.s32.totalorder %s5245, 31
          %s5249 = scalar_select %p5248, %s5245, 31
          %s5250 = smul.addr %s5247, 32
          %s5251 = sadd.s32 %s5249, %s5250
          %s5252 = smul.addr %s5251, 8
          %s5253 = scalar_lea.vmem %s9, %s5252
        $region80: #{daf_forward.6} parent=75 // pred_fallthru
          _
      $region76: #{daf_forward.6} parent=5 // pred_fallthru
        _
    $region6: #{daf_forward.6} parent=1 // loop_footer
      %s21 = sadd.s32 1, %s17
    $region7: #{daf_forward.6} parent=1 // loop_footer_branch
      %16 = sbr.rel target = $region3
    $region8: #{daf_forward.6} parent=1 // loop_exit
      _
    %5254 = vsyncpa [#allocation3], 1
    %s5255 = scalar_lea.sflag [#allocation3], 1
    %5256 = vsyncpa %s5255, 1
    %5257 = vsyncpa [#allocation5], 1

// kernel: daf_forward.7
$region0: #{daf_forward.7}
  #allocation0 [shape = 'u32[]', space=smem, size = 0x4, offset = 0x4, fixed_abs, tag = 'smem constant byte address 0x4 - core index']
  #allocation1 [shape = 'u32[72,128]{1,0:T(1,128)}', space=vmem, size = 0x9000, scoped, tag = 'internal scratch']
  %s0 = inlined_call_operand.vmem [shape: bf16[512,1152], index: 0, kind: input, shape index: {}]
  %s1 = inlined_call_operand.vmem [shape: bf16[1152,128], index: 1, kind: input, shape index: {}]
  %s2 = inlined_call_operand.vmem [shape: f32[1,128], index: 2, kind: input, shape index: {}]
  %s3 = inlined_call_operand.vmem [shape: f32[512,128], index: 3, kind: output, shape index: {}]
  %s4 = sld [smem:[#allocation0]]
  $region45: #{daf_forward.7} parent=0
    _
  %s6 = ssub.s32 1, %s4
  %s7 = scalar_select 0, %s6, %s4
  loop: start=0, step=1, limit=10
  $region2: #{daf_forward.7} parent=0 // loop_pre_header
    _
  $region3: #{daf_forward.7} parent=0 // loop_header
    %s9 = sphi 0, %s13
    %p10 = scmp.ge.s32.totalorder %s9, 10
    %s19 = sphi 0, %s21
    %s22 = sphi 0, %s19
    %s23 = sphi 0, %s22
    %s39 = sphi 0, %s23
    %s43 = sphi 0, %s43
    %s45 = sphi 0, %s43
    %s46 = sphi 0, %s45
    %s60 = sphi 0, %s46
    %s64 = sphi 0, %s64
    %s66 = sphi 0, %s64
    %s67 = sphi 0, %s66
    %s81 = sphi 0, %s67
    %s87 = sphi 0, %s89
    %s90 = sphi 0, %s87
    %s91 = sphi 0, %s90
    %s107 = sphi 0, %s91
  $region4: #{daf_forward.7} parent=0 // loop_header_branch
    %12 = sbr.rel (%p10) target = $region8
  $region5: #{daf_forward.7} parent=0 // loop_body
    %s14 = ssub.s32 %s9, 1
    %s15 = ssub.s32 %s9, 2
    %s16 = sadd.s32 %s9, 1
    %s17 = ssub.s32 %s9, %s16
    %p18 = scmp.eq.s32.totalorder %s17, 0
    %s20 = sadd.s32 %s19, 1
    %s21 = scalar_select %p18, %s19, %s20
    %p24 = pneg %p18
    %p25 = scmp.eq.s32.totalorder %s9, 7
    %p26 = por %p24, %p25
    %p27 = scmp.ne.s32.totalorder %s19, %s22
    %p28 = scmp.eq.s32.totalorder %s9, 0
    %p29 = por %p27, %p28
    %p30 = scmp.ne.s32.totalorder %s19, %s22
    %p31 = scmp.eq.s32.totalorder %s14, 7
    %p32 = por %p30, %p31
    %p33 = scmp.ne.s32.totalorder %s22, %s23
    %p34 = scmp.eq.s32.totalorder %s14, 0
    %p35 = por %p33, %p34
    %p36 = scmp.ne.s32.totalorder %s22, %s23
    %p37 = scmp.eq.s32.totalorder %s15, 7
    %p38 = por %p36, %p37
    %p40 = scmp.ne.s32.totalorder %s23, %s39
    %p41 = scmp.eq.s32.totalorder %s15, 0
    %p42 = por %p40, %p41
    %s44 = sadd.s32 %s43, 1
    %p47 = scmp.eq.s32.totalorder %s9, 7
    %p48 = scmp.ne.s32.totalorder %s43, %s45
    %p49 = scmp.eq.s32.totalorder %s9, 0
    %p50 = por %p48, %p49
    %p51 = scmp.ne.s32.totalorder %s43, %s45
    %p52 = scmp.eq.s32.totalorder %s14, 7
    %p53 = por %p51, %p52
    %p54 = scmp.ne.s32.totalorder %s45, %s46
    %p55 = scmp.eq.s32.totalorder %s14, 0
    %p56 = por %p54, %p55
    %p57 = scmp.ne.s32.totalorder %s45, %s46
    %p58 = scmp.eq.s32.totalorder %s15, 7
    %p59 = por %p57, %p58
    %p61 = scmp.ne.s32.totalorder %s46, %s60
    %p62 = scmp.eq.s32.totalorder %s15, 0
    %p63 = por %p61, %p62
    %s65 = sadd.s32 %s64, 1
    %p68 = scmp.eq.s32.totalorder %s9, 7
    %p69 = scmp.ne.s32.totalorder %s64, %s66
    %p70 = scmp.eq.s32.totalorder %s9, 0
    %p71 = por %p69, %p70
    %p72 = scmp.ne.s32.totalorder %s64, %s66
    %p73 = scmp.eq.s32.totalorder %s14, 7
    %p74 = por %p72, %p73
    %p75 = scmp.ne.s32.totalorder %s66, %s67
    %p76 = scmp.eq.s32.totalorder %s14, 0
    %p77 = por %p75, %p76
    %p78 = scmp.ne.s32.totalorder %s66, %s67
    %p79 = scmp.eq.s32.totalorder %s15, 7
    %p80 = por %p78, %p79
    %p82 = scmp.ne.s32.totalorder %s67, %s81
    %p83 = scmp.eq.s32.totalorder %s15, 0
    %p84 = por %p82, %p83
    %s85 = ssub.s32 %s9, %s16
    %p86 = scmp.eq.s32.totalorder %s85, 0
    %s88 = sadd.s32 %s87, 1
    %s89 = scalar_select %p86, %s87, %s88
    %p92 = pneg %p86
    %p93 = scmp.eq.s32.totalorder %s9, 7
    %p94 = por %p92, %p93
    %p95 = scmp.ne.s32.totalorder %s87, %s90
    %p96 = scmp.eq.s32.totalorder %s9, 0
    %p97 = por %p95, %p96
    %p98 = scmp.ne.s32.totalorder %s87, %s90
    %p99 = scmp.eq.s32.totalorder %s14, 7
    %p100 = por %p98, %p99
    %p101 = scmp.ne.s32.totalorder %s90, %s91
    %p102 = scmp.eq.s32.totalorder %s14, 0
    %p103 = por %p101, %p102
    %p104 = scmp.ne.s32.totalorder %s90, %s91
    %p105 = scmp.eq.s32.totalorder %s15, 7
    %p106 = por %p104, %p105
    %p108 = scmp.ne.s32.totalorder %s91, %s107
    %p109 = scmp.eq.s32.totalorder %s15, 0
    %p110 = por %p108, %p109
    %p111 = scmp.le.s32.totalorder 1, %s9
    %p112 = scmp.lt.s32.totalorder %s9, 9
    %p113 = pnand %p111, %p112
    %p114 = pneg %p113
    // Predicated region
    $region9: #{daf_forward.7} parent=5 // pred_check
      _
    $region10: #{daf_forward.7} parent=5 // pred_check_branch
      %116 = sbr.rel (%p113) target = $region12
    $region11: #{daf_forward.7} parent=5 // pred_region
      %s117 = ssub.s32 %s9, 1
      // Predicated region
      $region13: #{daf_forward.7} parent=11 // pred_check
        %p118 = pneg %p56
      $region14: #{daf_forward.7} parent=11 // pred_check_branch
        %120 = sbr.rel (%p118) target = $region16
      $region15: #{daf_forward.7} parent=11 // pred_region
        _
      $region16: #{daf_forward.7} parent=11 // pred_fallthru
        _
      // Predicated region
      $region17: #{daf_forward.7} parent=11 // pred_check
        %p121 = pneg %p77
      $region18: #{daf_forward.7} parent=11 // pred_check_branch
        %123 = sbr.rel (%p121) target = $region20
      $region19: #{daf_forward.7} parent=11 // pred_region
        _
      $region20: #{daf_forward.7} parent=11 // pred_fallthru
        _
    $region12: #{daf_forward.7} parent=5 // pred_fallthru
      _
    %p124 = scmp.lt.s32.totalorder %s9, 8
    // Predicated region
    $region21: #{daf_forward.7} parent=5 // pred_check
      %p125 = pneg %p124
    $region22: #{daf_forward.7} parent=5 // pred_check_branch
      %127 = sbr.rel (%p125) target = $region24
    $region23: #{daf_forward.7} parent=5 // pred_region
      // Predicated region
      $region25: #{daf_forward.7} parent=23 // pred_check
        %p128 = pneg %p29
      $region26: #{daf_forward.7} parent=23 // pred_check_branch
        %130 = sbr.rel (%p128) target = $region28
      $region27: #{daf_forward.7} parent=23 // pred_region
        %s131 = smul.u32 8, %s9
        %p132 = scmp.lt.s32.totalorder %s131, 63
        %s133 = scalar_select %p132, %s131, 63
        %s134 = smul.addr %s133, 9
        %s135 = smul.addr %s134, 4
        %s136 = scalar_lea.vmem %s0, %s135
        %s137 = smul.u32 8, %s9
      $region28: #{daf_forward.7} parent=23 // pred_fallthru
        _
    $region24: #{daf_forward.7} parent=5 // pred_fallthru
      _
    %p138 = scmp.le.s32.totalorder 1, %s9
    %p139 = scmp.lt.s32.totalorder %s9, 9
    %p140 = pnand %p138, %p139
    %p141 = pneg %p140
    // Predicated region
    $region29: #{daf_forward.7} parent=5 // pred_check
      _
    $region30: #{daf_forward.7} parent=5 // pred_check_branch
      %143 = sbr.rel (%p140) target = $region32
    $region31: #{daf_forward.7} parent=5 // pred_region
      %s144 = ssub.s32 %s9, 1
      %s145 = smul.u32 8, %s14
      %p146 = scmp.lt.s32.totalorder %s145, 63
      %s147 = scalar_select %p146, %s145, 63
      %s148 = smul.addr %s147, 9
      %s149 = smul.addr %s148, 4
      %s150 = scalar_lea.vmem %s0, %s149
      %p151 = pneg %p35
      %p152 = pneg %p32
      %p153 = pneg %p56
      %p154 = pneg %p53
      %p155 = pneg %p77
      %p156 = pneg %p74
      %p157 = pneg %p103
      %p158 = pneg %p100
      %s159 = smul.u32 8, %s14
      %p160 = scmp.lt.s32.totalorder %s159, 63
      %s161 = scalar_select %p160, %s159, 63
      %s162 = smul.addr %s161, 8
      %s163 = scalar_lea.vmem %s3, %s162
      %s164 = smul.u32 8, %s14
      %p165 = scmp.lt.s32.totalorder %s164, 63
      %s166 = scalar_select %p165, %s164, 63
      %s167 = smul.addr %s166, 9
      %s168 = smul.addr %s167, 4
      %s169 = scalar_lea.vmem %s0, %s168
      %s170 = smul.u32 8, %s14
      %s171 = smul.u32 8, %s14
      %p172 = scmp.lt.s32.totalorder %s171, 63
      %s173 = scalar_select %p172, %s171, 63
      %s174 = smul.addr %s173, 8
      %s175 = scalar_lea.vmem %s3, %s174
      %s176 = smul.u32 8, %s14
      %v177 = vld [vmem:[%s169] sm:$0xff]
      %v178 = vld [vmem:[%s169 + $0x8] sm:$0xff]
      %v179 = vld [vmem:[%s169 + $0x10] sm:$0xff]
      %v180 = vld [vmem:[%s169 + $0x18] sm:$0xff]
      %v181 = vld [vmem:[%s169 + $0x20] sm:$0xf]
      %v182 = vld [vmem:[%s169 + $0x24] sm:$0xff]
      %v183 = vld [vmem:[%s169 + $0x2c] sm:$0xff]
      %v184 = vld [vmem:[%s169 + $0x34] sm:$0xff]
      %v185 = vld [vmem:[%s169 + $0x3c] sm:$0xff]
      %v186 = vld [vmem:[%s169 + $0x44] sm:$0xf]
      %v187 = vld [vmem:[%s169 + $0x48] sm:$0xff]
      %v188 = vld [vmem:[%s169 + $0x50] sm:$0xff]
      %v189 = vld [vmem:[%s169 + $0x58] sm:$0xff]
      %v190 = vld [vmem:[%s169 + $0x60] sm:$0xff]
      %v191 = vld [vmem:[%s169 + $0x68] sm:$0xf]
      %v192 = vld [vmem:[%s169 + $0x6c] sm:$0xff]
      %v193 = vld [vmem:[%s169 + $0x74] sm:$0xff]
      %v194 = vld [vmem:[%s169 + $0x7c] sm:$0xff]
      %v195 = vld [vmem:[%s169 + $0x84] sm:$0xff]
      %v196 = vld [vmem:[%s169 + $0x8c] sm:$0xf]
      %v197 = vld [vmem:[%s169 + $0x90] sm:$0xff]
      %v198 = vld [vmem:[%s169 + $0x98] sm:$0xff]
      %v199 = vld [vmem:[%s169 + $0xa0] sm:$0xff]
      %v200 = vld [vmem:[%s169 + $0xa8] sm:$0xff]
      %v201 = vld [vmem:[%s169 + $0xb0] sm:$0xf]
      %v202 = vld [vmem:[%s169 + $0xb4] sm:$0xff]
      %v203 = vld [vmem:[%s169 + $0xbc] sm:$0xff]
      %v204 = vld [vmem:[%s169 + $0xc4] sm:$0xff]
      %v205 = vld [vmem:[%s169 + $0xcc] sm:$0xff]
      %v206 = vld [vmem:[%s169 + $0xd4] sm:$0xf]
      %v207 = vld [vmem:[%s169 + $0xd8] sm:$0xff]
      %v208 = vld [vmem:[%s169 + $0xe0] sm:$0xff]
      %v209 = vld [vmem:[%s169 + $0xe8] sm:$0xff]
      %v210 = vld [vmem:[%s169 + $0xf0] sm:$0xff]
      %v211 = vld [vmem:[%s169 + $0xf8] sm:$0xf]
      %v212 = vld [vmem:[%s169 + $0xfc] sm:$0xff]
      %v213 = vld [vmem:[%s169 + $0x104] sm:$0xff]
      %v214 = vld [vmem:[%s169 + $0x10c] sm:$0xff]
      %v215 = vld [vmem:[%s169 + $0x114] sm:$0xff]
      %v216 = vld [vmem:[%s169 + $0x11c] sm:$0xf]
      %v217 = vld [vmem:[%s1] sm:$0xf]
      %v218 = vld [vmem:[%s1 + $0x4] sm:$0xf]
      %v219 = vld [vmem:[%s1 + $0x8] sm:$0xf]
      %v220 = vld [vmem:[%s1 + $0xc] sm:$0xf]
      %v221 = vld [vmem:[%s1 + $0x10] sm:$0xf]
      %v222 = vld [vmem:[%s1 + $0x14] sm:$0xf]
      %v223 = vld [vmem:[%s1 + $0x18] sm:$0xf]
      %v224 = vld [vmem:[%s1 + $0x1c] sm:$0xf]
      %v225 = vld [vmem:[%s1 + $0x20] sm:$0xf]
      %v226 = vld [vmem:[%s1 + $0x24] sm:$0xf]
      %v227 = vld [vmem:[%s1 + $0x28] sm:$0xf]
      %v228 = vld [vmem:[%s1 + $0x2c] sm:$0xf]
      %v229 = vld [vmem:[%s1 + $0x30] sm:$0xf]
      %v230 = vld [vmem:[%s1 + $0x34] sm:$0xf]
      %v231 = vld [vmem:[%s1 + $0x38] sm:$0xf]
      %v232 = vld [vmem:[%s1 + $0x3c] sm:$0xf]
      %v233 = vld [vmem:[%s1 + $0x40] sm:$0xf]
      %v234 = vld [vmem:[%s1 + $0x44] sm:$0xf]
      %v235 = vld [vmem:[%s1 + $0x48] sm:$0xf]
      %v236 = vld [vmem:[%s1 + $0x4c] sm:$0xf]
      %v237 = vld [vmem:[%s1 + $0x50] sm:$0xf]
      %v238 = vld [vmem:[%s1 + $0x54] sm:$0xf]
      %v239 = vld [vmem:[%s1 + $0x58] sm:$0xf]
      %v240 = vld [vmem:[%s1 + $0x5c] sm:$0xf]
      %v241 = vld [vmem:[%s1 + $0x60] sm:$0xf]
      %v242 = vld [vmem:[%s1 + $0x64] sm:$0xf]
      %v243 = vld [vmem:[%s1 + $0x68] sm:$0xf]
      %v244 = vld [vmem:[%s1 + $0x6c] sm:$0xf]
      %v245 = vld [vmem:[%s1 + $0x70] sm:$0xf]
      %v246 = vld [vmem:[%s1 + $0x74] sm:$0xf]
      %v247 = vld [vmem:[%s1 + $0x78] sm:$0xf]
      %v248 = vld [vmem:[%s1 + $0x7c] sm:$0xf]
      %v249 = vld [vmem:[%s1 + $0x80] sm:$0xf]
      %v250 = vld [vmem:[%s1 + $0x84] sm:$0xf]
      %v251 = vld [vmem:[%s1 + $0x88] sm:$0xf]
      %v252 = vld [vmem:[%s1 + $0x8c] sm:$0xf]
      %v253 = vld [vmem:[%s1 + $0x90] sm:$0xf]
      %v254 = vld [vmem:[%s1 + $0x94] sm:$0xf]
      %v255 = vld [vmem:[%s1 + $0x98] sm:$0xf]
      %v256 = vld [vmem:[%s1 + $0x9c] sm:$0xf]
      %v257 = vld [vmem:[%s1 + $0xa0] sm:$0xf]
      %v258 = vld [vmem:[%s1 + $0xa4] sm:$0xf]
      %v259 = vld [vmem:[%s1 + $0xa8] sm:$0xf]
      %v260 = vld [vmem:[%s1 + $0xac] sm:$0xf]
      %v261 = vld [vmem:[%s1 + $0xb0] sm:$0xf]
      %v262 = vld [vmem:[%s1 + $0xb4] sm:$0xf]
      %v263 = vld [vmem:[%s1 + $0xb8] sm:$0xf]
      %v264 = vld [vmem:[%s1 + $0xbc] sm:$0xf]
      %v265 = vld [vmem:[%s1 + $0xc0] sm:$0xf]
      %v266 = vld [vmem:[%s1 + $0xc4] sm:$0xf]
      %v267 = vld [vmem:[%s1 + $0xc8] sm:$0xf]
      %v268 = vld [vmem:[%s1 + $0xcc] sm:$0xf]
      %v269 = vld [vmem:[%s1 + $0xd0] sm:$0xf]
      %v270 = vld [vmem:[%s1 + $0xd4] sm:$0xf]
      %v271 = vld [vmem:[%s1 + $0xd8] sm:$0xf]
      %v272 = vld [vmem:[%s1 + $0xdc] sm:$0xf]
      %v273 = vld [vmem:[%s1 + $0xe0] sm:$0xf]
      %v274 = vld [vmem:[%s1 + $0xe4] sm:$0xf]
      %v275 = vld [vmem:[%s1 + $0xe8] sm:$0xf]
      %v276 = vld [vmem:[%s1 + $0xec] sm:$0xf]
      %v277 = vld [vmem:[%s1 + $0xf0] sm:$0xf]
      %v278 = vld [vmem:[%s1 + $0xf4] sm:$0xf]
      %v279 = vld [vmem:[%s1 + $0xf8] sm:$0xf]
      %v280 = vld [vmem:[%s1 + $0xfc] sm:$0xf]
      %v281 = vld [vmem:[%s1 + $0x100] sm:$0xf]
      %v282 = vld [vmem:[%s1 + $0x104] sm:$0xf]
      %v283 = vld [vmem:[%s1 + $0x108] sm:$0xf]
      %v284 = vld [vmem:[%s1 + $0x10c] sm:$0xf]
      %v285 = vld [vmem:[%s1 + $0x110] sm:$0xf]
      %v286 = vld [vmem:[%s1 + $0x114] sm:$0xf]
      %v287 = vld [vmem:[%s1 + $0x118] sm:$0xf]
      %v288 = vld [vmem:[%s1 + $0x11c] sm:$0xf]
      %v289 = vld [vmem:[%s1 + $0x120] sm:$0xf]
      %v290 = vld [vmem:[%s1 + $0x124] sm:$0xf]
      %v291 = vld [vmem:[%s1 + $0x128] sm:$0xf]
      %v292 = vld [vmem:[%s1 + $0x12c] sm:$0xf]
      %v293 = vld [vmem:[%s1 + $0x130] sm:$0xf]
      %v294 = vld [vmem:[%s1 + $0x134] sm:$0xf]
      %v295 = vld [vmem:[%s1 + $0x138] sm:$0xf]
      %v296 = vld [vmem:[%s1 + $0x13c] sm:$0xf]
      %v297 = vld [vmem:[%s1 + $0x140] sm:$0xf]
      %v298 = vld [vmem:[%s1 + $0x144] sm:$0xf]
      %v299 = vld [vmem:[%s1 + $0x148] sm:$0xf]
      %v300 = vld [vmem:[%s1 + $0x14c] sm:$0xf]
      %v301 = vld [vmem:[%s1 + $0x150] sm:$0xf]
      %v302 = vld [vmem:[%s1 + $0x154] sm:$0xf]
      %v303 = vld [vmem:[%s1 + $0x158] sm:$0xf]
      %v304 = vld [vmem:[%s1 + $0x15c] sm:$0xf]
      %v305 = vld [vmem:[%s1 + $0x160] sm:$0xf]
      %v306 = vld [vmem:[%s1 + $0x164] sm:$0xf]
      %v307 = vld [vmem:[%s1 + $0x168] sm:$0xf]
      %v308 = vld [vmem:[%s1 + $0x16c] sm:$0xf]
      %v309 = vld [vmem:[%s1 + $0x170] sm:$0xf]
      %v310 = vld [vmem:[%s1 + $0x174] sm:$0xf]
      %v311 = vld [vmem:[%s1 + $0x178] sm:$0xf]
      %v312 = vld [vmem:[%s1 + $0x17c] sm:$0xf]
      %v313 = vld [vmem:[%s1 + $0x180] sm:$0xf]
      %v314 = vld [vmem:[%s1 + $0x184] sm:$0xf]
      %v315 = vld [vmem:[%s1 + $0x188] sm:$0xf]
      %v316 = vld [vmem:[%s1 + $0x18c] sm:$0xf]
      %v317 = vld [vmem:[%s1 + $0x190] sm:$0xf]
      %v318 = vld [vmem:[%s1 + $0x194] sm:$0xf]
      %v319 = vld [vmem:[%s1 + $0x198] sm:$0xf]
      %v320 = vld [vmem:[%s1 + $0x19c] sm:$0xf]
      %v321 = vld [vmem:[%s1 + $0x1a0] sm:$0xf]
      %v322 = vld [vmem:[%s1 + $0x1a4] sm:$0xf]
      %v323 = vld [vmem:[%s1 + $0x1a8] sm:$0xf]
      %v324 = vld [vmem:[%s1 + $0x1ac] sm:$0xf]
      %v325 = vld [vmem:[%s1 + $0x1b0] sm:$0xf]
      %v326 = vld [vmem:[%s1 + $0x1b4] sm:$0xf]
      %v327 = vld [vmem:[%s1 + $0x1b8] sm:$0xf]
      %v328 = vld [vmem:[%s1 + $0x1bc] sm:$0xf]
      %v329 = vld [vmem:[%s1 + $0x1c0] sm:$0xf]
      %v330 = vld [vmem:[%s1 + $0x1c4] sm:$0xf]
      %v331 = vld [vmem:[%s1 + $0x1c8] sm:$0xf]
      %v332 = vld [vmem:[%s1 + $0x1cc] sm:$0xf]
      %v333 = vld [vmem:[%s1 + $0x1d0] sm:$0xf]
      %v334 = vld [vmem:[%s1 + $0x1d4] sm:$0xf]
      %v335 = vld [vmem:[%s1 + $0x1d8] sm:$0xf]
      %v336 = vld [vmem:[%s1 + $0x1dc] sm:$0xf]
      %v337 = vld [vmem:[%s1 + $0x1e0] sm:$0xf]
      %v338 = vld [vmem:[%s1 + $0x1e4] sm:$0xf]
      %v339 = vld [vmem:[%s1 + $0x1e8] sm:$0xf]
      %v340 = vld [vmem:[%s1 + $0x1ec] sm:$0xf]
      %v341 = vld [vmem:[%s1 + $0x1f0] sm:$0xf]
      %v342 = vld [vmem:[%s1 + $0x1f4] sm:$0xf]
      %v343 = vld [vmem:[%s1 + $0x1f8] sm:$0xf]
      %v344 = vld [vmem:[%s1 + $0x1fc] sm:$0xf]
      %v345 = vld [vmem:[%s1 + $0x200] sm:$0xf]
      %v346 = vld [vmem:[%s1 + $0x204] sm:$0xf]
      %v347 = vld [vmem:[%s1 + $0x208] sm:$0xf]
      %v348 = vld [vmem:[%s1 + $0x20c] sm:$0xf]
      %v349 = vld [vmem:[%s1 + $0x210] sm:$0xf]
      %v350 = vld [vmem:[%s1 + $0x214] sm:$0xf]
      %v351 = vld [vmem:[%s1 + $0x218] sm:$0xf]
      %v352 = vld [vmem:[%s1 + $0x21c] sm:$0xf]
      %v353 = vld [vmem:[%s1 + $0x220] sm:$0xf]
      %v354 = vld [vmem:[%s1 + $0x224] sm:$0xf]
      %v355 = vld [vmem:[%s1 + $0x228] sm:$0xf]
      %v356 = vld [vmem:[%s1 + $0x22c] sm:$0xf]
      %v357 = vld [vmem:[%s1 + $0x230] sm:$0xf]
      %v358 = vld [vmem:[%s1 + $0x234] sm:$0xf]
      %v359 = vld [vmem:[%s1 + $0x238] sm:$0xf]
      %v360 = vld [vmem:[%s1 + $0x23c] sm:$0xf]
      %v361 = vld [vmem:[%s2] sm:$0x1]
      %v363 = vperm.slane %v361, 0
      %v405 = vunpack.c.l.b16 %v177
      %v406 = vunpack.c.h.b16 %v177
      %v407 = vunpack.c.l.b16 %v178
      %v408 = vunpack.c.h.b16 %v178
      %v409 = vunpack.c.l.b16 %v179
      %v410 = vunpack.c.h.b16 %v179
      %v411 = vunpack.c.l.b16 %v180
      %v412 = vunpack.c.h.b16 %v180
      %v413 = vunpack.c.l.b16 %v181
      %v414 = vunpack.c.l.b16 %v182
      %v415 = vunpack.c.h.b16 %v182
      %v416 = vunpack.c.l.b16 %v183
      %v417 = vunpack.c.h.b16 %v183
      %v418 = vunpack.c.l.b16 %v184
      %v419 = vunpack.c.h.b16 %v184
      %v420 = vunpack.c.l.b16 %v185
      %v421 = vunpack.c.h.b16 %v185
      %v422 = vunpack.c.l.b16 %v186
      %v423 = vunpack.c.l.b16 %v187
      %v424 = vunpack.c.h.b16 %v187
      %v425 = vunpack.c.l.b16 %v188
      %v426 = vunpack.c.h.b16 %v188
      %v427 = vunpack.c.l.b16 %v189
      %v428 = vunpack.c.h.b16 %v189
      %v429 = vunpack.c.l.b16 %v190
      %v430 = vunpack.c.h.b16 %v190
      %v431 = vunpack.c.l.b16 %v191
      %v432 = vunpack.c.l.b16 %v192
      %v433 = vunpack.c.h.b16 %v192
      %v434 = vunpack.c.l.b16 %v193
      %v435 = vunpack.c.h.b16 %v193
      %v436 = vunpack.c.l.b16 %v194
      %v437 = vunpack.c.h.b16 %v194
      %v438 = vunpack.c.l.b16 %v195
      %v439 = vunpack.c.h.b16 %v195
      %v440 = vunpack.c.l.b16 %v196
      %v441 = vunpack.c.l.b16 %v197
      %v442 = vunpack.c.h.b16 %v197
      %v443 = vunpack.c.l.b16 %v198
      %v444 = vunpack.c.h.b16 %v198
      %v445 = vunpack.c.l.b16 %v199
      %v446 = vunpack.c.h.b16 %v199
      %v447 = vunpack.c.l.b16 %v200
      %v448 = vunpack.c.h.b16 %v200
      %v449 = vunpack.c.l.b16 %v201
      %v450 = vunpack.c.l.b16 %v202
      %v451 = vunpack.c.h.b16 %v202
      %v452 = vunpack.c.l.b16 %v203
      %v453 = vunpack.c.h.b16 %v203
      %v454 = vunpack.c.l.b16 %v204
      %v455 = vunpack.c.h.b16 %v204
      %v456 = vunpack.c.l.b16 %v205
      %v457 = vunpack.c.h.b16 %v205
      %v458 = vunpack.c.l.b16 %v206
      %v459 = vunpack.c.l.b16 %v207
      %v460 = vunpack.c.h.b16 %v207
      %v461 = vunpack.c.l.b16 %v208
      %v462 = vunpack.c.h.b16 %v208
      %v463 = vunpack.c.l.b16 %v209
      %v464 = vunpack.c.h.b16 %v209
      %v465 = vunpack.c.l.b16 %v210
      %v466 = vunpack.c.h.b16 %v210
      %v467 = vunpack.c.l.b16 %v211
      %v468 = vunpack.c.l.b16 %v212
      %v469 = vunpack.c.h.b16 %v212
      %v470 = vunpack.c.l.b16 %v213
      %v471 = vunpack.c.h.b16 %v213
      %v472 = vunpack.c.l.b16 %v214
      %v473 = vunpack.c.h.b16 %v214
      %v474 = vunpack.c.l.b16 %v215
      %v475 = vunpack.c.h.b16 %v215
      %v476 = vunpack.c.l.b16 %v216
      %v477 = vpack.c.b16 %v414, %v405
      %v478 = vpack.c.b16 %v415, %v406
      %v479 = vpack.c.b16 %v416, %v407
      %v480 = vpack.c.b16 %v417, %v408
      %v481 = vpack.c.b16 %v418, %v409
      %v482 = vpack.c.b16 %v419, %v410
      %v483 = vpack.c.b16 %v420, %v411
      %v484 = vpack.c.b16 %v421, %v412
      %v485 = vpack.c.b16 %v422, %v413
      %v486 = vpack.c.b16 %v432, %v423
      %v487 = vpack.c.b16 %v433, %v424
      %v488 = vpack.c.b16 %v434, %v425
      %v489 = vpack.c.b16 %v435, %v426
      %v490 = vpack.c.b16 %v436, %v427
      %v491 = vpack.c.b16 %v437, %v428
      %v492 = vpack.c.b16 %v438, %v429
      %v493 = vpack.c.b16 %v439, %v430
      %v494 = vpack.c.b16 %v440, %v431
      %v495 = vpack.c.b16 %v450, %v441
      %v496 = vpack.c.b16 %v451, %v442
      %v497 = vpack.c.b16 %v452, %v443
      %v498 = vpack.c.b16 %v453, %v444
      %v499 = vpack.c.b16 %v454, %v445
      %v500 = vpack.c.b16 %v455, %v446
      %v501 = vpack.c.b16 %v456, %v447
      %v502 = vpack.c.b16 %v457, %v448
      %v503 = vpack.c.b16 %v458, %v449
      %v504 = vpack.c.b16 %v468, %v459
      %v505 = vpack.c.b16 %v469, %v460
      %v506 = vpack.c.b16 %v470, %v461
      %v507 = vpack.c.b16 %v471, %v462
      %v508 = vpack.c.b16 %v472, %v463
      %v509 = vpack.c.b16 %v473, %v464
      %v510 = vpack.c.b16 %v474, %v465
      %v511 = vpack.c.b16 %v475, %v466
      %v512 = vpack.c.b16 %v476, %v467
      %v693 = vunpack.c.l.b16 %v217
      %v694 = vunpack.c.l.b16 %v218
      %v695 = vunpack.c.l.b16 %v219
      %v696 = vunpack.c.l.b16 %v220
      %v697 = vunpack.c.l.b16 %v221
      %v698 = vunpack.c.l.b16 %v222
      %v699 = vunpack.c.l.b16 %v223
      %v700 = vunpack.c.l.b16 %v224
      %v701 = vunpack.c.l.b16 %v225
      %v702 = vunpack.c.l.b16 %v226
      %v703 = vunpack.c.l.b16 %v227
      %v704 = vunpack.c.l.b16 %v228
      %v705 = vunpack.c.l.b16 %v229
      %v706 = vunpack.c.l.b16 %v230
      %v707 = vunpack.c.l.b16 %v231
      %v708 = vunpack.c.l.b16 %v232
      %v709 = vunpack.c.l.b16 %v233
      %v710 = vunpack.c.l.b16 %v234
      %v711 = vunpack.c.l.b16 %v235
      %v712 = vunpack.c.l.b16 %v236
      %v713 = vunpack.c.l.b16 %v237
      %v714 = vunpack.c.l.b16 %v238
      %v715 = vunpack.c.l.b16 %v239
      %v716 = vunpack.c.l.b16 %v240
      %v717 = vunpack.c.l.b16 %v241
      %v718 = vunpack.c.l.b16 %v242
      %v719 = vunpack.c.l.b16 %v243
      %v720 = vunpack.c.l.b16 %v244
      %v721 = vunpack.c.l.b16 %v245
      %v722 = vunpack.c.l.b16 %v246
      %v723 = vunpack.c.l.b16 %v247
      %v724 = vunpack.c.l.b16 %v248
      %v725 = vunpack.c.l.b16 %v249
      %v726 = vunpack.c.l.b16 %v250
      %v727 = vunpack.c.l.b16 %v251
      %v728 = vunpack.c.l.b16 %v252
      %v729 = vunpack.c.l.b16 %v253
      %v730 = vunpack.c.l.b16 %v254
      %v731 = vunpack.c.l.b16 %v255
      %v732 = vunpack.c.l.b16 %v256
      %v733 = vunpack.c.l.b16 %v257
      %v734 = vunpack.c.l.b16 %v258
      %v735 = vunpack.c.l.b16 %v259
      %v736 = vunpack.c.l.b16 %v260
      %v737 = vunpack.c.l.b16 %v261
      %v738 = vunpack.c.l.b16 %v262
      %v739 = vunpack.c.l.b16 %v263
      %v740 = vunpack.c.l.b16 %v264
      %v741 = vunpack.c.l.b16 %v265
      %v742 = vunpack.c.l.b16 %v266
      %v743 = vunpack.c.l.b16 %v267
      %v744 = vunpack.c.l.b16 %v268
      %v745 = vunpack.c.l.b16 %v269
      %v746 = vunpack.c.l.b16 %v270
      %v747 = vunpack.c.l.b16 %v271
      %v748 = vunpack.c.l.b16 %v272
      %v749 = vunpack.c.l.b16 %v273
      %v750 = vunpack.c.l.b16 %v274
      %v751 = vunpack.c.l.b16 %v275
      %v752 = vunpack.c.l.b16 %v276
      %v753 = vunpack.c.l.b16 %v277
      %v754 = vunpack.c.l.b16 %v278
      %v755 = vunpack.c.l.b16 %v279
      %v756 = vunpack.c.l.b16 %v280
      %v757 = vunpack.c.l.b16 %v281
      %v758 = vunpack.c.l.b16 %v282
      %v759 = vunpack.c.l.b16 %v283
      %v760 = vunpack.c.l.b16 %v284
      %v761 = vunpack.c.l.b16 %v285
      %v762 = vunpack.c.l.b16 %v286
      %v763 = vunpack.c.l.b16 %v287
      %v764 = vunpack.c.l.b16 %v288
      %v765 = vunpack.c.l.b16 %v289
      %v766 = vunpack.c.l.b16 %v290
      %v767 = vunpack.c.l.b16 %v291
      %v768 = vunpack.c.l.b16 %v292
      %v769 = vunpack.c.l.b16 %v293
      %v770 = vunpack.c.l.b16 %v294
      %v771 = vunpack.c.l.b16 %v295
      %v772 = vunpack.c.l.b16 %v296
      %v773 = vunpack.c.l.b16 %v297
      %v774 = vunpack.c.l.b16 %v298
      %v775 = vunpack.c.l.b16 %v299
      %v776 = vunpack.c.l.b16 %v300
      %v777 = vunpack.c.l.b16 %v301
      %v778 = vunpack.c.l.b16 %v302
      %v779 = vunpack.c.l.b16 %v303
      %v780 = vunpack.c.l.b16 %v304
      %v781 = vunpack.c.l.b16 %v305
      %v782 = vunpack.c.l.b16 %v306
      %v783 = vunpack.c.l.b16 %v307
      %v784 = vunpack.c.l.b16 %v308
      %v785 = vunpack.c.l.b16 %v309
      %v786 = vunpack.c.l.b16 %v310
      %v787 = vunpack.c.l.b16 %v311
      %v788 = vunpack.c.l.b16 %v312
      %v789 = vunpack.c.l.b16 %v313
      %v790 = vunpack.c.l.b16 %v314
      %v791 = vunpack.c.l.b16 %v315
      %v792 = vunpack.c.l.b16 %v316
      %v793 = vunpack.c.l.b16 %v317
      %v794 = vunpack.c.l.b16 %v318
      %v795 = vunpack.c.l.b16 %v319
      %v796 = vunpack.c.l.b16 %v320
      %v797 = vunpack.c.l.b16 %v321
      %v798 = vunpack.c.l.b16 %v322
      %v799 = vunpack.c.l.b16 %v323
      %v800 = vunpack.c.l.b16 %v324
      %v801 = vunpack.c.l.b16 %v325
      %v802 = vunpack.c.l.b16 %v326
      %v803 = vunpack.c.l.b16 %v327
      %v804 = vunpack.c.l.b16 %v328
      %v805 = vunpack.c.l.b16 %v329
      %v806 = vunpack.c.l.b16 %v330
      %v807 = vunpack.c.l.b16 %v331
      %v808 = vunpack.c.l.b16 %v332
      %v809 = vunpack.c.l.b16 %v333
      %v810 = vunpack.c.l.b16 %v334
      %v811 = vunpack.c.l.b16 %v335
      %v812 = vunpack.c.l.b16 %v336
      %v813 = vunpack.c.l.b16 %v337
      %v814 = vunpack.c.l.b16 %v338
      %v815 = vunpack.c.l.b16 %v339
      %v816 = vunpack.c.l.b16 %v340
      %v817 = vunpack.c.l.b16 %v341
      %v818 = vunpack.c.l.b16 %v342
      %v819 = vunpack.c.l.b16 %v343
      %v820 = vunpack.c.l.b16 %v344
      %v821 = vunpack.c.l.b16 %v345
      %v822 = vunpack.c.l.b16 %v346
      %v823 = vunpack.c.l.b16 %v347
      %v824 = vunpack.c.l.b16 %v348
      %v825 = vunpack.c.l.b16 %v349
      %v826 = vunpack.c.l.b16 %v350
      %v827 = vunpack.c.l.b16 %v351
      %v828 = vunpack.c.l.b16 %v352
      %v829 = vunpack.c.l.b16 %v353
      %v830 = vunpack.c.l.b16 %v354
      %v831 = vunpack.c.l.b16 %v355
      %v832 = vunpack.c.l.b16 %v356
      %v833 = vunpack.c.l.b16 %v357
      %v834 = vunpack.c.l.b16 %v358
      %v835 = vunpack.c.l.b16 %v359
      %v836 = vunpack.c.l.b16 %v360
      %v837 = vpack.c.b16 %v694, %v693
      %v838 = vpack.c.b16 %v696, %v695
      %v839 = vpack.c.b16 %v698, %v697
      %v840 = vpack.c.b16 %v700, %v699
      %v841 = vpack.c.b16 %v702, %v701
      %v842 = vpack.c.b16 %v704, %v703
      %v843 = vpack.c.b16 %v706, %v705
      %v844 = vpack.c.b16 %v708, %v707
      %v845 = vpack.c.b16 %v710, %v709
      %v846 = vpack.c.b16 %v712, %v711
      %v847 = vpack.c.b16 %v714, %v713
      %v848 = vpack.c.b16 %v716, %v715
      %v849 = vpack.c.b16 %v718, %v717
      %v850 = vpack.c.b16 %v720, %v719
      %v851 = vpack.c.b16 %v722, %v721
      %v852 = vpack.c.b16 %v724, %v723
      %v853 = vpack.c.b16 %v726, %v725
      %v854 = vpack.c.b16 %v728, %v727
      %v855 = vpack.c.b16 %v730, %v729
      %v856 = vpack.c.b16 %v732, %v731
      %v857 = vpack.c.b16 %v734, %v733
      %v858 = vpack.c.b16 %v736, %v735
      %v859 = vpack.c.b16 %v738, %v737
      %v860 = vpack.c.b16 %v740, %v739
      %v861 = vpack.c.b16 %v742, %v741
      %v862 = vpack.c.b16 %v744, %v743
      %v863 = vpack.c.b16 %v746, %v745
      %v864 = vpack.c.b16 %v748, %v747
      %v865 = vpack.c.b16 %v750, %v749
      %v866 = vpack.c.b16 %v752, %v751
      %v867 = vpack.c.b16 %v754, %v753
      %v868 = vpack.c.b16 %v756, %v755
      %v869 = vpack.c.b16 %v758, %v757
      %v870 = vpack.c.b16 %v760, %v759
      %v871 = vpack.c.b16 %v762, %v761
      %v872 = vpack.c.b16 %v764, %v763
      %v873 = vpack.c.b16 %v766, %v765
      %v874 = vpack.c.b16 %v768, %v767
      %v875 = vpack.c.b16 %v770, %v769
      %v876 = vpack.c.b16 %v772, %v771
      %v877 = vpack.c.b16 %v774, %v773
      %v878 = vpack.c.b16 %v776, %v775
      %v879 = vpack.c.b16 %v778, %v777
      %v880 = vpack.c.b16 %v780, %v779
      %v881 = vpack.c.b16 %v782, %v781
      %v882 = vpack.c.b16 %v784, %v783
      %v883 = vpack.c.b16 %v786, %v785
      %v884 = vpack.c.b16 %v788, %v787
      %v885 = vpack.c.b16 %v790, %v789
      %v886 = vpack.c.b16 %v792, %v791
      %v887 = vpack.c.b16 %v794, %v793
      %v888 = vpack.c.b16 %v796, %v795
      %v889 = vpack.c.b16 %v798, %v797
      %v890 = vpack.c.b16 %v800, %v799
      %v891 = vpack.c.b16 %v802, %v801
      %v892 = vpack.c.b16 %v804, %v803
      %v893 = vpack.c.b16 %v806, %v805
      %v894 = vpack.c.b16 %v808, %v807
      %v895 = vpack.c.b16 %v810, %v809
      %v896 = vpack.c.b16 %v812, %v811
      %v897 = vpack.c.b16 %v814, %v813
      %v898 = vpack.c.b16 %v816, %v815
      %v899 = vpack.c.b16 %v818, %v817
      %v900 = vpack.c.b16 %v820, %v819
      %v901 = vpack.c.b16 %v822, %v821
      %v902 = vpack.c.b16 %v824, %v823
      %v903 = vpack.c.b16 %v826, %v825
      %v904 = vpack.c.b16 %v828, %v827
      %v905 = vpack.c.b16 %v830, %v829
      %v906 = vpack.c.b16 %v832, %v831
      %v907 = vpack.c.b16 %v834, %v833
      %v908 = vpack.c.b16 %v836, %v835
      %981 = vmatpush.bf16.msra.mxu0 %v844
      %982 = vmatpush.bf16.msra.mxu0 %v843
      %983 = vmatpush.bf16.msra.mxu0 %v842
      %984 = vmatpush.bf16.msra.mxu0 %v841
      %985 = vmatpush.bf16.msra.mxu0 %v840
      %986 = vmatpush.bf16.msra.mxu0 %v839
      %987 = vmatpush.bf16.msra.mxu0 %v838
      %988 = vmatpush.bf16.msra.mxu0 %v837
      %989 = vmatmul.bf16.gmra.mxu0 %v477
      %v990 = vpop.f32.mrf.mxu0
      %v991 = vadd.f32 %v363, %v990
      %v992 = vpop.f32.mrf.mxu0
      %v993 = vadd.f32 %v363, %v992
      %994 = vmatmul.bf16.gmra.mxu0 %v486
      %v995 = vpop.f32.mrf.mxu0
      %v996 = vadd.f32 %v363, %v995
      %v997 = vpop.f32.mrf.mxu0
      %v998 = vadd.f32 %v363, %v997
      %999 = vmatmul.bf16.gmra.mxu0 %v495
      %v1000 = vpop.f32.mrf.mxu0
      %v1001 = vadd.f32 %v363, %v1000
      %v1002 = vpop.f32.mrf.mxu0
      %v1003 = vadd.f32 %v363, %v1002
      %1004 = vmatmul.bf16.gmra.mxu0 %v504
      %v1005 = vpop.f32.mrf.mxu0
      %v1006 = vadd.f32 %v363, %v1005
      %v1007 = vpop.f32.mrf.mxu0
      %v1008 = vadd.f32 %v363, %v1007
      %1009 = vdwg.mxu0
      %1010 = vmatpush.bf16.msra.mxu0 %v852
      %1011 = vmatpush.bf16.msra.mxu0 %v851
      %1012 = vmatpush.bf16.msra.mxu0 %v850
      %1013 = vmatpush.bf16.msra.mxu0 %v849
      %1014 = vmatpush.bf16.msra.mxu0 %v848
      %1015 = vmatpush.bf16.msra.mxu0 %v847
      %1016 = vmatpush.bf16.msra.mxu0 %v846
      %1017 = vmatpush.bf16.msra.mxu0 %v845
      %1018 = vmatmul.bf16.gmra.mxu0 %v478
      %v1019 = vpop.f32.mrf.mxu0
      %v1020 = vadd.f32 %v991, %v1019
      %v1021 = vpop.f32.mrf.mxu0
      %v1022 = vadd.f32 %v993, %v1021
      %1023 = vmatmul.bf16.gmra.mxu0 %v487
      %v1024 = vpop.f32.mrf.mxu0
      %v1025 = vadd.f32 %v996, %v1024
      %v1026 = vpop.f32.mrf.mxu0
      %v1027 = vadd.f32 %v998, %v1026
      %1028 = vmatmul.bf16.gmra.mxu0 %v496
      %v1029 = vpop.f32.mrf.mxu0
      %v1030 = vadd.f32 %v1001, %v1029
      %v1031 = vpop.f32.mrf.mxu0
      %v1032 = vadd.f32 %v1003, %v1031
      %1033 = vmatmul.bf16.gmra.mxu0 %v505
      %v1034 = vpop.f32.mrf.mxu0
      %v1035 = vadd.f32 %v1006, %v1034
      %v1036 = vpop.f32.mrf.mxu0
      %v1037 = vadd.f32 %v1008, %v1036
      %1038 = vdwg.mxu0
      %1039 = vmatpush.bf16.msra.mxu0 %v860
      %1040 = vmatpush.bf16.msra.mxu0 %v859
      %1041 = vmatpush.bf16.msra.mxu0 %v858
      %1042 = vmatpush.bf16.msra.mxu0 %v857
      %1043 = vmatpush.bf16.msra.mxu0 %v856
      %1044 = vmatpush.bf16.msra.mxu0 %v855
      %1045 = vmatpush.bf16.msra.mxu0 %v854
      %1046 = vmatpush.bf16.msra.mxu0 %v853
      %1047 = vmatmul.bf16.gmra.mxu0 %v479
      %v1048 = vpop.f32.mrf.mxu0
      %v1049 = vadd.f32 %v1020, %v1048
      %v1050 = vpop.f32.mrf.mxu0
      %v1051 = vadd.f32 %v1022, %v1050
      %1052 = vmatmul.bf16.gmra.mxu0 %v488
      %v1053 = vpop.f32.mrf.mxu0
      %v1054 = vadd.f32 %v1025, %v1053
      %v1055 = vpop.f32.mrf.mxu0
      %v1056 = vadd.f32 %v1027, %v1055
      %1057 = vmatmul.bf16.gmra.mxu0 %v497
      %v1058 = vpop.f32.mrf.mxu0
      %v1059 = vadd.f32 %v1030, %v1058
      %v1060 = vpop.f32.mrf.mxu0
      %v1061 = vadd.f32 %v1032, %v1060
      %1062 = vmatmul.bf16.gmra.mxu0 %v506
      %v1063 = vpop.f32.mrf.mxu0
      %v1064 = vadd.f32 %v1035, %v1063
      %v1065 = vpop.f32.mrf.mxu0
      %v1066 = vadd.f32 %v1037, %v1065
      %1067 = vdwg.mxu0
      %1068 = vmatpush.bf16.msra.mxu0 %v868
      %1069 = vmatpush.bf16.msra.mxu0 %v867
      %1070 = vmatpush.bf16.msra.mxu0 %v866
      %1071 = vmatpush.bf16.msra.mxu0 %v865
      %1072 = vmatpush.bf16.msra.mxu0 %v864
      %1073 = vmatpush.bf16.msra.mxu0 %v863
      %1074 = vmatpush.bf16.msra.mxu0 %v862
      %1075 = vmatpush.bf16.msra.mxu0 %v861
      %1076 = vmatmul.bf16.gmra.mxu0 %v480
      %v1077 = vpop.f32.mrf.mxu0
      %v1078 = vadd.f32 %v1049, %v1077
      %v1079 = vpop.f32.mrf.mxu0
      %v1080 = vadd.f32 %v1051, %v1079
      %1081 = vmatmul.bf16.gmra.mxu0 %v489
      %v1082 = vpop.f32.mrf.mxu0
      %v1083 = vadd.f32 %v1054, %v1082
      %v1084 = vpop.f32.mrf.mxu0
      %v1085 = vadd.f32 %v1056, %v1084
      %1086 = vmatmul.bf16.gmra.mxu0 %v498
      %v1087 = vpop.f32.mrf.mxu0
      %v1088 = vadd.f32 %v1059, %v1087
      %v1089 = vpop.f32.mrf.mxu0
      %v1090 = vadd.f32 %v1061, %v1089
      %1091 = vmatmul.bf16.gmra.mxu0 %v507
      %v1092 = vpop.f32.mrf.mxu0
      %v1093 = vadd.f32 %v1064, %v1092
      %v1094 = vpop.f32.mrf.mxu0
      %v1095 = vadd.f32 %v1066, %v1094
      %1096 = vdwg.mxu0
      %1097 = vmatpush.bf16.msra.mxu0 %v876
      %1098 = vmatpush.bf16.msra.mxu0 %v875
      %1099 = vmatpush.bf16.msra.mxu0 %v874
      %1100 = vmatpush.bf16.msra.mxu0 %v873
      %1101 = vmatpush.bf16.msra.mxu0 %v872
      %1102 = vmatpush.bf16.msra.mxu0 %v871
      %1103 = vmatpush.bf16.msra.mxu0 %v870
      %1104 = vmatpush.bf16.msra.mxu0 %v869
      %1105 = vmatmul.bf16.gmra.mxu0 %v481
      %v1106 = vpop.f32.mrf.mxu0
      %v1107 = vadd.f32 %v1078, %v1106
      %v1108 = vpop.f32.mrf.mxu0
      %v1109 = vadd.f32 %v1080, %v1108
      %1110 = vmatmul.bf16.gmra.mxu0 %v490
      %v1111 = vpop.f32.mrf.mxu0
      %v1112 = vadd.f32 %v1083, %v1111
      %v1113 = vpop.f32.mrf.mxu0
      %v1114 = vadd.f32 %v1085, %v1113
      %1115 = vmatmul.bf16.gmra.mxu0 %v499
      %v1116 = vpop.f32.mrf.mxu0
      %v1117 = vadd.f32 %v1088, %v1116
      %v1118 = vpop.f32.mrf.mxu0
      %v1119 = vadd.f32 %v1090, %v1118
      %1120 = vmatmul.bf16.gmra.mxu0 %v508
      %v1121 = vpop.f32.mrf.mxu0
      %v1122 = vadd.f32 %v1093, %v1121
      %v1123 = vpop.f32.mrf.mxu0
      %v1124 = vadd.f32 %v1095, %v1123
      %1125 = vdwg.mxu0
      %1126 = vmatpush.bf16.msra.mxu0 %v884
      %1127 = vmatpush.bf16.msra.mxu0 %v883
      %1128 = vmatpush.bf16.msra.mxu0 %v882
      %1129 = vmatpush.bf16.msra.mxu0 %v881
      %1130 = vmatpush.bf16.msra.mxu0 %v880
      %1131 = vmatpush.bf16.msra.mxu0 %v879
      %1132 = vmatpush.bf16.msra.mxu0 %v878
      %1133 = vmatpush.bf16.msra.mxu0 %v877
      %1134 = vmatmul.bf16.gmra.mxu0 %v482
      %v1135 = vpop.f32.mrf.mxu0
      %v1136 = vadd.f32 %v1107, %v1135
      %v1137 = vpop.f32.mrf.mxu0
      %v1138 = vadd.f32 %v1109, %v1137
      %1139 = vmatmul.bf16.gmra.mxu0 %v491
      %v1140 = vpop.f32.mrf.mxu0
      %v1141 = vadd.f32 %v1112, %v1140
      %v1142 = vpop.f32.mrf.mxu0
      %v1143 = vadd.f32 %v1114, %v1142
      %1144 = vmatmul.bf16.gmra.mxu0 %v500
      %v1145 = vpop.f32.mrf.mxu0
      %v1146 = vadd.f32 %v1117, %v1145
      %v1147 = vpop.f32.mrf.mxu0
      %v1148 = vadd.f32 %v1119, %v1147
      %1149 = vmatmul.bf16.gmra.mxu0 %v509
      %v1150 = vpop.f32.mrf.mxu0
      %v1151 = vadd.f32 %v1122, %v1150
      %v1152 = vpop.f32.mrf.mxu0
      %v1153 = vadd.f32 %v1124, %v1152
      %1154 = vdwg.mxu0
      %1155 = vmatpush.bf16.msra.mxu0 %v892
      %1156 = vmatpush.bf16.msra.mxu0 %v891
      %1157 = vmatpush.bf16.msra.mxu0 %v890
      %1158 = vmatpush.bf16.msra.mxu0 %v889
      %1159 = vmatpush.bf16.msra.mxu0 %v888
      %1160 = vmatpush.bf16.msra.mxu0 %v887
      %1161 = vmatpush.bf16.msra.mxu0 %v886
      %1162 = vmatpush.bf16.msra.mxu0 %v885
      %1163 = vmatmul.bf16.gmra.mxu0 %v483
      %v1164 = vpop.f32.mrf.mxu0
      %v1165 = vadd.f32 %v1136, %v1164
      %v1166 = vpop.f32.mrf.mxu0
      %v1167 = vadd.f32 %v1138, %v1166
      %1168 = vmatmul.bf16.gmra.mxu0 %v492
      %v1169 = vpop.f32.mrf.mxu0
      %v1170 = vadd.f32 %v1141, %v1169
      %v1171 = vpop.f32.mrf.mxu0
      %v1172 = vadd.f32 %v1143, %v1171
      %1173 = vmatmul.bf16.gmra.mxu0 %v501
      %v1174 = vpop.f32.mrf.mxu0
      %v1175 = vadd.f32 %v1146, %v1174
      %v1176 = vpop.f32.mrf.mxu0
      %v1177 = vadd.f32 %v1148, %v1176
      %1178 = vmatmul.bf16.gmra.mxu0 %v510
      %v1179 = vpop.f32.mrf.mxu0
      %v1180 = vadd.f32 %v1151, %v1179
      %v1181 = vpop.f32.mrf.mxu0
      %v1182 = vadd.f32 %v1153, %v1181
      %1183 = vdwg.mxu0
      %1184 = vmatpush.bf16.msra.mxu0 %v900
      %1185 = vmatpush.bf16.msra.mxu0 %v899
      %1186 = vmatpush.bf16.msra.mxu0 %v898
      %1187 = vmatpush.bf16.msra.mxu0 %v897
      %1188 = vmatpush.bf16.msra.mxu0 %v896
      %1189 = vmatpush.bf16.msra.mxu0 %v895
      %1190 = vmatpush.bf16.msra.mxu0 %v894
      %1191 = vmatpush.bf16.msra.mxu0 %v893
      %1192 = vmatmul.bf16.gmra.mxu0 %v484
      %v1193 = vpop.f32.mrf.mxu0
      %v1194 = vadd.f32 %v1165, %v1193
      %v1195 = vpop.f32.mrf.mxu0
      %v1196 = vadd.f32 %v1167, %v1195
      %1197 = vmatmul.bf16.gmra.mxu0 %v493
      %v1198 = vpop.f32.mrf.mxu0
      %v1199 = vadd.f32 %v1170, %v1198
      %v1200 = vpop.f32.mrf.mxu0
      %v1201 = vadd.f32 %v1172, %v1200
      %1202 = vmatmul.bf16.gmra.mxu0 %v502
      %v1203 = vpop.f32.mrf.mxu0
      %v1204 = vadd.f32 %v1175, %v1203
      %v1205 = vpop.f32.mrf.mxu0
      %v1206 = vadd.f32 %v1177, %v1205
      %1207 = vmatmul.bf16.gmra.mxu0 %v511
      %v1208 = vpop.f32.mrf.mxu0
      %v1209 = vadd.f32 %v1180, %v1208
      %v1210 = vpop.f32.mrf.mxu0
      %v1211 = vadd.f32 %v1182, %v1210
      %1212 = vdwg.mxu0
      %1213 = vmatpush.bf16.msra.mxu0 %v908
      %1214 = vmatpush.bf16.msra.mxu0 %v907
      %1215 = vmatpush.bf16.msra.mxu0 %v906
      %1216 = vmatpush.bf16.msra.mxu0 %v905
      %1217 = vmatpush.bf16.msra.mxu0 %v904
      %1218 = vmatpush.bf16.msra.mxu0 %v903
      %1219 = vmatpush.bf16.msra.mxu0 %v902
      %1220 = vmatpush.bf16.msra.mxu0 %v901
      %1221 = vmatmul.bf16.gmra.mxu0 %v485
      %v1222 = vpop.f32.mrf.mxu0
      %v1223 = vadd.f32 %v1194, %v1222
      %v1224 = vpop.f32.mrf.mxu0
      %v1225 = vadd.f32 %v1196, %v1224
      %1226 = vmatmul.bf16.gmra.mxu0 %v494
      %v1227 = vpop.f32.mrf.mxu0
      %v1228 = vadd.f32 %v1199, %v1227
      %v1229 = vpop.f32.mrf.mxu0
      %v1230 = vadd.f32 %v1201, %v1229
      %1231 = vmatmul.bf16.gmra.mxu0 %v503
      %v1232 = vpop.f32.mrf.mxu0
      %v1233 = vadd.f32 %v1204, %v1232
      %v1234 = vpop.f32.mrf.mxu0
      %v1235 = vadd.f32 %v1206, %v1234
      %1236 = vmatmul.bf16.gmra.mxu0 %v512
      %v1237 = vpop.f32.mrf.mxu0
      %v1238 = vadd.f32 %v1209, %v1237
      %v1239 = vpop.f32.mrf.mxu0
      %v1240 = vadd.f32 %v1211, %v1239
      %1241 = vdwg.mxu0
      %v1242 = vmax.f32 %v1223, 0.0
      %v1243 = vmax.f32 %v1225, 0.0
      %v1244 = vmax.f32 %v1228, 0.0
      %v1245 = vmax.f32 %v1230, 0.0
      %v1246 = vmax.f32 %v1233, 0.0
      %v1247 = vmax.f32 %v1235, 0.0
      %v1248 = vmax.f32 %v1238, 0.0
      %v1249 = vmax.f32 %v1240, 0.0
      %1250 = vst [vmem:[%s175] sm:$0xff] %v1242
      %1251 = vst [vmem:[%s175 + $0x8] sm:$0xff] %v1243
      %1252 = vst [vmem:[%s175 + $0x10] sm:$0xff] %v1244
      %1253 = vst [vmem:[%s175 + $0x18] sm:$0xff] %v1245
      %1254 = vst [vmem:[%s175 + $0x20] sm:$0xff] %v1246
      %1255 = vst [vmem:[%s175 + $0x28] sm:$0xff] %v1247
      %1256 = vst [vmem:[%s175 + $0x30] sm:$0xff] %v1248
      %1257 = vst [vmem:[%s175 + $0x38] sm:$0xff] %v1249
      %s1258 = smul.u32 8, %s14
      %p1259 = scmp.lt.s32.totalorder %s1258, 63
      %s1260 = scalar_select %p1259, %s1258, 63
      %s1261 = smul.addr %s1260, 8
      %s1262 = scalar_lea.vmem %s3, %s1261
      // Predicated region
      $region33: #{daf_forward.7} parent=31 // pred_check
        %p1263 = pneg %p100
      $region34: #{daf_forward.7} parent=31 // pred_check_branch
        %1265 = sbr.rel (%p1263) target = $region36
      $region35: #{daf_forward.7} parent=31 // pred_region
        %s1266 = smul.u32 8, %s14
      $region36: #{daf_forward.7} parent=31 // pred_fallthru
        _
    $region32: #{daf_forward.7} parent=5 // pred_fallthru
      _
    %p1267 = scmp.le.s32.totalorder 2, %s9
    // Predicated region
    $region37: #{daf_forward.7} parent=5 // pred_check
      %p1268 = pneg %p1267
    $region38: #{daf_forward.7} parent=5 // pred_check_branch
      %1270 = sbr.rel (%p1268) target = $region40
    $region39: #{daf_forward.7} parent=5 // pred_region
      %s1271 = ssub.s32 %s9, 2
      // Predicated region
      $region41: #{daf_forward.7} parent=39 // pred_check
        %p1272 = pneg %p106
      $region42: #{daf_forward.7} parent=39 // pred_check_branch
        %1274 = sbr.rel (%p1272) target = $region44
      $region43: #{daf_forward.7} parent=39 // pred_region
        %s1275 = smul.u32 8, %s15
        %p1276 = scmp.lt.s32.totalorder %s1275, 63
        %s1277 = scalar_select %p1276, %s1275, 63
        %s1278 = smul.addr %s1277, 8
        %s1279 = scalar_lea.vmem %s3, %s1278
      $region44: #{daf_forward.7} parent=39 // pred_fallthru
        _
    $region40: #{daf_forward.7} parent=5 // pred_fallthru
      _
  $region6: #{daf_forward.7} parent=0 // loop_footer
    %s13 = sadd.s32 1, %s9
  $region7: #{daf_forward.7} parent=0 // loop_footer_branch
    %8 = sbr.rel target = $region3
  $region8: #{daf_forward.7} parent=0 // loop_exit
    _

</llo_original>
